<compile_context>
chip_gen: v7x
topology: tpu7x:2x2x1
jax: 0.10.0
libtpu: 0.0.40
codegen_flags: <defaults>
</compile_context>

<pallas_src>
import functools

import jax
import jax.numpy as jnp
from jax.experimental import pallas as pl
from jax.experimental.pallas import tpu as pltpu

EPS = 1e-5
SEQ_LEN = 192            # encoder flatten -> 90 features requires L = 192
F32 = jnp.float32
BF16 = jnp.bfloat16


# ---------------------------------------------------------------------------
# Kernel: chain of (TB, K) @ (K, N) matmuls with per-lane epilogues.
# Encoder max-pools are elementwise maxima of the even/odd phase matmuls.
# ---------------------------------------------------------------------------
def _ae_kernel(x_ref,
               ge1, go1, e1, ge2, go2, e2, ge3, go3, e3,     # encoder conv+pool stages
               we, be, wd, ed,                               # bottleneck dense layers
               gd1, ed1, gd2, ed2, gd3, ed3,                 # decoder ConvT+Upsample stages
               gf, bf,                                       # final ConvTranspose1d(5 -> 1)
               o_ref):
    def mm(a, w_ref):
        return jnp.dot(a.astype(BF16), w_ref[...], preferred_element_type=F32)

    def epi(y, e_ref):
        e = e_ref[...]                                        # (4, N): [bias, scale, shift, alpha]
        y = y + e[0:1, :]
        y = jnp.where(y > 0.0, y, e[3:4, :] * y)              # PReLU
        return y * e[1:2, :] + e[2:3, :]                      # BatchNorm (eval) affine

    def conv_pool(a, ge, go, e):
        # Conv1d(k=3,s=2,p=1)+PReLU+BN at even/odd pool phases, MaxPool1d(2) = elementwise max.
        return jnp.maximum(epi(mm(a, ge), e), epi(mm(a, go), e))

    x = x_ref[...].astype(F32)                                # (TB, 192), lanes = positions

    # -------- encoder: 3 x [Conv1d(s=2,p=1) + PReLU + BN + MaxPool(2)] --------
    a = conv_pool(x, ge1, go1, e1)                            # (TB, 48*5)
    a = conv_pool(a, ge2, go2, e2)                            # (TB, 12*15)
    a = conv_pool(a, ge3, go3, e3)                            # (TB,  3*30)

    # -------- Flatten + Linear(90 -> latent); Dropout uses eval semantics --------
    z = mm(a, we) + be[...]                                   # (TB, latent)

    # -------- decoder dense: Linear(latent -> 90) + PReLU + BN(90) --------
    z = epi(mm(z, wd), ed)                                    # (TB, 90), lanes = pos*30 + ch

    # -------- 3 x [ConvTranspose1d(s=2,op=1) + PReLU + BN + Upsample(x2)] --------
    z = epi(mm(z, gd1), ed1)                                  # (TB, 12*30)
    z = epi(mm(z, gd2), ed2)                                  # (TB, 48*15)
    z = epi(mm(z, gd3), ed3)                                  # (TB, 192*5)

    # -------- final ConvTranspose1d(5 -> 1, k=3, s=1, p=1): lane-dense output --------
    o_ref[...] = (mm(z, gf) + bf[...]).astype(o_ref.dtype)    # (TB, 192)


# ---------------------------------------------------------------------------
# Host-side folding of each stage into a dense lane->lane matrix (one-time prep).
# Lane convention everywhere: lane = position * C + channel (position-major).
# ---------------------------------------------------------------------------
def _scatter2d(shape, rows, cols, vals):
    return jnp.zeros(shape, F32).at[rows.reshape(-1), cols.reshape(-1)].add(vals.reshape(-1))


def _enc_stage_G(w, l_in, base):
    """Conv1d(k=3, s=2, p=1) sampled at the even (base=-1) / odd (base=+1) pool phase,
    as a dense (l_in*Cin, (l_in//4)*Cout) matrix."""
    c_out, c_in, k_sz = w.shape
    n = l_in // 4
    m = jnp.arange(n)[:, None, None, None]
    k = jnp.arange(k_sz)[None, :, None, None]
    ci = jnp.arange(c_in)[None, None, :, None]
    co = jnp.arange(c_out)[None, None, None, :]
    p = 4 * m + base + k                                      # input position of each tap
    valid = (p >= 0) & (p < l_in)
    sh = (n, k_sz, c_in, c_out)
    rows = jnp.broadcast_to(jnp.clip(p, 0, l_in - 1) * c_in + ci, sh)
    cols = jnp.broadcast_to(m * c_out + co, sh)
    vals = jnp.broadcast_to(jnp.transpose(w, (2, 1, 0))[None] * valid, sh)
    return _scatter2d((l_in * c_in, n * c_out), rows, cols, vals)


def _dec_stage_G(w, m_in):
    """ConvTranspose1d(k=3, s=2, p=1, op=1) + Upsample(x2, nearest) as a dense
    (m_in*Cin, 4*m_in*Cout) matrix.  out[4t+{0,1}] = x[t]@W1 ; out[4t+{2,3}] = x[t]@W2 + x[t+1]@W0."""
    c_in, c_out, _ = w.shape
    wt = jnp.transpose(w, (2, 0, 1))                          # (3, Cin, Cout)
    t = jnp.arange(m_in)[:, None, None, None]
    d = jnp.arange(4)[None, :, None, None]                    # upsampled sub-position
    ci = jnp.arange(c_in)[None, None, :, None]
    co = jnp.arange(c_out)[None, None, None, :]
    sh = (m_in, 4, c_in, c_out)
    cols = jnp.broadcast_to((4 * t + d) * c_out + co, sh)
    # contribution from x[t]: tap W1 on even ConvT positions, W2 on odd ones
    rows_a = jnp.broadcast_to(t * c_in + ci, sh)
    vals_a = jnp.broadcast_to(wt[jnp.array([1, 1, 2, 2])][None], sh)
    # contribution from x[t+1] on odd ConvT positions: tap W0 (x[m_in] == 0)
    mask_b = ((d >= 2) & (t + 1 < m_in)).astype(F32)
    rows_b = jnp.broadcast_to(jnp.clip(t + 1, 0, m_in - 1) * c_in + ci, sh)
    vals_b = jnp.broadcast_to(wt[0][None, None] * mask_b, sh)
    g = _scatter2d((m_in * c_in, 4 * m_in * c_out), rows_a, cols, vals_a)
    return g.at[rows_b.reshape(-1), cols.reshape(-1)].add(vals_b.reshape(-1))


def _final_stage_G(w, l_out):
    """ConvTranspose1d(Cin -> 1, k=3, s=1, p=1) as a dense (l_out*Cin, l_out) matrix.
    out[p] = sum_{cin,k} w[cin,0,k] * x[p+1-k, cin]."""
    c_in = w.shape[0]
    p = jnp.arange(l_out)[:, None, None]
    k = jnp.arange(3)[None, :, None]
    ci = jnp.arange(c_in)[None, None, :]
    src = p + 1 - k
    valid = (src >= 0) & (src < l_out)
    sh = (l_out, 3, c_in)
    rows = jnp.broadcast_to(jnp.clip(src, 0, l_out - 1) * c_in + ci, sh)
    cols = jnp.broadcast_to(p, sh)
    vals = jnp.broadcast_to(jnp.transpose(w[:, 0, :], (1, 0))[None] * valid, sh)
    return _scatter2d((l_out * c_in, l_out), rows, cols, vals)


def _bn_affine(gamma, beta, mean, var):
    scale = gamma / jnp.sqrt(var + EPS)
    return scale, beta - mean * scale


def _epi_channels(bias, alpha, scale, shift, n_pos):
    """Per-lane epilogue rows [bias, scale, shift, alpha] for position-major lanes."""
    def tile(v):
        return jnp.tile(v.astype(F32), n_pos)
    n = bias.shape[0] * n_pos
    return jnp.stack([tile(bias), tile(scale), tile(shift),
                      jnp.full((n,), alpha, F32)], axis=0)


# ---------------------------------------------------------------------------
# Forward pass (matches Autoencoder.forward, eval semantics)
# ---------------------------------------------------------------------------
def autoencoder_forward(params, x, *, batch_block=8):
    p = params
    b_total = x.shape[0]
    assert x.shape[1] == SEQ_LEN and x.shape[2] == 1, x.shape
    latent = p["enc_dense_w"].shape[0]

    # lane (pos*30 + ch) of the 90-wide bottleneck  <->  torch flatten feature (ch*3 + pos)
    perm = (jnp.arange(90) % 30) * 3 + jnp.arange(90) // 30

    ge1 = _enc_stage_G(p["conv1_w"], SEQ_LEN, -1)
    go1 = _enc_stage_G(p["conv1_w"], SEQ_LEN, +1)
    e1 = _epi_channels(p["conv1_b"], p["prelu1"],
                       *_bn_affine(p["bn1_g"], p["bn1_b"], p["bn1_m"], p["bn1_v"]), 48)
    ge2 = _enc_stage_G(p["conv2_w"], 48, -1)
    go2 = _enc_stage_G(p["conv2_w"], 48, +1)
    e2 = _epi_channels(p["conv2_b"], p["prelu2"],
                       *_bn_affine(p["bn2_g"], p["bn2_b"], p["bn2_m"], p["bn2_v"]), 12)
    ge3 = _enc_stage_G(p["conv3_w"], 12, -1)
    go3 = _enc_stage_G(p["conv3_w"], 12, +1)
    e3 = _epi_channels(p["conv3_b"], p["prelu3"],
                       *_bn_affine(p["bn3_g"], p["bn3_b"], p["bn3_m"], p["bn3_v"]), 3)

    we = p["enc_dense_w"].T[perm, :].astype(F32)              # (90, latent)
    be = p["enc_dense_b"].reshape(1, latent).astype(F32)

    wd = p["dec_dense_w"].T[:, perm].astype(F32)              # (latent, 90)
    sc90, sh90 = _bn_affine(p["bn_d90_g"], p["bn_d90_b"], p["bn_d90_m"], p["bn_d90_v"])
    ed = jnp.stack([p["dec_dense_b"][perm].astype(F32), sc90[perm].astype(F32),
                    sh90[perm].astype(F32), jnp.full((90,), p["prelu_d0"], F32)], axis=0)

    gd1 = _dec_stage_G(p["convt3_w"], 3)
    ed1 = _epi_channels(p["convt3_b"], p["prelu_d1"],
                        *_bn_affine(p["bn_d30_g"], p["bn_d30_b"], p["bn_d30_m"], p["bn_d30_v"]), 12)
    gd2 = _dec_stage_G(p["convt2_w"], 12)
    ed2 = _epi_channels(p["convt2_b"], p["prelu_d2"],
                        *_bn_affine(p["bn_d15_g"], p["bn_d15_b"], p["bn_d15_m"], p["bn_d15_v"]), 48)
    gd3 = _dec_stage_G(p["convt1_w"], 48)
    ed3 = _epi_channels(p["convt1_b"], p["prelu_d3"],
                        *_bn_affine(p["bn_d5_g"], p["bn_d5_b"], p["bn_d5_m"], p["bn_d5_v"]), SEQ_LEN)
    gf = _final_stage_G(p["convtf_w"], SEQ_LEN)
    bf = jnp.broadcast_to(p["convtf_b"].astype(F32).reshape(1, 1), (1, SEQ_LEN))

    def w16(m):  # matmul operands in bf16; accumulation/epilogues stay f32
        return m.astype(BF16)

    args = (
        w16(ge1), w16(go1), e1,
        w16(ge2), w16(go2), e2,
        w16(ge3), w16(go3), e3,
        w16(we), be,
        w16(wd), ed,
        w16(gd1), ed1, w16(gd2), ed2, w16(gd3), ed3,
        w16(gf), bf,
    )

    tb = max(1, min(batch_block, b_total))
    b_pad = pl.cdiv(b_total, tb) * tb
    xs = x.reshape(b_total, SEQ_LEN).astype(F32)              # lane-dense input
    if b_pad != b_total:
        xs = jnp.pad(xs, ((0, b_pad - b_total), (0, 0)))

    in_specs = [pl.BlockSpec((tb, SEQ_LEN), lambda b: (b, 0))]
    in_specs += [pl.BlockSpec(a.shape, lambda b: (0, 0)) for a in args]

    mats = (ge1, go1, ge2, go2, ge3, go3, we, wd, gd1, gd2, gd3, gf)
    flops = 2 * b_pad * sum(int(a.shape[0]) * int(a.shape[1]) for a in mats)
    bytes_accessed = int(sum(int(a.size) * a.dtype.itemsize for a in args)
                         + 4 * 2 * b_pad * SEQ_LEN)

    out = pl.pallas_call(
        _ae_kernel,
        out_shape=jax.ShapeDtypeStruct((b_pad, SEQ_LEN), F32),
        grid=(b_pad // tb,),
        in_specs=in_specs,
        out_specs=pl.BlockSpec((tb, SEQ_LEN), lambda b: (b, 0)),
        compiler_params=pltpu.CompilerParams(
            dimension_semantics=("parallel",),
            vmem_limit_bytes=32 * 1024 * 1024),
        cost_estimate=pl.CostEstimate(flops=int(flops), transcendentals=0,
                                      bytes_accessed=bytes_accessed),
    )(xs, *args)

    return out[:b_total].reshape(b_total, 1, SEQ_LEN)         # matches torch decoder output


# ---------------------------------------------------------------------------
# Pure-JAX eval-mode reference (mirrors the PyTorch module) — used as a check.
# ---------------------------------------------------------------------------
def reference_forward(params, x):
    p = params

    def prelu(v, a):
        return jnp.where(v > 0, v, a * v)

    def bn(v, g, b, m, var):
        sc = g / jnp.sqrt(var + EPS)
        sh = b - m * sc
        if v.ndim == 3:
            return v * sc[None, :, None] + sh[None, :, None]
        return v * sc[None, :] + sh[None, :]

    def conv_s2(v, w, b):                                     # (B,Cin,L) -> (B,Cout,L//2)
        l_out = v.shape[2] // 2
        vp = jnp.pad(v, ((0, 0), (0, 0), (1, 1)))
        out = b[None, :, None]
        for k in range(3):
            out = out + jnp.einsum("bcl,oc->bol", vp[:, :, k:k + 2 * l_out:2], w[:, :, k])
        return out

    def pool(v):
        return jnp.maximum(v[:, :, 0::2], v[:, :, 1::2])

    def convt_s2(v, w, b):                                    # (B,Cin,M) -> (B,Cout,2M)
        bsz, _, m = v.shape
        c_out = w.shape[1]
        vs = jnp.concatenate([v[:, :, 1:], jnp.zeros_like(v[:, :, :1])], axis=2)
        even = jnp.einsum("bcm,co->bom", v, w[:, :, 1])
        odd = jnp.einsum("bcm,co->bom", v, w[:, :, 2]) + jnp.einsum("bcm,co->bom", vs, w[:, :, 0])
        return jnp.stack([even, odd], axis=3).reshape(bsz, c_out, 2 * m) + b[None, :, None]

    def upsample(v):
        return jnp.repeat(v, 2, axis=2)

    xc = jnp.transpose(x.astype(F32), (0, 2, 1))              # (B, 1, 192)
    h = pool(bn(prelu(conv_s2(xc, p["conv1_w"], p["conv1_b"]), p["prelu1"]),
                p["bn1_g"], p["bn1_b"], p["bn1_m"], p["bn1_v"]))
    h = pool(bn(prelu(conv_s2(h, p["conv2_w"], p["conv2_b"]), p["prelu2"]),
                p["bn2_g"], p["bn2_b"], p["bn2_m"], p["bn2_v"]))
    h = pool(bn(prelu(conv_s2(h, p["conv3_w"], p["conv3_b"]), p["prelu3"]),
                p["bn3_g"], p["bn3_b"], p["bn3_m"], p["bn3_v"]))
    enc = h.reshape(h.shape[0], 90) @ p["enc_dense_w"].T + p["enc_dense_b"]

    d = enc @ p["dec_dense_w"].T + p["dec_dense_b"]
    d = bn(prelu(d, p["prelu_d0"]), p["bn_d90_g"], p["bn_d90_b"], p["bn_d90_m"], p["bn_d90_v"])
    y = d.reshape(d.shape[0], 30, 3)
    y = upsample(bn(prelu(convt_s2(y, p["convt3_w"], p["convt3_b"]), p["prelu_d1"]),
                    p["bn_d30_g"], p["bn_d30_b"], p["bn_d30_m"], p["bn_d30_v"]))
    y = upsample(bn(prelu(convt_s2(y, p["convt2_w"], p["convt2_b"]), p["prelu_d2"]),
                    p["bn_d15_g"], p["bn_d15_b"], p["bn_d15_m"], p["bn_d15_v"]))
    y = upsample(bn(prelu(convt_s2(y, p["convt1_w"], p["convt1_b"]), p["prelu_d3"]),
                    p["bn_d5_g"], p["bn_d5_b"], p["bn_d5_m"], p["bn_d5_v"]))

    yp = jnp.pad(y, ((0, 0), (0, 0), (1, 1)))                 # (B, 5, 194)
    wf = p["convtf_w"]
    res = jnp.zeros((y.shape[0], SEQ_LEN), F32) + p["convtf_b"][0]
    for k in range(3):
        res = res + jnp.einsum("bcl,c->bl", yp[:, :, 2 - k:2 - k + SEQ_LEN], wf[:, 0, k])
    return res.reshape(y.shape[0], 1, SEQ_LEN)


# ---------------------------------------------------------------------------
# Parameters (deterministic synthetic init, torch layouts)
# ---------------------------------------------------------------------------
def init_params(key, latent_dim):
    keys = iter(jax.random.split(key, 64))

    def nrm(shape, s=0.1):
        return (s * jax.random.normal(next(keys), shape)).astype(jnp.float32)

    p = {}

    def bn(prefix, n):
        p[prefix + "_g"] = 1.0 + nrm((n,), 0.05)
        p[prefix + "_b"] = nrm((n,), 0.05)
        p[prefix + "_m"] = jnp.zeros((n,), jnp.float32)
        p[prefix + "_v"] = jnp.ones((n,), jnp.float32)

    # encoder
    p["conv1_w"], p["conv1_b"] = nrm((5, 1, 3)), nrm((5,), 0.01)
    p["prelu1"] = jnp.float32(0.25); bn("bn1", 5)
    p["conv2_w"], p["conv2_b"] = nrm((15, 5, 3)), nrm((15,), 0.01)
    p["prelu2"] = jnp.float32(0.25); bn("bn2", 15)
    p["conv3_w"], p["conv3_b"] = nrm((30, 15, 3)), nrm((30,), 0.01)
    p["prelu3"] = jnp.float32(0.25); bn("bn3", 30)
    p["enc_dense_w"], p["enc_dense_b"] = nrm((latent_dim, 90)), nrm((latent_dim,), 0.01)
    # decoder
    p["dec_dense_w"], p["dec_dense_b"] = nrm((90, latent_dim)), nrm((90,), 0.01)
    p["prelu_d0"] = jnp.float32(0.25); bn("bn_d90", 90)
    p["convt3_w"], p["convt3_b"] = nrm((30, 30, 3)), nrm((30,), 0.01)
    p["prelu_d1"] = jnp.float32(0.25); bn("bn_d30", 30)
    p["convt2_w"], p["convt2_b"] = nrm((30, 15, 3)), nrm((15,), 0.01)
    p["prelu_d2"] = jnp.float32(0.25); bn("bn_d15", 15)
    p["convt1_w"], p["convt1_b"] = nrm((15, 5, 3)), nrm((5,), 0.01)
    p["prelu_d3"] = jnp.float32(0.25); bn("bn_d5", 5)
    p["convtf_w"], p["convtf_b"] = nrm((5, 1, 3)), nrm((1,), 0.01)
    return p


# ---------------------------------------------------------------------------
if __name__ == "__main__":
    key = jax.random.PRNGKey(0)
    pkey, xkey = jax.random.split(key)

    latent_dim = 32
    params = init_params(pkey, latent_dim)

    B = 16                                   # grid of 2 batch blocks -> both v7x cores busy
    x = jax.random.normal(xkey, (B, SEQ_LEN, 1), jnp.float32)

    fwd = jax.jit(functools.partial(autoencoder_forward, params))
    out = fwd(x)
    jax.block_until_ready(out)

    assert out.shape == (B, 1, SEQ_LEN), out.shape
    assert bool(jnp.all(jnp.isfinite(out)))

    # bf16-matmul kernel vs f32 reference: loose tolerance, catches structural errors.
    ref = reference_forward(params, x)
    err = float(jnp.max(jnp.abs(out - ref)) / (jnp.max(jnp.abs(ref)) + 1e-6))
    assert err < 0.08, f"kernel/reference mismatch: rel-to-max error {err:.4f}"

    print("KERNEL_OK")
</pallas_src>

<mosaic_0001>
module attributes {stable_mosaic.version = 11 : i64} {
  func.func private @main(%arg0: i32) attributes {dimension_semantics = [#tpu.dimension_semantics<core_parallel>], iteration_bounds = array<i64: 2>, tpu.core_type = #tpu.core_type<sc_scalar_subcore>, window_params = []} {
    return
  }
}

module attributes {stable_mosaic.version = 11 : i64} {
  func.func private @main(%arg0: i32) attributes {dimension_semantics = [#tpu.dimension_semantics<core_parallel>], iteration_bounds = array<i64: 2>, tpu.core_type = #tpu.core_type<sc_scalar_subcore>, window_params = []} {
    return
  }
}

module attributes {stable_mosaic.version = 11 : i64} {
  func.func @_ae_kernel(%arg0: i32, %arg1: memref<8x192xf32, #tpu.memory_space<vmem>>, %arg2: memref<192x240xbf16, #tpu.memory_space<vmem>>, %arg3: memref<192x240xbf16, #tpu.memory_space<vmem>>, %arg4: memref<4x240xf32, #tpu.memory_space<vmem>>, %arg5: memref<240x180xbf16, #tpu.memory_space<vmem>>, %arg6: memref<240x180xbf16, #tpu.memory_space<vmem>>, %arg7: memref<4x180xf32, #tpu.memory_space<vmem>>, %arg8: memref<180x90xbf16, #tpu.memory_space<vmem>>, %arg9: memref<180x90xbf16, #tpu.memory_space<vmem>>, %arg10: memref<4x90xf32, #tpu.memory_space<vmem>>, %arg11: memref<90x32xbf16, #tpu.memory_space<vmem>>, %arg12: memref<1x32xf32, #tpu.memory_space<vmem>>, %arg13: memref<32x90xbf16, #tpu.memory_space<vmem>>, %arg14: memref<4x90xf32, #tpu.memory_space<vmem>>, %arg15: memref<90x360xbf16, #tpu.memory_space<vmem>>, %arg16: memref<4x360xf32, #tpu.memory_space<vmem>>, %arg17: memref<360x720xbf16, #tpu.memory_space<vmem>>, %arg18: memref<4x720xf32, #tpu.memory_space<vmem>>, %arg19: memref<720x960xbf16, #tpu.memory_space<vmem>>, %arg20: memref<4x960xf32, #tpu.memory_space<vmem>>, %arg21: memref<960x192xbf16, #tpu.memory_space<vmem>>, %arg22: memref<1x192xf32, #tpu.memory_space<vmem>>, %arg23: memref<8x192xf32, #tpu.memory_space<vmem>>) attributes {dimension_semantics = [#tpu.dimension_semantics<parallel>], iteration_bounds = array<i64: 2>, scalar_prefetch = 0 : i64, scratch_operands = 0 : i64, tpu.core_type = #tpu.core_type<tc>, window_params = [{transform_indices = @transform_0, window_bounds = array<i64: 8, 192>}, {pipeline_mode = #tpu.pipeline_mode<synchronous>, transform_indices = @transform_1, window_bounds = array<i64: 192, 240>}, {pipeline_mode = #tpu.pipeline_mode<synchronous>, transform_indices = @transform_2, window_bounds = array<i64: 192, 240>}, {pipeline_mode = #tpu.pipeline_mode<synchronous>, transform_indices = @transform_3, window_bounds = array<i64: 4, 240>}, {pipeline_mode = #tpu.pipeline_mode<synchronous>, transform_indices = @transform_4, window_bounds = array<i64: 240, 180>}, {pipeline_mode = #tpu.pipeline_mode<synchronous>, transform_indices = @transform_5, window_bounds = array<i64: 240, 180>}, {pipeline_mode = #tpu.pipeline_mode<synchronous>, transform_indices = @transform_6, window_bounds = array<i64: 4, 180>}, {pipeline_mode = #tpu.pipeline_mode<synchronous>, transform_indices = @transform_7, window_bounds = array<i64: 180, 90>}, {pipeline_mode = #tpu.pipeline_mode<synchronous>, transform_indices = @transform_8, window_bounds = array<i64: 180, 90>}, {pipeline_mode = #tpu.pipeline_mode<synchronous>, transform_indices = @transform_9, window_bounds = array<i64: 4, 90>}, {pipeline_mode = #tpu.pipeline_mode<synchronous>, transform_indices = @transform_10, window_bounds = array<i64: 90, 32>}, {pipeline_mode = #tpu.pipeline_mode<synchronous>, transform_indices = @transform_11, window_bounds = array<i64: 1, 32>}, {pipeline_mode = #tpu.pipeline_mode<synchronous>, transform_indices = @transform_12, window_bounds = array<i64: 32, 90>}, {pipeline_mode = #tpu.pipeline_mode<synchronous>, transform_indices = @transform_13, window_bounds = array<i64: 4, 90>}, {pipeline_mode = #tpu.pipeline_mode<synchronous>, transform_indices = @transform_14, window_bounds = array<i64: 90, 360>}, {pipeline_mode = #tpu.pipeline_mode<synchronous>, transform_indices = @transform_15, window_bounds = array<i64: 4, 360>}, {pipeline_mode = #tpu.pipeline_mode<synchronous>, transform_indices = @transform_16, window_bounds = array<i64: 360, 720>}, {pipeline_mode = #tpu.pipeline_mode<synchronous>, transform_indices = @transform_17, window_bounds = array<i64: 4, 720>}, {pipeline_mode = #tpu.pipeline_mode<synchronous>, transform_indices = @transform_18, window_bounds = array<i64: 720, 960>}, {pipeline_mode = #tpu.pipeline_mode<synchronous>, transform_indices = @transform_19, window_bounds = array<i64: 4, 960>}, {pipeline_mode = #tpu.pipeline_mode<synchronous>, transform_indices = @transform_20, window_bounds = array<i64: 960, 192>}, {pipeline_mode = #tpu.pipeline_mode<synchronous>, transform_indices = @transform_21, window_bounds = array<i64: 1, 192>}, {transform_indices = @transform_22, window_bounds = array<i64: 8, 192>}]} {
    %c0 = arith.constant 0 : index
    %c0_0 = arith.constant 0 : index
    %0 = vector.load %arg1[%c0, %c0_0] : memref<8x192xf32, #tpu.memory_space<vmem>>, vector<8x192xf32>
    %1 = arith.truncf %0 : vector<8x192xf32> to vector<8x192xbf16>
    %c0_1 = arith.constant 0 : index
    %c0_2 = arith.constant 0 : index
    %2 = vector.load %arg2[%c0_1, %c0_2] : memref<192x240xbf16, #tpu.memory_space<vmem>>, vector<192x240xbf16>
    %cst = arith.constant dense<0.000000e+00> : vector<8x240xf32>
    %3 = tpu.matmul %1, %2, %cst {dimension_numbers = #tpu.dot_dimension_numbers<[1], [0], [0], [1], [0, 0, 1, 1], [], []>} : vector<8x192xbf16>, vector<192x240xbf16>, vector<8x240xf32> -> vector<8x240xf32>
    %c0_3 = arith.constant 0 : index
    %c0_4 = arith.constant 0 : index
    %4 = vector.load %arg4[%c0_3, %c0_4] : memref<4x240xf32, #tpu.memory_space<vmem>>, vector<4x240xf32>
    %5 = vector.extract_strided_slice %4 {offsets = [0, 0], sizes = [1, 240], strides = [1, 1]} : vector<4x240xf32> to vector<1x240xf32>
    %6 = vector.broadcast %5 : vector<1x240xf32> to vector<8x240xf32>
    %7 = arith.addf %3, %6 : vector<8x240xf32>
    %cst_5 = arith.constant 0.000000e+00 : f32
    %8 = vector.broadcast %cst_5 : f32 to vector<8x240xf32>
    %9 = arith.cmpf ogt, %7, %8 : vector<8x240xf32>
    %10 = vector.extract_strided_slice %4 {offsets = [3, 0], sizes = [1, 240], strides = [1, 1]} : vector<4x240xf32> to vector<1x240xf32>
    %11 = vector.broadcast %10 : vector<1x240xf32> to vector<8x240xf32>
    %12 = arith.mulf %11, %7 : vector<8x240xf32>
    %13 = arith.select %9, %7, %12 : vector<8x240xi1>, vector<8x240xf32>
    %14 = vector.extract_strided_slice %4 {offsets = [1, 0], sizes = [1, 240], strides = [1, 1]} : vector<4x240xf32> to vector<1x240xf32>
    %15 = vector.broadcast %14 : vector<1x240xf32> to vector<8x240xf32>
    %16 = arith.mulf %13, %15 : vector<8x240xf32>
    %17 = vector.extract_strided_slice %4 {offsets = [2, 0], sizes = [1, 240], strides = [1, 1]} : vector<4x240xf32> to vector<1x240xf32>
    %18 = vector.broadcast %17 : vector<1x240xf32> to vector<8x240xf32>
    %19 = arith.addf %16, %18 : vector<8x240xf32>
    %20 = arith.truncf %0 : vector<8x192xf32> to vector<8x192xbf16>
    %c0_6 = arith.constant 0 : index
    %c0_7 = arith.constant 0 : index
    %21 = vector.load %arg3[%c0_6, %c0_7] : memref<192x240xbf16, #tpu.memory_space<vmem>>, vector<192x240xbf16>
    %cst_8 = arith.constant dense<0.000000e+00> : vector<8x240xf32>
    %22 = tpu.matmul %20, %21, %cst_8 {dimension_numbers = #tpu.dot_dimension_numbers<[1], [0], [0], [1], [0, 0, 1, 1], [], []>} : vector<8x192xbf16>, vector<192x240xbf16>, vector<8x240xf32> -> vector<8x240xf32>
    %c0_9 = arith.constant 0 : index
    %c0_10 = arith.constant 0 : index
    %23 = vector.load %arg4[%c0_9, %c0_10] : memref<4x240xf32, #tpu.memory_space<vmem>>, vector<4x240xf32>
    %24 = vector.extract_strided_slice %23 {offsets = [0, 0], sizes = [1, 240], strides = [1, 1]} : vector<4x240xf32> to vector<1x240xf32>
    %25 = vector.broadcast %24 : vector<1x240xf32> to vector<8x240xf32>
    %26 = arith.addf %22, %25 : vector<8x240xf32>
    %cst_11 = arith.constant 0.000000e+00 : f32
    %27 = vector.broadcast %cst_11 : f32 to vector<8x240xf32>
    %28 = arith.cmpf ogt, %26, %27 : vector<8x240xf32>
    %29 = vector.extract_strided_slice %23 {offsets = [3, 0], sizes = [1, 240], strides = [1, 1]} : vector<4x240xf32> to vector<1x240xf32>
    %30 = vector.broadcast %29 : vector<1x240xf32> to vector<8x240xf32>
    %31 = arith.mulf %30, %26 : vector<8x240xf32>
    %32 = arith.select %28, %26, %31 : vector<8x240xi1>, vector<8x240xf32>
    %33 = vector.extract_strided_slice %23 {offsets = [1, 0], sizes = [1, 240], strides = [1, 1]} : vector<4x240xf32> to vector<1x240xf32>
    %34 = vector.broadcast %33 : vector<1x240xf32> to vector<8x240xf32>
    %35 = arith.mulf %32, %34 : vector<8x240xf32>
    %36 = vector.extract_strided_slice %23 {offsets = [2, 0], sizes = [1, 240], strides = [1, 1]} : vector<4x240xf32> to vector<1x240xf32>
    %37 = vector.broadcast %36 : vector<1x240xf32> to vector<8x240xf32>
    %38 = arith.addf %35, %37 : vector<8x240xf32>
    %39 = arith.maximumf %19, %38 : vector<8x240xf32>
    %40 = arith.truncf %39 : vector<8x240xf32> to vector<8x240xbf16>
    %c0_12 = arith.constant 0 : index
    %c0_13 = arith.constant 0 : index
    %41 = vector.load %arg5[%c0_12, %c0_13] : memref<240x180xbf16, #tpu.memory_space<vmem>>, vector<240x180xbf16>
    %cst_14 = arith.constant dense<0.000000e+00> : vector<8x180xf32>
    %42 = tpu.matmul %40, %41, %cst_14 {dimension_numbers = #tpu.dot_dimension_numbers<[1], [0], [0], [1], [0, 0, 1, 1], [], []>} : vector<8x240xbf16>, vector<240x180xbf16>, vector<8x180xf32> -> vector<8x180xf32>
    %c0_15 = arith.constant 0 : index
    %c0_16 = arith.constant 0 : index
    %43 = vector.load %arg7[%c0_15, %c0_16] : memref<4x180xf32, #tpu.memory_space<vmem>>, vector<4x180xf32>
    %44 = vector.extract_strided_slice %43 {offsets = [0, 0], sizes = [1, 180], strides = [1, 1]} : vector<4x180xf32> to vector<1x180xf32>
    %45 = vector.broadcast %44 : vector<1x180xf32> to vector<8x180xf32>
    %46 = arith.addf %42, %45 : vector<8x180xf32>
    %cst_17 = arith.constant 0.000000e+00 : f32
    %47 = vector.broadcast %cst_17 : f32 to vector<8x180xf32>
    %48 = arith.cmpf ogt, %46, %47 : vector<8x180xf32>
    %49 = vector.extract_strided_slice %43 {offsets = [3, 0], sizes = [1, 180], strides = [1, 1]} : vector<4x180xf32> to vector<1x180xf32>
    %50 = vector.broadcast %49 : vector<1x180xf32> to vector<8x180xf32>
    %51 = arith.mulf %50, %46 : vector<8x180xf32>
    %52 = arith.select %48, %46, %51 : vector<8x180xi1>, vector<8x180xf32>
    %53 = vector.extract_strided_slice %43 {offsets = [1, 0], sizes = [1, 180], strides = [1, 1]} : vector<4x180xf32> to vector<1x180xf32>
    %54 = vector.broadcast %53 : vector<1x180xf32> to vector<8x180xf32>
    %55 = arith.mulf %52, %54 : vector<8x180xf32>
    %56 = vector.extract_strided_slice %43 {offsets = [2, 0], sizes = [1, 180], strides = [1, 1]} : vector<4x180xf32> to vector<1x180xf32>
    %57 = vector.broadcast %56 : vector<1x180xf32> to vector<8x180xf32>
    %58 = arith.addf %55, %57 : vector<8x180xf32>
    %59 = arith.truncf %39 : vector<8x240xf32> to vector<8x240xbf16>
    %c0_18 = arith.constant 0 : index
    %c0_19 = arith.constant 0 : index
    %60 = vector.load %arg6[%c0_18, %c0_19] : memref<240x180xbf16, #tpu.memory_space<vmem>>, vector<240x180xbf16>
    %cst_20 = arith.constant dense<0.000000e+00> : vector<8x180xf32>
    %61 = tpu.matmul %59, %60, %cst_20 {dimension_numbers = #tpu.dot_dimension_numbers<[1], [0], [0], [1], [0, 0, 1, 1], [], []>} : vector<8x240xbf16>, vector<240x180xbf16>, vector<8x180xf32> -> vector<8x180xf32>
    %c0_21 = arith.constant 0 : index
    %c0_22 = arith.constant 0 : index
    %62 = vector.load %arg7[%c0_21, %c0_22] : memref<4x180xf32, #tpu.memory_space<vmem>>, vector<4x180xf32>
    %63 = vector.extract_strided_slice %62 {offsets = [0, 0], sizes = [1, 180], strides = [1, 1]} : vector<4x180xf32> to vector<1x180xf32>
    %64 = vector.broadcast %63 : vector<1x180xf32> to vector<8x180xf32>
    %65 = arith.addf %61, %64 : vector<8x180xf32>
    %cst_23 = arith.constant 0.000000e+00 : f32
    %66 = vector.broadcast %cst_23 : f32 to vector<8x180xf32>
    %67 = arith.cmpf ogt, %65, %66 : vector<8x180xf32>
    %68 = vector.extract_strided_slice %62 {offsets = [3, 0], sizes = [1, 180], strides = [1, 1]} : vector<4x180xf32> to vector<1x180xf32>
    %69 = vector.broadcast %68 : vector<1x180xf32> to vector<8x180xf32>
    %70 = arith.mulf %69, %65 : vector<8x180xf32>
    %71 = arith.select %67, %65, %70 : vector<8x180xi1>, vector<8x180xf32>
    %72 = vector.extract_strided_slice %62 {offsets = [1, 0], sizes = [1, 180], strides = [1, 1]} : vector<4x180xf32> to vector<1x180xf32>
    %73 = vector.broadcast %72 : vector<1x180xf32> to vector<8x180xf32>
    %74 = arith.mulf %71, %73 : vector<8x180xf32>
    %75 = vector.extract_strided_slice %62 {offsets = [2, 0], sizes = [1, 180], strides = [1, 1]} : vector<4x180xf32> to vector<1x180xf32>
    %76 = vector.broadcast %75 : vector<1x180xf32> to vector<8x180xf32>
    %77 = arith.addf %74, %76 : vector<8x180xf32>
    %78 = arith.maximumf %58, %77 : vector<8x180xf32>
    %79 = arith.truncf %78 : vector<8x180xf32> to vector<8x180xbf16>
    %c0_24 = arith.constant 0 : index
    %c0_25 = arith.constant 0 : index
    %80 = vector.load %arg8[%c0_24, %c0_25] : memref<180x90xbf16, #tpu.memory_space<vmem>>, vector<180x90xbf16>
    %cst_26 = arith.constant dense<0.000000e+00> : vector<8x90xf32>
    %81 = tpu.matmul %79, %80, %cst_26 {dimension_numbers = #tpu.dot_dimension_numbers<[1], [0], [0], [1], [0, 0, 1, 1], [], []>} : vector<8x180xbf16>, vector<180x90xbf16>, vector<8x90xf32> -> vector<8x90xf32>
    %c0_27 = arith.constant 0 : index
    %c0_28 = arith.constant 0 : index
    %82 = vector.load %arg10[%c0_27, %c0_28] : memref<4x90xf32, #tpu.memory_space<vmem>>, vector<4x90xf32>
    %83 = vector.extract_strided_slice %82 {offsets = [0, 0], sizes = [1, 90], strides = [1, 1]} : vector<4x90xf32> to vector<1x90xf32>
    %84 = vector.broadcast %83 : vector<1x90xf32> to vector<8x90xf32>
    %85 = arith.addf %81, %84 : vector<8x90xf32>
    %cst_29 = arith.constant 0.000000e+00 : f32
    %86 = vector.broadcast %cst_29 : f32 to vector<8x90xf32>
    %87 = arith.cmpf ogt, %85, %86 : vector<8x90xf32>
    %88 = vector.extract_strided_slice %82 {offsets = [3, 0], sizes = [1, 90], strides = [1, 1]} : vector<4x90xf32> to vector<1x90xf32>
    %89 = vector.broadcast %88 : vector<1x90xf32> to vector<8x90xf32>
    %90 = arith.mulf %89, %85 : vector<8x90xf32>
    %91 = arith.select %87, %85, %90 : vector<8x90xi1>, vector<8x90xf32>
    %92 = vector.extract_strided_slice %82 {offsets = [1, 0], sizes = [1, 90], strides = [1, 1]} : vector<4x90xf32> to vector<1x90xf32>
    %93 = vector.broadcast %92 : vector<1x90xf32> to vector<8x90xf32>
    %94 = arith.mulf %91, %93 : vector<8x90xf32>
    %95 = vector.extract_strided_slice %82 {offsets = [2, 0], sizes = [1, 90], strides = [1, 1]} : vector<4x90xf32> to vector<1x90xf32>
    %96 = vector.broadcast %95 : vector<1x90xf32> to vector<8x90xf32>
    %97 = arith.addf %94, %96 : vector<8x90xf32>
    %98 = arith.truncf %78 : vector<8x180xf32> to vector<8x180xbf16>
    %c0_30 = arith.constant 0 : index
    %c0_31 = arith.constant 0 : index
    %99 = vector.load %arg9[%c0_30, %c0_31] : memref<180x90xbf16, #tpu.memory_space<vmem>>, vector<180x90xbf16>
    %cst_32 = arith.constant dense<0.000000e+00> : vector<8x90xf32>
    %100 = tpu.matmul %98, %99, %cst_32 {dimension_numbers = #tpu.dot_dimension_numbers<[1], [0], [0], [1], [0, 0, 1, 1], [], []>} : vector<8x180xbf16>, vector<180x90xbf16>, vector<8x90xf32> -> vector<8x90xf32>
    %c0_33 = arith.constant 0 : index
    %c0_34 = arith.constant 0 : index
    %101 = vector.load %arg10[%c0_33, %c0_34] : memref<4x90xf32, #tpu.memory_space<vmem>>, vector<4x90xf32>
    %102 = vector.extract_strided_slice %101 {offsets = [0, 0], sizes = [1, 90], strides = [1, 1]} : vector<4x90xf32> to vector<1x90xf32>
    %103 = vector.broadcast %102 : vector<1x90xf32> to vector<8x90xf32>
    %104 = arith.addf %100, %103 : vector<8x90xf32>
    %cst_35 = arith.constant 0.000000e+00 : f32
    %105 = vector.broadcast %cst_35 : f32 to vector<8x90xf32>
    %106 = arith.cmpf ogt, %104, %105 : vector<8x90xf32>
    %107 = vector.extract_strided_slice %101 {offsets = [3, 0], sizes = [1, 90], strides = [1, 1]} : vector<4x90xf32> to vector<1x90xf32>
    %108 = vector.broadcast %107 : vector<1x90xf32> to vector<8x90xf32>
    %109 = arith.mulf %108, %104 : vector<8x90xf32>
    %110 = arith.select %106, %104, %109 : vector<8x90xi1>, vector<8x90xf32>
    %111 = vector.extract_strided_slice %101 {offsets = [1, 0], sizes = [1, 90], strides = [1, 1]} : vector<4x90xf32> to vector<1x90xf32>
    %112 = vector.broadcast %111 : vector<1x90xf32> to vector<8x90xf32>
    %113 = arith.mulf %110, %112 : vector<8x90xf32>
    %114 = vector.extract_strided_slice %101 {offsets = [2, 0], sizes = [1, 90], strides = [1, 1]} : vector<4x90xf32> to vector<1x90xf32>
    %115 = vector.broadcast %114 : vector<1x90xf32> to vector<8x90xf32>
    %116 = arith.addf %113, %115 : vector<8x90xf32>
    %117 = arith.maximumf %97, %116 : vector<8x90xf32>
    %118 = arith.truncf %117 : vector<8x90xf32> to vector<8x90xbf16>
    %c0_36 = arith.constant 0 : index
    %c0_37 = arith.constant 0 : index
    %119 = vector.load %arg11[%c0_36, %c0_37] : memref<90x32xbf16, #tpu.memory_space<vmem>>, vector<90x32xbf16>
    %cst_38 = arith.constant dense<0.000000e+00> : vector<8x32xf32>
    %120 = tpu.matmul %118, %119, %cst_38 {dimension_numbers = #tpu.dot_dimension_numbers<[1], [0], [0], [1], [0, 0, 1, 1], [], []>} : vector<8x90xbf16>, vector<90x32xbf16>, vector<8x32xf32> -> vector<8x32xf32>
    %c0_39 = arith.constant 0 : index
    %c0_40 = arith.constant 0 : index
    %121 = vector.load %arg12[%c0_39, %c0_40] : memref<1x32xf32, #tpu.memory_space<vmem>>, vector<1x32xf32>
    %122 = vector.broadcast %121 : vector<1x32xf32> to vector<8x32xf32>
    %123 = arith.addf %120, %122 : vector<8x32xf32>
    %124 = arith.truncf %123 : vector<8x32xf32> to vector<8x32xbf16>
    %c0_41 = arith.constant 0 : index
    %c0_42 = arith.constant 0 : index
    %125 = vector.load %arg13[%c0_41, %c0_42] : memref<32x90xbf16, #tpu.memory_space<vmem>>, vector<32x90xbf16>
    %cst_43 = arith.constant dense<0.000000e+00> : vector<8x90xf32>
    %126 = tpu.matmul %124, %125, %cst_43 {dimension_numbers = #tpu.dot_dimension_numbers<[1], [0], [0], [1], [0, 0, 1, 1], [], []>} : vector<8x32xbf16>, vector<32x90xbf16>, vector<8x90xf32> -> vector<8x90xf32>
    %c0_44 = arith.constant 0 : index
    %c0_45 = arith.constant 0 : index
    %127 = vector.load %arg14[%c0_44, %c0_45] : memref<4x90xf32, #tpu.memory_space<vmem>>, vector<4x90xf32>
    %128 = vector.extract_strided_slice %127 {offsets = [0, 0], sizes = [1, 90], strides = [1, 1]} : vector<4x90xf32> to vector<1x90xf32>
    %129 = vector.broadcast %128 : vector<1x90xf32> to vector<8x90xf32>
    %130 = arith.addf %126, %129 : vector<8x90xf32>
    %cst_46 = arith.constant 0.000000e+00 : f32
    %131 = vector.broadcast %cst_46 : f32 to vector<8x90xf32>
    %132 = arith.cmpf ogt, %130, %131 : vector<8x90xf32>
    %133 = vector.extract_strided_slice %127 {offsets = [3, 0], sizes = [1, 90], strides = [1, 1]} : vector<4x90xf32> to vector<1x90xf32>
    %134 = vector.broadcast %133 : vector<1x90xf32> to vector<8x90xf32>
    %135 = arith.mulf %134, %130 : vector<8x90xf32>
    %136 = arith.select %132, %130, %135 : vector<8x90xi1>, vector<8x90xf32>
    %137 = vector.extract_strided_slice %127 {offsets = [1, 0], sizes = [1, 90], strides = [1, 1]} : vector<4x90xf32> to vector<1x90xf32>
    %138 = vector.broadcast %137 : vector<1x90xf32> to vector<8x90xf32>
    %139 = arith.mulf %136, %138 : vector<8x90xf32>
    %140 = vector.extract_strided_slice %127 {offsets = [2, 0], sizes = [1, 90], strides = [1, 1]} : vector<4x90xf32> to vector<1x90xf32>
    %141 = vector.broadcast %140 : vector<1x90xf32> to vector<8x90xf32>
    %142 = arith.addf %139, %141 : vector<8x90xf32>
    %143 = arith.truncf %142 : vector<8x90xf32> to vector<8x90xbf16>
    %c0_47 = arith.constant 0 : index
    %c0_48 = arith.constant 0 : index
    %144 = vector.load %arg15[%c0_47, %c0_48] : memref<90x360xbf16, #tpu.memory_space<vmem>>, vector<90x360xbf16>
    %cst_49 = arith.constant dense<0.000000e+00> : vector<8x360xf32>
    %145 = tpu.matmul %143, %144, %cst_49 {dimension_numbers = #tpu.dot_dimension_numbers<[1], [0], [0], [1], [0, 0, 1, 1], [], []>} : vector<8x90xbf16>, vector<90x360xbf16>, vector<8x360xf32> -> vector<8x360xf32>
    %c0_50 = arith.constant 0 : index
    %c0_51 = arith.constant 0 : index
    %146 = vector.load %arg16[%c0_50, %c0_51] : memref<4x360xf32, #tpu.memory_space<vmem>>, vector<4x360xf32>
    %147 = vector.extract_strided_slice %146 {offsets = [0, 0], sizes = [1, 360], strides = [1, 1]} : vector<4x360xf32> to vector<1x360xf32>
    %148 = vector.broadcast %147 : vector<1x360xf32> to vector<8x360xf32>
    %149 = arith.addf %145, %148 : vector<8x360xf32>
    %cst_52 = arith.constant 0.000000e+00 : f32
    %150 = vector.broadcast %cst_52 : f32 to vector<8x360xf32>
    %151 = arith.cmpf ogt, %149, %150 : vector<8x360xf32>
    %152 = vector.extract_strided_slice %146 {offsets = [3, 0], sizes = [1, 360], strides = [1, 1]} : vector<4x360xf32> to vector<1x360xf32>
    %153 = vector.broadcast %152 : vector<1x360xf32> to vector<8x360xf32>
    %154 = arith.mulf %153, %149 : vector<8x360xf32>
    %155 = arith.select %151, %149, %154 : vector<8x360xi1>, vector<8x360xf32>
    %156 = vector.extract_strided_slice %146 {offsets = [1, 0], sizes = [1, 360], strides = [1, 1]} : vector<4x360xf32> to vector<1x360xf32>
    %157 = vector.broadcast %156 : vector<1x360xf32> to vector<8x360xf32>
    %158 = arith.mulf %155, %157 : vector<8x360xf32>
    %159 = vector.extract_strided_slice %146 {offsets = [2, 0], sizes = [1, 360], strides = [1, 1]} : vector<4x360xf32> to vector<1x360xf32>
    %160 = vector.broadcast %159 : vector<1x360xf32> to vector<8x360xf32>
    %161 = arith.addf %158, %160 : vector<8x360xf32>
    %162 = arith.truncf %161 : vector<8x360xf32> to vector<8x360xbf16>
    %c0_53 = arith.constant 0 : index
    %c0_54 = arith.constant 0 : index
    %163 = vector.load %arg17[%c0_53, %c0_54] : memref<360x720xbf16, #tpu.memory_space<vmem>>, vector<360x720xbf16>
    %cst_55 = arith.constant dense<0.000000e+00> : vector<8x720xf32>
    %164 = tpu.matmul %162, %163, %cst_55 {dimension_numbers = #tpu.dot_dimension_numbers<[1], [0], [0], [1], [0, 0, 1, 1], [], []>} : vector<8x360xbf16>, vector<360x720xbf16>, vector<8x720xf32> -> vector<8x720xf32>
    %c0_56 = arith.constant 0 : index
    %c0_57 = arith.constant 0 : index
    %165 = vector.load %arg18[%c0_56, %c0_57] : memref<4x720xf32, #tpu.memory_space<vmem>>, vector<4x720xf32>
    %166 = vector.extract_strided_slice %165 {offsets = [0, 0], sizes = [1, 720], strides = [1, 1]} : vector<4x720xf32> to vector<1x720xf32>
    %167 = vector.broadcast %166 : vector<1x720xf32> to vector<8x720xf32>
    %168 = arith.addf %164, %167 : vector<8x720xf32>
    %cst_58 = arith.constant 0.000000e+00 : f32
    %169 = vector.broadcast %cst_58 : f32 to vector<8x720xf32>
    %170 = arith.cmpf ogt, %168, %169 : vector<8x720xf32>
    %171 = vector.extract_strided_slice %165 {offsets = [3, 0], sizes = [1, 720], strides = [1, 1]} : vector<4x720xf32> to vector<1x720xf32>
    %172 = vector.broadcast %171 : vector<1x720xf32> to vector<8x720xf32>
    %173 = arith.mulf %172, %168 : vector<8x720xf32>
    %174 = arith.select %170, %168, %173 : vector<8x720xi1>, vector<8x720xf32>
    %175 = vector.extract_strided_slice %165 {offsets = [1, 0], sizes = [1, 720], strides = [1, 1]} : vector<4x720xf32> to vector<1x720xf32>
    %176 = vector.broadcast %175 : vector<1x720xf32> to vector<8x720xf32>
    %177 = arith.mulf %174, %176 : vector<8x720xf32>
    %178 = vector.extract_strided_slice %165 {offsets = [2, 0], sizes = [1, 720], strides = [1, 1]} : vector<4x720xf32> to vector<1x720xf32>
    %179 = vector.broadcast %178 : vector<1x720xf32> to vector<8x720xf32>
    %180 = arith.addf %177, %179 : vector<8x720xf32>
    %181 = arith.truncf %180 : vector<8x720xf32> to vector<8x720xbf16>
    %c0_59 = arith.constant 0 : index
    %c0_60 = arith.constant 0 : index
    %182 = vector.load %arg19[%c0_59, %c0_60] : memref<720x960xbf16, #tpu.memory_space<vmem>>, vector<720x960xbf16>
    %cst_61 = arith.constant dense<0.000000e+00> : vector<8x960xf32>
    %183 = tpu.matmul %181, %182, %cst_61 {dimension_numbers = #tpu.dot_dimension_numbers<[1], [0], [0], [1], [0, 0, 1, 1], [], []>} : vector<8x720xbf16>, vector<720x960xbf16>, vector<8x960xf32> -> vector<8x960xf32>
    %c0_62 = arith.constant 0 : index
    %c0_63 = arith.constant 0 : index
    %184 = vector.load %arg20[%c0_62, %c0_63] : memref<4x960xf32, #tpu.memory_space<vmem>>, vector<4x960xf32>
    %185 = vector.extract_strided_slice %184 {offsets = [0, 0], sizes = [1, 960], strides = [1, 1]} : vector<4x960xf32> to vector<1x960xf32>
    %186 = vector.broadcast %185 : vector<1x960xf32> to vector<8x960xf32>
    %187 = arith.addf %183, %186 : vector<8x960xf32>
    %cst_64 = arith.constant 0.000000e+00 : f32
    %188 = vector.broadcast %cst_64 : f32 to vector<8x960xf32>
    %189 = arith.cmpf ogt, %187, %188 : vector<8x960xf32>
    %190 = vector.extract_strided_slice %184 {offsets = [3, 0], sizes = [1, 960], strides = [1, 1]} : vector<4x960xf32> to vector<1x960xf32>
    %191 = vector.broadcast %190 : vector<1x960xf32> to vector<8x960xf32>
    %192 = arith.mulf %191, %187 : vector<8x960xf32>
    %193 = arith.select %189, %187, %192 : vector<8x960xi1>, vector<8x960xf32>
    %194 = vector.extract_strided_slice %184 {offsets = [1, 0], sizes = [1, 960], strides = [1, 1]} : vector<4x960xf32> to vector<1x960xf32>
    %195 = vector.broadcast %194 : vector<1x960xf32> to vector<8x960xf32>
    %196 = arith.mulf %193, %195 : vector<8x960xf32>
    %197 = vector.extract_strided_slice %184 {offsets = [2, 0], sizes = [1, 960], strides = [1, 1]} : vector<4x960xf32> to vector<1x960xf32>
    %198 = vector.broadcast %197 : vector<1x960xf32> to vector<8x960xf32>
    %199 = arith.addf %196, %198 : vector<8x960xf32>
    %200 = arith.truncf %199 : vector<8x960xf32> to vector<8x960xbf16>
    %c0_65 = arith.constant 0 : index
    %c0_66 = arith.constant 0 : index
    %201 = vector.load %arg21[%c0_65, %c0_66] : memref<960x192xbf16, #tpu.memory_space<vmem>>, vector<960x192xbf16>
    %cst_67 = arith.constant dense<0.000000e+00> : vector<8x192xf32>
    %202 = tpu.matmul %200, %201, %cst_67 {dimension_numbers = #tpu.dot_dimension_numbers<[1], [0], [0], [1], [0, 0, 1, 1], [], []>} : vector<8x960xbf16>, vector<960x192xbf16>, vector<8x192xf32> -> vector<8x192xf32>
    %c0_68 = arith.constant 0 : index
    %c0_69 = arith.constant 0 : index
    %203 = vector.load %arg22[%c0_68, %c0_69] : memref<1x192xf32, #tpu.memory_space<vmem>>, vector<1x192xf32>
    %204 = vector.broadcast %203 : vector<1x192xf32> to vector<8x192xf32>
    %205 = arith.addf %202, %204 : vector<8x192xf32>
    %c0_70 = arith.constant 0 : index
    %c0_71 = arith.constant 0 : index
    %206 = vector.load %arg23[%c0_70, %c0_71] : memref<8x192xf32, #tpu.memory_space<vmem>>, vector<8x192xf32>
    tpu.vector_store %arg23[%c0_70, %c0_71], %205 {strides = array<i32>} : memref<8x192xf32, #tpu.memory_space<vmem>>, vector<8x192xf32>,
    return
  }
  func.func @transform_0(%arg0: i32) -> (i32, i32) {
    %c0_i32 = arith.constant 0 : i32
    %c0_i32_0 = arith.constant 0 : i32
    return %arg0, %c0_i32 : i32, i32
  }
  func.func @transform_1(%arg0: i32) -> (i32, i32) {
    %c0_i32 = arith.constant 0 : i32
    %c0_i32_0 = arith.constant 0 : i32
    %c0_i32_1 = arith.constant 0 : i32
    return %c0_i32, %c0_i32_0 : i32, i32
  }
  func.func @transform_2(%arg0: i32) -> (i32, i32) {
    %c0_i32 = arith.constant 0 : i32
    %c0_i32_0 = arith.constant 0 : i32
    %c0_i32_1 = arith.constant 0 : i32
    return %c0_i32, %c0_i32_0 : i32, i32
  }
  func.func @transform_3(%arg0: i32) -> (i32, i32) {
    %c0_i32 = arith.constant 0 : i32
    %c0_i32_0 = arith.constant 0 : i32
    %c0_i32_1 = arith.constant 0 : i32
    return %c0_i32, %c0_i32_0 : i32, i32
  }
  func.func @transform_4(%arg0: i32) -> (i32, i32) {
    %c0_i32 = arith.constant 0 : i32
    %c0_i32_0 = arith.constant 0 : i32
    %c0_i32_1 = arith.constant 0 : i32
    return %c0_i32, %c0_i32_0 : i32, i32
  }
  func.func @transform_5(%arg0: i32) -> (i32, i32) {
    %c0_i32 = arith.constant 0 : i32
    %c0_i32_0 = arith.constant 0 : i32
    %c0_i32_1 = arith.constant 0 : i32
    return %c0_i32, %c0_i32_0 : i32, i32
  }
  func.func @transform_6(%arg0: i32) -> (i32, i32) {
    %c0_i32 = arith.constant 0 : i32
    %c0_i32_0 = arith.constant 0 : i32
    %c0_i32_1 = arith.constant 0 : i32
    return %c0_i32, %c0_i32_0 : i32, i32
  }
  func.func @transform_7(%arg0: i32) -> (i32, i32) {
    %c0_i32 = arith.constant 0 : i32
    %c0_i32_0 = arith.constant 0 : i32
    %c0_i32_1 = arith.constant 0 : i32
    return %c0_i32, %c0_i32_0 : i32, i32
  }
  func.func @transform_8(%arg0: i32) -> (i32, i32) {
    %c0_i32 = arith.constant 0 : i32
    %c0_i32_0 = arith.constant 0 : i32
    %c0_i32_1 = arith.constant 0 : i32
    return %c0_i32, %c0_i32_0 : i32, i32
  }
  func.func @transform_9(%arg0: i32) -> (i32, i32) {
    %c0_i32 = arith.constant 0 : i32
    %c0_i32_0 = arith.constant 0 : i32
    %c0_i32_1 = arith.constant 0 : i32
    return %c0_i32, %c0_i32_0 : i32, i32
  }
  func.func @transform_10(%arg0: i32) -> (i32, i32) {
    %c0_i32 = arith.constant 0 : i32
    %c0_i32_0 = arith.constant 0 : i32
    %c0_i32_1 = arith.constant 0 : i32
    return %c0_i32, %c0_i32_0 : i32, i32
  }
  func.func @transform_11(%arg0: i32) -> (i32, i32) {
    %c0_i32 = arith.constant 0 : i32
    %c0_i32_0 = arith.constant 0 : i32
    %c0_i32_1 = arith.constant 0 : i32
    return %c0_i32, %c0_i32_0 : i32, i32
  }
  func.func @transform_12(%arg0: i32) -> (i32, i32) {
    %c0_i32 = arith.constant 0 : i32
    %c0_i32_0 = arith.constant 0 : i32
    %c0_i32_1 = arith.constant 0 : i32
    return %c0_i32, %c0_i32_0 : i32, i32
  }
  func.func @transform_13(%arg0: i32) -> (i32, i32) {
    %c0_i32 = arith.constant 0 : i32
    %c0_i32_0 = arith.constant 0 : i32
    %c0_i32_1 = arith.constant 0 : i32
    return %c0_i32, %c0_i32_0 : i32, i32
  }
  func.func @transform_14(%arg0: i32) -> (i32, i32) {
    %c0_i32 = arith.constant 0 : i32
    %c0_i32_0 = arith.constant 0 : i32
    %c0_i32_1 = arith.constant 0 : i32
    return %c0_i32, %c0_i32_0 : i32, i32
  }
  func.func @transform_15(%arg0: i32) -> (i32, i32) {
    %c0_i32 = arith.constant 0 : i32
    %c0_i32_0 = arith.constant 0 : i32
    %c0_i32_1 = arith.constant 0 : i32
    return %c0_i32, %c0_i32_0 : i32, i32
  }
  func.func @transform_16(%arg0: i32) -> (i32, i32) {
    %c0_i32 = arith.constant 0 : i32
    %c0_i32_0 = arith.constant 0 : i32
    %c0_i32_1 = arith.constant 0 : i32
    return %c0_i32, %c0_i32_0 : i32, i32
  }
  func.func @transform_17(%arg0: i32) -> (i32, i32) {
    %c0_i32 = arith.constant 0 : i32
    %c0_i32_0 = arith.constant 0 : i32
    %c0_i32_1 = arith.constant 0 : i32
    return %c0_i32, %c0_i32_0 : i32, i32
  }
  func.func @transform_18(%arg0: i32) -> (i32, i32) {
    %c0_i32 = arith.constant 0 : i32
    %c0_i32_0 = arith.constant 0 : i32
    %c0_i32_1 = arith.constant 0 : i32
    return %c0_i32, %c0_i32_0 : i32, i32
  }
  func.func @transform_19(%arg0: i32) -> (i32, i32) {
    %c0_i32 = arith.constant 0 : i32
    %c0_i32_0 = arith.constant 0 : i32
    %c0_i32_1 = arith.constant 0 : i32
    return %c0_i32, %c0_i32_0 : i32, i32
  }
  func.func @transform_20(%arg0: i32) -> (i32, i32) {
    %c0_i32 = arith.constant 0 : i32
    %c0_i32_0 = arith.constant 0 : i32
    %c0_i32_1 = arith.constant 0 : i32
    return %c0_i32, %c0_i32_0 : i32, i32
  }
  func.func @transform_21(%arg0: i32) -> (i32, i32) {
    %c0_i32 = arith.constant 0 : i32
    %c0_i32_0 = arith.constant 0 : i32
    %c0_i32_1 = arith.constant 0 : i32
    return %c0_i32, %c0_i32_0 : i32, i32
  }
  func.func @transform_22(%arg0: i32) -> (i32, i32) {
    %c0_i32 = arith.constant 0 : i32
    %c0_i32_0 = arith.constant 0 : i32
    return %arg0, %c0_i32 : i32, i32
  }
}

</mosaic_0001>

<llo_original>
// kernel: tile.98
$region0: #{tile.98}
  #allocation0 [shape = 's32[1]{0}', space=sflag, size = 0x4, scoped, tag = 'scoped memory for tile.98']
  %s0 = inlined_call_operand.vmem [shape: f32[30], index: 0, kind: input, shape index: {}]
  %s1 = inlined_call_operand.vmem [shape: f32[3,30], index: 1, kind: output, shape index: {}]
  // Predicated region
  $region2: #{tile.98} parent=0 // pred_check
    _
  $region3: #{tile.98} parent=0 // pred_check_branch
    %3 = sbr.rel (0) target = $region5
  $region4: #{tile.98} parent=0 // pred_region
    _
  $region5: #{tile.98} parent=0 // pred_fallthru
    _
  %v4 = vld [vmem:[%s0] ss:$0 sm:$0xff]
  %5 = vst [vmem:[%s1] sm:$0xf] %v4

// kernel: tile.105
$region0: #{tile.105}
  %s0 = inlined_call_operand.vmem [shape: f32[3,30], index: 0, kind: input, shape index: {}]
  %s1 = inlined_call_operand.vmem [shape: f32[1,90], index: 1, kind: output, shape index: {}]
  $region1: #{tile.105} parent=0
    #allocation0 [shape = 'u8[4096]{0}', space=vmem, size = 0x1000, scoped, tag = 'scoped mem for output reshape']
    #allocation1 [shape = 'u8[4096]{0}', space=vmem, size = 0x1000, scoped, tag = 'scoped mem for input reshape']
    %s3 = sshllo.u32 0, 4
    %v4 = vld [vmem:[%s0] sm:%s3]
    %5 = vst [vmem:[#allocation1] sm:%s3] %v4
    %v6 = vld [vmem:[#allocation1] sm:$0x1]
    %vm7 = vcmask 244736
    %8 = vst.msk [vmem:[#allocation0] sm:$0x1] %vm7, %v6
    %s9 = scalar_lea.vmem [#allocation1], 2
    %v10 = vld [vmem:[%s9] sm:$0x1]
    %11 = vrot.lane.b32.xlu0 %v10, 60
    %v12 = vpop.permute.xlu0 %11
    %vm13 = vcmask 736736
    %14 = vst.msk [vmem:[#allocation0] sm:$0x1] %vm13, %v12
    %s15 = scalar_lea.vmem [#allocation1], 1
    %v16 = vld [vmem:[%s15] sm:$0x1]
    %17 = vrot.lane.b32.xlu0 %v16, 30
    %v18 = vpop.permute.xlu0 %17
    %vm19 = vcmask 490736
    %20 = vst.msk [vmem:[#allocation0] sm:$0x1] %vm19, %v18
    %s22 = sshllo.u32 0, 1
    %v24 = vld [vmem:[#allocation0] sm:%s22]
    %s25 = sshllo.u32 0, 1
    %26 = vst [vmem:[%s1] sm:%s25] %v24

// kernel: tile.134
$region0: #{tile.134}
  #allocation0 [shape = 's32[1]{0}', space=sflag, size = 0x4, scoped, tag = 'scoped memory for tile.134']
  %s0 = inlined_call_operand.vmem [shape: f32[5], index: 0, kind: input, shape index: {}]
  %s1 = inlined_call_operand.vmem [shape: f32[192,5], index: 1, kind: output, shape index: {}]
  // Predicated region
  $region2: #{tile.134} parent=0 // pred_check
    _
  $region3: #{tile.134} parent=0 // pred_check_branch
    %3 = sbr.rel (0) target = $region5
  $region4: #{tile.134} parent=0 // pred_region
    _
  $region5: #{tile.134} parent=0 // pred_fallthru
    _
  %v4 = vld [vmem:[%s0] ss:$0 sm:$0xff]
  %5 = vst [vmem:[%s1] sm:$0xff] %v4
  %s6 = scalar_lea.vmem %s1, 8
  %7 = vst [vmem:[%s6] sm:$0xff] %v4
  %s8 = scalar_lea.vmem %s1, 16
  %9 = vst [vmem:[%s8] sm:$0xff] %v4
  %s10 = scalar_lea.vmem %s1, 24
  %11 = vst [vmem:[%s10] sm:$0xff] %v4
  %s12 = scalar_lea.vmem %s1, 32
  %13 = vst [vmem:[%s12] sm:$0xff] %v4
  %s14 = scalar_lea.vmem %s1, 40
  %15 = vst [vmem:[%s14] sm:$0xff] %v4
  %s16 = scalar_lea.vmem %s1, 48
  %17 = vst [vmem:[%s16] sm:$0xff] %v4
  %s18 = scalar_lea.vmem %s1, 56
  %19 = vst [vmem:[%s18] sm:$0xff] %v4
  %s20 = scalar_lea.vmem %s1, 64
  %21 = vst [vmem:[%s20] sm:$0xff] %v4
  %s22 = scalar_lea.vmem %s1, 72
  %23 = vst [vmem:[%s22] sm:$0xff] %v4
  %s24 = scalar_lea.vmem %s1, 80
  %25 = vst [vmem:[%s24] sm:$0xff] %v4
  %s26 = scalar_lea.vmem %s1, 88
  %27 = vst [vmem:[%s26] sm:$0xff] %v4
  %s28 = scalar_lea.vmem %s1, 96
  %29 = vst [vmem:[%s28] sm:$0xff] %v4
  %s30 = scalar_lea.vmem %s1, 104
  %31 = vst [vmem:[%s30] sm:$0xff] %v4
  %s32 = scalar_lea.vmem %s1, 112
  %33 = vst [vmem:[%s32] sm:$0xff] %v4
  %s34 = scalar_lea.vmem %s1, 120
  %35 = vst [vmem:[%s34] sm:$0xff] %v4
  %s36 = scalar_lea.vmem %s1, 128
  %37 = vst [vmem:[%s36] sm:$0xff] %v4
  %s38 = scalar_lea.vmem %s1, 136
  %39 = vst [vmem:[%s38] sm:$0xff] %v4
  %s40 = scalar_lea.vmem %s1, 144
  %41 = vst [vmem:[%s40] sm:$0xff] %v4
  %s42 = scalar_lea.vmem %s1, 152
  %43 = vst [vmem:[%s42] sm:$0xff] %v4
  %s44 = scalar_lea.vmem %s1, 160
  %45 = vst [vmem:[%s44] sm:$0xff] %v4
  %s46 = scalar_lea.vmem %s1, 168
  %47 = vst [vmem:[%s46] sm:$0xff] %v4
  %s48 = scalar_lea.vmem %s1, 176
  %49 = vst [vmem:[%s48] sm:$0xff] %v4
  %s50 = scalar_lea.vmem %s1, 184
  %51 = vst [vmem:[%s50] sm:$0xff] %v4

// kernel: tile.141
$region0: #{tile.141}
  %s0 = inlined_call_operand.vmem [shape: f32[192,5], index: 0, kind: input, shape index: {}]
  %s1 = inlined_call_operand.vmem [shape: f32[1,960], index: 1, kind: output, shape index: {}]
  $region1: #{tile.141} parent=0
    #allocation0 [shape = 'u8[32768]{0}', space=vmem, size = 0x8000, scoped, tag = 'scoped mem for output reshape']
    %v2 = vld [vmem:[%s0] sm:$0x1]
    %s3 = scalar_lea.vmem %s0, 127
    %v4 = vld [vmem:[%s3] sm:$0x2]
    %vm5 = vcmask 1041409
    %v6 = vsel %vm5, %v4, %v2
    %vm7 = vcmask 39936
    %8 = vst.msk [vmem:[#allocation0] ss:$40 sm:$0x3] %vm7, %v6
    %s9 = scalar_lea.vmem %s0, 51
    %v10 = vld [vmem:[%s9] sm:$0x1]
    %s11 = scalar_lea.vmem %s0, 178
    %v12 = vld [vmem:[%s11] sm:$0x2]
    %vm13 = vcmask 1041409
    %v14 = vsel %vm13, %v12, %v10
    %s15 = scalar_lea.vmem %s0, 51
    %v16 = vld [vmem:[%s15] sm:$0x1]
    %s17 = scalar_lea.vmem %s0, 178
    %v18 = vld [vmem:[%s17] sm:$0x2]
    %vm19 = vcmask 1041409
    %v20 = vsel %vm19, %v18, %v16
    %vm21 = vcmask 7168
    %v22 = vsel %vm21, %v20, %v14
    %23 = vrot.lane.b32.xlu0 %v22, 127
    %v24 = vpop.permute.xlu0 %23
    %vm25 = vcmask 31744
    %s26 = scalar_lea.vmem [#allocation0], 16
    %27 = vst.msk [vmem:[%s26] ss:$40 sm:$0x3] %vm25, %v24
    %vm28 = vcmask 1048568
    %s29 = scalar_lea.vmem [#allocation0], 8
    %30 = vst.msk [vmem:[%s29] ss:$40 sm:$0x3] %vm28, %v24
    %s31 = scalar_lea.vmem %s0, 102
    %v32 = vld [vmem:[%s31] sm:$0x1]
    %s33 = scalar_lea.vmem %s0, 102
    %v34 = vld [vmem:[%s33] sm:$0x1]
    %vm35 = vcmask 15360
    %v36 = vsel %vm35, %v34, %v32
    %37 = vrot.lane.b32.xlu0 %v36, 126
    %v38 = vpop.permute.xlu0 %37
    %vm39 = vcmask 23552
    %s40 = scalar_lea.vmem [#allocation0], 32
    %41 = vst.msk [vmem:[%s40] sm:$0x1] %vm39, %v38
    %vm42 = vcmask 1048560
    %s43 = scalar_lea.vmem [#allocation0], 24
    %44 = vst.msk [vmem:[%s43] sm:$0x1] %vm42, %v38
    %s45 = scalar_lea.vmem %s0, 25
    %v46 = vld [vmem:[%s45] sm:$0x1]
    %s47 = scalar_lea.vmem %s0, 152
    %v48 = vld [vmem:[%s47] sm:$0x2]
    %vm49 = vcmask 1041409
    %v50 = vsel %vm49, %v48, %v46
    %s51 = scalar_lea.vmem %s0, 25
    %v52 = vld [vmem:[%s51] sm:$0x1]
    %s53 = scalar_lea.vmem %s0, 152
    %v54 = vld [vmem:[%s53] sm:$0x2]
    %vm55 = vcmask 1041409
    %v56 = vsel %vm55, %v54, %v52
    %vm57 = vcmask 23552
    %v58 = vsel %vm57, %v56, %v50
    %59 = vrot.lane.b32.xlu0 %v58, 125
    %v60 = vpop.permute.xlu0 %59
    %vm61 = vcmask 15360
    %s62 = scalar_lea.vmem [#allocation0], 8
    %63 = vst.msk [vmem:[%s62] ss:$40 sm:$0x3] %vm61, %v60
    %vm64 = vcmask 1048552
    %65 = vst.msk [vmem:[#allocation0] ss:$40 sm:$0x3] %vm64, %v60
    %s66 = scalar_lea.vmem %s0, 76
    %v67 = vld [vmem:[%s66] sm:$0x1]
    %s68 = scalar_lea.vmem %s0, 76
    %v69 = vld [vmem:[%s68] sm:$0x1]
    %vm70 = vcmask 31744
    %v71 = vsel %vm70, %v69, %v67
    %72 = vrot.lane.b32.xlu0 %v71, 124
    %v73 = vpop.permute.xlu0 %72
    %vm74 = vcmask 7168
    %s75 = scalar_lea.vmem [#allocation0], 24
    %76 = vst.msk [vmem:[%s75] sm:$0x1] %vm74, %v73
    %vm77 = vcmask 1048544
    %s78 = scalar_lea.vmem [#allocation0], 16
    %79 = vst.msk [vmem:[%s78] sm:$0x1] %vm77, %v73
    %s80 = scalar_lea.vmem %s0, 127
    %v81 = vld [vmem:[%s80] sm:$0x1]
    %82 = vrot.lane.b32.xlu0 %v81, 123
    %v83 = vpop.permute.xlu0 %82
    %vm84 = vcmask 1048536
    %s85 = scalar_lea.vmem [#allocation0], 32
    %86 = vst.msk [vmem:[%s85] sm:$0x1] %vm84, %v83
    %s87 = scalar_lea.vmem %s0, 50
    %v88 = vld [vmem:[%s87] sm:$0x1]
    %s89 = scalar_lea.vmem %s0, 177
    %v90 = vld [vmem:[%s89] sm:$0x2]
    %vm91 = vcmask 1041409
    %v92 = vsel %vm91, %v90, %v88
    %93 = vrot.lane.b32.xlu0 %v92, 122
    %v94 = vpop.permute.xlu0 %93
    %vm95 = vcmask 1040336
    %s96 = scalar_lea.vmem [#allocation0], 8
    %97 = vst.msk [vmem:[%s96] ss:$40 sm:$0x3] %vm95, %v94
    %s98 = scalar_lea.vmem %s0, 101
    %v99 = vld [vmem:[%s98] sm:$0x1]
    %100 = vrot.lane.b32.xlu0 %v99, 121
    %v101 = vpop.permute.xlu0 %100
    %vm102 = vcmask 1032136
    %s103 = scalar_lea.vmem [#allocation0], 24
    %104 = vst.msk [vmem:[%s103] sm:$0x1] %vm102, %v101
    %s105 = scalar_lea.vmem %s0, 24
    %v106 = vld [vmem:[%s105] sm:$0x1]
    %s107 = scalar_lea.vmem %s0, 151
    %v108 = vld [vmem:[%s107] sm:$0x2]
    %vm109 = vcmask 1041409
    %v110 = vsel %vm109, %v108, %v106
    %111 = vrot.lane.b32.xlu0 %v110, 120
    %v112 = vpop.permute.xlu0 %111
    %vm113 = vcmask 1023936
    %114 = vst.msk [vmem:[#allocation0] ss:$40 sm:$0x3] %vm113, %v112
    %s115 = scalar_lea.vmem %s0, 75
    %v116 = vld [vmem:[%s115] sm:$0x1]
    %117 = vrot.lane.b32.xlu0 %v116, 119
    %v118 = vpop.permute.xlu0 %117
    %vm119 = vcmask 1015736
    %s120 = scalar_lea.vmem [#allocation0], 16
    %121 = vst.msk [vmem:[%s120] sm:$0x1] %vm119, %v118
    %s122 = scalar_lea.vmem %s0, 126
    %v123 = vld [vmem:[%s122] sm:$0x1]
    %124 = vrot.lane.b32.xlu0 %v123, 118
    %v125 = vpop.permute.xlu0 %124
    %vm126 = vcmask 1007536
    %s127 = scalar_lea.vmem [#allocation0], 32
    %128 = vst.msk [vmem:[%s127] sm:$0x1] %vm126, %v125
    %s129 = scalar_lea.vmem %s0, 49
    %v130 = vld [vmem:[%s129] sm:$0x1]
    %s131 = scalar_lea.vmem %s0, 176
    %v132 = vld [vmem:[%s131] sm:$0x2]
    %vm133 = vcmask 1041409
    %v134 = vsel %vm133, %v132, %v130
    %135 = vrot.lane.b32.xlu0 %v134, 117
    %v136 = vpop.permute.xlu0 %135
    %vm137 = vcmask 999336
    %s138 = scalar_lea.vmem [#allocation0], 8
    %139 = vst.msk [vmem:[%s138] ss:$40 sm:$0x3] %vm137, %v136
    %s140 = scalar_lea.vmem %s0, 100
    %v141 = vld [vmem:[%s140] sm:$0x1]
    %142 = vrot.lane.b32.xlu0 %v141, 116
    %v143 = vpop.permute.xlu0 %142
    %vm144 = vcmask 991136
    %s145 = scalar_lea.vmem [#allocation0], 24
    %146 = vst.msk [vmem:[%s145] sm:$0x1] %vm144, %v143
    %s147 = scalar_lea.vmem %s0, 23
    %v148 = vld [vmem:[%s147] sm:$0x1]
    %s149 = scalar_lea.vmem %s0, 150
    %v150 = vld [vmem:[%s149] sm:$0x2]
    %vm151 = vcmask 1041409
    %v152 = vsel %vm151, %v150, %v148
    %153 = vrot.lane.b32.xlu0 %v152, 115
    %v154 = vpop.permute.xlu0 %153
    %vm155 = vcmask 982936
    %156 = vst.msk [vmem:[#allocation0] ss:$40 sm:$0x3] %vm155, %v154
    %s157 = scalar_lea.vmem %s0, 74
    %v158 = vld [vmem:[%s157] sm:$0x1]
    %159 = vrot.lane.b32.xlu0 %v158, 114
    %v160 = vpop.permute.xlu0 %159
    %vm161 = vcmask 974736
    %s162 = scalar_lea.vmem [#allocation0], 16
    %163 = vst.msk [vmem:[%s162] sm:$0x1] %vm161, %v160
    %s164 = scalar_lea.vmem %s0, 125
    %v165 = vld [vmem:[%s164] sm:$0x1]
    %166 = vrot.lane.b32.xlu0 %v165, 113
    %v167 = vpop.permute.xlu0 %166
    %vm168 = vcmask 966536
    %s169 = scalar_lea.vmem [#allocation0], 32
    %170 = vst.msk [vmem:[%s169] sm:$0x1] %vm168, %v167
    %s171 = scalar_lea.vmem %s0, 48
    %v172 = vld [vmem:[%s171] sm:$0x1]
    %s173 = scalar_lea.vmem %s0, 175
    %v174 = vld [vmem:[%s173] sm:$0x2]
    %vm175 = vcmask 1041409
    %v176 = vsel %vm175, %v174, %v172
    %177 = vrot.lane.b32.xlu0 %v176, 112
    %v178 = vpop.permute.xlu0 %177
    %vm179 = vcmask 958336
    %s180 = scalar_lea.vmem [#allocation0], 8
    %181 = vst.msk [vmem:[%s180] ss:$40 sm:$0x3] %vm179, %v178
    %s182 = scalar_lea.vmem %s0, 99
    %v183 = vld [vmem:[%s182] sm:$0x1]
    %184 = vrot.lane.b32.xlu0 %v183, 111
    %v185 = vpop.permute.xlu0 %184
    %vm186 = vcmask 950136
    %s187 = scalar_lea.vmem [#allocation0], 24
    %188 = vst.msk [vmem:[%s187] sm:$0x1] %vm186, %v185
    %s189 = scalar_lea.vmem %s0, 22
    %v190 = vld [vmem:[%s189] sm:$0x1]
    %s191 = scalar_lea.vmem %s0, 149
    %v192 = vld [vmem:[%s191] sm:$0x2]
    %vm193 = vcmask 1041409
    %v194 = vsel %vm193, %v192, %v190
    %195 = vrot.lane.b32.xlu0 %v194, 110
    %v196 = vpop.permute.xlu0 %195
    %vm197 = vcmask 941936
    %198 = vst.msk [vmem:[#allocation0] ss:$40 sm:$0x3] %vm197, %v196
    %s199 = scalar_lea.vmem %s0, 73
    %v200 = vld [vmem:[%s199] sm:$0x1]
    %201 = vrot.lane.b32.xlu0 %v200, 109
    %v202 = vpop.permute.xlu0 %201
    %vm203 = vcmask 933736
    %s204 = scalar_lea.vmem [#allocation0], 16
    %205 = vst.msk [vmem:[%s204] sm:$0x1] %vm203, %v202
    %s206 = scalar_lea.vmem %s0, 124
    %v207 = vld [vmem:[%s206] sm:$0x1]
    %208 = vrot.lane.b32.xlu0 %v207, 108
    %v209 = vpop.permute.xlu0 %208
    %vm210 = vcmask 925536
    %s211 = scalar_lea.vmem [#allocation0], 32
    %212 = vst.msk [vmem:[%s211] sm:$0x1] %vm210, %v209
    %s213 = scalar_lea.vmem %s0, 47
    %v214 = vld [vmem:[%s213] sm:$0x1]
    %s215 = scalar_lea.vmem %s0, 174
    %v216 = vld [vmem:[%s215] sm:$0x2]
    %vm217 = vcmask 1041409
    %v218 = vsel %vm217, %v216, %v214
    %219 = vrot.lane.b32.xlu0 %v218, 107
    %v220 = vpop.permute.xlu0 %219
    %vm221 = vcmask 917336
    %s222 = scalar_lea.vmem [#allocation0], 8
    %223 = vst.msk [vmem:[%s222] ss:$40 sm:$0x3] %vm221, %v220
    %s224 = scalar_lea.vmem %s0, 98
    %v225 = vld [vmem:[%s224] sm:$0x1]
    %226 = vrot.lane.b32.xlu0 %v225, 106
    %v227 = vpop.permute.xlu0 %226
    %vm228 = vcmask 909136
    %s229 = scalar_lea.vmem [#allocation0], 24
    %230 = vst.msk [vmem:[%s229] sm:$0x1] %vm228, %v227
    %s231 = scalar_lea.vmem %s0, 21
    %v232 = vld [vmem:[%s231] sm:$0x1]
    %s233 = scalar_lea.vmem %s0, 148
    %v234 = vld [vmem:[%s233] sm:$0x2]
    %vm235 = vcmask 1041409
    %v236 = vsel %vm235, %v234, %v232
    %237 = vrot.lane.b32.xlu0 %v236, 105
    %v238 = vpop.permute.xlu0 %237
    %vm239 = vcmask 900936
    %240 = vst.msk [vmem:[#allocation0] ss:$40 sm:$0x3] %vm239, %v238
    %s241 = scalar_lea.vmem %s0, 72
    %v242 = vld [vmem:[%s241] sm:$0x1]
    %243 = vrot.lane.b32.xlu0 %v242, 104
    %v244 = vpop.permute.xlu0 %243
    %vm245 = vcmask 892736
    %s246 = scalar_lea.vmem [#allocation0], 16
    %247 = vst.msk [vmem:[%s246] sm:$0x1] %vm245, %v244
    %s248 = scalar_lea.vmem %s0, 123
    %v249 = vld [vmem:[%s248] sm:$0x1]
    %250 = vrot.lane.b32.xlu0 %v249, 103
    %v251 = vpop.permute.xlu0 %250
    %vm252 = vcmask 884536
    %s253 = scalar_lea.vmem [#allocation0], 32
    %254 = vst.msk [vmem:[%s253] sm:$0x1] %vm252, %v251
    %s255 = scalar_lea.vmem %s0, 46
    %v256 = vld [vmem:[%s255] sm:$0x1]
    %s257 = scalar_lea.vmem %s0, 173
    %v258 = vld [vmem:[%s257] sm:$0x2]
    %vm259 = vcmask 1041409
    %v260 = vsel %vm259, %v258, %v256
    %261 = vrot.lane.b32.xlu0 %v260, 102
    %v262 = vpop.permute.xlu0 %261
    %vm263 = vcmask 876336
    %s264 = scalar_lea.vmem [#allocation0], 8
    %265 = vst.msk [vmem:[%s264] ss:$40 sm:$0x3] %vm263, %v262
    %s266 = scalar_lea.vmem %s0, 97
    %v267 = vld [vmem:[%s266] sm:$0x1]
    %268 = vrot.lane.b32.xlu0 %v267, 101
    %v269 = vpop.permute.xlu0 %268
    %vm270 = vcmask 868136
    %s271 = scalar_lea.vmem [#allocation0], 24
    %272 = vst.msk [vmem:[%s271] sm:$0x1] %vm270, %v269
    %s273 = scalar_lea.vmem %s0, 20
    %v274 = vld [vmem:[%s273] sm:$0x1]
    %s275 = scalar_lea.vmem %s0, 147
    %v276 = vld [vmem:[%s275] sm:$0x2]
    %vm277 = vcmask 1041409
    %v278 = vsel %vm277, %v276, %v274
    %279 = vrot.lane.b32.xlu0 %v278, 100
    %v280 = vpop.permute.xlu0 %279
    %vm281 = vcmask 859936
    %282 = vst.msk [vmem:[#allocation0] ss:$40 sm:$0x3] %vm281, %v280
    %s283 = scalar_lea.vmem %s0, 71
    %v284 = vld [vmem:[%s283] sm:$0x1]
    %285 = vrot.lane.b32.xlu0 %v284, 99
    %v286 = vpop.permute.xlu0 %285
    %vm287 = vcmask 851736
    %s288 = scalar_lea.vmem [#allocation0], 16
    %289 = vst.msk [vmem:[%s288] sm:$0x1] %vm287, %v286
    %s290 = scalar_lea.vmem %s0, 122
    %v291 = vld [vmem:[%s290] sm:$0x1]
    %292 = vrot.lane.b32.xlu0 %v291, 98
    %v293 = vpop.permute.xlu0 %292
    %vm294 = vcmask 843536
    %s295 = scalar_lea.vmem [#allocation0], 32
    %296 = vst.msk [vmem:[%s295] sm:$0x1] %vm294, %v293
    %s297 = scalar_lea.vmem %s0, 45
    %v298 = vld [vmem:[%s297] sm:$0x1]
    %s299 = scalar_lea.vmem %s0, 172
    %v300 = vld [vmem:[%s299] sm:$0x2]
    %vm301 = vcmask 1041409
    %v302 = vsel %vm301, %v300, %v298
    %303 = vrot.lane.b32.xlu0 %v302, 97
    %v304 = vpop.permute.xlu0 %303
    %vm305 = vcmask 835336
    %s306 = scalar_lea.vmem [#allocation0], 8
    %307 = vst.msk [vmem:[%s306] ss:$40 sm:$0x3] %vm305, %v304
    %s308 = scalar_lea.vmem %s0, 96
    %v309 = vld [vmem:[%s308] sm:$0x1]
    %310 = vrot.lane.b32.xlu0 %v309, 96
    %v311 = vpop.permute.xlu0 %310
    %vm312 = vcmask 827136
    %s313 = scalar_lea.vmem [#allocation0], 24
    %314 = vst.msk [vmem:[%s313] sm:$0x1] %vm312, %v311
    %s315 = scalar_lea.vmem %s0, 19
    %v316 = vld [vmem:[%s315] sm:$0x1]
    %s317 = scalar_lea.vmem %s0, 146
    %v318 = vld [vmem:[%s317] sm:$0x2]
    %vm319 = vcmask 1041409
    %v320 = vsel %vm319, %v318, %v316
    %321 = vrot.lane.b32.xlu0 %v320, 95
    %v322 = vpop.permute.xlu0 %321
    %vm323 = vcmask 818936
    %324 = vst.msk [vmem:[#allocation0] ss:$40 sm:$0x3] %vm323, %v322
    %s325 = scalar_lea.vmem %s0, 70
    %v326 = vld [vmem:[%s325] sm:$0x1]
    %327 = vrot.lane.b32.xlu0 %v326, 94
    %v328 = vpop.permute.xlu0 %327
    %vm329 = vcmask 810736
    %s330 = scalar_lea.vmem [#allocation0], 16
    %331 = vst.msk [vmem:[%s330] sm:$0x1] %vm329, %v328
    %s332 = scalar_lea.vmem %s0, 121
    %v333 = vld [vmem:[%s332] sm:$0x1]
    %334 = vrot.lane.b32.xlu0 %v333, 93
    %v335 = vpop.permute.xlu0 %334
    %vm336 = vcmask 802536
    %s337 = scalar_lea.vmem [#allocation0], 32
    %338 = vst.msk [vmem:[%s337] sm:$0x1] %vm336, %v335
    %s339 = scalar_lea.vmem %s0, 44
    %v340 = vld [vmem:[%s339] sm:$0x1]
    %s341 = scalar_lea.vmem %s0, 171
    %v342 = vld [vmem:[%s341] sm:$0x2]
    %vm343 = vcmask 1041409
    %v344 = vsel %vm343, %v342, %v340
    %345 = vrot.lane.b32.xlu0 %v344, 92
    %v346 = vpop.permute.xlu0 %345
    %vm347 = vcmask 794336
    %s348 = scalar_lea.vmem [#allocation0], 8
    %349 = vst.msk [vmem:[%s348] ss:$40 sm:$0x3] %vm347, %v346
    %s350 = scalar_lea.vmem %s0, 95
    %v351 = vld [vmem:[%s350] sm:$0x1]
    %352 = vrot.lane.b32.xlu0 %v351, 91
    %v353 = vpop.permute.xlu0 %352
    %vm354 = vcmask 786136
    %s355 = scalar_lea.vmem [#allocation0], 24
    %356 = vst.msk [vmem:[%s355] sm:$0x1] %vm354, %v353
    %s357 = scalar_lea.vmem %s0, 18
    %v358 = vld [vmem:[%s357] sm:$0x1]
    %s359 = scalar_lea.vmem %s0, 145
    %v360 = vld [vmem:[%s359] sm:$0x2]
    %vm361 = vcmask 1041409
    %v362 = vsel %vm361, %v360, %v358
    %363 = vrot.lane.b32.xlu0 %v362, 90
    %v364 = vpop.permute.xlu0 %363
    %vm365 = vcmask 777936
    %366 = vst.msk [vmem:[#allocation0] ss:$40 sm:$0x3] %vm365, %v364
    %s367 = scalar_lea.vmem %s0, 69
    %v368 = vld [vmem:[%s367] sm:$0x1]
    %369 = vrot.lane.b32.xlu0 %v368, 89
    %v370 = vpop.permute.xlu0 %369
    %vm371 = vcmask 769736
    %s372 = scalar_lea.vmem [#allocation0], 16
    %373 = vst.msk [vmem:[%s372] sm:$0x1] %vm371, %v370
    %s374 = scalar_lea.vmem %s0, 120
    %v375 = vld [vmem:[%s374] sm:$0x1]
    %376 = vrot.lane.b32.xlu0 %v375, 88
    %v377 = vpop.permute.xlu0 %376
    %vm378 = vcmask 761536
    %s379 = scalar_lea.vmem [#allocation0], 32
    %380 = vst.msk [vmem:[%s379] sm:$0x1] %vm378, %v377
    %s381 = scalar_lea.vmem %s0, 43
    %v382 = vld [vmem:[%s381] sm:$0x1]
    %s383 = scalar_lea.vmem %s0, 170
    %v384 = vld [vmem:[%s383] sm:$0x2]
    %vm385 = vcmask 1041409
    %v386 = vsel %vm385, %v384, %v382
    %387 = vrot.lane.b32.xlu0 %v386, 87
    %v388 = vpop.permute.xlu0 %387
    %vm389 = vcmask 753336
    %s390 = scalar_lea.vmem [#allocation0], 8
    %391 = vst.msk [vmem:[%s390] ss:$40 sm:$0x3] %vm389, %v388
    %s392 = scalar_lea.vmem %s0, 94
    %v393 = vld [vmem:[%s392] sm:$0x1]
    %394 = vrot.lane.b32.xlu0 %v393, 86
    %v395 = vpop.permute.xlu0 %394
    %vm396 = vcmask 745136
    %s397 = scalar_lea.vmem [#allocation0], 24
    %398 = vst.msk [vmem:[%s397] sm:$0x1] %vm396, %v395
    %s399 = scalar_lea.vmem %s0, 17
    %v400 = vld [vmem:[%s399] sm:$0x1]
    %s401 = scalar_lea.vmem %s0, 144
    %v402 = vld [vmem:[%s401] sm:$0x2]
    %vm403 = vcmask 1041409
    %v404 = vsel %vm403, %v402, %v400
    %405 = vrot.lane.b32.xlu0 %v404, 85
    %v406 = vpop.permute.xlu0 %405
    %vm407 = vcmask 736936
    %408 = vst.msk [vmem:[#allocation0] ss:$40 sm:$0x3] %vm407, %v406
    %s409 = scalar_lea.vmem %s0, 68
    %v410 = vld [vmem:[%s409] sm:$0x1]
    %411 = vrot.lane.b32.xlu0 %v410, 84
    %v412 = vpop.permute.xlu0 %411
    %vm413 = vcmask 728736
    %s414 = scalar_lea.vmem [#allocation0], 16
    %415 = vst.msk [vmem:[%s414] sm:$0x1] %vm413, %v412
    %s416 = scalar_lea.vmem %s0, 119
    %v417 = vld [vmem:[%s416] sm:$0x1]
    %418 = vrot.lane.b32.xlu0 %v417, 83
    %v419 = vpop.permute.xlu0 %418
    %vm420 = vcmask 720536
    %s421 = scalar_lea.vmem [#allocation0], 32
    %422 = vst.msk [vmem:[%s421] sm:$0x1] %vm420, %v419
    %s423 = scalar_lea.vmem %s0, 42
    %v424 = vld [vmem:[%s423] sm:$0x1]
    %s425 = scalar_lea.vmem %s0, 169
    %v426 = vld [vmem:[%s425] sm:$0x2]
    %vm427 = vcmask 1041409
    %v428 = vsel %vm427, %v426, %v424
    %429 = vrot.lane.b32.xlu0 %v428, 82
    %v430 = vpop.permute.xlu0 %429
    %vm431 = vcmask 712336
    %s432 = scalar_lea.vmem [#allocation0], 8
    %433 = vst.msk [vmem:[%s432] ss:$40 sm:$0x3] %vm431, %v430
    %s434 = scalar_lea.vmem %s0, 93
    %v435 = vld [vmem:[%s434] sm:$0x1]
    %436 = vrot.lane.b32.xlu0 %v435, 81
    %v437 = vpop.permute.xlu0 %436
    %vm438 = vcmask 704136
    %s439 = scalar_lea.vmem [#allocation0], 24
    %440 = vst.msk [vmem:[%s439] sm:$0x1] %vm438, %v437
    %s441 = scalar_lea.vmem %s0, 16
    %v442 = vld [vmem:[%s441] sm:$0x1]
    %s443 = scalar_lea.vmem %s0, 143
    %v444 = vld [vmem:[%s443] sm:$0x2]
    %vm445 = vcmask 1041409
    %v446 = vsel %vm445, %v444, %v442
    %447 = vrot.lane.b32.xlu0 %v446, 80
    %v448 = vpop.permute.xlu0 %447
    %vm449 = vcmask 695936
    %450 = vst.msk [vmem:[#allocation0] ss:$40 sm:$0x3] %vm449, %v448
    %s451 = scalar_lea.vmem %s0, 67
    %v452 = vld [vmem:[%s451] sm:$0x1]
    %453 = vrot.lane.b32.xlu0 %v452, 79
    %v454 = vpop.permute.xlu0 %453
    %vm455 = vcmask 687736
    %s456 = scalar_lea.vmem [#allocation0], 16
    %457 = vst.msk [vmem:[%s456] sm:$0x1] %vm455, %v454
    %s458 = scalar_lea.vmem %s0, 118
    %v459 = vld [vmem:[%s458] sm:$0x1]
    %460 = vrot.lane.b32.xlu0 %v459, 78
    %v461 = vpop.permute.xlu0 %460
    %vm462 = vcmask 679536
    %s463 = scalar_lea.vmem [#allocation0], 32
    %464 = vst.msk [vmem:[%s463] sm:$0x1] %vm462, %v461
    %s465 = scalar_lea.vmem %s0, 41
    %v466 = vld [vmem:[%s465] sm:$0x1]
    %s467 = scalar_lea.vmem %s0, 168
    %v468 = vld [vmem:[%s467] sm:$0x2]
    %vm469 = vcmask 1041409
    %v470 = vsel %vm469, %v468, %v466
    %471 = vrot.lane.b32.xlu0 %v470, 77
    %v472 = vpop.permute.xlu0 %471
    %vm473 = vcmask 671336
    %s474 = scalar_lea.vmem [#allocation0], 8
    %475 = vst.msk [vmem:[%s474] ss:$40 sm:$0x3] %vm473, %v472
    %s476 = scalar_lea.vmem %s0, 92
    %v477 = vld [vmem:[%s476] sm:$0x1]
    %478 = vrot.lane.b32.xlu0 %v477, 76
    %v479 = vpop.permute.xlu0 %478
    %vm480 = vcmask 663136
    %s481 = scalar_lea.vmem [#allocation0], 24
    %482 = vst.msk [vmem:[%s481] sm:$0x1] %vm480, %v479
    %s483 = scalar_lea.vmem %s0, 15
    %v484 = vld [vmem:[%s483] sm:$0x1]
    %s485 = scalar_lea.vmem %s0, 142
    %v486 = vld [vmem:[%s485] sm:$0x2]
    %vm487 = vcmask 1041409
    %v488 = vsel %vm487, %v486, %v484
    %489 = vrot.lane.b32.xlu0 %v488, 75
    %v490 = vpop.permute.xlu0 %489
    %vm491 = vcmask 654936
    %492 = vst.msk [vmem:[#allocation0] ss:$40 sm:$0x3] %vm491, %v490
    %s493 = scalar_lea.vmem %s0, 66
    %v494 = vld [vmem:[%s493] sm:$0x1]
    %495 = vrot.lane.b32.xlu0 %v494, 74
    %v496 = vpop.permute.xlu0 %495
    %vm497 = vcmask 646736
    %s498 = scalar_lea.vmem [#allocation0], 16
    %499 = vst.msk [vmem:[%s498] sm:$0x1] %vm497, %v496
    %s500 = scalar_lea.vmem %s0, 117
    %v501 = vld [vmem:[%s500] sm:$0x1]
    %502 = vrot.lane.b32.xlu0 %v501, 73
    %v503 = vpop.permute.xlu0 %502
    %vm504 = vcmask 638536
    %s505 = scalar_lea.vmem [#allocation0], 32
    %506 = vst.msk [vmem:[%s505] sm:$0x1] %vm504, %v503
    %s507 = scalar_lea.vmem %s0, 40
    %v508 = vld [vmem:[%s507] sm:$0x1]
    %s509 = scalar_lea.vmem %s0, 167
    %v510 = vld [vmem:[%s509] sm:$0x2]
    %vm511 = vcmask 1041409
    %v512 = vsel %vm511, %v510, %v508
    %513 = vrot.lane.b32.xlu0 %v512, 72
    %v514 = vpop.permute.xlu0 %513
    %vm515 = vcmask 630336
    %s516 = scalar_lea.vmem [#allocation0], 8
    %517 = vst.msk [vmem:[%s516] ss:$40 sm:$0x3] %vm515, %v514
    %s518 = scalar_lea.vmem %s0, 91
    %v519 = vld [vmem:[%s518] sm:$0x1]
    %520 = vrot.lane.b32.xlu0 %v519, 71
    %v521 = vpop.permute.xlu0 %520
    %vm522 = vcmask 622136
    %s523 = scalar_lea.vmem [#allocation0], 24
    %524 = vst.msk [vmem:[%s523] sm:$0x1] %vm522, %v521
    %s525 = scalar_lea.vmem %s0, 14
    %v526 = vld [vmem:[%s525] sm:$0x1]
    %s527 = scalar_lea.vmem %s0, 141
    %v528 = vld [vmem:[%s527] sm:$0x2]
    %vm529 = vcmask 1041409
    %v530 = vsel %vm529, %v528, %v526
    %531 = vrot.lane.b32.xlu0 %v530, 70
    %v532 = vpop.permute.xlu0 %531
    %vm533 = vcmask 613936
    %534 = vst.msk [vmem:[#allocation0] ss:$40 sm:$0x3] %vm533, %v532
    %s535 = scalar_lea.vmem %s0, 65
    %v536 = vld [vmem:[%s535] sm:$0x1]
    %537 = vrot.lane.b32.xlu0 %v536, 69
    %v538 = vpop.permute.xlu0 %537
    %vm539 = vcmask 605736
    %s540 = scalar_lea.vmem [#allocation0], 16
    %541 = vst.msk [vmem:[%s540] sm:$0x1] %vm539, %v538
    %s542 = scalar_lea.vmem %s0, 116
    %v543 = vld [vmem:[%s542] sm:$0x1]
    %544 = vrot.lane.b32.xlu0 %v543, 68
    %v545 = vpop.permute.xlu0 %544
    %vm546 = vcmask 597536
    %s547 = scalar_lea.vmem [#allocation0], 32
    %548 = vst.msk [vmem:[%s547] sm:$0x1] %vm546, %v545
    %s549 = scalar_lea.vmem %s0, 39
    %v550 = vld [vmem:[%s549] sm:$0x1]
    %s551 = scalar_lea.vmem %s0, 166
    %v552 = vld [vmem:[%s551] sm:$0x2]
    %vm553 = vcmask 1041409
    %v554 = vsel %vm553, %v552, %v550
    %555 = vrot.lane.b32.xlu0 %v554, 67
    %v556 = vpop.permute.xlu0 %555
    %vm557 = vcmask 589336
    %s558 = scalar_lea.vmem [#allocation0], 8
    %559 = vst.msk [vmem:[%s558] ss:$40 sm:$0x3] %vm557, %v556
    %s560 = scalar_lea.vmem %s0, 90
    %v561 = vld [vmem:[%s560] sm:$0x1]
    %562 = vrot.lane.b32.xlu0 %v561, 66
    %v563 = vpop.permute.xlu0 %562
    %vm564 = vcmask 581136
    %s565 = scalar_lea.vmem [#allocation0], 24
    %566 = vst.msk [vmem:[%s565] sm:$0x1] %vm564, %v563
    %s567 = scalar_lea.vmem %s0, 13
    %v568 = vld [vmem:[%s567] sm:$0x1]
    %s569 = scalar_lea.vmem %s0, 140
    %v570 = vld [vmem:[%s569] sm:$0x2]
    %vm571 = vcmask 1041409
    %v572 = vsel %vm571, %v570, %v568
    %573 = vrot.lane.b32.xlu0 %v572, 65
    %v574 = vpop.permute.xlu0 %573
    %vm575 = vcmask 572936
    %576 = vst.msk [vmem:[#allocation0] ss:$40 sm:$0x3] %vm575, %v574
    %s577 = scalar_lea.vmem %s0, 64
    %v578 = vld [vmem:[%s577] sm:$0x1]
    %579 = vrot.lane.b32.xlu0 %v578, 64
    %v580 = vpop.permute.xlu0 %579
    %vm581 = vcmask 564736
    %s582 = scalar_lea.vmem [#allocation0], 16
    %583 = vst.msk [vmem:[%s582] sm:$0x1] %vm581, %v580
    %s584 = scalar_lea.vmem %s0, 115
    %v585 = vld [vmem:[%s584] sm:$0x1]
    %586 = vrot.lane.b32.xlu0 %v585, 63
    %v587 = vpop.permute.xlu0 %586
    %vm588 = vcmask 556536
    %s589 = scalar_lea.vmem [#allocation0], 32
    %590 = vst.msk [vmem:[%s589] sm:$0x1] %vm588, %v587
    %s591 = scalar_lea.vmem %s0, 38
    %v592 = vld [vmem:[%s591] sm:$0x1]
    %s593 = scalar_lea.vmem %s0, 165
    %v594 = vld [vmem:[%s593] sm:$0x2]
    %vm595 = vcmask 1041409
    %v596 = vsel %vm595, %v594, %v592
    %597 = vrot.lane.b32.xlu0 %v596, 62
    %v598 = vpop.permute.xlu0 %597
    %vm599 = vcmask 548336
    %s600 = scalar_lea.vmem [#allocation0], 8
    %601 = vst.msk [vmem:[%s600] ss:$40 sm:$0x3] %vm599, %v598
    %s602 = scalar_lea.vmem %s0, 89
    %v603 = vld [vmem:[%s602] sm:$0x1]
    %604 = vrot.lane.b32.xlu0 %v603, 61
    %v605 = vpop.permute.xlu0 %604
    %vm606 = vcmask 540136
    %s607 = scalar_lea.vmem [#allocation0], 24
    %608 = vst.msk [vmem:[%s607] sm:$0x1] %vm606, %v605
    %s609 = scalar_lea.vmem %s0, 12
    %v610 = vld [vmem:[%s609] sm:$0x1]
    %s611 = scalar_lea.vmem %s0, 139
    %v612 = vld [vmem:[%s611] sm:$0x2]
    %vm613 = vcmask 1041409
    %v614 = vsel %vm613, %v612, %v610
    %615 = vrot.lane.b32.xlu0 %v614, 60
    %v616 = vpop.permute.xlu0 %615
    %vm617 = vcmask 531936
    %618 = vst.msk [vmem:[#allocation0] ss:$40 sm:$0x3] %vm617, %v616
    %s619 = scalar_lea.vmem %s0, 63
    %v620 = vld [vmem:[%s619] sm:$0x1]
    %s621 = scalar_lea.vmem %s0, 190
    %v622 = vld [vmem:[%s621] sm:$0x2]
    %vm623 = vcmask 1041409
    %v624 = vsel %vm623, %v622, %v620
    %625 = vrot.lane.b32.xlu0 %v624, 59
    %v626 = vpop.permute.xlu0 %625
    %vm627 = vcmask 523736
    %s628 = scalar_lea.vmem [#allocation0], 16
    %629 = vst.msk [vmem:[%s628] ss:$40 sm:$0x3] %vm627, %v626
    %s630 = scalar_lea.vmem %s0, 114
    %v631 = vld [vmem:[%s630] sm:$0x1]
    %632 = vrot.lane.b32.xlu0 %v631, 58
    %v633 = vpop.permute.xlu0 %632
    %vm634 = vcmask 515536
    %s635 = scalar_lea.vmem [#allocation0], 32
    %636 = vst.msk [vmem:[%s635] sm:$0x1] %vm634, %v633
    %s637 = scalar_lea.vmem %s0, 37
    %v638 = vld [vmem:[%s637] sm:$0x1]
    %s639 = scalar_lea.vmem %s0, 164
    %v640 = vld [vmem:[%s639] sm:$0x2]
    %vm641 = vcmask 1041409
    %v642 = vsel %vm641, %v640, %v638
    %643 = vrot.lane.b32.xlu0 %v642, 57
    %v644 = vpop.permute.xlu0 %643
    %vm645 = vcmask 507336
    %s646 = scalar_lea.vmem [#allocation0], 8
    %647 = vst.msk [vmem:[%s646] ss:$40 sm:$0x3] %vm645, %v644
    %s648 = scalar_lea.vmem %s0, 88
    %v649 = vld [vmem:[%s648] sm:$0x1]
    %650 = vrot.lane.b32.xlu0 %v649, 56
    %v651 = vpop.permute.xlu0 %650
    %vm652 = vcmask 499136
    %s653 = scalar_lea.vmem [#allocation0], 24
    %654 = vst.msk [vmem:[%s653] sm:$0x1] %vm652, %v651
    %s655 = scalar_lea.vmem %s0, 11
    %v656 = vld [vmem:[%s655] sm:$0x1]
    %s657 = scalar_lea.vmem %s0, 138
    %v658 = vld [vmem:[%s657] sm:$0x2]
    %vm659 = vcmask 1041409
    %v660 = vsel %vm659, %v658, %v656
    %661 = vrot.lane.b32.xlu0 %v660, 55
    %v662 = vpop.permute.xlu0 %661
    %vm663 = vcmask 490936
    %664 = vst.msk [vmem:[#allocation0] ss:$40 sm:$0x3] %vm663, %v662
    %s665 = scalar_lea.vmem %s0, 62
    %v666 = vld [vmem:[%s665] sm:$0x1]
    %s667 = scalar_lea.vmem %s0, 189
    %v668 = vld [vmem:[%s667] sm:$0x2]
    %vm669 = vcmask 1041409
    %v670 = vsel %vm669, %v668, %v666
    %671 = vrot.lane.b32.xlu0 %v670, 54
    %v672 = vpop.permute.xlu0 %671
    %vm673 = vcmask 482736
    %s674 = scalar_lea.vmem [#allocation0], 16
    %675 = vst.msk [vmem:[%s674] ss:$40 sm:$0x3] %vm673, %v672
    %s676 = scalar_lea.vmem %s0, 113
    %v677 = vld [vmem:[%s676] sm:$0x1]
    %678 = vrot.lane.b32.xlu0 %v677, 53
    %v679 = vpop.permute.xlu0 %678
    %vm680 = vcmask 474536
    %s681 = scalar_lea.vmem [#allocation0], 32
    %682 = vst.msk [vmem:[%s681] sm:$0x1] %vm680, %v679
    %s683 = scalar_lea.vmem %s0, 36
    %v684 = vld [vmem:[%s683] sm:$0x1]
    %s685 = scalar_lea.vmem %s0, 163
    %v686 = vld [vmem:[%s685] sm:$0x2]
    %vm687 = vcmask 1041409
    %v688 = vsel %vm687, %v686, %v684
    %689 = vrot.lane.b32.xlu0 %v688, 52
    %v690 = vpop.permute.xlu0 %689
    %vm691 = vcmask 466336
    %s692 = scalar_lea.vmem [#allocation0], 8
    %693 = vst.msk [vmem:[%s692] ss:$40 sm:$0x3] %vm691, %v690
    %s694 = scalar_lea.vmem %s0, 87
    %v695 = vld [vmem:[%s694] sm:$0x1]
    %696 = vrot.lane.b32.xlu0 %v695, 51
    %v697 = vpop.permute.xlu0 %696
    %vm698 = vcmask 458136
    %s699 = scalar_lea.vmem [#allocation0], 24
    %700 = vst.msk [vmem:[%s699] sm:$0x1] %vm698, %v697
    %s701 = scalar_lea.vmem %s0, 10
    %v702 = vld [vmem:[%s701] sm:$0x1]
    %s703 = scalar_lea.vmem %s0, 137
    %v704 = vld [vmem:[%s703] sm:$0x2]
    %vm705 = vcmask 1041409
    %v706 = vsel %vm705, %v704, %v702
    %707 = vrot.lane.b32.xlu0 %v706, 50
    %v708 = vpop.permute.xlu0 %707
    %vm709 = vcmask 449936
    %710 = vst.msk [vmem:[#allocation0] ss:$40 sm:$0x3] %vm709, %v708
    %s711 = scalar_lea.vmem %s0, 61
    %v712 = vld [vmem:[%s711] sm:$0x1]
    %s713 = scalar_lea.vmem %s0, 188
    %v714 = vld [vmem:[%s713] sm:$0x2]
    %vm715 = vcmask 1041409
    %v716 = vsel %vm715, %v714, %v712
    %717 = vrot.lane.b32.xlu0 %v716, 49
    %v718 = vpop.permute.xlu0 %717
    %vm719 = vcmask 441736
    %s720 = scalar_lea.vmem [#allocation0], 16
    %721 = vst.msk [vmem:[%s720] ss:$40 sm:$0x3] %vm719, %v718
    %s722 = scalar_lea.vmem %s0, 112
    %v723 = vld [vmem:[%s722] sm:$0x1]
    %724 = vrot.lane.b32.xlu0 %v723, 48
    %v725 = vpop.permute.xlu0 %724
    %vm726 = vcmask 433536
    %s727 = scalar_lea.vmem [#allocation0], 32
    %728 = vst.msk [vmem:[%s727] sm:$0x1] %vm726, %v725
    %s729 = scalar_lea.vmem %s0, 35
    %v730 = vld [vmem:[%s729] sm:$0x1]
    %s731 = scalar_lea.vmem %s0, 162
    %v732 = vld [vmem:[%s731] sm:$0x2]
    %vm733 = vcmask 1041409
    %v734 = vsel %vm733, %v732, %v730
    %735 = vrot.lane.b32.xlu0 %v734, 47
    %v736 = vpop.permute.xlu0 %735
    %vm737 = vcmask 425336
    %s738 = scalar_lea.vmem [#allocation0], 8
    %739 = vst.msk [vmem:[%s738] ss:$40 sm:$0x3] %vm737, %v736
    %s740 = scalar_lea.vmem %s0, 86
    %v741 = vld [vmem:[%s740] sm:$0x1]
    %742 = vrot.lane.b32.xlu0 %v741, 46
    %v743 = vpop.permute.xlu0 %742
    %vm744 = vcmask 417136
    %s745 = scalar_lea.vmem [#allocation0], 24
    %746 = vst.msk [vmem:[%s745] sm:$0x1] %vm744, %v743
    %s747 = scalar_lea.vmem %s0, 9
    %v748 = vld [vmem:[%s747] sm:$0x1]
    %s749 = scalar_lea.vmem %s0, 136
    %v750 = vld [vmem:[%s749] sm:$0x2]
    %vm751 = vcmask 1041409
    %v752 = vsel %vm751, %v750, %v748
    %753 = vrot.lane.b32.xlu0 %v752, 45
    %v754 = vpop.permute.xlu0 %753
    %vm755 = vcmask 408936
    %756 = vst.msk [vmem:[#allocation0] ss:$40 sm:$0x3] %vm755, %v754
    %s757 = scalar_lea.vmem %s0, 60
    %v758 = vld [vmem:[%s757] sm:$0x1]
    %s759 = scalar_lea.vmem %s0, 187
    %v760 = vld [vmem:[%s759] sm:$0x2]
    %vm761 = vcmask 1041409
    %v762 = vsel %vm761, %v760, %v758
    %763 = vrot.lane.b32.xlu0 %v762, 44
    %v764 = vpop.permute.xlu0 %763
    %vm765 = vcmask 400736
    %s766 = scalar_lea.vmem [#allocation0], 16
    %767 = vst.msk [vmem:[%s766] ss:$40 sm:$0x3] %vm765, %v764
    %s768 = scalar_lea.vmem %s0, 111
    %v769 = vld [vmem:[%s768] sm:$0x1]
    %770 = vrot.lane.b32.xlu0 %v769, 43
    %v771 = vpop.permute.xlu0 %770
    %vm772 = vcmask 392536
    %s773 = scalar_lea.vmem [#allocation0], 32
    %774 = vst.msk [vmem:[%s773] sm:$0x1] %vm772, %v771
    %s775 = scalar_lea.vmem %s0, 34
    %v776 = vld [vmem:[%s775] sm:$0x1]
    %s777 = scalar_lea.vmem %s0, 161
    %v778 = vld [vmem:[%s777] sm:$0x2]
    %vm779 = vcmask 1041409
    %v780 = vsel %vm779, %v778, %v776
    %781 = vrot.lane.b32.xlu0 %v780, 42
    %v782 = vpop.permute.xlu0 %781
    %vm783 = vcmask 384336
    %s784 = scalar_lea.vmem [#allocation0], 8
    %785 = vst.msk [vmem:[%s784] ss:$40 sm:$0x3] %vm783, %v782
    %s786 = scalar_lea.vmem %s0, 85
    %v787 = vld [vmem:[%s786] sm:$0x1]
    %788 = vrot.lane.b32.xlu0 %v787, 41
    %v789 = vpop.permute.xlu0 %788
    %vm790 = vcmask 376136
    %s791 = scalar_lea.vmem [#allocation0], 24
    %792 = vst.msk [vmem:[%s791] sm:$0x1] %vm790, %v789
    %s793 = scalar_lea.vmem %s0, 8
    %v794 = vld [vmem:[%s793] sm:$0x1]
    %s795 = scalar_lea.vmem %s0, 135
    %v796 = vld [vmem:[%s795] sm:$0x2]
    %vm797 = vcmask 1041409
    %v798 = vsel %vm797, %v796, %v794
    %799 = vrot.lane.b32.xlu0 %v798, 40
    %v800 = vpop.permute.xlu0 %799
    %vm801 = vcmask 367936
    %802 = vst.msk [vmem:[#allocation0] ss:$40 sm:$0x3] %vm801, %v800
    %s803 = scalar_lea.vmem %s0, 59
    %v804 = vld [vmem:[%s803] sm:$0x1]
    %s805 = scalar_lea.vmem %s0, 186
    %v806 = vld [vmem:[%s805] sm:$0x2]
    %vm807 = vcmask 1041409
    %v808 = vsel %vm807, %v806, %v804
    %809 = vrot.lane.b32.xlu0 %v808, 39
    %v810 = vpop.permute.xlu0 %809
    %vm811 = vcmask 359736
    %s812 = scalar_lea.vmem [#allocation0], 16
    %813 = vst.msk [vmem:[%s812] ss:$40 sm:$0x3] %vm811, %v810
    %s814 = scalar_lea.vmem %s0, 110
    %v815 = vld [vmem:[%s814] sm:$0x1]
    %816 = vrot.lane.b32.xlu0 %v815, 38
    %v817 = vpop.permute.xlu0 %816
    %vm818 = vcmask 351536
    %s819 = scalar_lea.vmem [#allocation0], 32
    %820 = vst.msk [vmem:[%s819] sm:$0x1] %vm818, %v817
    %s821 = scalar_lea.vmem %s0, 33
    %v822 = vld [vmem:[%s821] sm:$0x1]
    %s823 = scalar_lea.vmem %s0, 160
    %v824 = vld [vmem:[%s823] sm:$0x2]
    %vm825 = vcmask 1041409
    %v826 = vsel %vm825, %v824, %v822
    %827 = vrot.lane.b32.xlu0 %v826, 37
    %v828 = vpop.permute.xlu0 %827
    %vm829 = vcmask 343336
    %s830 = scalar_lea.vmem [#allocation0], 8
    %831 = vst.msk [vmem:[%s830] ss:$40 sm:$0x3] %vm829, %v828
    %s832 = scalar_lea.vmem %s0, 84
    %v833 = vld [vmem:[%s832] sm:$0x1]
    %834 = vrot.lane.b32.xlu0 %v833, 36
    %v835 = vpop.permute.xlu0 %834
    %vm836 = vcmask 335136
    %s837 = scalar_lea.vmem [#allocation0], 24
    %838 = vst.msk [vmem:[%s837] sm:$0x1] %vm836, %v835
    %s839 = scalar_lea.vmem %s0, 7
    %v840 = vld [vmem:[%s839] sm:$0x1]
    %s841 = scalar_lea.vmem %s0, 134
    %v842 = vld [vmem:[%s841] sm:$0x2]
    %vm843 = vcmask 1041409
    %v844 = vsel %vm843, %v842, %v840
    %845 = vrot.lane.b32.xlu0 %v844, 35
    %v846 = vpop.permute.xlu0 %845
    %vm847 = vcmask 326936
    %848 = vst.msk [vmem:[#allocation0] ss:$40 sm:$0x3] %vm847, %v846
    %s849 = scalar_lea.vmem %s0, 58
    %v850 = vld [vmem:[%s849] sm:$0x1]
    %s851 = scalar_lea.vmem %s0, 185
    %v852 = vld [vmem:[%s851] sm:$0x2]
    %vm853 = vcmask 1041409
    %v854 = vsel %vm853, %v852, %v850
    %855 = vrot.lane.b32.xlu0 %v854, 34
    %v856 = vpop.permute.xlu0 %855
    %vm857 = vcmask 318736
    %s858 = scalar_lea.vmem [#allocation0], 16
    %859 = vst.msk [vmem:[%s858] ss:$40 sm:$0x3] %vm857, %v856
    %s860 = scalar_lea.vmem %s0, 109
    %v861 = vld [vmem:[%s860] sm:$0x1]
    %862 = vrot.lane.b32.xlu0 %v861, 33
    %v863 = vpop.permute.xlu0 %862
    %vm864 = vcmask 310536
    %s865 = scalar_lea.vmem [#allocation0], 32
    %866 = vst.msk [vmem:[%s865] sm:$0x1] %vm864, %v863
    %s867 = scalar_lea.vmem %s0, 32
    %v868 = vld [vmem:[%s867] sm:$0x1]
    %s869 = scalar_lea.vmem %s0, 159
    %v870 = vld [vmem:[%s869] sm:$0x2]
    %vm871 = vcmask 1041409
    %v872 = vsel %vm871, %v870, %v868
    %873 = vrot.lane.b32.xlu0 %v872, 32
    %v874 = vpop.permute.xlu0 %873
    %vm875 = vcmask 302336
    %s876 = scalar_lea.vmem [#allocation0], 8
    %877 = vst.msk [vmem:[%s876] ss:$40 sm:$0x3] %vm875, %v874
    %s878 = scalar_lea.vmem %s0, 83
    %v879 = vld [vmem:[%s878] sm:$0x1]
    %880 = vrot.lane.b32.xlu0 %v879, 31
    %v881 = vpop.permute.xlu0 %880
    %vm882 = vcmask 294136
    %s883 = scalar_lea.vmem [#allocation0], 24
    %884 = vst.msk [vmem:[%s883] sm:$0x1] %vm882, %v881
    %s885 = scalar_lea.vmem %s0, 6
    %v886 = vld [vmem:[%s885] sm:$0x1]
    %s887 = scalar_lea.vmem %s0, 133
    %v888 = vld [vmem:[%s887] sm:$0x2]
    %vm889 = vcmask 1041409
    %v890 = vsel %vm889, %v888, %v886
    %891 = vrot.lane.b32.xlu0 %v890, 30
    %v892 = vpop.permute.xlu0 %891
    %vm893 = vcmask 285936
    %894 = vst.msk [vmem:[#allocation0] ss:$40 sm:$0x3] %vm893, %v892
    %s895 = scalar_lea.vmem %s0, 57
    %v896 = vld [vmem:[%s895] sm:$0x1]
    %s897 = scalar_lea.vmem %s0, 184
    %v898 = vld [vmem:[%s897] sm:$0x2]
    %vm899 = vcmask 1041409
    %v900 = vsel %vm899, %v898, %v896
    %901 = vrot.lane.b32.xlu0 %v900, 29
    %v902 = vpop.permute.xlu0 %901
    %vm903 = vcmask 277736
    %s904 = scalar_lea.vmem [#allocation0], 16
    %905 = vst.msk [vmem:[%s904] ss:$40 sm:$0x3] %vm903, %v902
    %s906 = scalar_lea.vmem %s0, 108
    %v907 = vld [vmem:[%s906] sm:$0x1]
    %908 = vrot.lane.b32.xlu0 %v907, 28
    %v909 = vpop.permute.xlu0 %908
    %vm910 = vcmask 269536
    %s911 = scalar_lea.vmem [#allocation0], 32
    %912 = vst.msk [vmem:[%s911] sm:$0x1] %vm910, %v909
    %s913 = scalar_lea.vmem %s0, 31
    %v914 = vld [vmem:[%s913] sm:$0x1]
    %s915 = scalar_lea.vmem %s0, 158
    %v916 = vld [vmem:[%s915] sm:$0x2]
    %vm917 = vcmask 1041409
    %v918 = vsel %vm917, %v916, %v914
    %919 = vrot.lane.b32.xlu0 %v918, 27
    %v920 = vpop.permute.xlu0 %919
    %vm921 = vcmask 261336
    %s922 = scalar_lea.vmem [#allocation0], 8
    %923 = vst.msk [vmem:[%s922] ss:$40 sm:$0x3] %vm921, %v920
    %s924 = scalar_lea.vmem %s0, 82
    %v925 = vld [vmem:[%s924] sm:$0x1]
    %926 = vrot.lane.b32.xlu0 %v925, 26
    %v927 = vpop.permute.xlu0 %926
    %vm928 = vcmask 253136
    %s929 = scalar_lea.vmem [#allocation0], 24
    %930 = vst.msk [vmem:[%s929] sm:$0x1] %vm928, %v927
    %s931 = scalar_lea.vmem %s0, 5
    %v932 = vld [vmem:[%s931] sm:$0x1]
    %s933 = scalar_lea.vmem %s0, 132
    %v934 = vld [vmem:[%s933] sm:$0x2]
    %vm935 = vcmask 1041409
    %v936 = vsel %vm935, %v934, %v932
    %937 = vrot.lane.b32.xlu0 %v936, 25
    %v938 = vpop.permute.xlu0 %937
    %vm939 = vcmask 244936
    %940 = vst.msk [vmem:[#allocation0] ss:$40 sm:$0x3] %vm939, %v938
    %s941 = scalar_lea.vmem %s0, 56
    %v942 = vld [vmem:[%s941] sm:$0x1]
    %s943 = scalar_lea.vmem %s0, 183
    %v944 = vld [vmem:[%s943] sm:$0x2]
    %vm945 = vcmask 1041409
    %v946 = vsel %vm945, %v944, %v942
    %947 = vrot.lane.b32.xlu0 %v946, 24
    %v948 = vpop.permute.xlu0 %947
    %vm949 = vcmask 236736
    %s950 = scalar_lea.vmem [#allocation0], 16
    %951 = vst.msk [vmem:[%s950] ss:$40 sm:$0x3] %vm949, %v948
    %s952 = scalar_lea.vmem %s0, 107
    %v953 = vld [vmem:[%s952] sm:$0x1]
    %954 = vrot.lane.b32.xlu0 %v953, 23
    %v955 = vpop.permute.xlu0 %954
    %vm956 = vcmask 228536
    %s957 = scalar_lea.vmem [#allocation0], 32
    %958 = vst.msk [vmem:[%s957] sm:$0x1] %vm956, %v955
    %s959 = scalar_lea.vmem %s0, 30
    %v960 = vld [vmem:[%s959] sm:$0x1]
    %s961 = scalar_lea.vmem %s0, 157
    %v962 = vld [vmem:[%s961] sm:$0x2]
    %vm963 = vcmask 1041409
    %v964 = vsel %vm963, %v962, %v960
    %965 = vrot.lane.b32.xlu0 %v964, 22
    %v966 = vpop.permute.xlu0 %965
    %vm967 = vcmask 220336
    %s968 = scalar_lea.vmem [#allocation0], 8
    %969 = vst.msk [vmem:[%s968] ss:$40 sm:$0x3] %vm967, %v966
    %s970 = scalar_lea.vmem %s0, 81
    %v971 = vld [vmem:[%s970] sm:$0x1]
    %972 = vrot.lane.b32.xlu0 %v971, 21
    %v973 = vpop.permute.xlu0 %972
    %vm974 = vcmask 212136
    %s975 = scalar_lea.vmem [#allocation0], 24
    %976 = vst.msk [vmem:[%s975] sm:$0x1] %vm974, %v973
    %s977 = scalar_lea.vmem %s0, 4
    %v978 = vld [vmem:[%s977] sm:$0x1]
    %s979 = scalar_lea.vmem %s0, 131
    %v980 = vld [vmem:[%s979] sm:$0x2]
    %vm981 = vcmask 1041409
    %v982 = vsel %vm981, %v980, %v978
    %983 = vrot.lane.b32.xlu0 %v982, 20
    %v984 = vpop.permute.xlu0 %983
    %vm985 = vcmask 203936
    %986 = vst.msk [vmem:[#allocation0] ss:$40 sm:$0x3] %vm985, %v984
    %s987 = scalar_lea.vmem %s0, 55
    %v988 = vld [vmem:[%s987] sm:$0x1]
    %s989 = scalar_lea.vmem %s0, 182
    %v990 = vld [vmem:[%s989] sm:$0x2]
    %vm991 = vcmask 1041409
    %v992 = vsel %vm991, %v990, %v988
    %993 = vrot.lane.b32.xlu0 %v992, 19
    %v994 = vpop.permute.xlu0 %993
    %vm995 = vcmask 195736
    %s996 = scalar_lea.vmem [#allocation0], 16
    %997 = vst.msk [vmem:[%s996] ss:$40 sm:$0x3] %vm995, %v994
    %s998 = scalar_lea.vmem %s0, 106
    %v999 = vld [vmem:[%s998] sm:$0x1]
    %1000 = vrot.lane.b32.xlu0 %v999, 18
    %v1001 = vpop.permute.xlu0 %1000
    %vm1002 = vcmask 187536
    %s1003 = scalar_lea.vmem [#allocation0], 32
    %1004 = vst.msk [vmem:[%s1003] sm:$0x1] %vm1002, %v1001
    %s1005 = scalar_lea.vmem %s0, 29
    %v1006 = vld [vmem:[%s1005] sm:$0x1]
    %s1007 = scalar_lea.vmem %s0, 156
    %v1008 = vld [vmem:[%s1007] sm:$0x2]
    %vm1009 = vcmask 1041409
    %v1010 = vsel %vm1009, %v1008, %v1006
    %1011 = vrot.lane.b32.xlu0 %v1010, 17
    %v1012 = vpop.permute.xlu0 %1011
    %vm1013 = vcmask 179336
    %s1014 = scalar_lea.vmem [#allocation0], 8
    %1015 = vst.msk [vmem:[%s1014] ss:$40 sm:$0x3] %vm1013, %v1012
    %s1016 = scalar_lea.vmem %s0, 80
    %v1017 = vld [vmem:[%s1016] sm:$0x1]
    %1018 = vrot.lane.b32.xlu0 %v1017, 16
    %v1019 = vpop.permute.xlu0 %1018
    %vm1020 = vcmask 171136
    %s1021 = scalar_lea.vmem [#allocation0], 24
    %1022 = vst.msk [vmem:[%s1021] sm:$0x1] %vm1020, %v1019
    %s1023 = scalar_lea.vmem %s0, 3
    %v1024 = vld [vmem:[%s1023] sm:$0x1]
    %s1025 = scalar_lea.vmem %s0, 130
    %v1026 = vld [vmem:[%s1025] sm:$0x2]
    %vm1027 = vcmask 1041409
    %v1028 = vsel %vm1027, %v1026, %v1024
    %1029 = vrot.lane.b32.xlu0 %v1028, 15
    %v1030 = vpop.permute.xlu0 %1029
    %vm1031 = vcmask 162936
    %1032 = vst.msk [vmem:[#allocation0] ss:$40 sm:$0x3] %vm1031, %v1030
    %s1033 = scalar_lea.vmem %s0, 54
    %v1034 = vld [vmem:[%s1033] sm:$0x1]
    %s1035 = scalar_lea.vmem %s0, 181
    %v1036 = vld [vmem:[%s1035] sm:$0x2]
    %vm1037 = vcmask 1041409
    %v1038 = vsel %vm1037, %v1036, %v1034
    %1039 = vrot.lane.b32.xlu0 %v1038, 14
    %v1040 = vpop.permute.xlu0 %1039
    %vm1041 = vcmask 154736
    %s1042 = scalar_lea.vmem [#allocation0], 16
    %1043 = vst.msk [vmem:[%s1042] ss:$40 sm:$0x3] %vm1041, %v1040
    %s1044 = scalar_lea.vmem %s0, 105
    %v1045 = vld [vmem:[%s1044] sm:$0x1]
    %1046 = vrot.lane.b32.xlu0 %v1045, 13
    %v1047 = vpop.permute.xlu0 %1046
    %vm1048 = vcmask 146536
    %s1049 = scalar_lea.vmem [#allocation0], 32
    %1050 = vst.msk [vmem:[%s1049] sm:$0x1] %vm1048, %v1047
    %s1051 = scalar_lea.vmem %s0, 28
    %v1052 = vld [vmem:[%s1051] sm:$0x1]
    %s1053 = scalar_lea.vmem %s0, 155
    %v1054 = vld [vmem:[%s1053] sm:$0x2]
    %vm1055 = vcmask 1041409
    %v1056 = vsel %vm1055, %v1054, %v1052
    %1057 = vrot.lane.b32.xlu0 %v1056, 12
    %v1058 = vpop.permute.xlu0 %1057
    %vm1059 = vcmask 138336
    %s1060 = scalar_lea.vmem [#allocation0], 8
    %1061 = vst.msk [vmem:[%s1060] ss:$40 sm:$0x3] %vm1059, %v1058
    %s1062 = scalar_lea.vmem %s0, 79
    %v1063 = vld [vmem:[%s1062] sm:$0x1]
    %1064 = vrot.lane.b32.xlu0 %v1063, 11
    %v1065 = vpop.permute.xlu0 %1064
    %vm1066 = vcmask 130136
    %s1067 = scalar_lea.vmem [#allocation0], 24
    %1068 = vst.msk [vmem:[%s1067] sm:$0x1] %vm1066, %v1065
    %s1069 = scalar_lea.vmem %s0, 2
    %v1070 = vld [vmem:[%s1069] sm:$0x1]
    %s1071 = scalar_lea.vmem %s0, 129
    %v1072 = vld [vmem:[%s1071] sm:$0x2]
    %vm1073 = vcmask 1041409
    %v1074 = vsel %vm1073, %v1072, %v1070
    %1075 = vrot.lane.b32.xlu0 %v1074, 10
    %v1076 = vpop.permute.xlu0 %1075
    %vm1077 = vcmask 121936
    %1078 = vst.msk [vmem:[#allocation0] ss:$40 sm:$0x3] %vm1077, %v1076
    %s1079 = scalar_lea.vmem %s0, 53
    %v1080 = vld [vmem:[%s1079] sm:$0x1]
    %s1081 = scalar_lea.vmem %s0, 180
    %v1082 = vld [vmem:[%s1081] sm:$0x2]
    %vm1083 = vcmask 1041409
    %v1084 = vsel %vm1083, %v1082, %v1080
    %1085 = vrot.lane.b32.xlu0 %v1084, 9
    %v1086 = vpop.permute.xlu0 %1085
    %vm1087 = vcmask 113736
    %s1088 = scalar_lea.vmem [#allocation0], 16
    %1089 = vst.msk [vmem:[%s1088] ss:$40 sm:$0x3] %vm1087, %v1086
    %s1090 = scalar_lea.vmem %s0, 104
    %v1091 = vld [vmem:[%s1090] sm:$0x1]
    %1092 = vrot.lane.b32.xlu0 %v1091, 8
    %v1093 = vpop.permute.xlu0 %1092
    %vm1094 = vcmask 105536
    %s1095 = scalar_lea.vmem [#allocation0], 32
    %1096 = vst.msk [vmem:[%s1095] sm:$0x1] %vm1094, %v1093
    %s1097 = scalar_lea.vmem %s0, 27
    %v1098 = vld [vmem:[%s1097] sm:$0x1]
    %s1099 = scalar_lea.vmem %s0, 154
    %v1100 = vld [vmem:[%s1099] sm:$0x2]
    %vm1101 = vcmask 1041409
    %v1102 = vsel %vm1101, %v1100, %v1098
    %1103 = vrot.lane.b32.xlu0 %v1102, 7
    %v1104 = vpop.permute.xlu0 %1103
    %vm1105 = vcmask 97336
    %s1106 = scalar_lea.vmem [#allocation0], 8
    %1107 = vst.msk [vmem:[%s1106] ss:$40 sm:$0x3] %vm1105, %v1104
    %s1108 = scalar_lea.vmem %s0, 78
    %v1109 = vld [vmem:[%s1108] sm:$0x1]
    %1110 = vrot.lane.b32.xlu0 %v1109, 6
    %v1111 = vpop.permute.xlu0 %1110
    %vm1112 = vcmask 89136
    %s1113 = scalar_lea.vmem [#allocation0], 24
    %1114 = vst.msk [vmem:[%s1113] sm:$0x1] %vm1112, %v1111
    %s1115 = scalar_lea.vmem %s0, 1
    %v1116 = vld [vmem:[%s1115] sm:$0x1]
    %s1117 = scalar_lea.vmem %s0, 128
    %v1118 = vld [vmem:[%s1117] sm:$0x2]
    %vm1119 = vcmask 1041409
    %v1120 = vsel %vm1119, %v1118, %v1116
    %1121 = vrot.lane.b32.xlu0 %v1120, 5
    %v1122 = vpop.permute.xlu0 %1121
    %vm1123 = vcmask 80936
    %1124 = vst.msk [vmem:[#allocation0] ss:$40 sm:$0x3] %vm1123, %v1122
    %s1125 = scalar_lea.vmem %s0, 52
    %v1126 = vld [vmem:[%s1125] sm:$0x1]
    %s1127 = scalar_lea.vmem %s0, 179
    %v1128 = vld [vmem:[%s1127] sm:$0x2]
    %vm1129 = vcmask 1041409
    %v1130 = vsel %vm1129, %v1128, %v1126
    %1131 = vrot.lane.b32.xlu0 %v1130, 4
    %v1132 = vpop.permute.xlu0 %1131
    %vm1133 = vcmask 72736
    %s1134 = scalar_lea.vmem [#allocation0], 16
    %1135 = vst.msk [vmem:[%s1134] ss:$40 sm:$0x3] %vm1133, %v1132
    %s1136 = scalar_lea.vmem %s0, 103
    %v1137 = vld [vmem:[%s1136] sm:$0x1]
    %1138 = vrot.lane.b32.xlu0 %v1137, 3
    %v1139 = vpop.permute.xlu0 %1138
    %vm1140 = vcmask 64536
    %s1141 = scalar_lea.vmem [#allocation0], 32
    %1142 = vst.msk [vmem:[%s1141] sm:$0x1] %vm1140, %v1139
    %s1143 = scalar_lea.vmem %s0, 26
    %v1144 = vld [vmem:[%s1143] sm:$0x1]
    %s1145 = scalar_lea.vmem %s0, 153
    %v1146 = vld [vmem:[%s1145] sm:$0x2]
    %vm1147 = vcmask 1041409
    %v1148 = vsel %vm1147, %v1146, %v1144
    %1149 = vrot.lane.b32.xlu0 %v1148, 2
    %v1150 = vpop.permute.xlu0 %1149
    %vm1151 = vcmask 56336
    %s1152 = scalar_lea.vmem [#allocation0], 8
    %1153 = vst.msk [vmem:[%s1152] ss:$40 sm:$0x3] %vm1151, %v1150
    %s1154 = scalar_lea.vmem %s0, 77
    %v1155 = vld [vmem:[%s1154] sm:$0x1]
    %1156 = vrot.lane.b32.xlu0 %v1155, 1
    %v1157 = vpop.permute.xlu0 %1156
    %vm1158 = vcmask 48136
    %s1159 = scalar_lea.vmem [#allocation0], 24
    %1160 = vst.msk [vmem:[%s1159] sm:$0x1] %vm1158, %v1157
    %s1162 = sshllo.u32 0, 1
    %v1164 = vld [vmem:[#allocation0] sm:%s1162]
    %s1165 = sshllo.u32 0, 1
    %1166 = vst [vmem:[%s1] sm:%s1165] %v1164
    %s1167 = scalar_lea.vmem [#allocation0], 8
    %v1168 = vld [vmem:[%s1167] sm:%s1162]
    %s1169 = sshllo.u32 0, 1
    %s1170 = scalar_lea.vmem %s1, 1
    %1171 = vst [vmem:[%s1170] sm:%s1169] %v1168
    %s1172 = scalar_lea.vmem [#allocation0], 16
    %v1173 = vld [vmem:[%s1172] sm:%s1162]
    %s1174 = sshllo.u32 0, 1
    %s1175 = smul.addr 1, 2
    %s1176 = scalar_lea.vmem %s1, %s1175
    %1177 = vst [vmem:[%s1176] sm:%s1174] %v1173
    %s1178 = scalar_lea.vmem [#allocation0], 24
    %v1179 = vld [vmem:[%s1178] sm:%s1162]
    %s1180 = sshllo.u32 0, 1
    %s1181 = smul.addr 1, 3
    %s1182 = scalar_lea.vmem %s1, %s1181
    %1183 = vst [vmem:[%s1182] sm:%s1180] %v1179
    %s1184 = scalar_lea.vmem [#allocation0], 32
    %v1185 = vld [vmem:[%s1184] sm:%s1162]
    %s1186 = sshllo.u32 0, 1
    %s1187 = smul.addr 1, 4
    %s1188 = scalar_lea.vmem %s1, %s1187
    %1189 = vst [vmem:[%s1188] sm:%s1186] %v1185
    %s1190 = scalar_lea.vmem [#allocation0], 40
    %v1191 = vld [vmem:[%s1190] sm:%s1162]
    %s1192 = sshllo.u32 0, 1
    %s1193 = smul.addr 1, 5
    %s1194 = scalar_lea.vmem %s1, %s1193
    %1195 = vst [vmem:[%s1194] sm:%s1192] %v1191
    %s1196 = scalar_lea.vmem [#allocation0], 48
    %v1197 = vld [vmem:[%s1196] sm:%s1162]
    %s1198 = sshllo.u32 0, 1
    %s1199 = smul.addr 1, 6
    %s1200 = scalar_lea.vmem %s1, %s1199
    %1201 = vst [vmem:[%s1200] sm:%s1198] %v1197
    %s1202 = scalar_lea.vmem [#allocation0], 56
    %v1203 = vld [vmem:[%s1202] sm:%s1162]
    %s1204 = sshllo.u32 0, 1
    %s1205 = smul.addr 1, 7
    %s1206 = scalar_lea.vmem %s1, %s1205
    %1207 = vst [vmem:[%s1206] sm:%s1204] %v1203

// kernel: tile.122
$region0: #{tile.122}
  #allocation0 [shape = 's32[1]{0}', space=sflag, size = 0x4, scoped, tag = 'scoped memory for tile.122']
  %s0 = inlined_call_operand.vmem [shape: f32[15], index: 0, kind: input, shape index: {}]
  %s1 = inlined_call_operand.vmem [shape: f32[48,15], index: 1, kind: output, shape index: {}]
  // Predicated region
  $region2: #{tile.122} parent=0 // pred_check
    _
  $region3: #{tile.122} parent=0 // pred_check_branch
    %3 = sbr.rel (0) target = $region5
  $region4: #{tile.122} parent=0 // pred_region
    _
  $region5: #{tile.122} parent=0 // pred_fallthru
    _
  %v4 = vld [vmem:[%s0] ss:$0 sm:$0xff]
  %5 = vst [vmem:[%s1] sm:$0xff] %v4
  %s6 = scalar_lea.vmem %s1, 8
  %7 = vst [vmem:[%s6] sm:$0xff] %v4
  %s8 = scalar_lea.vmem %s1, 16
  %9 = vst [vmem:[%s8] sm:$0xff] %v4
  %s10 = scalar_lea.vmem %s1, 24
  %11 = vst [vmem:[%s10] sm:$0xff] %v4
  %s12 = scalar_lea.vmem %s1, 32
  %13 = vst [vmem:[%s12] sm:$0xff] %v4
  %s14 = scalar_lea.vmem %s1, 40
  %15 = vst [vmem:[%s14] sm:$0xff] %v4

// kernel: tile.129
$region0: #{tile.129}
  %s0 = inlined_call_operand.vmem [shape: f32[48,15], index: 0, kind: input, shape index: {}]
  %s1 = inlined_call_operand.vmem [shape: f32[1,720], index: 1, kind: output, shape index: {}]
  $region1: #{tile.129} parent=0
    #allocation0 [shape = 'u8[24576]{0}', space=vmem, size = 0x6000, scoped, tag = 'scoped mem for output reshape']
    %v2 = vld [vmem:[%s0] sm:$0x1]
    %vm3 = vcmask 121856
    %4 = vst.msk [vmem:[#allocation0] sm:$0x1] %vm3, %v2
    %s5 = scalar_lea.vmem %s0, 17
    %v6 = vld [vmem:[%s5] sm:$0x1]
    %s7 = scalar_lea.vmem %s0, 17
    %v8 = vld [vmem:[%s7] sm:$0x1]
    %vm9 = vcmask 7168
    %v10 = vsel %vm9, %v8, %v6
    %11 = vrot.lane.b32.xlu0 %v10, 127
    %v12 = vpop.permute.xlu0 %11
    %vm13 = vcmask 113664
    %s14 = scalar_lea.vmem [#allocation0], 16
    %15 = vst.msk [vmem:[%s14] sm:$0x1] %vm13, %v12
    %vm16 = vcmask 1048568
    %s17 = scalar_lea.vmem [#allocation0], 8
    %18 = vst.msk [vmem:[%s17] sm:$0x1] %vm16, %v12
    %s19 = scalar_lea.vmem %s0, 34
    %v20 = vld [vmem:[%s19] sm:$0x1]
    %s21 = scalar_lea.vmem %s0, 34
    %v22 = vld [vmem:[%s21] sm:$0x1]
    %vm23 = vcmask 15360
    %v24 = vsel %vm23, %v22, %v20
    %25 = vrot.lane.b32.xlu0 %v24, 126
    %v26 = vpop.permute.xlu0 %25
    %vm27 = vcmask 105472
    %s28 = scalar_lea.vmem [#allocation0], 32
    %29 = vst.msk [vmem:[%s28] sm:$0x1] %vm27, %v26
    %vm30 = vcmask 1048560
    %s31 = scalar_lea.vmem [#allocation0], 24
    %32 = vst.msk [vmem:[%s31] sm:$0x1] %vm30, %v26
    %s33 = scalar_lea.vmem %s0, 8
    %v34 = vld [vmem:[%s33] sm:$0x1]
    %s35 = scalar_lea.vmem %s0, 8
    %v36 = vld [vmem:[%s35] sm:$0x1]
    %vm37 = vcmask 64512
    %v38 = vsel %vm37, %v36, %v34
    %39 = vrot.lane.b32.xlu0 %v38, 120
    %v40 = vpop.permute.xlu0 %39
    %vm41 = vcmask 56320
    %s42 = scalar_lea.vmem [#allocation0], 8
    %43 = vst.msk [vmem:[%s42] sm:$0x1] %vm41, %v40
    %vm44 = vcmask 1048512
    %45 = vst.msk [vmem:[#allocation0] sm:$0x1] %vm44, %v40
    %s46 = scalar_lea.vmem %s0, 25
    %v47 = vld [vmem:[%s46] sm:$0x1]
    %s48 = scalar_lea.vmem %s0, 25
    %v49 = vld [vmem:[%s48] sm:$0x1]
    %vm50 = vcmask 72704
    %v51 = vsel %vm50, %v49, %v47
    %52 = vrot.lane.b32.xlu0 %v51, 119
    %v53 = vpop.permute.xlu0 %52
    %vm54 = vcmask 48128
    %s55 = scalar_lea.vmem [#allocation0], 24
    %56 = vst.msk [vmem:[%s55] sm:$0x1] %vm54, %v53
    %vm57 = vcmask 1048504
    %s58 = scalar_lea.vmem [#allocation0], 16
    %59 = vst.msk [vmem:[%s58] sm:$0x1] %vm57, %v53
    %s60 = scalar_lea.vmem %s0, 42
    %v61 = vld [vmem:[%s60] sm:$0x1]
    %s62 = scalar_lea.vmem %s0, 42
    %v63 = vld [vmem:[%s62] sm:$0x1]
    %vm64 = vcmask 80896
    %v65 = vsel %vm64, %v63, %v61
    %66 = vrot.lane.b32.xlu0 %v65, 118
    %v67 = vpop.permute.xlu0 %66
    %vm68 = vcmask 39936
    %s69 = scalar_lea.vmem [#allocation0], 40
    %70 = vst.msk [vmem:[%s69] sm:$0x1] %vm68, %v67
    %vm71 = vcmask 1048496
    %s72 = scalar_lea.vmem [#allocation0], 32
    %73 = vst.msk [vmem:[%s72] sm:$0x1] %vm71, %v67
    %s74 = scalar_lea.vmem %s0, 16
    %v75 = vld [vmem:[%s74] sm:$0x1]
    %76 = vrot.lane.b32.xlu0 %v75, 112
    %v77 = vpop.permute.xlu0 %76
    %vm78 = vcmask 1040256
    %s79 = scalar_lea.vmem [#allocation0], 8
    %80 = vst.msk [vmem:[%s79] sm:$0x1] %vm78, %v77
    %s81 = scalar_lea.vmem %s0, 33
    %v82 = vld [vmem:[%s81] sm:$0x1]
    %83 = vrot.lane.b32.xlu0 %v82, 111
    %v84 = vpop.permute.xlu0 %83
    %vm85 = vcmask 1032056
    %s86 = scalar_lea.vmem [#allocation0], 24
    %87 = vst.msk [vmem:[%s86] sm:$0x1] %vm85, %v84
    %s88 = scalar_lea.vmem %s0, 7
    %v89 = vld [vmem:[%s88] sm:$0x1]
    %90 = vrot.lane.b32.xlu0 %v89, 105
    %v91 = vpop.permute.xlu0 %90
    %vm92 = vcmask 982856
    %93 = vst.msk [vmem:[#allocation0] sm:$0x1] %vm92, %v91
    %s94 = scalar_lea.vmem %s0, 24
    %v95 = vld [vmem:[%s94] sm:$0x1]
    %96 = vrot.lane.b32.xlu0 %v95, 104
    %v97 = vpop.permute.xlu0 %96
    %vm98 = vcmask 974656
    %s99 = scalar_lea.vmem [#allocation0], 16
    %100 = vst.msk [vmem:[%s99] sm:$0x1] %vm98, %v97
    %s101 = scalar_lea.vmem %s0, 41
    %v102 = vld [vmem:[%s101] sm:$0x1]
    %103 = vrot.lane.b32.xlu0 %v102, 103
    %v104 = vpop.permute.xlu0 %103
    %vm105 = vcmask 966456
    %s106 = scalar_lea.vmem [#allocation0], 32
    %107 = vst.msk [vmem:[%s106] sm:$0x1] %vm105, %v104
    %s108 = scalar_lea.vmem %s0, 15
    %v109 = vld [vmem:[%s108] sm:$0x1]
    %110 = vrot.lane.b32.xlu0 %v109, 97
    %v111 = vpop.permute.xlu0 %110
    %vm112 = vcmask 917256
    %s113 = scalar_lea.vmem [#allocation0], 8
    %114 = vst.msk [vmem:[%s113] sm:$0x1] %vm112, %v111
    %s115 = scalar_lea.vmem %s0, 32
    %v116 = vld [vmem:[%s115] sm:$0x1]
    %117 = vrot.lane.b32.xlu0 %v116, 96
    %v118 = vpop.permute.xlu0 %117
    %vm119 = vcmask 909056
    %s120 = scalar_lea.vmem [#allocation0], 24
    %121 = vst.msk [vmem:[%s120] sm:$0x1] %vm119, %v118
    %s122 = scalar_lea.vmem %s0, 6
    %v123 = vld [vmem:[%s122] sm:$0x1]
    %124 = vrot.lane.b32.xlu0 %v123, 90
    %v125 = vpop.permute.xlu0 %124
    %vm126 = vcmask 859856
    %127 = vst.msk [vmem:[#allocation0] sm:$0x1] %vm126, %v125
    %s128 = scalar_lea.vmem %s0, 23
    %v129 = vld [vmem:[%s128] sm:$0x1]
    %130 = vrot.lane.b32.xlu0 %v129, 89
    %v131 = vpop.permute.xlu0 %130
    %vm132 = vcmask 851656
    %s133 = scalar_lea.vmem [#allocation0], 16
    %134 = vst.msk [vmem:[%s133] sm:$0x1] %vm132, %v131
    %s135 = scalar_lea.vmem %s0, 40
    %v136 = vld [vmem:[%s135] sm:$0x1]
    %137 = vrot.lane.b32.xlu0 %v136, 88
    %v138 = vpop.permute.xlu0 %137
    %vm139 = vcmask 843456
    %s140 = scalar_lea.vmem [#allocation0], 32
    %141 = vst.msk [vmem:[%s140] sm:$0x1] %vm139, %v138
    %s142 = scalar_lea.vmem %s0, 14
    %v143 = vld [vmem:[%s142] sm:$0x1]
    %144 = vrot.lane.b32.xlu0 %v143, 82
    %v145 = vpop.permute.xlu0 %144
    %vm146 = vcmask 794256
    %s147 = scalar_lea.vmem [#allocation0], 8
    %148 = vst.msk [vmem:[%s147] sm:$0x1] %vm146, %v145
    %s149 = scalar_lea.vmem %s0, 31
    %v150 = vld [vmem:[%s149] sm:$0x1]
    %151 = vrot.lane.b32.xlu0 %v150, 81
    %v152 = vpop.permute.xlu0 %151
    %vm153 = vcmask 786056
    %s154 = scalar_lea.vmem [#allocation0], 24
    %155 = vst.msk [vmem:[%s154] sm:$0x1] %vm153, %v152
    %s156 = scalar_lea.vmem %s0, 5
    %v157 = vld [vmem:[%s156] sm:$0x1]
    %158 = vrot.lane.b32.xlu0 %v157, 75
    %v159 = vpop.permute.xlu0 %158
    %vm160 = vcmask 736856
    %161 = vst.msk [vmem:[#allocation0] sm:$0x1] %vm160, %v159
    %s162 = scalar_lea.vmem %s0, 22
    %v163 = vld [vmem:[%s162] sm:$0x1]
    %164 = vrot.lane.b32.xlu0 %v163, 74
    %v165 = vpop.permute.xlu0 %164
    %vm166 = vcmask 728656
    %s167 = scalar_lea.vmem [#allocation0], 16
    %168 = vst.msk [vmem:[%s167] sm:$0x1] %vm166, %v165
    %s169 = scalar_lea.vmem %s0, 39
    %v170 = vld [vmem:[%s169] sm:$0x1]
    %171 = vrot.lane.b32.xlu0 %v170, 73
    %v172 = vpop.permute.xlu0 %171
    %vm173 = vcmask 720456
    %s174 = scalar_lea.vmem [#allocation0], 32
    %175 = vst.msk [vmem:[%s174] sm:$0x1] %vm173, %v172
    %s176 = scalar_lea.vmem %s0, 13
    %v177 = vld [vmem:[%s176] sm:$0x1]
    %178 = vrot.lane.b32.xlu0 %v177, 67
    %v179 = vpop.permute.xlu0 %178
    %vm180 = vcmask 671256
    %s181 = scalar_lea.vmem [#allocation0], 8
    %182 = vst.msk [vmem:[%s181] sm:$0x1] %vm180, %v179
    %s183 = scalar_lea.vmem %s0, 30
    %v184 = vld [vmem:[%s183] sm:$0x1]
    %185 = vrot.lane.b32.xlu0 %v184, 66
    %v186 = vpop.permute.xlu0 %185
    %vm187 = vcmask 663056
    %s188 = scalar_lea.vmem [#allocation0], 24
    %189 = vst.msk [vmem:[%s188] sm:$0x1] %vm187, %v186
    %s190 = scalar_lea.vmem %s0, 47
    %v191 = vld [vmem:[%s190] sm:$0x1]
    %192 = vrot.lane.b32.xlu0 %v191, 65
    %v193 = vpop.permute.xlu0 %192
    %vm194 = vcmask 654856
    %s195 = scalar_lea.vmem [#allocation0], 40
    %196 = vst.msk [vmem:[%s195] sm:$0x1] %vm194, %v193
    %s197 = scalar_lea.vmem %s0, 4
    %v198 = vld [vmem:[%s197] sm:$0x1]
    %199 = vrot.lane.b32.xlu0 %v198, 60
    %v200 = vpop.permute.xlu0 %199
    %vm201 = vcmask 613856
    %202 = vst.msk [vmem:[#allocation0] sm:$0x1] %vm201, %v200
    %s203 = scalar_lea.vmem %s0, 21
    %v204 = vld [vmem:[%s203] sm:$0x1]
    %205 = vrot.lane.b32.xlu0 %v204, 59
    %v206 = vpop.permute.xlu0 %205
    %vm207 = vcmask 605656
    %s208 = scalar_lea.vmem [#allocation0], 16
    %209 = vst.msk [vmem:[%s208] sm:$0x1] %vm207, %v206
    %s210 = scalar_lea.vmem %s0, 38
    %v211 = vld [vmem:[%s210] sm:$0x1]
    %212 = vrot.lane.b32.xlu0 %v211, 58
    %v213 = vpop.permute.xlu0 %212
    %vm214 = vcmask 597456
    %s215 = scalar_lea.vmem [#allocation0], 32
    %216 = vst.msk [vmem:[%s215] sm:$0x1] %vm214, %v213
    %s217 = scalar_lea.vmem %s0, 12
    %v218 = vld [vmem:[%s217] sm:$0x1]
    %219 = vrot.lane.b32.xlu0 %v218, 52
    %v220 = vpop.permute.xlu0 %219
    %vm221 = vcmask 548256
    %s222 = scalar_lea.vmem [#allocation0], 8
    %223 = vst.msk [vmem:[%s222] sm:$0x1] %vm221, %v220
    %s224 = scalar_lea.vmem %s0, 29
    %v225 = vld [vmem:[%s224] sm:$0x1]
    %226 = vrot.lane.b32.xlu0 %v225, 51
    %v227 = vpop.permute.xlu0 %226
    %vm228 = vcmask 540056
    %s229 = scalar_lea.vmem [#allocation0], 24
    %230 = vst.msk [vmem:[%s229] sm:$0x1] %vm228, %v227
    %s231 = scalar_lea.vmem %s0, 46
    %v232 = vld [vmem:[%s231] sm:$0x1]
    %233 = vrot.lane.b32.xlu0 %v232, 50
    %v234 = vpop.permute.xlu0 %233
    %vm235 = vcmask 531856
    %s236 = scalar_lea.vmem [#allocation0], 40
    %237 = vst.msk [vmem:[%s236] sm:$0x1] %vm235, %v234
    %s238 = scalar_lea.vmem %s0, 3
    %v239 = vld [vmem:[%s238] sm:$0x1]
    %240 = vrot.lane.b32.xlu0 %v239, 45
    %v241 = vpop.permute.xlu0 %240
    %vm242 = vcmask 490856
    %243 = vst.msk [vmem:[#allocation0] sm:$0x1] %vm242, %v241
    %s244 = scalar_lea.vmem %s0, 20
    %v245 = vld [vmem:[%s244] sm:$0x1]
    %246 = vrot.lane.b32.xlu0 %v245, 44
    %v247 = vpop.permute.xlu0 %246
    %vm248 = vcmask 482656
    %s249 = scalar_lea.vmem [#allocation0], 16
    %250 = vst.msk [vmem:[%s249] sm:$0x1] %vm248, %v247
    %s251 = scalar_lea.vmem %s0, 37
    %v252 = vld [vmem:[%s251] sm:$0x1]
    %253 = vrot.lane.b32.xlu0 %v252, 43
    %v254 = vpop.permute.xlu0 %253
    %vm255 = vcmask 474456
    %s256 = scalar_lea.vmem [#allocation0], 32
    %257 = vst.msk [vmem:[%s256] sm:$0x1] %vm255, %v254
    %s258 = scalar_lea.vmem %s0, 11
    %v259 = vld [vmem:[%s258] sm:$0x1]
    %260 = vrot.lane.b32.xlu0 %v259, 37
    %v261 = vpop.permute.xlu0 %260
    %vm262 = vcmask 425256
    %s263 = scalar_lea.vmem [#allocation0], 8
    %264 = vst.msk [vmem:[%s263] sm:$0x1] %vm262, %v261
    %s265 = scalar_lea.vmem %s0, 28
    %v266 = vld [vmem:[%s265] sm:$0x1]
    %267 = vrot.lane.b32.xlu0 %v266, 36
    %v268 = vpop.permute.xlu0 %267
    %vm269 = vcmask 417056
    %s270 = scalar_lea.vmem [#allocation0], 24
    %271 = vst.msk [vmem:[%s270] sm:$0x1] %vm269, %v268
    %s272 = scalar_lea.vmem %s0, 45
    %v273 = vld [vmem:[%s272] sm:$0x1]
    %274 = vrot.lane.b32.xlu0 %v273, 35
    %v275 = vpop.permute.xlu0 %274
    %vm276 = vcmask 408856
    %s277 = scalar_lea.vmem [#allocation0], 40
    %278 = vst.msk [vmem:[%s277] sm:$0x1] %vm276, %v275
    %s279 = scalar_lea.vmem %s0, 2
    %v280 = vld [vmem:[%s279] sm:$0x1]
    %281 = vrot.lane.b32.xlu0 %v280, 30
    %v282 = vpop.permute.xlu0 %281
    %vm283 = vcmask 367856
    %284 = vst.msk [vmem:[#allocation0] sm:$0x1] %vm283, %v282
    %s285 = scalar_lea.vmem %s0, 19
    %v286 = vld [vmem:[%s285] sm:$0x1]
    %287 = vrot.lane.b32.xlu0 %v286, 29
    %v288 = vpop.permute.xlu0 %287
    %vm289 = vcmask 359656
    %s290 = scalar_lea.vmem [#allocation0], 16
    %291 = vst.msk [vmem:[%s290] sm:$0x1] %vm289, %v288
    %s292 = scalar_lea.vmem %s0, 36
    %v293 = vld [vmem:[%s292] sm:$0x1]
    %294 = vrot.lane.b32.xlu0 %v293, 28
    %v295 = vpop.permute.xlu0 %294
    %vm296 = vcmask 351456
    %s297 = scalar_lea.vmem [#allocation0], 32
    %298 = vst.msk [vmem:[%s297] sm:$0x1] %vm296, %v295
    %s299 = scalar_lea.vmem %s0, 10
    %v300 = vld [vmem:[%s299] sm:$0x1]
    %301 = vrot.lane.b32.xlu0 %v300, 22
    %v302 = vpop.permute.xlu0 %301
    %vm303 = vcmask 302256
    %s304 = scalar_lea.vmem [#allocation0], 8
    %305 = vst.msk [vmem:[%s304] sm:$0x1] %vm303, %v302
    %s306 = scalar_lea.vmem %s0, 27
    %v307 = vld [vmem:[%s306] sm:$0x1]
    %308 = vrot.lane.b32.xlu0 %v307, 21
    %v309 = vpop.permute.xlu0 %308
    %vm310 = vcmask 294056
    %s311 = scalar_lea.vmem [#allocation0], 24
    %312 = vst.msk [vmem:[%s311] sm:$0x1] %vm310, %v309
    %s313 = scalar_lea.vmem %s0, 44
    %v314 = vld [vmem:[%s313] sm:$0x1]
    %315 = vrot.lane.b32.xlu0 %v314, 20
    %v316 = vpop.permute.xlu0 %315
    %vm317 = vcmask 285856
    %s318 = scalar_lea.vmem [#allocation0], 40
    %319 = vst.msk [vmem:[%s318] sm:$0x1] %vm317, %v316
    %s320 = scalar_lea.vmem %s0, 1
    %v321 = vld [vmem:[%s320] sm:$0x1]
    %322 = vrot.lane.b32.xlu0 %v321, 15
    %v323 = vpop.permute.xlu0 %322
    %vm324 = vcmask 244856
    %325 = vst.msk [vmem:[#allocation0] sm:$0x1] %vm324, %v323
    %s326 = scalar_lea.vmem %s0, 18
    %v327 = vld [vmem:[%s326] sm:$0x1]
    %328 = vrot.lane.b32.xlu0 %v327, 14
    %v329 = vpop.permute.xlu0 %328
    %vm330 = vcmask 236656
    %s331 = scalar_lea.vmem [#allocation0], 16
    %332 = vst.msk [vmem:[%s331] sm:$0x1] %vm330, %v329
    %s333 = scalar_lea.vmem %s0, 35
    %v334 = vld [vmem:[%s333] sm:$0x1]
    %335 = vrot.lane.b32.xlu0 %v334, 13
    %v336 = vpop.permute.xlu0 %335
    %vm337 = vcmask 228456
    %s338 = scalar_lea.vmem [#allocation0], 32
    %339 = vst.msk [vmem:[%s338] sm:$0x1] %vm337, %v336
    %s340 = scalar_lea.vmem %s0, 9
    %v341 = vld [vmem:[%s340] sm:$0x1]
    %342 = vrot.lane.b32.xlu0 %v341, 7
    %v343 = vpop.permute.xlu0 %342
    %vm344 = vcmask 179256
    %s345 = scalar_lea.vmem [#allocation0], 8
    %346 = vst.msk [vmem:[%s345] sm:$0x1] %vm344, %v343
    %s347 = scalar_lea.vmem %s0, 26
    %v348 = vld [vmem:[%s347] sm:$0x1]
    %349 = vrot.lane.b32.xlu0 %v348, 6
    %v350 = vpop.permute.xlu0 %349
    %vm351 = vcmask 171056
    %s352 = scalar_lea.vmem [#allocation0], 24
    %353 = vst.msk [vmem:[%s352] sm:$0x1] %vm351, %v350
    %s354 = scalar_lea.vmem %s0, 43
    %v355 = vld [vmem:[%s354] sm:$0x1]
    %356 = vrot.lane.b32.xlu0 %v355, 5
    %v357 = vpop.permute.xlu0 %356
    %vm358 = vcmask 162856
    %s359 = scalar_lea.vmem [#allocation0], 40
    %360 = vst.msk [vmem:[%s359] sm:$0x1] %vm358, %v357
    %s362 = sshllo.u32 0, 1
    %v364 = vld [vmem:[#allocation0] sm:%s362]
    %s365 = sshllo.u32 0, 1
    %366 = vst [vmem:[%s1] sm:%s365] %v364
    %s367 = scalar_lea.vmem [#allocation0], 8
    %v368 = vld [vmem:[%s367] sm:%s362]
    %s369 = sshllo.u32 0, 1
    %s370 = scalar_lea.vmem %s1, 1
    %371 = vst [vmem:[%s370] sm:%s369] %v368
    %s372 = scalar_lea.vmem [#allocation0], 16
    %v373 = vld [vmem:[%s372] sm:%s362]
    %s374 = sshllo.u32 0, 1
    %s375 = smul.addr 1, 2
    %s376 = scalar_lea.vmem %s1, %s375
    %377 = vst [vmem:[%s376] sm:%s374] %v373
    %s378 = scalar_lea.vmem [#allocation0], 24
    %v379 = vld [vmem:[%s378] sm:%s362]
    %s380 = sshllo.u32 0, 1
    %s381 = smul.addr 1, 3
    %s382 = scalar_lea.vmem %s1, %s381
    %383 = vst [vmem:[%s382] sm:%s380] %v379
    %s384 = scalar_lea.vmem [#allocation0], 32
    %v385 = vld [vmem:[%s384] sm:%s362]
    %s386 = sshllo.u32 0, 1
    %s387 = smul.addr 1, 4
    %s388 = scalar_lea.vmem %s1, %s387
    %389 = vst [vmem:[%s388] sm:%s386] %v385
    %s390 = scalar_lea.vmem [#allocation0], 40
    %v391 = vld [vmem:[%s390] sm:%s362]
    %s392 = sshllo.u32 0, 1
    %s393 = smul.addr 1, 5
    %s394 = scalar_lea.vmem %s1, %s393
    %395 = vst [vmem:[%s394] sm:%s392] %v391

// kernel: tile.74
$region0: #{tile.74}
  #allocation0 [shape = 's32[1]{0}', space=sflag, size = 0x4, scoped, tag = 'scoped memory for tile.74']
  %s0 = inlined_call_operand.vmem [shape: f32[5], index: 0, kind: input, shape index: {}]
  %s1 = inlined_call_operand.vmem [shape: f32[48,5], index: 1, kind: output, shape index: {}]
  // Predicated region
  $region2: #{tile.74} parent=0 // pred_check
    _
  $region3: #{tile.74} parent=0 // pred_check_branch
    %3 = sbr.rel (0) target = $region5
  $region4: #{tile.74} parent=0 // pred_region
    _
  $region5: #{tile.74} parent=0 // pred_fallthru
    _
  %v4 = vld [vmem:[%s0] ss:$0 sm:$0xff]
  %5 = vst [vmem:[%s1] sm:$0xff] %v4
  %s6 = scalar_lea.vmem %s1, 8
  %7 = vst [vmem:[%s6] sm:$0xff] %v4
  %s8 = scalar_lea.vmem %s1, 16
  %9 = vst [vmem:[%s8] sm:$0xff] %v4
  %s10 = scalar_lea.vmem %s1, 24
  %11 = vst [vmem:[%s10] sm:$0xff] %v4
  %s12 = scalar_lea.vmem %s1, 32
  %13 = vst [vmem:[%s12] sm:$0xff] %v4
  %s14 = scalar_lea.vmem %s1, 40
  %15 = vst [vmem:[%s14] sm:$0xff] %v4

// kernel: tile.81
$region0: #{tile.81}
  %s0 = inlined_call_operand.vmem [shape: f32[48,5], index: 0, kind: input, shape index: {}]
  %s1 = inlined_call_operand.vmem [shape: f32[1,240], index: 1, kind: output, shape index: {}]
  $region1: #{tile.81} parent=0
    #allocation0 [shape = 'u8[8192]{0}', space=vmem, size = 0x2000, scoped, tag = 'scoped mem for output reshape']
    %v2 = vld [vmem:[%s0] sm:$0x1]
    %vm3 = vcmask 39936
    %4 = vst.msk [vmem:[#allocation0] sm:$0x1] %vm3, %v2
    %s5 = scalar_lea.vmem %s0, 25
    %v6 = vld [vmem:[%s5] sm:$0x1]
    %s7 = scalar_lea.vmem %s0, 25
    %v8 = vld [vmem:[%s7] sm:$0x1]
    %vm9 = vcmask 23552
    %v10 = vsel %vm9, %v8, %v6
    %11 = vrot.lane.b32.xlu0 %v10, 125
    %v12 = vpop.permute.xlu0 %11
    %vm13 = vcmask 15360
    %s14 = scalar_lea.vmem [#allocation0], 8
    %15 = vst.msk [vmem:[%s14] sm:$0x1] %vm13, %v12
    %vm16 = vcmask 1048552
    %17 = vst.msk [vmem:[#allocation0] sm:$0x1] %vm16, %v12
    %s18 = scalar_lea.vmem %s0, 24
    %v19 = vld [vmem:[%s18] sm:$0x1]
    %20 = vrot.lane.b32.xlu0 %v19, 120
    %v21 = vpop.permute.xlu0 %20
    %vm22 = vcmask 1023936
    %23 = vst.msk [vmem:[#allocation0] sm:$0x1] %vm22, %v21
    %s24 = scalar_lea.vmem %s0, 23
    %v25 = vld [vmem:[%s24] sm:$0x1]
    %26 = vrot.lane.b32.xlu0 %v25, 115
    %v27 = vpop.permute.xlu0 %26
    %vm28 = vcmask 982936
    %29 = vst.msk [vmem:[#allocation0] sm:$0x1] %vm28, %v27
    %s30 = scalar_lea.vmem %s0, 22
    %v31 = vld [vmem:[%s30] sm:$0x1]
    %32 = vrot.lane.b32.xlu0 %v31, 110
    %v33 = vpop.permute.xlu0 %32
    %vm34 = vcmask 941936
    %35 = vst.msk [vmem:[#allocation0] sm:$0x1] %vm34, %v33
    %s36 = scalar_lea.vmem %s0, 47
    %v37 = vld [vmem:[%s36] sm:$0x1]
    %38 = vrot.lane.b32.xlu0 %v37, 107
    %v39 = vpop.permute.xlu0 %38
    %vm40 = vcmask 917336
    %s41 = scalar_lea.vmem [#allocation0], 8
    %42 = vst.msk [vmem:[%s41] sm:$0x1] %vm40, %v39
    %s43 = scalar_lea.vmem %s0, 21
    %v44 = vld [vmem:[%s43] sm:$0x1]
    %45 = vrot.lane.b32.xlu0 %v44, 105
    %v46 = vpop.permute.xlu0 %45
    %vm47 = vcmask 900936
    %48 = vst.msk [vmem:[#allocation0] sm:$0x1] %vm47, %v46
    %s49 = scalar_lea.vmem %s0, 46
    %v50 = vld [vmem:[%s49] sm:$0x1]
    %51 = vrot.lane.b32.xlu0 %v50, 102
    %v52 = vpop.permute.xlu0 %51
    %vm53 = vcmask 876336
    %s54 = scalar_lea.vmem [#allocation0], 8
    %55 = vst.msk [vmem:[%s54] sm:$0x1] %vm53, %v52
    %s56 = scalar_lea.vmem %s0, 20
    %v57 = vld [vmem:[%s56] sm:$0x1]
    %58 = vrot.lane.b32.xlu0 %v57, 100
    %v59 = vpop.permute.xlu0 %58
    %vm60 = vcmask 859936
    %61 = vst.msk [vmem:[#allocation0] sm:$0x1] %vm60, %v59
    %s62 = scalar_lea.vmem %s0, 45
    %v63 = vld [vmem:[%s62] sm:$0x1]
    %64 = vrot.lane.b32.xlu0 %v63, 97
    %v65 = vpop.permute.xlu0 %64
    %vm66 = vcmask 835336
    %s67 = scalar_lea.vmem [#allocation0], 8
    %68 = vst.msk [vmem:[%s67] sm:$0x1] %vm66, %v65
    %s69 = scalar_lea.vmem %s0, 19
    %v70 = vld [vmem:[%s69] sm:$0x1]
    %71 = vrot.lane.b32.xlu0 %v70, 95
    %v72 = vpop.permute.xlu0 %71
    %vm73 = vcmask 818936
    %74 = vst.msk [vmem:[#allocation0] sm:$0x1] %vm73, %v72
    %s75 = scalar_lea.vmem %s0, 44
    %v76 = vld [vmem:[%s75] sm:$0x1]
    %77 = vrot.lane.b32.xlu0 %v76, 92
    %v78 = vpop.permute.xlu0 %77
    %vm79 = vcmask 794336
    %s80 = scalar_lea.vmem [#allocation0], 8
    %81 = vst.msk [vmem:[%s80] sm:$0x1] %vm79, %v78
    %s82 = scalar_lea.vmem %s0, 18
    %v83 = vld [vmem:[%s82] sm:$0x1]
    %84 = vrot.lane.b32.xlu0 %v83, 90
    %v85 = vpop.permute.xlu0 %84
    %vm86 = vcmask 777936
    %87 = vst.msk [vmem:[#allocation0] sm:$0x1] %vm86, %v85
    %s88 = scalar_lea.vmem %s0, 43
    %v89 = vld [vmem:[%s88] sm:$0x1]
    %90 = vrot.lane.b32.xlu0 %v89, 87
    %v91 = vpop.permute.xlu0 %90
    %vm92 = vcmask 753336
    %s93 = scalar_lea.vmem [#allocation0], 8
    %94 = vst.msk [vmem:[%s93] sm:$0x1] %vm92, %v91
    %s95 = scalar_lea.vmem %s0, 17
    %v96 = vld [vmem:[%s95] sm:$0x1]
    %97 = vrot.lane.b32.xlu0 %v96, 85
    %v98 = vpop.permute.xlu0 %97
    %vm99 = vcmask 736936
    %100 = vst.msk [vmem:[#allocation0] sm:$0x1] %vm99, %v98
    %s101 = scalar_lea.vmem %s0, 42
    %v102 = vld [vmem:[%s101] sm:$0x1]
    %103 = vrot.lane.b32.xlu0 %v102, 82
    %v104 = vpop.permute.xlu0 %103
    %vm105 = vcmask 712336
    %s106 = scalar_lea.vmem [#allocation0], 8
    %107 = vst.msk [vmem:[%s106] sm:$0x1] %vm105, %v104
    %s108 = scalar_lea.vmem %s0, 16
    %v109 = vld [vmem:[%s108] sm:$0x1]
    %110 = vrot.lane.b32.xlu0 %v109, 80
    %v111 = vpop.permute.xlu0 %110
    %vm112 = vcmask 695936
    %113 = vst.msk [vmem:[#allocation0] sm:$0x1] %vm112, %v111
    %s114 = scalar_lea.vmem %s0, 41
    %v115 = vld [vmem:[%s114] sm:$0x1]
    %116 = vrot.lane.b32.xlu0 %v115, 77
    %v117 = vpop.permute.xlu0 %116
    %vm118 = vcmask 671336
    %s119 = scalar_lea.vmem [#allocation0], 8
    %120 = vst.msk [vmem:[%s119] sm:$0x1] %vm118, %v117
    %s121 = scalar_lea.vmem %s0, 15
    %v122 = vld [vmem:[%s121] sm:$0x1]
    %123 = vrot.lane.b32.xlu0 %v122, 75
    %v124 = vpop.permute.xlu0 %123
    %vm125 = vcmask 654936
    %126 = vst.msk [vmem:[#allocation0] sm:$0x1] %vm125, %v124
    %s127 = scalar_lea.vmem %s0, 40
    %v128 = vld [vmem:[%s127] sm:$0x1]
    %129 = vrot.lane.b32.xlu0 %v128, 72
    %v130 = vpop.permute.xlu0 %129
    %vm131 = vcmask 630336
    %s132 = scalar_lea.vmem [#allocation0], 8
    %133 = vst.msk [vmem:[%s132] sm:$0x1] %vm131, %v130
    %s134 = scalar_lea.vmem %s0, 14
    %v135 = vld [vmem:[%s134] sm:$0x1]
    %136 = vrot.lane.b32.xlu0 %v135, 70
    %v137 = vpop.permute.xlu0 %136
    %vm138 = vcmask 613936
    %139 = vst.msk [vmem:[#allocation0] sm:$0x1] %vm138, %v137
    %s140 = scalar_lea.vmem %s0, 39
    %v141 = vld [vmem:[%s140] sm:$0x1]
    %142 = vrot.lane.b32.xlu0 %v141, 67
    %v143 = vpop.permute.xlu0 %142
    %vm144 = vcmask 589336
    %s145 = scalar_lea.vmem [#allocation0], 8
    %146 = vst.msk [vmem:[%s145] sm:$0x1] %vm144, %v143
    %s147 = scalar_lea.vmem %s0, 13
    %v148 = vld [vmem:[%s147] sm:$0x1]
    %149 = vrot.lane.b32.xlu0 %v148, 65
    %v150 = vpop.permute.xlu0 %149
    %vm151 = vcmask 572936
    %152 = vst.msk [vmem:[#allocation0] sm:$0x1] %vm151, %v150
    %s153 = scalar_lea.vmem %s0, 38
    %v154 = vld [vmem:[%s153] sm:$0x1]
    %155 = vrot.lane.b32.xlu0 %v154, 62
    %v156 = vpop.permute.xlu0 %155
    %vm157 = vcmask 548336
    %s158 = scalar_lea.vmem [#allocation0], 8
    %159 = vst.msk [vmem:[%s158] sm:$0x1] %vm157, %v156
    %s160 = scalar_lea.vmem %s0, 12
    %v161 = vld [vmem:[%s160] sm:$0x1]
    %162 = vrot.lane.b32.xlu0 %v161, 60
    %v163 = vpop.permute.xlu0 %162
    %vm164 = vcmask 531936
    %165 = vst.msk [vmem:[#allocation0] sm:$0x1] %vm164, %v163
    %s166 = scalar_lea.vmem %s0, 37
    %v167 = vld [vmem:[%s166] sm:$0x1]
    %168 = vrot.lane.b32.xlu0 %v167, 57
    %v169 = vpop.permute.xlu0 %168
    %vm170 = vcmask 507336
    %s171 = scalar_lea.vmem [#allocation0], 8
    %172 = vst.msk [vmem:[%s171] sm:$0x1] %vm170, %v169
    %s173 = scalar_lea.vmem %s0, 11
    %v174 = vld [vmem:[%s173] sm:$0x1]
    %175 = vrot.lane.b32.xlu0 %v174, 55
    %v176 = vpop.permute.xlu0 %175
    %vm177 = vcmask 490936
    %178 = vst.msk [vmem:[#allocation0] sm:$0x1] %vm177, %v176
    %s179 = scalar_lea.vmem %s0, 36
    %v180 = vld [vmem:[%s179] sm:$0x1]
    %181 = vrot.lane.b32.xlu0 %v180, 52
    %v182 = vpop.permute.xlu0 %181
    %vm183 = vcmask 466336
    %s184 = scalar_lea.vmem [#allocation0], 8
    %185 = vst.msk [vmem:[%s184] sm:$0x1] %vm183, %v182
    %s186 = scalar_lea.vmem %s0, 10
    %v187 = vld [vmem:[%s186] sm:$0x1]
    %188 = vrot.lane.b32.xlu0 %v187, 50
    %v189 = vpop.permute.xlu0 %188
    %vm190 = vcmask 449936
    %191 = vst.msk [vmem:[#allocation0] sm:$0x1] %vm190, %v189
    %s192 = scalar_lea.vmem %s0, 35
    %v193 = vld [vmem:[%s192] sm:$0x1]
    %194 = vrot.lane.b32.xlu0 %v193, 47
    %v195 = vpop.permute.xlu0 %194
    %vm196 = vcmask 425336
    %s197 = scalar_lea.vmem [#allocation0], 8
    %198 = vst.msk [vmem:[%s197] sm:$0x1] %vm196, %v195
    %s199 = scalar_lea.vmem %s0, 9
    %v200 = vld [vmem:[%s199] sm:$0x1]
    %201 = vrot.lane.b32.xlu0 %v200, 45
    %v202 = vpop.permute.xlu0 %201
    %vm203 = vcmask 408936
    %204 = vst.msk [vmem:[#allocation0] sm:$0x1] %vm203, %v202
    %s205 = scalar_lea.vmem %s0, 34
    %v206 = vld [vmem:[%s205] sm:$0x1]
    %207 = vrot.lane.b32.xlu0 %v206, 42
    %v208 = vpop.permute.xlu0 %207
    %vm209 = vcmask 384336
    %s210 = scalar_lea.vmem [#allocation0], 8
    %211 = vst.msk [vmem:[%s210] sm:$0x1] %vm209, %v208
    %s212 = scalar_lea.vmem %s0, 8
    %v213 = vld [vmem:[%s212] sm:$0x1]
    %214 = vrot.lane.b32.xlu0 %v213, 40
    %v215 = vpop.permute.xlu0 %214
    %vm216 = vcmask 367936
    %217 = vst.msk [vmem:[#allocation0] sm:$0x1] %vm216, %v215
    %s218 = scalar_lea.vmem %s0, 33
    %v219 = vld [vmem:[%s218] sm:$0x1]
    %220 = vrot.lane.b32.xlu0 %v219, 37
    %v221 = vpop.permute.xlu0 %220
    %vm222 = vcmask 343336
    %s223 = scalar_lea.vmem [#allocation0], 8
    %224 = vst.msk [vmem:[%s223] sm:$0x1] %vm222, %v221
    %s225 = scalar_lea.vmem %s0, 7
    %v226 = vld [vmem:[%s225] sm:$0x1]
    %227 = vrot.lane.b32.xlu0 %v226, 35
    %v228 = vpop.permute.xlu0 %227
    %vm229 = vcmask 326936
    %230 = vst.msk [vmem:[#allocation0] sm:$0x1] %vm229, %v228
    %s231 = scalar_lea.vmem %s0, 32
    %v232 = vld [vmem:[%s231] sm:$0x1]
    %233 = vrot.lane.b32.xlu0 %v232, 32
    %v234 = vpop.permute.xlu0 %233
    %vm235 = vcmask 302336
    %s236 = scalar_lea.vmem [#allocation0], 8
    %237 = vst.msk [vmem:[%s236] sm:$0x1] %vm235, %v234
    %s238 = scalar_lea.vmem %s0, 6
    %v239 = vld [vmem:[%s238] sm:$0x1]
    %240 = vrot.lane.b32.xlu0 %v239, 30
    %v241 = vpop.permute.xlu0 %240
    %vm242 = vcmask 285936
    %243 = vst.msk [vmem:[#allocation0] sm:$0x1] %vm242, %v241
    %s244 = scalar_lea.vmem %s0, 31
    %v245 = vld [vmem:[%s244] sm:$0x1]
    %246 = vrot.lane.b32.xlu0 %v245, 27
    %v247 = vpop.permute.xlu0 %246
    %vm248 = vcmask 261336
    %s249 = scalar_lea.vmem [#allocation0], 8
    %250 = vst.msk [vmem:[%s249] sm:$0x1] %vm248, %v247
    %s251 = scalar_lea.vmem %s0, 5
    %v252 = vld [vmem:[%s251] sm:$0x1]
    %253 = vrot.lane.b32.xlu0 %v252, 25
    %v254 = vpop.permute.xlu0 %253
    %vm255 = vcmask 244936
    %256 = vst.msk [vmem:[#allocation0] sm:$0x1] %vm255, %v254
    %s257 = scalar_lea.vmem %s0, 30
    %v258 = vld [vmem:[%s257] sm:$0x1]
    %259 = vrot.lane.b32.xlu0 %v258, 22
    %v260 = vpop.permute.xlu0 %259
    %vm261 = vcmask 220336
    %s262 = scalar_lea.vmem [#allocation0], 8
    %263 = vst.msk [vmem:[%s262] sm:$0x1] %vm261, %v260
    %s264 = scalar_lea.vmem %s0, 4
    %v265 = vld [vmem:[%s264] sm:$0x1]
    %266 = vrot.lane.b32.xlu0 %v265, 20
    %v267 = vpop.permute.xlu0 %266
    %vm268 = vcmask 203936
    %269 = vst.msk [vmem:[#allocation0] sm:$0x1] %vm268, %v267
    %s270 = scalar_lea.vmem %s0, 29
    %v271 = vld [vmem:[%s270] sm:$0x1]
    %272 = vrot.lane.b32.xlu0 %v271, 17
    %v273 = vpop.permute.xlu0 %272
    %vm274 = vcmask 179336
    %s275 = scalar_lea.vmem [#allocation0], 8
    %276 = vst.msk [vmem:[%s275] sm:$0x1] %vm274, %v273
    %s277 = scalar_lea.vmem %s0, 3
    %v278 = vld [vmem:[%s277] sm:$0x1]
    %279 = vrot.lane.b32.xlu0 %v278, 15
    %v280 = vpop.permute.xlu0 %279
    %vm281 = vcmask 162936
    %282 = vst.msk [vmem:[#allocation0] sm:$0x1] %vm281, %v280
    %s283 = scalar_lea.vmem %s0, 28
    %v284 = vld [vmem:[%s283] sm:$0x1]
    %285 = vrot.lane.b32.xlu0 %v284, 12
    %v286 = vpop.permute.xlu0 %285
    %vm287 = vcmask 138336
    %s288 = scalar_lea.vmem [#allocation0], 8
    %289 = vst.msk [vmem:[%s288] sm:$0x1] %vm287, %v286
    %s290 = scalar_lea.vmem %s0, 2
    %v291 = vld [vmem:[%s290] sm:$0x1]
    %292 = vrot.lane.b32.xlu0 %v291, 10
    %v293 = vpop.permute.xlu0 %292
    %vm294 = vcmask 121936
    %295 = vst.msk [vmem:[#allocation0] sm:$0x1] %vm294, %v293
    %s296 = scalar_lea.vmem %s0, 27
    %v297 = vld [vmem:[%s296] sm:$0x1]
    %298 = vrot.lane.b32.xlu0 %v297, 7
    %v299 = vpop.permute.xlu0 %298
    %vm300 = vcmask 97336
    %s301 = scalar_lea.vmem [#allocation0], 8
    %302 = vst.msk [vmem:[%s301] sm:$0x1] %vm300, %v299
    %s303 = scalar_lea.vmem %s0, 1
    %v304 = vld [vmem:[%s303] sm:$0x1]
    %305 = vrot.lane.b32.xlu0 %v304, 5
    %v306 = vpop.permute.xlu0 %305
    %vm307 = vcmask 80936
    %308 = vst.msk [vmem:[#allocation0] sm:$0x1] %vm307, %v306
    %s309 = scalar_lea.vmem %s0, 26
    %v310 = vld [vmem:[%s309] sm:$0x1]
    %311 = vrot.lane.b32.xlu0 %v310, 2
    %v312 = vpop.permute.xlu0 %311
    %vm313 = vcmask 56336
    %s314 = scalar_lea.vmem [#allocation0], 8
    %315 = vst.msk [vmem:[%s314] sm:$0x1] %vm313, %v312
    %s317 = sshllo.u32 0, 1
    %v319 = vld [vmem:[#allocation0] sm:%s317]
    %s320 = sshllo.u32 0, 1
    %321 = vst [vmem:[%s1] sm:%s320] %v319
    %s322 = scalar_lea.vmem [#allocation0], 8
    %v323 = vld [vmem:[%s322] sm:%s317]
    %s324 = sshllo.u32 0, 1
    %s325 = scalar_lea.vmem %s1, 1
    %326 = vst [vmem:[%s325] sm:%s324] %v323

// kernel: tile.110
$region0: #{tile.110}
  #allocation0 [shape = 's32[1]{0}', space=sflag, size = 0x4, scoped, tag = 'scoped memory for tile.110']
  %s0 = inlined_call_operand.vmem [shape: f32[30], index: 0, kind: input, shape index: {}]
  %s1 = inlined_call_operand.vmem [shape: f32[12,30], index: 1, kind: output, shape index: {}]
  // Predicated region
  $region2: #{tile.110} parent=0 // pred_check
    _
  $region3: #{tile.110} parent=0 // pred_check_branch
    %3 = sbr.rel (0) target = $region5
  $region4: #{tile.110} parent=0 // pred_region
    _
  $region5: #{tile.110} parent=0 // pred_fallthru
    _
  %v4 = vld [vmem:[%s0] ss:$0 sm:$0xff]
  %5 = vst [vmem:[%s1] sm:$0xff] %v4
  %s6 = scalar_lea.vmem %s1, 8
  %7 = vst [vmem:[%s6] sm:$0xff] %v4

// kernel: tile.117
$region0: #{tile.117}
  %s0 = inlined_call_operand.vmem [shape: f32[12,30], index: 0, kind: input, shape index: {}]
  %s1 = inlined_call_operand.vmem [shape: f32[1,360], index: 1, kind: output, shape index: {}]
  $region1: #{tile.117} parent=0
    #allocation0 [shape = 'u8[12288]{0}', space=vmem, size = 0x3000, scoped, tag = 'scoped mem for output reshape']
    %v2 = vld [vmem:[%s0] sm:$0x1]
    %vm3 = vcmask 244736
    %4 = vst.msk [vmem:[#allocation0] sm:$0x1] %vm3, %v2
    %s5 = scalar_lea.vmem %s0, 4
    %v6 = vld [vmem:[%s5] sm:$0x1]
    %s7 = scalar_lea.vmem %s0, 4
    %v8 = vld [vmem:[%s7] sm:$0x1]
    %vm9 = vcmask 64512
    %v10 = vsel %vm9, %v8, %v6
    %11 = vrot.lane.b32.xlu0 %v10, 120
    %v12 = vpop.permute.xlu0 %11
    %vm13 = vcmask 179200
    %s14 = scalar_lea.vmem [#allocation0], 8
    %15 = vst.msk [vmem:[%s14] sm:$0x1] %vm13, %v12
    %vm16 = vcmask 1048512
    %17 = vst.msk [vmem:[#allocation0] sm:$0x1] %vm16, %v12
    %s18 = scalar_lea.vmem %s0, 8
    %v19 = vld [vmem:[%s18] sm:$0x1]
    %s20 = scalar_lea.vmem %s0, 8
    %v21 = vld [vmem:[%s20] sm:$0x1]
    %vm22 = vcmask 130048
    %v23 = vsel %vm22, %v21, %v19
    %24 = vrot.lane.b32.xlu0 %v23, 112
    %v25 = vpop.permute.xlu0 %24
    %vm26 = vcmask 113664
    %s27 = scalar_lea.vmem [#allocation0], 16
    %28 = vst.msk [vmem:[%s27] sm:$0x1] %vm26, %v25
    %vm29 = vcmask 1048448
    %s30 = scalar_lea.vmem [#allocation0], 8
    %31 = vst.msk [vmem:[%s30] sm:$0x1] %vm29, %v25
    %s32 = scalar_lea.vmem %s0, 3
    %v33 = vld [vmem:[%s32] sm:$0x1]
    %34 = vrot.lane.b32.xlu0 %v33, 90
    %v35 = vpop.permute.xlu0 %34
    %vm36 = vcmask 982736
    %37 = vst.msk [vmem:[#allocation0] sm:$0x1] %vm36, %v35
    %s38 = scalar_lea.vmem %s0, 7
    %v39 = vld [vmem:[%s38] sm:$0x1]
    %40 = vrot.lane.b32.xlu0 %v39, 82
    %v41 = vpop.permute.xlu0 %40
    %vm42 = vcmask 917136
    %s43 = scalar_lea.vmem [#allocation0], 8
    %44 = vst.msk [vmem:[%s43] sm:$0x1] %vm42, %v41
    %s45 = scalar_lea.vmem %s0, 11
    %v46 = vld [vmem:[%s45] sm:$0x1]
    %47 = vrot.lane.b32.xlu0 %v46, 74
    %v48 = vpop.permute.xlu0 %47
    %vm49 = vcmask 851536
    %s50 = scalar_lea.vmem [#allocation0], 16
    %51 = vst.msk [vmem:[%s50] sm:$0x1] %vm49, %v48
    %s52 = scalar_lea.vmem %s0, 2
    %v53 = vld [vmem:[%s52] sm:$0x1]
    %54 = vrot.lane.b32.xlu0 %v53, 60
    %v55 = vpop.permute.xlu0 %54
    %vm56 = vcmask 736736
    %57 = vst.msk [vmem:[#allocation0] sm:$0x1] %vm56, %v55
    %s58 = scalar_lea.vmem %s0, 6
    %v59 = vld [vmem:[%s58] sm:$0x1]
    %60 = vrot.lane.b32.xlu0 %v59, 52
    %v61 = vpop.permute.xlu0 %60
    %vm62 = vcmask 671136
    %s63 = scalar_lea.vmem [#allocation0], 8
    %64 = vst.msk [vmem:[%s63] sm:$0x1] %vm62, %v61
    %s65 = scalar_lea.vmem %s0, 10
    %v66 = vld [vmem:[%s65] sm:$0x1]
    %67 = vrot.lane.b32.xlu0 %v66, 44
    %v68 = vpop.permute.xlu0 %67
    %vm69 = vcmask 605536
    %s70 = scalar_lea.vmem [#allocation0], 16
    %71 = vst.msk [vmem:[%s70] sm:$0x1] %vm69, %v68
    %s72 = scalar_lea.vmem %s0, 1
    %v73 = vld [vmem:[%s72] sm:$0x1]
    %74 = vrot.lane.b32.xlu0 %v73, 30
    %v75 = vpop.permute.xlu0 %74
    %vm76 = vcmask 490736
    %77 = vst.msk [vmem:[#allocation0] sm:$0x1] %vm76, %v75
    %s78 = scalar_lea.vmem %s0, 5
    %v79 = vld [vmem:[%s78] sm:$0x1]
    %80 = vrot.lane.b32.xlu0 %v79, 22
    %v81 = vpop.permute.xlu0 %80
    %vm82 = vcmask 425136
    %s83 = scalar_lea.vmem [#allocation0], 8
    %84 = vst.msk [vmem:[%s83] sm:$0x1] %vm82, %v81
    %s85 = scalar_lea.vmem %s0, 9
    %v86 = vld [vmem:[%s85] sm:$0x1]
    %87 = vrot.lane.b32.xlu0 %v86, 14
    %v88 = vpop.permute.xlu0 %87
    %vm89 = vcmask 359536
    %s90 = scalar_lea.vmem [#allocation0], 16
    %91 = vst.msk [vmem:[%s90] sm:$0x1] %vm89, %v88
    %s93 = sshllo.u32 0, 1
    %v95 = vld [vmem:[#allocation0] sm:%s93]
    %s96 = sshllo.u32 0, 1
    %97 = vst [vmem:[%s1] sm:%s96] %v95
    %s98 = scalar_lea.vmem [#allocation0], 8
    %v99 = vld [vmem:[%s98] sm:%s93]
    %s100 = sshllo.u32 0, 1
    %s101 = scalar_lea.vmem %s1, 1
    %102 = vst [vmem:[%s101] sm:%s100] %v99
    %s103 = scalar_lea.vmem [#allocation0], 16
    %v104 = vld [vmem:[%s103] sm:%s93]
    %s105 = sshllo.u32 0, 1
    %s106 = smul.addr 1, 2
    %s107 = scalar_lea.vmem %s1, %s106
    %108 = vst [vmem:[%s107] sm:%s105] %v104

// kernel: tile.86
$region0: #{tile.86}
  #allocation0 [shape = 's32[1]{0}', space=sflag, size = 0x4, scoped, tag = 'scoped memory for tile.86']
  %s0 = inlined_call_operand.vmem [shape: f32[15], index: 0, kind: input, shape index: {}]
  %s1 = inlined_call_operand.vmem [shape: f32[12,15], index: 1, kind: output, shape index: {}]
  // Predicated region
  $region2: #{tile.86} parent=0 // pred_check
    _
  $region3: #{tile.86} parent=0 // pred_check_branch
    %3 = sbr.rel (0) target = $region5
  $region4: #{tile.86} parent=0 // pred_region
    _
  $region5: #{tile.86} parent=0 // pred_fallthru
    _
  %v4 = vld [vmem:[%s0] ss:$0 sm:$0xff]
  %5 = vst [vmem:[%s1] sm:$0xff] %v4
  %s6 = scalar_lea.vmem %s1, 8
  %7 = vst [vmem:[%s6] sm:$0xff] %v4

// kernel: tile.93
$region0: #{tile.93}
  %s0 = inlined_call_operand.vmem [shape: f32[12,15], index: 0, kind: input, shape index: {}]
  %s1 = inlined_call_operand.vmem [shape: f32[1,180], index: 1, kind: output, shape index: {}]
  $region1: #{tile.93} parent=0
    #allocation0 [shape = 'u8[8192]{0}', space=vmem, size = 0x2000, scoped, tag = 'scoped mem for output reshape']
    %v2 = vld [vmem:[%s0] sm:$0x1]
    %vm3 = vcmask 121856
    %4 = vst.msk [vmem:[#allocation0] sm:$0x1] %vm3, %v2
    %s5 = scalar_lea.vmem %s0, 8
    %v6 = vld [vmem:[%s5] sm:$0x1]
    %s7 = scalar_lea.vmem %s0, 8
    %v8 = vld [vmem:[%s7] sm:$0x1]
    %vm9 = vcmask 64512
    %v10 = vsel %vm9, %v8, %v6
    %11 = vrot.lane.b32.xlu0 %v10, 120
    %v12 = vpop.permute.xlu0 %11
    %vm13 = vcmask 56320
    %s14 = scalar_lea.vmem [#allocation0], 8
    %15 = vst.msk [vmem:[%s14] sm:$0x1] %vm13, %v12
    %vm16 = vcmask 1048512
    %17 = vst.msk [vmem:[#allocation0] sm:$0x1] %vm16, %v12
    %s18 = scalar_lea.vmem %s0, 7
    %v19 = vld [vmem:[%s18] sm:$0x1]
    %20 = vrot.lane.b32.xlu0 %v19, 105
    %v21 = vpop.permute.xlu0 %20
    %vm22 = vcmask 982856
    %23 = vst.msk [vmem:[#allocation0] sm:$0x1] %vm22, %v21
    %s24 = scalar_lea.vmem %s0, 6
    %v25 = vld [vmem:[%s24] sm:$0x1]
    %26 = vrot.lane.b32.xlu0 %v25, 90
    %v27 = vpop.permute.xlu0 %26
    %vm28 = vcmask 859856
    %29 = vst.msk [vmem:[#allocation0] sm:$0x1] %vm28, %v27
    %s30 = scalar_lea.vmem %s0, 5
    %v31 = vld [vmem:[%s30] sm:$0x1]
    %32 = vrot.lane.b32.xlu0 %v31, 75
    %v33 = vpop.permute.xlu0 %32
    %vm34 = vcmask 736856
    %35 = vst.msk [vmem:[#allocation0] sm:$0x1] %vm34, %v33
    %s36 = scalar_lea.vmem %s0, 4
    %v37 = vld [vmem:[%s36] sm:$0x1]
    %38 = vrot.lane.b32.xlu0 %v37, 60
    %v39 = vpop.permute.xlu0 %38
    %vm40 = vcmask 613856
    %41 = vst.msk [vmem:[#allocation0] sm:$0x1] %vm40, %v39
    %s42 = scalar_lea.vmem %s0, 3
    %v43 = vld [vmem:[%s42] sm:$0x1]
    %44 = vrot.lane.b32.xlu0 %v43, 45
    %v45 = vpop.permute.xlu0 %44
    %vm46 = vcmask 490856
    %47 = vst.msk [vmem:[#allocation0] sm:$0x1] %vm46, %v45
    %s48 = scalar_lea.vmem %s0, 11
    %v49 = vld [vmem:[%s48] sm:$0x1]
    %50 = vrot.lane.b32.xlu0 %v49, 37
    %v51 = vpop.permute.xlu0 %50
    %vm52 = vcmask 425256
    %s53 = scalar_lea.vmem [#allocation0], 8
    %54 = vst.msk [vmem:[%s53] sm:$0x1] %vm52, %v51
    %s55 = scalar_lea.vmem %s0, 2
    %v56 = vld [vmem:[%s55] sm:$0x1]
    %57 = vrot.lane.b32.xlu0 %v56, 30
    %v58 = vpop.permute.xlu0 %57
    %vm59 = vcmask 367856
    %60 = vst.msk [vmem:[#allocation0] sm:$0x1] %vm59, %v58
    %s61 = scalar_lea.vmem %s0, 10
    %v62 = vld [vmem:[%s61] sm:$0x1]
    %63 = vrot.lane.b32.xlu0 %v62, 22
    %v64 = vpop.permute.xlu0 %63
    %vm65 = vcmask 302256
    %s66 = scalar_lea.vmem [#allocation0], 8
    %67 = vst.msk [vmem:[%s66] sm:$0x1] %vm65, %v64
    %s68 = scalar_lea.vmem %s0, 1
    %v69 = vld [vmem:[%s68] sm:$0x1]
    %70 = vrot.lane.b32.xlu0 %v69, 15
    %v71 = vpop.permute.xlu0 %70
    %vm72 = vcmask 244856
    %73 = vst.msk [vmem:[#allocation0] sm:$0x1] %vm72, %v71
    %s74 = scalar_lea.vmem %s0, 9
    %v75 = vld [vmem:[%s74] sm:$0x1]
    %76 = vrot.lane.b32.xlu0 %v75, 7
    %v77 = vpop.permute.xlu0 %76
    %vm78 = vcmask 179256
    %s79 = scalar_lea.vmem [#allocation0], 8
    %80 = vst.msk [vmem:[%s79] sm:$0x1] %vm78, %v77
    %s82 = sshllo.u32 0, 1
    %v84 = vld [vmem:[#allocation0] sm:%s82]
    %s85 = sshllo.u32 0, 1
    %86 = vst [vmem:[%s1] sm:%s85] %v84
    %s87 = scalar_lea.vmem [#allocation0], 8
    %v88 = vld [vmem:[%s87] sm:%s82]
    %s89 = sshllo.u32 0, 1
    %s90 = scalar_lea.vmem %s1, 1
    %91 = vst [vmem:[%s90] sm:%s89] %v88

// kernel: autoencoder_forward.1
$region0: #{autoencoder_forward.1}
  #allocation0 [shape = 'u32[]', space=smem, size = 0x4, offset = 0x4, fixed_abs, tag = 'smem constant byte address 0x4 - core index']
  #allocation1 [shape = 'u32[144,128]{1,0:T(1,128)}', space=vmem, size = 0x12000, scoped, tag = 'internal scratch']
  %s0 = inlined_call_operand.vmem [shape: f32[16,192], index: 0, kind: input, shape index: {}]
  %s1 = inlined_call_operand.vmem [shape: bf16[192,240], index: 1, kind: input, shape index: {}]
  %s2 = inlined_call_operand.vmem [shape: bf16[192,240], index: 2, kind: input, shape index: {}]
  %s3 = inlined_call_operand.vmem [shape: f32[4,240], index: 3, kind: input, shape index: {}]
  %s4 = inlined_call_operand.vmem [shape: bf16[240,180], index: 4, kind: input, shape index: {}]
  %s5 = inlined_call_operand.vmem [shape: bf16[240,180], index: 5, kind: input, shape index: {}]
  %s6 = inlined_call_operand.vmem [shape: f32[4,180], index: 6, kind: input, shape index: {}]
  %s7 = inlined_call_operand.vmem [shape: bf16[180,90], index: 7, kind: input, shape index: {}]
  %s8 = inlined_call_operand.vmem [shape: bf16[180,90], index: 8, kind: input, shape index: {}]
  %s9 = inlined_call_operand.vmem [shape: f32[4,90], index: 9, kind: input, shape index: {}]
  %s10 = inlined_call_operand.vmem [shape: bf16[90,32], index: 10, kind: input, shape index: {}]
  %s11 = inlined_call_operand.vmem [shape: f32[1,32], index: 11, kind: input, shape index: {}]
  %s12 = inlined_call_operand.vmem [shape: bf16[32,90], index: 12, kind: input, shape index: {}]
  %s13 = inlined_call_operand.vmem [shape: f32[4,90], index: 13, kind: input, shape index: {}]
  %s14 = inlined_call_operand.vmem [shape: bf16[90,360], index: 14, kind: input, shape index: {}]
  %s15 = inlined_call_operand.vmem [shape: f32[4,360], index: 15, kind: input, shape index: {}]
  %s16 = inlined_call_operand.vmem [shape: bf16[360,720], index: 16, kind: input, shape index: {}]
  %s17 = inlined_call_operand.vmem [shape: f32[4,720], index: 17, kind: input, shape index: {}]
  %s18 = inlined_call_operand.vmem [shape: bf16[720,960], index: 18, kind: input, shape index: {}]
  %s19 = inlined_call_operand.vmem [shape: f32[4,960], index: 19, kind: input, shape index: {}]
  %s20 = inlined_call_operand.vmem [shape: bf16[960,192], index: 20, kind: input, shape index: {}]
  %s21 = inlined_call_operand.vmem [shape: f32[1,192], index: 21, kind: input, shape index: {}]
  %s22 = inlined_call_operand.vmem [shape: f32[16,192], index: 22, kind: output, shape index: {}]
  %s23 = sld [smem:[#allocation0]]
  $region121: #{autoencoder_forward.1} parent=0
    _
  %s25 = ssub.s32 1, %s23
  %s26 = scalar_select 0, %s25, %s23
  loop: start=0, step=1, limit=4
  $region2: #{autoencoder_forward.1} parent=0 // loop_pre_header
    _
  $region3: #{autoencoder_forward.1} parent=0 // loop_header
    %s28 = sphi 0, %s32
    %p29 = scmp.ge.s32.totalorder %s28, 4
    %s38 = sphi 0, %s40
    %s41 = sphi 0, %s38
    %s42 = sphi 0, %s41
    %s58 = sphi 0, %s42
    %s62 = sphi 0, %s62
    %s64 = sphi 0, %s62
    %s65 = sphi 0, %s64
    %s79 = sphi 0, %s65
    %s83 = sphi 0, %s83
    %s85 = sphi 0, %s83
    %s86 = sphi 0, %s85
    %s100 = sphi 0, %s86
    %s104 = sphi 0, %s104
    %s106 = sphi 0, %s104
    %s107 = sphi 0, %s106
    %s121 = sphi 0, %s107
    %s125 = sphi 0, %s125
    %s127 = sphi 0, %s125
    %s128 = sphi 0, %s127
    %s142 = sphi 0, %s128
    %s146 = sphi 0, %s146
    %s148 = sphi 0, %s146
    %s149 = sphi 0, %s148
    %s163 = sphi 0, %s149
    %s167 = sphi 0, %s167
    %s169 = sphi 0, %s167
    %s170 = sphi 0, %s169
    %s184 = sphi 0, %s170
    %s188 = sphi 0, %s188
    %s190 = sphi 0, %s188
    %s191 = sphi 0, %s190
    %s205 = sphi 0, %s191
    %s209 = sphi 0, %s209
    %s211 = sphi 0, %s209
    %s212 = sphi 0, %s211
    %s226 = sphi 0, %s212
    %s230 = sphi 0, %s230
    %s232 = sphi 0, %s230
    %s233 = sphi 0, %s232
    %s247 = sphi 0, %s233
    %s251 = sphi 0, %s251
    %s253 = sphi 0, %s251
    %s254 = sphi 0, %s253
    %s268 = sphi 0, %s254
    %s272 = sphi 0, %s272
    %s274 = sphi 0, %s272
    %s275 = sphi 0, %s274
    %s289 = sphi 0, %s275
    %s293 = sphi 0, %s293
    %s295 = sphi 0, %s293
    %s296 = sphi 0, %s295
    %s310 = sphi 0, %s296
    %s314 = sphi 0, %s314
    %s316 = sphi 0, %s314
    %s317 = sphi 0, %s316
    %s331 = sphi 0, %s317
    %s335 = sphi 0, %s335
    %s337 = sphi 0, %s335
    %s338 = sphi 0, %s337
    %s352 = sphi 0, %s338
    %s356 = sphi 0, %s356
    %s358 = sphi 0, %s356
    %s359 = sphi 0, %s358
    %s373 = sphi 0, %s359
    %s377 = sphi 0, %s377
    %s379 = sphi 0, %s377
    %s380 = sphi 0, %s379
    %s394 = sphi 0, %s380
    %s398 = sphi 0, %s398
    %s400 = sphi 0, %s398
    %s401 = sphi 0, %s400
    %s415 = sphi 0, %s401
    %s419 = sphi 0, %s419
    %s421 = sphi 0, %s419
    %s422 = sphi 0, %s421
    %s436 = sphi 0, %s422
    %s440 = sphi 0, %s440
    %s442 = sphi 0, %s440
    %s443 = sphi 0, %s442
    %s457 = sphi 0, %s443
    %s461 = sphi 0, %s461
    %s463 = sphi 0, %s461
    %s464 = sphi 0, %s463
    %s478 = sphi 0, %s464
    %s482 = sphi 0, %s482
    %s484 = sphi 0, %s482
    %s485 = sphi 0, %s484
    %s499 = sphi 0, %s485
    %s505 = sphi 0, %s507
    %s508 = sphi 0, %s505
    %s509 = sphi 0, %s508
    %s525 = sphi 0, %s509
  $region4: #{autoencoder_forward.1} parent=0 // loop_header_branch
    %31 = sbr.rel (%p29) target = $region8
  $region5: #{autoencoder_forward.1} parent=0 // loop_body
    %s33 = ssub.s32 %s28, 1
    %s34 = ssub.s32 %s28, 2
    %s35 = sadd.s32 %s28, 1
    %s36 = ssub.s32 %s28, %s35
    %p37 = scmp.eq.s32.totalorder %s36, 0
    %s39 = sadd.s32 %s38, 1
    %s40 = scalar_select %p37, %s38, %s39
    %p43 = pneg %p37
    %p44 = scmp.eq.s32.totalorder %s28, 1
    %p45 = por %p43, %p44
    %p46 = scmp.ne.s32.totalorder %s38, %s41
    %p47 = scmp.eq.s32.totalorder %s28, 0
    %p48 = por %p46, %p47
    %p49 = scmp.ne.s32.totalorder %s38, %s41
    %p50 = scmp.eq.s32.totalorder %s33, 1
    %p51 = por %p49, %p50
    %p52 = scmp.ne.s32.totalorder %s41, %s42
    %p53 = scmp.eq.s32.totalorder %s33, 0
    %p54 = por %p52, %p53
    %p55 = scmp.ne.s32.totalorder %s41, %s42
    %p56 = scmp.eq.s32.totalorder %s34, 1
    %p57 = por %p55, %p56
    %p59 = scmp.ne.s32.totalorder %s42, %s58
    %p60 = scmp.eq.s32.totalorder %s34, 0
    %p61 = por %p59, %p60
    %s63 = sadd.s32 %s62, 1
    %p66 = scmp.eq.s32.totalorder %s28, 1
    %p67 = scmp.ne.s32.totalorder %s62, %s64
    %p68 = scmp.eq.s32.totalorder %s28, 0
    %p69 = por %p67, %p68
    %p70 = scmp.ne.s32.totalorder %s62, %s64
    %p71 = scmp.eq.s32.totalorder %s33, 1
    %p72 = por %p70, %p71
    %p73 = scmp.ne.s32.totalorder %s64, %s65
    %p74 = scmp.eq.s32.totalorder %s33, 0
    %p75 = por %p73, %p74
    %p76 = scmp.ne.s32.totalorder %s64, %s65
    %p77 = scmp.eq.s32.totalorder %s34, 1
    %p78 = por %p76, %p77
    %p80 = scmp.ne.s32.totalorder %s65, %s79
    %p81 = scmp.eq.s32.totalorder %s34, 0
    %p82 = por %p80, %p81
    %s84 = sadd.s32 %s83, 1
    %p87 = scmp.eq.s32.totalorder %s28, 1
    %p88 = scmp.ne.s32.totalorder %s83, %s85
    %p89 = scmp.eq.s32.totalorder %s28, 0
    %p90 = por %p88, %p89
    %p91 = scmp.ne.s32.totalorder %s83, %s85
    %p92 = scmp.eq.s32.totalorder %s33, 1
    %p93 = por %p91, %p92
    %p94 = scmp.ne.s32.totalorder %s85, %s86
    %p95 = scmp.eq.s32.totalorder %s33, 0
    %p96 = por %p94, %p95
    %p97 = scmp.ne.s32.totalorder %s85, %s86
    %p98 = scmp.eq.s32.totalorder %s34, 1
    %p99 = por %p97, %p98
    %p101 = scmp.ne.s32.totalorder %s86, %s100
    %p102 = scmp.eq.s32.totalorder %s34, 0
    %p103 = por %p101, %p102
    %s105 = sadd.s32 %s104, 1
    %p108 = scmp.eq.s32.totalorder %s28, 1
    %p109 = scmp.ne.s32.totalorder %s104, %s106
    %p110 = scmp.eq.s32.totalorder %s28, 0
    %p111 = por %p109, %p110
    %p112 = scmp.ne.s32.totalorder %s104, %s106
    %p113 = scmp.eq.s32.totalorder %s33, 1
    %p114 = por %p112, %p113
    %p115 = scmp.ne.s32.totalorder %s106, %s107
    %p116 = scmp.eq.s32.totalorder %s33, 0
    %p117 = por %p115, %p116
    %p118 = scmp.ne.s32.totalorder %s106, %s107
    %p119 = scmp.eq.s32.totalorder %s34, 1
    %p120 = por %p118, %p119
    %p122 = scmp.ne.s32.totalorder %s107, %s121
    %p123 = scmp.eq.s32.totalorder %s34, 0
    %p124 = por %p122, %p123
    %s126 = sadd.s32 %s125, 1
    %p129 = scmp.eq.s32.totalorder %s28, 1
    %p130 = scmp.ne.s32.totalorder %s125, %s127
    %p131 = scmp.eq.s32.totalorder %s28, 0
    %p132 = por %p130, %p131
    %p133 = scmp.ne.s32.totalorder %s125, %s127
    %p134 = scmp.eq.s32.totalorder %s33, 1
    %p135 = por %p133, %p134
    %p136 = scmp.ne.s32.totalorder %s127, %s128
    %p137 = scmp.eq.s32.totalorder %s33, 0
    %p138 = por %p136, %p137
    %p139 = scmp.ne.s32.totalorder %s127, %s128
    %p140 = scmp.eq.s32.totalorder %s34, 1
    %p141 = por %p139, %p140
    %p143 = scmp.ne.s32.totalorder %s128, %s142
    %p144 = scmp.eq.s32.totalorder %s34, 0
    %p145 = por %p143, %p144
    %s147 = sadd.s32 %s146, 1
    %p150 = scmp.eq.s32.totalorder %s28, 1
    %p151 = scmp.ne.s32.totalorder %s146, %s148
    %p152 = scmp.eq.s32.totalorder %s28, 0
    %p153 = por %p151, %p152
    %p154 = scmp.ne.s32.totalorder %s146, %s148
    %p155 = scmp.eq.s32.totalorder %s33, 1
    %p156 = por %p154, %p155
    %p157 = scmp.ne.s32.totalorder %s148, %s149
    %p158 = scmp.eq.s32.totalorder %s33, 0
    %p159 = por %p157, %p158
    %p160 = scmp.ne.s32.totalorder %s148, %s149
    %p161 = scmp.eq.s32.totalorder %s34, 1
    %p162 = por %p160, %p161
    %p164 = scmp.ne.s32.totalorder %s149, %s163
    %p165 = scmp.eq.s32.totalorder %s34, 0
    %p166 = por %p164, %p165
    %s168 = sadd.s32 %s167, 1
    %p171 = scmp.eq.s32.totalorder %s28, 1
    %p172 = scmp.ne.s32.totalorder %s167, %s169
    %p173 = scmp.eq.s32.totalorder %s28, 0
    %p174 = por %p172, %p173
    %p175 = scmp.ne.s32.totalorder %s167, %s169
    %p176 = scmp.eq.s32.totalorder %s33, 1
    %p177 = por %p175, %p176
    %p178 = scmp.ne.s32.totalorder %s169, %s170
    %p179 = scmp.eq.s32.totalorder %s33, 0
    %p180 = por %p178, %p179
    %p181 = scmp.ne.s32.totalorder %s169, %s170
    %p182 = scmp.eq.s32.totalorder %s34, 1
    %p183 = por %p181, %p182
    %p185 = scmp.ne.s32.totalorder %s170, %s184
    %p186 = scmp.eq.s32.totalorder %s34, 0
    %p187 = por %p185, %p186
    %s189 = sadd.s32 %s188, 1
    %p192 = scmp.eq.s32.totalorder %s28, 1
    %p193 = scmp.ne.s32.totalorder %s188, %s190
    %p194 = scmp.eq.s32.totalorder %s28, 0
    %p195 = por %p193, %p194
    %p196 = scmp.ne.s32.totalorder %s188, %s190
    %p197 = scmp.eq.s32.totalorder %s33, 1
    %p198 = por %p196, %p197
    %p199 = scmp.ne.s32.totalorder %s190, %s191
    %p200 = scmp.eq.s32.totalorder %s33, 0
    %p201 = por %p199, %p200
    %p202 = scmp.ne.s32.totalorder %s190, %s191
    %p203 = scmp.eq.s32.totalorder %s34, 1
    %p204 = por %p202, %p203
    %p206 = scmp.ne.s32.totalorder %s191, %s205
    %p207 = scmp.eq.s32.totalorder %s34, 0
    %p208 = por %p206, %p207
    %s210 = sadd.s32 %s209, 1
    %p213 = scmp.eq.s32.totalorder %s28, 1
    %p214 = scmp.ne.s32.totalorder %s209, %s211
    %p215 = scmp.eq.s32.totalorder %s28, 0
    %p216 = por %p214, %p215
    %p217 = scmp.ne.s32.totalorder %s209, %s211
    %p218 = scmp.eq.s32.totalorder %s33, 1
    %p219 = por %p217, %p218
    %p220 = scmp.ne.s32.totalorder %s211, %s212
    %p221 = scmp.eq.s32.totalorder %s33, 0
    %p222 = por %p220, %p221
    %p223 = scmp.ne.s32.totalorder %s211, %s212
    %p224 = scmp.eq.s32.totalorder %s34, 1
    %p225 = por %p223, %p224
    %p227 = scmp.ne.s32.totalorder %s212, %s226
    %p228 = scmp.eq.s32.totalorder %s34, 0
    %p229 = por %p227, %p228
    %s231 = sadd.s32 %s230, 1
    %p234 = scmp.eq.s32.totalorder %s28, 1
    %p235 = scmp.ne.s32.totalorder %s230, %s232
    %p236 = scmp.eq.s32.totalorder %s28, 0
    %p237 = por %p235, %p236
    %p238 = scmp.ne.s32.totalorder %s230, %s232
    %p239 = scmp.eq.s32.totalorder %s33, 1
    %p240 = por %p238, %p239
    %p241 = scmp.ne.s32.totalorder %s232, %s233
    %p242 = scmp.eq.s32.totalorder %s33, 0
    %p243 = por %p241, %p242
    %p244 = scmp.ne.s32.totalorder %s232, %s233
    %p245 = scmp.eq.s32.totalorder %s34, 1
    %p246 = por %p244, %p245
    %p248 = scmp.ne.s32.totalorder %s233, %s247
    %p249 = scmp.eq.s32.totalorder %s34, 0
    %p250 = por %p248, %p249
    %s252 = sadd.s32 %s251, 1
    %p255 = scmp.eq.s32.totalorder %s28, 1
    %p256 = scmp.ne.s32.totalorder %s251, %s253
    %p257 = scmp.eq.s32.totalorder %s28, 0
    %p258 = por %p256, %p257
    %p259 = scmp.ne.s32.totalorder %s251, %s253
    %p260 = scmp.eq.s32.totalorder %s33, 1
    %p261 = por %p259, %p260
    %p262 = scmp.ne.s32.totalorder %s253, %s254
    %p263 = scmp.eq.s32.totalorder %s33, 0
    %p264 = por %p262, %p263
    %p265 = scmp.ne.s32.totalorder %s253, %s254
    %p266 = scmp.eq.s32.totalorder %s34, 1
    %p267 = por %p265, %p266
    %p269 = scmp.ne.s32.totalorder %s254, %s268
    %p270 = scmp.eq.s32.totalorder %s34, 0
    %p271 = por %p269, %p270
    %s273 = sadd.s32 %s272, 1
    %p276 = scmp.eq.s32.totalorder %s28, 1
    %p277 = scmp.ne.s32.totalorder %s272, %s274
    %p278 = scmp.eq.s32.totalorder %s28, 0
    %p279 = por %p277, %p278
    %p280 = scmp.ne.s32.totalorder %s272, %s274
    %p281 = scmp.eq.s32.totalorder %s33, 1
    %p282 = por %p280, %p281
    %p283 = scmp.ne.s32.totalorder %s274, %s275
    %p284 = scmp.eq.s32.totalorder %s33, 0
    %p285 = por %p283, %p284
    %p286 = scmp.ne.s32.totalorder %s274, %s275
    %p287 = scmp.eq.s32.totalorder %s34, 1
    %p288 = por %p286, %p287
    %p290 = scmp.ne.s32.totalorder %s275, %s289
    %p291 = scmp.eq.s32.totalorder %s34, 0
    %p292 = por %p290, %p291
    %s294 = sadd.s32 %s293, 1
    %p297 = scmp.eq.s32.totalorder %s28, 1
    %p298 = scmp.ne.s32.totalorder %s293, %s295
    %p299 = scmp.eq.s32.totalorder %s28, 0
    %p300 = por %p298, %p299
    %p301 = scmp.ne.s32.totalorder %s293, %s295
    %p302 = scmp.eq.s32.totalorder %s33, 1
    %p303 = por %p301, %p302
    %p304 = scmp.ne.s32.totalorder %s295, %s296
    %p305 = scmp.eq.s32.totalorder %s33, 0
    %p306 = por %p304, %p305
    %p307 = scmp.ne.s32.totalorder %s295, %s296
    %p308 = scmp.eq.s32.totalorder %s34, 1
    %p309 = por %p307, %p308
    %p311 = scmp.ne.s32.totalorder %s296, %s310
    %p312 = scmp.eq.s32.totalorder %s34, 0
    %p313 = por %p311, %p312
    %s315 = sadd.s32 %s314, 1
    %p318 = scmp.eq.s32.totalorder %s28, 1
    %p319 = scmp.ne.s32.totalorder %s314, %s316
    %p320 = scmp.eq.s32.totalorder %s28, 0
    %p321 = por %p319, %p320
    %p322 = scmp.ne.s32.totalorder %s314, %s316
    %p323 = scmp.eq.s32.totalorder %s33, 1
    %p324 = por %p322, %p323
    %p325 = scmp.ne.s32.totalorder %s316, %s317
    %p326 = scmp.eq.s32.totalorder %s33, 0
    %p327 = por %p325, %p326
    %p328 = scmp.ne.s32.totalorder %s316, %s317
    %p329 = scmp.eq.s32.totalorder %s34, 1
    %p330 = por %p328, %p329
    %p332 = scmp.ne.s32.totalorder %s317, %s331
    %p333 = scmp.eq.s32.totalorder %s34, 0
    %p334 = por %p332, %p333
    %s336 = sadd.s32 %s335, 1
    %p339 = scmp.eq.s32.totalorder %s28, 1
    %p340 = scmp.ne.s32.totalorder %s335, %s337
    %p341 = scmp.eq.s32.totalorder %s28, 0
    %p342 = por %p340, %p341
    %p343 = scmp.ne.s32.totalorder %s335, %s337
    %p344 = scmp.eq.s32.totalorder %s33, 1
    %p345 = por %p343, %p344
    %p346 = scmp.ne.s32.totalorder %s337, %s338
    %p347 = scmp.eq.s32.totalorder %s33, 0
    %p348 = por %p346, %p347
    %p349 = scmp.ne.s32.totalorder %s337, %s338
    %p350 = scmp.eq.s32.totalorder %s34, 1
    %p351 = por %p349, %p350
    %p353 = scmp.ne.s32.totalorder %s338, %s352
    %p354 = scmp.eq.s32.totalorder %s34, 0
    %p355 = por %p353, %p354
    %s357 = sadd.s32 %s356, 1
    %p360 = scmp.eq.s32.totalorder %s28, 1
    %p361 = scmp.ne.s32.totalorder %s356, %s358
    %p362 = scmp.eq.s32.totalorder %s28, 0
    %p363 = por %p361, %p362
    %p364 = scmp.ne.s32.totalorder %s356, %s358
    %p365 = scmp.eq.s32.totalorder %s33, 1
    %p366 = por %p364, %p365
    %p367 = scmp.ne.s32.totalorder %s358, %s359
    %p368 = scmp.eq.s32.totalorder %s33, 0
    %p369 = por %p367, %p368
    %p370 = scmp.ne.s32.totalorder %s358, %s359
    %p371 = scmp.eq.s32.totalorder %s34, 1
    %p372 = por %p370, %p371
    %p374 = scmp.ne.s32.totalorder %s359, %s373
    %p375 = scmp.eq.s32.totalorder %s34, 0
    %p376 = por %p374, %p375
    %s378 = sadd.s32 %s377, 1
    %p381 = scmp.eq.s32.totalorder %s28, 1
    %p382 = scmp.ne.s32.totalorder %s377, %s379
    %p383 = scmp.eq.s32.totalorder %s28, 0
    %p384 = por %p382, %p383
    %p385 = scmp.ne.s32.totalorder %s377, %s379
    %p386 = scmp.eq.s32.totalorder %s33, 1
    %p387 = por %p385, %p386
    %p388 = scmp.ne.s32.totalorder %s379, %s380
    %p389 = scmp.eq.s32.totalorder %s33, 0
    %p390 = por %p388, %p389
    %p391 = scmp.ne.s32.totalorder %s379, %s380
    %p392 = scmp.eq.s32.totalorder %s34, 1
    %p393 = por %p391, %p392
    %p395 = scmp.ne.s32.totalorder %s380, %s394
    %p396 = scmp.eq.s32.totalorder %s34, 0
    %p397 = por %p395, %p396
    %s399 = sadd.s32 %s398, 1
    %p402 = scmp.eq.s32.totalorder %s28, 1
    %p403 = scmp.ne.s32.totalorder %s398, %s400
    %p404 = scmp.eq.s32.totalorder %s28, 0
    %p405 = por %p403, %p404
    %p406 = scmp.ne.s32.totalorder %s398, %s400
    %p407 = scmp.eq.s32.totalorder %s33, 1
    %p408 = por %p406, %p407
    %p409 = scmp.ne.s32.totalorder %s400, %s401
    %p410 = scmp.eq.s32.totalorder %s33, 0
    %p411 = por %p409, %p410
    %p412 = scmp.ne.s32.totalorder %s400, %s401
    %p413 = scmp.eq.s32.totalorder %s34, 1
    %p414 = por %p412, %p413
    %p416 = scmp.ne.s32.totalorder %s401, %s415
    %p417 = scmp.eq.s32.totalorder %s34, 0
    %p418 = por %p416, %p417
    %s420 = sadd.s32 %s419, 1
    %p423 = scmp.eq.s32.totalorder %s28, 1
    %p424 = scmp.ne.s32.totalorder %s419, %s421
    %p425 = scmp.eq.s32.totalorder %s28, 0
    %p426 = por %p424, %p425
    %p427 = scmp.ne.s32.totalorder %s419, %s421
    %p428 = scmp.eq.s32.totalorder %s33, 1
    %p429 = por %p427, %p428
    %p430 = scmp.ne.s32.totalorder %s421, %s422
    %p431 = scmp.eq.s32.totalorder %s33, 0
    %p432 = por %p430, %p431
    %p433 = scmp.ne.s32.totalorder %s421, %s422
    %p434 = scmp.eq.s32.totalorder %s34, 1
    %p435 = por %p433, %p434
    %p437 = scmp.ne.s32.totalorder %s422, %s436
    %p438 = scmp.eq.s32.totalorder %s34, 0
    %p439 = por %p437, %p438
    %s441 = sadd.s32 %s440, 1
    %p444 = scmp.eq.s32.totalorder %s28, 1
    %p445 = scmp.ne.s32.totalorder %s440, %s442
    %p446 = scmp.eq.s32.totalorder %s28, 0
    %p447 = por %p445, %p446
    %p448 = scmp.ne.s32.totalorder %s440, %s442
    %p449 = scmp.eq.s32.totalorder %s33, 1
    %p450 = por %p448, %p449
    %p451 = scmp.ne.s32.totalorder %s442, %s443
    %p452 = scmp.eq.s32.totalorder %s33, 0
    %p453 = por %p451, %p452
    %p454 = scmp.ne.s32.totalorder %s442, %s443
    %p455 = scmp.eq.s32.totalorder %s34, 1
    %p456 = por %p454, %p455
    %p458 = scmp.ne.s32.totalorder %s443, %s457
    %p459 = scmp.eq.s32.totalorder %s34, 0
    %p460 = por %p458, %p459
    %s462 = sadd.s32 %s461, 1
    %p465 = scmp.eq.s32.totalorder %s28, 1
    %p466 = scmp.ne.s32.totalorder %s461, %s463
    %p467 = scmp.eq.s32.totalorder %s28, 0
    %p468 = por %p466, %p467
    %p469 = scmp.ne.s32.totalorder %s461, %s463
    %p470 = scmp.eq.s32.totalorder %s33, 1
    %p471 = por %p469, %p470
    %p472 = scmp.ne.s32.totalorder %s463, %s464
    %p473 = scmp.eq.s32.totalorder %s33, 0
    %p474 = por %p472, %p473
    %p475 = scmp.ne.s32.totalorder %s463, %s464
    %p476 = scmp.eq.s32.totalorder %s34, 1
    %p477 = por %p475, %p476
    %p479 = scmp.ne.s32.totalorder %s464, %s478
    %p480 = scmp.eq.s32.totalorder %s34, 0
    %p481 = por %p479, %p480
    %s483 = sadd.s32 %s482, 1
    %p486 = scmp.eq.s32.totalorder %s28, 1
    %p487 = scmp.ne.s32.totalorder %s482, %s484
    %p488 = scmp.eq.s32.totalorder %s28, 0
    %p489 = por %p487, %p488
    %p490 = scmp.ne.s32.totalorder %s482, %s484
    %p491 = scmp.eq.s32.totalorder %s33, 1
    %p492 = por %p490, %p491
    %p493 = scmp.ne.s32.totalorder %s484, %s485
    %p494 = scmp.eq.s32.totalorder %s33, 0
    %p495 = por %p493, %p494
    %p496 = scmp.ne.s32.totalorder %s484, %s485
    %p497 = scmp.eq.s32.totalorder %s34, 1
    %p498 = por %p496, %p497
    %p500 = scmp.ne.s32.totalorder %s485, %s499
    %p501 = scmp.eq.s32.totalorder %s34, 0
    %p502 = por %p500, %p501
    %s503 = ssub.s32 %s28, %s35
    %p504 = scmp.eq.s32.totalorder %s503, 0
    %s506 = sadd.s32 %s505, 1
    %s507 = scalar_select %p504, %s505, %s506
    %p510 = pneg %p504
    %p511 = scmp.eq.s32.totalorder %s28, 1
    %p512 = por %p510, %p511
    %p513 = scmp.ne.s32.totalorder %s505, %s508
    %p514 = scmp.eq.s32.totalorder %s28, 0
    %p515 = por %p513, %p514
    %p516 = scmp.ne.s32.totalorder %s505, %s508
    %p517 = scmp.eq.s32.totalorder %s33, 1
    %p518 = por %p516, %p517
    %p519 = scmp.ne.s32.totalorder %s508, %s509
    %p520 = scmp.eq.s32.totalorder %s33, 0
    %p521 = por %p519, %p520
    %p522 = scmp.ne.s32.totalorder %s508, %s509
    %p523 = scmp.eq.s32.totalorder %s34, 1
    %p524 = por %p522, %p523
    %p526 = scmp.ne.s32.totalorder %s509, %s525
    %p527 = scmp.eq.s32.totalorder %s34, 0
    %p528 = por %p526, %p527
    %p529 = scmp.le.s32.totalorder 1, %s28
    %p530 = scmp.lt.s32.totalorder %s28, 3
    %p531 = pnand %p529, %p530
    %p532 = pneg %p531
    // Predicated region
    $region9: #{autoencoder_forward.1} parent=5 // pred_check
      _
    $region10: #{autoencoder_forward.1} parent=5 // pred_check_branch
      %534 = sbr.rel (%p531) target = $region12
    $region11: #{autoencoder_forward.1} parent=5 // pred_region
      %s535 = ssub.s32 %s28, 1
      // Predicated region
      $region13: #{autoencoder_forward.1} parent=11 // pred_check
        %p536 = pneg %p75
      $region14: #{autoencoder_forward.1} parent=11 // pred_check_branch
        %538 = sbr.rel (%p536) target = $region16
      $region15: #{autoencoder_forward.1} parent=11 // pred_region
        _
      $region16: #{autoencoder_forward.1} parent=11 // pred_fallthru
        _
      // Predicated region
      $region17: #{autoencoder_forward.1} parent=11 // pred_check
        %p539 = pneg %p96
      $region18: #{autoencoder_forward.1} parent=11 // pred_check_branch
        %541 = sbr.rel (%p539) target = $region20
      $region19: #{autoencoder_forward.1} parent=11 // pred_region
        _
      $region20: #{autoencoder_forward.1} parent=11 // pred_fallthru
        _
      // Predicated region
      $region21: #{autoencoder_forward.1} parent=11 // pred_check
        %p542 = pneg %p117
      $region22: #{autoencoder_forward.1} parent=11 // pred_check_branch
        %544 = sbr.rel (%p542) target = $region24
      $region23: #{autoencoder_forward.1} parent=11 // pred_region
        _
      $region24: #{autoencoder_forward.1} parent=11 // pred_fallthru
        _
      // Predicated region
      $region25: #{autoencoder_forward.1} parent=11 // pred_check
        %p545 = pneg %p138
      $region26: #{autoencoder_forward.1} parent=11 // pred_check_branch
        %547 = sbr.rel (%p545) target = $region28
      $region27: #{autoencoder_forward.1} parent=11 // pred_region
        _
      $region28: #{autoencoder_forward.1} parent=11 // pred_fallthru
        _
      // Predicated region
      $region29: #{autoencoder_forward.1} parent=11 // pred_check
        %p548 = pneg %p159
      $region30: #{autoencoder_forward.1} parent=11 // pred_check_branch
        %550 = sbr.rel (%p548) target = $region32
      $region31: #{autoencoder_forward.1} parent=11 // pred_region
        _
      $region32: #{autoencoder_forward.1} parent=11 // pred_fallthru
        _
      // Predicated region
      $region33: #{autoencoder_forward.1} parent=11 // pred_check
        %p551 = pneg %p180
      $region34: #{autoencoder_forward.1} parent=11 // pred_check_branch
        %553 = sbr.rel (%p551) target = $region36
      $region35: #{autoencoder_forward.1} parent=11 // pred_region
        _
      $region36: #{autoencoder_forward.1} parent=11 // pred_fallthru
        _
      // Predicated region
      $region37: #{autoencoder_forward.1} parent=11 // pred_check
        %p554 = pneg %p201
      $region38: #{autoencoder_forward.1} parent=11 // pred_check_branch
        %556 = sbr.rel (%p554) target = $region40
      $region39: #{autoencoder_forward.1} parent=11 // pred_region
        _
      $region40: #{autoencoder_forward.1} parent=11 // pred_fallthru
        _
      // Predicated region
      $region41: #{autoencoder_forward.1} parent=11 // pred_check
        %p557 = pneg %p222
      $region42: #{autoencoder_forward.1} parent=11 // pred_check_branch
        %559 = sbr.rel (%p557) target = $region44
      $region43: #{autoencoder_forward.1} parent=11 // pred_region
        _
      $region44: #{autoencoder_forward.1} parent=11 // pred_fallthru
        _
      // Predicated region
      $region45: #{autoencoder_forward.1} parent=11 // pred_check
        %p560 = pneg %p243
      $region46: #{autoencoder_forward.1} parent=11 // pred_check_branch
        %562 = sbr.rel (%p560) target = $region48
      $region47: #{autoencoder_forward.1} parent=11 // pred_region
        _
      $region48: #{autoencoder_forward.1} parent=11 // pred_fallthru
        _
      // Predicated region
      $region49: #{autoencoder_forward.1} parent=11 // pred_check
        %p563 = pneg %p264
      $region50: #{autoencoder_forward.1} parent=11 // pred_check_branch
        %565 = sbr.rel (%p563) target = $region52
      $region51: #{autoencoder_forward.1} parent=11 // pred_region
        _
      $region52: #{autoencoder_forward.1} parent=11 // pred_fallthru
        _
      // Predicated region
      $region53: #{autoencoder_forward.1} parent=11 // pred_check
        %p566 = pneg %p285
      $region54: #{autoencoder_forward.1} parent=11 // pred_check_branch
        %568 = sbr.rel (%p566) target = $region56
      $region55: #{autoencoder_forward.1} parent=11 // pred_region
        _
      $region56: #{autoencoder_forward.1} parent=11 // pred_fallthru
        _
      // Predicated region
      $region57: #{autoencoder_forward.1} parent=11 // pred_check
        %p569 = pneg %p306
      $region58: #{autoencoder_forward.1} parent=11 // pred_check_branch
        %571 = sbr.rel (%p569) target = $region60
      $region59: #{autoencoder_forward.1} parent=11 // pred_region
        _
      $region60: #{autoencoder_forward.1} parent=11 // pred_fallthru
        _
      // Predicated region
      $region61: #{autoencoder_forward.1} parent=11 // pred_check
        %p572 = pneg %p327
      $region62: #{autoencoder_forward.1} parent=11 // pred_check_branch
        %574 = sbr.rel (%p572) target = $region64
      $region63: #{autoencoder_forward.1} parent=11 // pred_region
        _
      $region64: #{autoencoder_forward.1} parent=11 // pred_fallthru
        _
      // Predicated region
      $region65: #{autoencoder_forward.1} parent=11 // pred_check
        %p575 = pneg %p348
      $region66: #{autoencoder_forward.1} parent=11 // pred_check_branch
        %577 = sbr.rel (%p575) target = $region68
      $region67: #{autoencoder_forward.1} parent=11 // pred_region
        _
      $region68: #{autoencoder_forward.1} parent=11 // pred_fallthru
        _
      // Predicated region
      $region69: #{autoencoder_forward.1} parent=11 // pred_check
        %p578 = pneg %p369
      $region70: #{autoencoder_forward.1} parent=11 // pred_check_branch
        %580 = sbr.rel (%p578) target = $region72
      $region71: #{autoencoder_forward.1} parent=11 // pred_region
        _
      $region72: #{autoencoder_forward.1} parent=11 // pred_fallthru
        _
      // Predicated region
      $region73: #{autoencoder_forward.1} parent=11 // pred_check
        %p581 = pneg %p390
      $region74: #{autoencoder_forward.1} parent=11 // pred_check_branch
        %583 = sbr.rel (%p581) target = $region76
      $region75: #{autoencoder_forward.1} parent=11 // pred_region
        _
      $region76: #{autoencoder_forward.1} parent=11 // pred_fallthru
        _
      // Predicated region
      $region77: #{autoencoder_forward.1} parent=11 // pred_check
        %p584 = pneg %p411
      $region78: #{autoencoder_forward.1} parent=11 // pred_check_branch
        %586 = sbr.rel (%p584) target = $region80
      $region79: #{autoencoder_forward.1} parent=11 // pred_region
        _
      $region80: #{autoencoder_forward.1} parent=11 // pred_fallthru
        _
      // Predicated region
      $region81: #{autoencoder_forward.1} parent=11 // pred_check
        %p587 = pneg %p432
      $region82: #{autoencoder_forward.1} parent=11 // pred_check_branch
        %589 = sbr.rel (%p587) target = $region84
      $region83: #{autoencoder_forward.1} parent=11 // pred_region
        _
      $region84: #{autoencoder_forward.1} parent=11 // pred_fallthru
        _
      // Predicated region
      $region85: #{autoencoder_forward.1} parent=11 // pred_check
        %p590 = pneg %p453
      $region86: #{autoencoder_forward.1} parent=11 // pred_check_branch
        %592 = sbr.rel (%p590) target = $region88
      $region87: #{autoencoder_forward.1} parent=11 // pred_region
        _
      $region88: #{autoencoder_forward.1} parent=11 // pred_fallthru
        _
      // Predicated region
      $region89: #{autoencoder_forward.1} parent=11 // pred_check
        %p593 = pneg %p474
      $region90: #{autoencoder_forward.1} parent=11 // pred_check_branch
        %595 = sbr.rel (%p593) target = $region92
      $region91: #{autoencoder_forward.1} parent=11 // pred_region
        _
      $region92: #{autoencoder_forward.1} parent=11 // pred_fallthru
        _
      // Predicated region
      $region93: #{autoencoder_forward.1} parent=11 // pred_check
        %p596 = pneg %p495
      $region94: #{autoencoder_forward.1} parent=11 // pred_check_branch
        %598 = sbr.rel (%p596) target = $region96
      $region95: #{autoencoder_forward.1} parent=11 // pred_region
        _
      $region96: #{autoencoder_forward.1} parent=11 // pred_fallthru
        _
    $region12: #{autoencoder_forward.1} parent=5 // pred_fallthru
      _
    %p599 = scmp.lt.s32.totalorder %s28, 2
    // Predicated region
    $region97: #{autoencoder_forward.1} parent=5 // pred_check
      %p600 = pneg %p599
    $region98: #{autoencoder_forward.1} parent=5 // pred_check_branch
      %602 = sbr.rel (%p600) target = $region100
    $region99: #{autoencoder_forward.1} parent=5 // pred_region
      // Predicated region
      $region101: #{autoencoder_forward.1} parent=99 // pred_check
        %p603 = pneg %p48
      $region102: #{autoencoder_forward.1} parent=99 // pred_check_branch
        %605 = sbr.rel (%p603) target = $region104
      $region103: #{autoencoder_forward.1} parent=99 // pred_region
        %p606 = scmp.lt.s32.totalorder %s28, 1
        %s607 = scalar_select %p606, %s28, 1
        %s608 = smul.addr %s607, 2
        %s609 = smul.addr %s608, 8
        %s610 = scalar_lea.vmem %s0, %s609
      $region104: #{autoencoder_forward.1} parent=99 // pred_fallthru
        _
    $region100: #{autoencoder_forward.1} parent=5 // pred_fallthru
      _
    %p611 = scmp.le.s32.totalorder 1, %s28
    %p612 = scmp.lt.s32.totalorder %s28, 3
    %p613 = pnand %p611, %p612
    %p614 = pneg %p613
    // Predicated region
    $region105: #{autoencoder_forward.1} parent=5 // pred_check
      _
    $region106: #{autoencoder_forward.1} parent=5 // pred_check_branch
      %616 = sbr.rel (%p613) target = $region108
    $region107: #{autoencoder_forward.1} parent=5 // pred_region
      %s617 = ssub.s32 %s28, 1
      %p618 = scmp.lt.s32.totalorder %s33, 1
      %s619 = scalar_select %p618, %s33, 1
      %s620 = smul.addr %s619, 2
      %s621 = smul.addr %s620, 8
      %s622 = scalar_lea.vmem %s0, %s621
      %p623 = pneg %p54
      %p624 = pneg %p51
      %p625 = pneg %p75
      %p626 = pneg %p72
      %p627 = pneg %p96
      %p628 = pneg %p93
      %p629 = pneg %p117
      %p630 = pneg %p114
      %p631 = pneg %p138
      %p632 = pneg %p135
      %p633 = pneg %p159
      %p634 = pneg %p156
      %p635 = pneg %p180
      %p636 = pneg %p177
      %p637 = pneg %p201
      %p638 = pneg %p198
      %p639 = pneg %p222
      %p640 = pneg %p219
      %p641 = pneg %p243
      %p642 = pneg %p240
      %p643 = pneg %p264
      %p644 = pneg %p261
      %p645 = pneg %p285
      %p646 = pneg %p282
      %p647 = pneg %p306
      %p648 = pneg %p303
      %p649 = pneg %p327
      %p650 = pneg %p324
      %p651 = pneg %p348
      %p652 = pneg %p345
      %p653 = pneg %p369
      %p654 = pneg %p366
      %p655 = pneg %p390
      %p656 = pneg %p387
      %p657 = pneg %p411
      %p658 = pneg %p408
      %p659 = pneg %p432
      %p660 = pneg %p429
      %p661 = pneg %p453
      %p662 = pneg %p450
      %p663 = pneg %p474
      %p664 = pneg %p471
      %p665 = pneg %p495
      %p666 = pneg %p492
      %p667 = pneg %p521
      %p668 = pneg %p518
      %p669 = scmp.lt.s32.totalorder %s33, 1
      %s670 = scalar_select %p669, %s33, 1
      %s671 = smul.addr %s670, 2
      %s672 = smul.addr %s671, 8
      %s673 = scalar_lea.vmem %s22, %s672
      %p674 = scmp.lt.s32.totalorder %s33, 1
      %s675 = scalar_select %p674, %s33, 1
      %s676 = smul.addr %s675, 2
      %s677 = smul.addr %s676, 8
      %s678 = scalar_lea.vmem %s0, %s677
      %p679 = scmp.lt.s32.totalorder %s33, 1
      %s680 = scalar_select %p679, %s33, 1
      %s681 = smul.addr %s680, 2
      %s682 = smul.addr %s681, 8
      %s683 = scalar_lea.vmem %s22, %s682
      %v685 = vld [vmem:[%s678] sm:$0xff]
      %v686 = vld [vmem:[%s678 + $0x8] sm:$0xff]
      %v687 = vpack.c.bf16 %v685, %v685
      %v688 = vpack.c.bf16 %v686, %v686
      %v689 = vld [vmem:[%s1] sm:$0xff]
      %v690 = vld [vmem:[%s1 + $0x8] sm:$0xff]
      %v691 = vld [vmem:[%s1 + $0x10] sm:$0xff]
      %v692 = vld [vmem:[%s1 + $0x18] sm:$0xff]
      %v693 = vld [vmem:[%s1 + $0x20] sm:$0xff]
      %v694 = vld [vmem:[%s1 + $0x28] sm:$0xff]
      %v695 = vld [vmem:[%s1 + $0x30] sm:$0xff]
      %v696 = vld [vmem:[%s1 + $0x38] sm:$0xff]
      %v697 = vld [vmem:[%s1 + $0x40] sm:$0xff]
      %v698 = vld [vmem:[%s1 + $0x48] sm:$0xff]
      %v699 = vld [vmem:[%s1 + $0x50] sm:$0xff]
      %v700 = vld [vmem:[%s1 + $0x58] sm:$0xff]
      %v701 = vld [vmem:[%s1 + $0x60] sm:$0xff]
      %v702 = vld [vmem:[%s1 + $0x68] sm:$0xff]
      %v703 = vld [vmem:[%s1 + $0x70] sm:$0xff]
      %v704 = vld [vmem:[%s1 + $0x78] sm:$0xff]
      %v705 = vld [vmem:[%s1 + $0x80] sm:$0xff]
      %v706 = vld [vmem:[%s1 + $0x88] sm:$0xff]
      %v707 = vld [vmem:[%s1 + $0x90] sm:$0xff]
      %v708 = vld [vmem:[%s1 + $0x98] sm:$0xff]
      %v709 = vld [vmem:[%s1 + $0xa0] sm:$0xff]
      %v710 = vld [vmem:[%s1 + $0xa8] sm:$0xff]
      %v711 = vld [vmem:[%s1 + $0xb0] sm:$0xff]
      %v712 = vld [vmem:[%s1 + $0xb8] sm:$0xff]
      %v713 = vld [vmem:[%s3] sm:$0xff]
      %v715 = vlaneseq
      %v716 = vshrl.u32 %v715, 7
      %v717 = vsub.s32 0, %v716
      %v718 = vrot.slane %v713, %v717
      %v719 = vlaneseq
      %v720 = vshrl.u32 %v719, 7
      %v721 = vsub.s32 4, %v720
      %v722 = vrot.slane %v713, %v721
      %v725 = vlaneseq
      %v726 = vshrl.u32 %v725, 7
      %v727 = vsub.s32 0, %v726
      %v728 = vrot.slane %v718, %v727
      %v729 = vlaneseq
      %v730 = vshrl.u32 %v729, 7
      %v731 = vsub.s32 0, %v730
      %v732 = vrot.slane %v722, %v731
      %v757 = vunpack.c.l.b16 %v689
      %v758 = vunpack.c.h.b16 %v689
      %v759 = vunpack.c.l.b16 %v690
      %v760 = vunpack.c.h.b16 %v690
      %v761 = vunpack.c.l.b16 %v691
      %v762 = vunpack.c.h.b16 %v691
      %v763 = vunpack.c.l.b16 %v692
      %v764 = vunpack.c.h.b16 %v692
      %v765 = vunpack.c.l.b16 %v693
      %v766 = vunpack.c.h.b16 %v693
      %v767 = vunpack.c.l.b16 %v694
      %v768 = vunpack.c.h.b16 %v694
      %v769 = vunpack.c.l.b16 %v695
      %v770 = vunpack.c.h.b16 %v695
      %v771 = vunpack.c.l.b16 %v696
      %v772 = vunpack.c.h.b16 %v696
      %v773 = vunpack.c.l.b16 %v697
      %v774 = vunpack.c.h.b16 %v697
      %v775 = vunpack.c.l.b16 %v698
      %v776 = vunpack.c.h.b16 %v698
      %v777 = vunpack.c.l.b16 %v699
      %v778 = vunpack.c.h.b16 %v699
      %v779 = vunpack.c.l.b16 %v700
      %v780 = vunpack.c.h.b16 %v700
      %v781 = vunpack.c.l.b16 %v701
      %v782 = vunpack.c.h.b16 %v701
      %v783 = vunpack.c.l.b16 %v702
      %v784 = vunpack.c.h.b16 %v702
      %v785 = vunpack.c.l.b16 %v703
      %v786 = vunpack.c.h.b16 %v703
      %v787 = vunpack.c.l.b16 %v704
      %v788 = vunpack.c.h.b16 %v704
      %v789 = vunpack.c.l.b16 %v705
      %v790 = vunpack.c.h.b16 %v705
      %v791 = vunpack.c.l.b16 %v706
      %v792 = vunpack.c.h.b16 %v706
      %v793 = vunpack.c.l.b16 %v707
      %v794 = vunpack.c.h.b16 %v707
      %v795 = vunpack.c.l.b16 %v708
      %v796 = vunpack.c.h.b16 %v708
      %v797 = vunpack.c.l.b16 %v709
      %v798 = vunpack.c.h.b16 %v709
      %v799 = vunpack.c.l.b16 %v710
      %v800 = vunpack.c.h.b16 %v710
      %v801 = vunpack.c.l.b16 %v711
      %v802 = vunpack.c.h.b16 %v711
      %v803 = vunpack.c.l.b16 %v712
      %v804 = vunpack.c.h.b16 %v712
      %v805 = vpack.c.b16 %v759, %v757
      %v806 = vpack.c.b16 %v760, %v758
      %v807 = vpack.c.b16 %v763, %v761
      %v808 = vpack.c.b16 %v764, %v762
      %v809 = vpack.c.b16 %v767, %v765
      %v810 = vpack.c.b16 %v768, %v766
      %v811 = vpack.c.b16 %v771, %v769
      %v812 = vpack.c.b16 %v772, %v770
      %v813 = vpack.c.b16 %v775, %v773
      %v814 = vpack.c.b16 %v776, %v774
      %v815 = vpack.c.b16 %v779, %v777
      %v816 = vpack.c.b16 %v780, %v778
      %v817 = vpack.c.b16 %v783, %v781
      %v818 = vpack.c.b16 %v784, %v782
      %v819 = vpack.c.b16 %v787, %v785
      %v820 = vpack.c.b16 %v788, %v786
      %v821 = vpack.c.b16 %v791, %v789
      %v822 = vpack.c.b16 %v792, %v790
      %v823 = vpack.c.b16 %v795, %v793
      %v824 = vpack.c.b16 %v796, %v794
      %v825 = vpack.c.b16 %v799, %v797
      %v826 = vpack.c.b16 %v800, %v798
      %v827 = vpack.c.b16 %v803, %v801
      %v828 = vpack.c.b16 %v804, %v802
      %vm853 = vcmask 523264
      %v855 = vsel %vm853, %v688, 0
      %857 = vmatprep.subr.bf16.mxu0 %v806
      %858 = vmatpush1.bf16.msra.mxu0 %v805
      %859 = vmatprep.subr.bf16.mxu0 %v808
      %860 = vmatpush1.bf16.msra.mxu0 %v807
      %861 = vmatprep.subr.bf16.mxu0 %v810
      %862 = vmatpush1.bf16.msra.mxu0 %v809
      %863 = vmatprep.subr.bf16.mxu0 %v812
      %864 = vmatpush1.bf16.msra.mxu0 %v811
      %865 = vmatprep.subr.bf16.mxu0 %v814
      %866 = vmatpush1.bf16.msra.mxu0 %v813
      %867 = vmatprep.subr.bf16.mxu0 %v816
      %868 = vmatpush1.bf16.msra.mxu0 %v815
      %869 = vmatprep.subr.bf16.mxu0 %v818
      %870 = vmatpush1.bf16.msra.mxu0 %v817
      %871 = vmatprep.subr.bf16.mxu0 %v820
      %872 = vmatpush1.bf16.msra.mxu0 %v819
      %873 = vmatprep.subr.bf16.mxu0 %v822
      %874 = vmatpush1.bf16.msra.mxu0 %v821
      %875 = vmatprep.subr.bf16.mxu0 %v824
      %876 = vmatpush1.bf16.msra.mxu0 %v823
      %877 = vmatprep.subr.bf16.mxu0 %v826
      %878 = vmatpush1.bf16.msra.mxu0 %v825
      %879 = vmatprep.subr.bf16.mxu0 %v828
      %880 = vmatpush1.bf16.msra.mxu0 %v827
      %881 = vmatprep.subr.bf16.mxu0 0
      %882 = vmatpush1.bf16.msra.mxu0 0
      %883 = vmatprep.subr.bf16.mxu0 0
      %884 = vmatpush1.bf16.msra.mxu0 0
      %885 = vmatprep.subr.bf16.mxu0 0
      %886 = vmatpush1.bf16.msra.mxu0 0
      %887 = vmatprep.subr.bf16.mxu0 0
      %888 = vmatpush1.bf16.msra.mxu0 0
      %889 = vmatprep.mubr.bf16.mxu0 %v855
      %890 = vmatmul.mubr.bf16.gmra.mrb[0].mxu0 %v687
      %v891 = vpop.f32.mrb[0].mxu0
      %v892 = vadd.f32 %v728, %v891
      %v893 = vpop.f32.mrb[0].mxu0
      %v894 = vadd.f32 %v732, %v893
      %v895 = vpop.f32.mrb[0].mxu0
      %v896 = vpop.f32.mrb[0].mxu0
      %897 = vdwg.mxu0
      %vm898 = vcmp.gt.f32.partialorder %v892, 0.0
      %vm899 = vcmp.gt.f32.partialorder %v894, 0.0
      %v900 = vlaneseq
      %v901 = vshrl.u32 %v900, 7
      %v902 = vsub.s32 3, %v901
      %v903 = vrot.slane %v713, %v902
      %v904 = vlaneseq
      %v905 = vshrl.u32 %v904, 7
      %v906 = vsub.s32 7, %v905
      %v907 = vrot.slane %v713, %v906
      %v910 = vlaneseq
      %v911 = vshrl.u32 %v910, 7
      %v912 = vsub.s32 3, %v911
      %v913 = vrot.slane %v903, %v912
      %v914 = vlaneseq
      %v915 = vshrl.u32 %v914, 7
      %v916 = vsub.s32 3, %v915
      %v917 = vrot.slane %v907, %v916
      %v918 = vmul.f32 %v913, %v892
      %v919 = vmul.f32 %v917, %v894
      %v920 = vsel %vm898, %v892, %v918
      %v921 = vsel %vm899, %v894, %v919
      %v922 = vlaneseq
      %v923 = vshrl.u32 %v922, 7
      %v924 = vsub.s32 1, %v923
      %v925 = vrot.slane %v713, %v924
      %v926 = vlaneseq
      %v927 = vshrl.u32 %v926, 7
      %v928 = vsub.s32 5, %v927
      %v929 = vrot.slane %v713, %v928
      %v932 = vlaneseq
      %v933 = vshrl.u32 %v932, 7
      %v934 = vsub.s32 1, %v933
      %v935 = vrot.slane %v925, %v934
      %v936 = vlaneseq
      %v937 = vshrl.u32 %v936, 7
      %v938 = vsub.s32 1, %v937
      %v939 = vrot.slane %v929, %v938
      %v940 = vmul.f32 %v920, %v935
      %v941 = vmul.f32 %v921, %v939
      %v942 = vlaneseq
      %v943 = vshrl.u32 %v942, 7
      %v944 = vsub.s32 2, %v943
      %v945 = vrot.slane %v713, %v944
      %v946 = vlaneseq
      %v947 = vshrl.u32 %v946, 7
      %v948 = vsub.s32 6, %v947
      %v949 = vrot.slane %v713, %v948
      %v952 = vlaneseq
      %v953 = vshrl.u32 %v952, 7
      %v954 = vsub.s32 2, %v953
      %v955 = vrot.slane %v945, %v954
      %v956 = vlaneseq
      %v957 = vshrl.u32 %v956, 7
      %v958 = vsub.s32 2, %v957
      %v959 = vrot.slane %v949, %v958
      %v960 = vadd.f32 %v940, %v955
      %v961 = vadd.f32 %v941, %v959
      %v962 = vld [vmem:[%s2] sm:$0xff]
      %v963 = vld [vmem:[%s2 + $0x8] sm:$0xff]
      %v964 = vld [vmem:[%s2 + $0x10] sm:$0xff]
      %v965 = vld [vmem:[%s2 + $0x18] sm:$0xff]
      %v966 = vld [vmem:[%s2 + $0x20] sm:$0xff]
      %v967 = vld [vmem:[%s2 + $0x28] sm:$0xff]
      %v968 = vld [vmem:[%s2 + $0x30] sm:$0xff]
      %v969 = vld [vmem:[%s2 + $0x38] sm:$0xff]
      %v970 = vld [vmem:[%s2 + $0x40] sm:$0xff]
      %v971 = vld [vmem:[%s2 + $0x48] sm:$0xff]
      %v972 = vld [vmem:[%s2 + $0x50] sm:$0xff]
      %v973 = vld [vmem:[%s2 + $0x58] sm:$0xff]
      %v974 = vld [vmem:[%s2 + $0x60] sm:$0xff]
      %v975 = vld [vmem:[%s2 + $0x68] sm:$0xff]
      %v976 = vld [vmem:[%s2 + $0x70] sm:$0xff]
      %v977 = vld [vmem:[%s2 + $0x78] sm:$0xff]
      %v978 = vld [vmem:[%s2 + $0x80] sm:$0xff]
      %v979 = vld [vmem:[%s2 + $0x88] sm:$0xff]
      %v980 = vld [vmem:[%s2 + $0x90] sm:$0xff]
      %v981 = vld [vmem:[%s2 + $0x98] sm:$0xff]
      %v982 = vld [vmem:[%s2 + $0xa0] sm:$0xff]
      %v983 = vld [vmem:[%s2 + $0xa8] sm:$0xff]
      %v984 = vld [vmem:[%s2 + $0xb0] sm:$0xff]
      %v985 = vld [vmem:[%s2 + $0xb8] sm:$0xff]
      %v1010 = vunpack.c.l.b16 %v962
      %v1011 = vunpack.c.h.b16 %v962
      %v1012 = vunpack.c.l.b16 %v963
      %v1013 = vunpack.c.h.b16 %v963
      %v1014 = vunpack.c.l.b16 %v964
      %v1015 = vunpack.c.h.b16 %v964
      %v1016 = vunpack.c.l.b16 %v965
      %v1017 = vunpack.c.h.b16 %v965
      %v1018 = vunpack.c.l.b16 %v966
      %v1019 = vunpack.c.h.b16 %v966
      %v1020 = vunpack.c.l.b16 %v967
      %v1021 = vunpack.c.h.b16 %v967
      %v1022 = vunpack.c.l.b16 %v968
      %v1023 = vunpack.c.h.b16 %v968
      %v1024 = vunpack.c.l.b16 %v969
      %v1025 = vunpack.c.h.b16 %v969
      %v1026 = vunpack.c.l.b16 %v970
      %v1027 = vunpack.c.h.b16 %v970
      %v1028 = vunpack.c.l.b16 %v971
      %v1029 = vunpack.c.h.b16 %v971
      %v1030 = vunpack.c.l.b16 %v972
      %v1031 = vunpack.c.h.b16 %v972
      %v1032 = vunpack.c.l.b16 %v973
      %v1033 = vunpack.c.h.b16 %v973
      %v1034 = vunpack.c.l.b16 %v974
      %v1035 = vunpack.c.h.b16 %v974
      %v1036 = vunpack.c.l.b16 %v975
      %v1037 = vunpack.c.h.b16 %v975
      %v1038 = vunpack.c.l.b16 %v976
      %v1039 = vunpack.c.h.b16 %v976
      %v1040 = vunpack.c.l.b16 %v977
      %v1041 = vunpack.c.h.b16 %v977
      %v1042 = vunpack.c.l.b16 %v978
      %v1043 = vunpack.c.h.b16 %v978
      %v1044 = vunpack.c.l.b16 %v979
      %v1045 = vunpack.c.h.b16 %v979
      %v1046 = vunpack.c.l.b16 %v980
      %v1047 = vunpack.c.h.b16 %v980
      %v1048 = vunpack.c.l.b16 %v981
      %v1049 = vunpack.c.h.b16 %v981
      %v1050 = vunpack.c.l.b16 %v982
      %v1051 = vunpack.c.h.b16 %v982
      %v1052 = vunpack.c.l.b16 %v983
      %v1053 = vunpack.c.h.b16 %v983
      %v1054 = vunpack.c.l.b16 %v984
      %v1055 = vunpack.c.h.b16 %v984
      %v1056 = vunpack.c.l.b16 %v985
      %v1057 = vunpack.c.h.b16 %v985
      %v1058 = vpack.c.b16 %v1012, %v1010
      %v1059 = vpack.c.b16 %v1013, %v1011
      %v1060 = vpack.c.b16 %v1016, %v1014
      %v1061 = vpack.c.b16 %v1017, %v1015
      %v1062 = vpack.c.b16 %v1020, %v1018
      %v1063 = vpack.c.b16 %v1021, %v1019
      %v1064 = vpack.c.b16 %v1024, %v1022
      %v1065 = vpack.c.b16 %v1025, %v1023
      %v1066 = vpack.c.b16 %v1028, %v1026
      %v1067 = vpack.c.b16 %v1029, %v1027
      %v1068 = vpack.c.b16 %v1032, %v1030
      %v1069 = vpack.c.b16 %v1033, %v1031
      %v1070 = vpack.c.b16 %v1036, %v1034
      %v1071 = vpack.c.b16 %v1037, %v1035
      %v1072 = vpack.c.b16 %v1040, %v1038
      %v1073 = vpack.c.b16 %v1041, %v1039
      %v1074 = vpack.c.b16 %v1044, %v1042
      %v1075 = vpack.c.b16 %v1045, %v1043
      %v1076 = vpack.c.b16 %v1048, %v1046
      %v1077 = vpack.c.b16 %v1049, %v1047
      %v1078 = vpack.c.b16 %v1052, %v1050
      %v1079 = vpack.c.b16 %v1053, %v1051
      %v1080 = vpack.c.b16 %v1056, %v1054
      %v1081 = vpack.c.b16 %v1057, %v1055
      %1106 = vmatprep.subr.bf16.mxu0 %v1059
      %1107 = vmatpush1.bf16.msra.mxu0 %v1058
      %1108 = vmatprep.subr.bf16.mxu0 %v1061
      %1109 = vmatpush1.bf16.msra.mxu0 %v1060
      %1110 = vmatprep.subr.bf16.mxu0 %v1063
      %1111 = vmatpush1.bf16.msra.mxu0 %v1062
      %1112 = vmatprep.subr.bf16.mxu0 %v1065
      %1113 = vmatpush1.bf16.msra.mxu0 %v1064
      %1114 = vmatprep.subr.bf16.mxu0 %v1067
      %1115 = vmatpush1.bf16.msra.mxu0 %v1066
      %1116 = vmatprep.subr.bf16.mxu0 %v1069
      %1117 = vmatpush1.bf16.msra.mxu0 %v1068
      %1118 = vmatprep.subr.bf16.mxu0 %v1071
      %1119 = vmatpush1.bf16.msra.mxu0 %v1070
      %1120 = vmatprep.subr.bf16.mxu0 %v1073
      %1121 = vmatpush1.bf16.msra.mxu0 %v1072
      %1122 = vmatprep.subr.bf16.mxu0 %v1075
      %1123 = vmatpush1.bf16.msra.mxu0 %v1074
      %1124 = vmatprep.subr.bf16.mxu0 %v1077
      %1125 = vmatpush1.bf16.msra.mxu0 %v1076
      %1126 = vmatprep.subr.bf16.mxu0 %v1079
      %1127 = vmatpush1.bf16.msra.mxu0 %v1078
      %1128 = vmatprep.subr.bf16.mxu0 %v1081
      %1129 = vmatpush1.bf16.msra.mxu0 %v1080
      %1130 = vmatprep.subr.bf16.mxu0 0
      %1131 = vmatpush1.bf16.msra.mxu0 0
      %1132 = vmatprep.subr.bf16.mxu0 0
      %1133 = vmatpush1.bf16.msra.mxu0 0
      %1134 = vmatprep.subr.bf16.mxu0 0
      %1135 = vmatpush1.bf16.msra.mxu0 0
      %1136 = vmatprep.subr.bf16.mxu0 0
      %1137 = vmatpush1.bf16.msra.mxu0 0
      %1138 = vmatprep.mubr.bf16.mxu0 %v855
      %1139 = vmatmul.mubr.bf16.gmra.mrb[0].mxu0 %v687
      %v1140 = vpop.f32.mrb[0].mxu0
      %v1141 = vadd.f32 %v728, %v1140
      %v1142 = vpop.f32.mrb[0].mxu0
      %v1143 = vadd.f32 %v732, %v1142
      %v1144 = vpop.f32.mrb[0].mxu0
      %v1145 = vpop.f32.mrb[0].mxu0
      %1146 = vdwg.mxu0
      %vm1147 = vcmp.gt.f32.partialorder %v1141, 0.0
      %vm1148 = vcmp.gt.f32.partialorder %v1143, 0.0
      %v1149 = vmul.f32 %v913, %v1141
      %v1150 = vmul.f32 %v917, %v1143
      %v1151 = vsel %vm1147, %v1141, %v1149
      %v1152 = vsel %vm1148, %v1143, %v1150
      %v1153 = vmul.f32 %v1151, %v935
      %v1154 = vmul.f32 %v1152, %v939
      %v1155 = vadd.f32 %v1153, %v955
      %v1156 = vadd.f32 %v1154, %v959
      %v1157 = vmax.f32 %v960, %v1155
      %v1158 = vmax.f32 %v961, %v1156
      %v1159 = vpack.c.bf16 %v1157, %v1157
      %v1160 = vpack.c.bf16 %v1158, %v1158
      %v1161 = vld [vmem:[%s4] sm:$0xff]
      %v1162 = vld [vmem:[%s4 + $0x8] sm:$0xff]
      %v1163 = vld [vmem:[%s4 + $0x10] sm:$0xff]
      %v1164 = vld [vmem:[%s4 + $0x18] sm:$0xff]
      %v1165 = vld [vmem:[%s4 + $0x20] sm:$0xff]
      %v1166 = vld [vmem:[%s4 + $0x28] sm:$0xff]
      %v1167 = vld [vmem:[%s4 + $0x30] sm:$0xff]
      %v1168 = vld [vmem:[%s4 + $0x38] sm:$0xff]
      %v1169 = vld [vmem:[%s4 + $0x40] sm:$0xff]
      %v1170 = vld [vmem:[%s4 + $0x48] sm:$0xff]
      %v1171 = vld [vmem:[%s4 + $0x50] sm:$0xff]
      %v1172 = vld [vmem:[%s4 + $0x58] sm:$0xff]
      %v1173 = vld [vmem:[%s4 + $0x60] sm:$0xff]
      %v1174 = vld [vmem:[%s4 + $0x68] sm:$0xff]
      %v1175 = vld [vmem:[%s4 + $0x70] sm:$0xff]
      %v1176 = vld [vmem:[%s4 + $0x78] sm:$0xff]
      %v1177 = vld [vmem:[%s4 + $0x80] sm:$0xff]
      %v1178 = vld [vmem:[%s4 + $0x88] sm:$0xff]
      %v1179 = vld [vmem:[%s4 + $0x90] sm:$0xff]
      %v1180 = vld [vmem:[%s4 + $0x98] sm:$0xff]
      %v1181 = vld [vmem:[%s4 + $0xa0] sm:$0xff]
      %v1182 = vld [vmem:[%s4 + $0xa8] sm:$0xff]
      %v1183 = vld [vmem:[%s4 + $0xb0] sm:$0xff]
      %v1184 = vld [vmem:[%s4 + $0xb8] sm:$0xff]
      %v1185 = vld [vmem:[%s4 + $0xc0] sm:$0xff]
      %v1186 = vld [vmem:[%s4 + $0xc8] sm:$0xff]
      %v1187 = vld [vmem:[%s4 + $0xd0] sm:$0xff]
      %v1188 = vld [vmem:[%s4 + $0xd8] sm:$0xff]
      %v1189 = vld [vmem:[%s4 + $0xe0] sm:$0xff]
      %v1190 = vld [vmem:[%s4 + $0xe8] sm:$0xff]
      %v1191 = vld [vmem:[%s6] sm:$0xff]
      %v1193 = vlaneseq
      %v1194 = vshrl.u32 %v1193, 7
      %v1195 = vsub.s32 0, %v1194
      %v1196 = vrot.slane %v1191, %v1195
      %v1197 = vlaneseq
      %v1198 = vshrl.u32 %v1197, 7
      %v1199 = vsub.s32 4, %v1198
      %v1200 = vrot.slane %v1191, %v1199
      %v1203 = vlaneseq
      %v1204 = vshrl.u32 %v1203, 7
      %v1205 = vsub.s32 0, %v1204
      %v1206 = vrot.slane %v1196, %v1205
      %v1207 = vlaneseq
      %v1208 = vshrl.u32 %v1207, 7
      %v1209 = vsub.s32 0, %v1208
      %v1210 = vrot.slane %v1200, %v1209
      %v1241 = vunpack.c.l.b16 %v1161
      %v1242 = vunpack.c.h.b16 %v1161
      %v1243 = vunpack.c.l.b16 %v1162
      %v1244 = vunpack.c.h.b16 %v1162
      %v1245 = vunpack.c.l.b16 %v1163
      %v1246 = vunpack.c.h.b16 %v1163
      %v1247 = vunpack.c.l.b16 %v1164
      %v1248 = vunpack.c.h.b16 %v1164
      %v1249 = vunpack.c.l.b16 %v1165
      %v1250 = vunpack.c.h.b16 %v1165
      %v1251 = vunpack.c.l.b16 %v1166
      %v1252 = vunpack.c.h.b16 %v1166
      %v1253 = vunpack.c.l.b16 %v1167
      %v1254 = vunpack.c.h.b16 %v1167
      %v1255 = vunpack.c.l.b16 %v1168
      %v1256 = vunpack.c.h.b16 %v1168
      %v1257 = vunpack.c.l.b16 %v1169
      %v1258 = vunpack.c.h.b16 %v1169
      %v1259 = vunpack.c.l.b16 %v1170
      %v1260 = vunpack.c.h.b16 %v1170
      %v1261 = vunpack.c.l.b16 %v1171
      %v1262 = vunpack.c.h.b16 %v1171
      %v1263 = vunpack.c.l.b16 %v1172
      %v1264 = vunpack.c.h.b16 %v1172
      %v1265 = vunpack.c.l.b16 %v1173
      %v1266 = vunpack.c.h.b16 %v1173
      %v1267 = vunpack.c.l.b16 %v1174
      %v1268 = vunpack.c.h.b16 %v1174
      %v1269 = vunpack.c.l.b16 %v1175
      %v1270 = vunpack.c.h.b16 %v1175
      %v1271 = vunpack.c.l.b16 %v1176
      %v1272 = vunpack.c.h.b16 %v1176
      %v1273 = vunpack.c.l.b16 %v1177
      %v1274 = vunpack.c.h.b16 %v1177
      %v1275 = vunpack.c.l.b16 %v1178
      %v1276 = vunpack.c.h.b16 %v1178
      %v1277 = vunpack.c.l.b16 %v1179
      %v1278 = vunpack.c.h.b16 %v1179
      %v1279 = vunpack.c.l.b16 %v1180
      %v1280 = vunpack.c.h.b16 %v1180
      %v1281 = vunpack.c.l.b16 %v1181
      %v1282 = vunpack.c.h.b16 %v1181
      %v1283 = vunpack.c.l.b16 %v1182
      %v1284 = vunpack.c.h.b16 %v1182
      %v1285 = vunpack.c.l.b16 %v1183
      %v1286 = vunpack.c.h.b16 %v1183
      %v1287 = vunpack.c.l.b16 %v1184
      %v1288 = vunpack.c.h.b16 %v1184
      %v1289 = vunpack.c.l.b16 %v1185
      %v1290 = vunpack.c.h.b16 %v1185
      %v1291 = vunpack.c.l.b16 %v1186
      %v1292 = vunpack.c.h.b16 %v1186
      %v1293 = vunpack.c.l.b16 %v1187
      %v1294 = vunpack.c.h.b16 %v1187
      %v1295 = vunpack.c.l.b16 %v1188
      %v1296 = vunpack.c.h.b16 %v1188
      %v1297 = vunpack.c.l.b16 %v1189
      %v1298 = vunpack.c.h.b16 %v1189
      %v1299 = vunpack.c.l.b16 %v1190
      %v1300 = vunpack.c.h.b16 %v1190
      %v1301 = vpack.c.b16 %v1243, %v1241
      %v1302 = vpack.c.b16 %v1244, %v1242
      %v1303 = vpack.c.b16 %v1247, %v1245
      %v1304 = vpack.c.b16 %v1248, %v1246
      %v1305 = vpack.c.b16 %v1251, %v1249
      %v1306 = vpack.c.b16 %v1252, %v1250
      %v1307 = vpack.c.b16 %v1255, %v1253
      %v1308 = vpack.c.b16 %v1256, %v1254
      %v1309 = vpack.c.b16 %v1259, %v1257
      %v1310 = vpack.c.b16 %v1260, %v1258
      %v1311 = vpack.c.b16 %v1263, %v1261
      %v1312 = vpack.c.b16 %v1264, %v1262
      %v1313 = vpack.c.b16 %v1267, %v1265
      %v1314 = vpack.c.b16 %v1268, %v1266
      %v1315 = vpack.c.b16 %v1271, %v1269
      %v1316 = vpack.c.b16 %v1272, %v1270
      %v1317 = vpack.c.b16 %v1275, %v1273
      %v1318 = vpack.c.b16 %v1276, %v1274
      %v1319 = vpack.c.b16 %v1279, %v1277
      %v1320 = vpack.c.b16 %v1280, %v1278
      %v1321 = vpack.c.b16 %v1283, %v1281
      %v1322 = vpack.c.b16 %v1284, %v1282
      %v1323 = vpack.c.b16 %v1287, %v1285
      %v1324 = vpack.c.b16 %v1288, %v1286
      %v1325 = vpack.c.b16 %v1291, %v1289
      %v1326 = vpack.c.b16 %v1292, %v1290
      %v1327 = vpack.c.b16 %v1295, %v1293
      %v1328 = vpack.c.b16 %v1296, %v1294
      %v1329 = vpack.c.b16 %v1299, %v1297
      %v1330 = vpack.c.b16 %v1300, %v1298
      %vm1361 = vcmask 916480
      %v1363 = vsel %vm1361, %v1160, 0
      %1365 = vmatprep.subr.bf16.mxu0 %v1302
      %1366 = vmatpush1.bf16.msra.mxu0 %v1301
      %1367 = vmatprep.subr.bf16.mxu0 %v1304
      %1368 = vmatpush1.bf16.msra.mxu0 %v1303
      %1369 = vmatprep.subr.bf16.mxu0 %v1306
      %1370 = vmatpush1.bf16.msra.mxu0 %v1305
      %1371 = vmatprep.subr.bf16.mxu0 %v1308
      %1372 = vmatpush1.bf16.msra.mxu0 %v1307
      %1373 = vmatprep.subr.bf16.mxu0 %v1310
      %1374 = vmatpush1.bf16.msra.mxu0 %v1309
      %1375 = vmatprep.subr.bf16.mxu0 %v1312
      %1376 = vmatpush1.bf16.msra.mxu0 %v1311
      %1377 = vmatprep.subr.bf16.mxu0 %v1314
      %1378 = vmatpush1.bf16.msra.mxu0 %v1313
      %1379 = vmatprep.subr.bf16.mxu0 %v1316
      %1380 = vmatpush1.bf16.msra.mxu0 %v1315
      %1381 = vmatprep.subr.bf16.mxu0 %v1318
      %1382 = vmatpush1.bf16.msra.mxu0 %v1317
      %1383 = vmatprep.subr.bf16.mxu0 %v1320
      %1384 = vmatpush1.bf16.msra.mxu0 %v1319
      %1385 = vmatprep.subr.bf16.mxu0 %v1322
      %1386 = vmatpush1.bf16.msra.mxu0 %v1321
      %1387 = vmatprep.subr.bf16.mxu0 %v1324
      %1388 = vmatpush1.bf16.msra.mxu0 %v1323
      %1389 = vmatprep.subr.bf16.mxu0 %v1326
      %1390 = vmatpush1.bf16.msra.mxu0 %v1325
      %1391 = vmatprep.subr.bf16.mxu0 %v1328
      %1392 = vmatpush1.bf16.msra.mxu0 %v1327
      %1393 = vmatprep.subr.bf16.mxu0 %v1330
      %1394 = vmatpush1.bf16.msra.mxu0 %v1329
      %1395 = vmatprep.subr.bf16.mxu0 0
      %1396 = vmatpush1.bf16.msra.mxu0 0
      %1397 = vmatprep.mubr.bf16.mxu0 %v1363
      %1398 = vmatmul.mubr.bf16.gmra.mrb[0].mxu0 %v1159
      %v1399 = vpop.f32.mrb[0].mxu0
      %v1400 = vadd.f32 %v1206, %v1399
      %v1401 = vpop.f32.mrb[0].mxu0
      %v1402 = vadd.f32 %v1210, %v1401
      %v1403 = vpop.f32.mrb[0].mxu0
      %v1404 = vpop.f32.mrb[0].mxu0
      %1405 = vdwg.mxu0
      %vm1406 = vcmp.gt.f32.partialorder %v1400, 0.0
      %vm1407 = vcmp.gt.f32.partialorder %v1402, 0.0
      %v1408 = vlaneseq
      %v1409 = vshrl.u32 %v1408, 7
      %v1410 = vsub.s32 3, %v1409
      %v1411 = vrot.slane %v1191, %v1410
      %v1412 = vlaneseq
      %v1413 = vshrl.u32 %v1412, 7
      %v1414 = vsub.s32 7, %v1413
      %v1415 = vrot.slane %v1191, %v1414
      %v1418 = vlaneseq
      %v1419 = vshrl.u32 %v1418, 7
      %v1420 = vsub.s32 3, %v1419
      %v1421 = vrot.slane %v1411, %v1420
      %v1422 = vlaneseq
      %v1423 = vshrl.u32 %v1422, 7
      %v1424 = vsub.s32 3, %v1423
      %v1425 = vrot.slane %v1415, %v1424
      %v1426 = vmul.f32 %v1421, %v1400
      %v1427 = vmul.f32 %v1425, %v1402
      %v1428 = vsel %vm1406, %v1400, %v1426
      %v1429 = vsel %vm1407, %v1402, %v1427
      %v1430 = vlaneseq
      %v1431 = vshrl.u32 %v1430, 7
      %v1432 = vsub.s32 1, %v1431
      %v1433 = vrot.slane %v1191, %v1432
      %v1434 = vlaneseq
      %v1435 = vshrl.u32 %v1434, 7
      %v1436 = vsub.s32 5, %v1435
      %v1437 = vrot.slane %v1191, %v1436
      %v1440 = vlaneseq
      %v1441 = vshrl.u32 %v1440, 7
      %v1442 = vsub.s32 1, %v1441
      %v1443 = vrot.slane %v1433, %v1442
      %v1444 = vlaneseq
      %v1445 = vshrl.u32 %v1444, 7
      %v1446 = vsub.s32 1, %v1445
      %v1447 = vrot.slane %v1437, %v1446
      %v1448 = vmul.f32 %v1428, %v1443
      %v1449 = vmul.f32 %v1429, %v1447
      %v1450 = vlaneseq
      %v1451 = vshrl.u32 %v1450, 7
      %v1452 = vsub.s32 2, %v1451
      %v1453 = vrot.slane %v1191, %v1452
      %v1454 = vlaneseq
      %v1455 = vshrl.u32 %v1454, 7
      %v1456 = vsub.s32 6, %v1455
      %v1457 = vrot.slane %v1191, %v1456
      %v1460 = vlaneseq
      %v1461 = vshrl.u32 %v1460, 7
      %v1462 = vsub.s32 2, %v1461
      %v1463 = vrot.slane %v1453, %v1462
      %v1464 = vlaneseq
      %v1465 = vshrl.u32 %v1464, 7
      %v1466 = vsub.s32 2, %v1465
      %v1467 = vrot.slane %v1457, %v1466
      %v1468 = vadd.f32 %v1448, %v1463
      %v1469 = vadd.f32 %v1449, %v1467
      %v1470 = vld [vmem:[%s5] sm:$0xff]
      %v1471 = vld [vmem:[%s5 + $0x8] sm:$0xff]
      %v1472 = vld [vmem:[%s5 + $0x10] sm:$0xff]
      %v1473 = vld [vmem:[%s5 + $0x18] sm:$0xff]
      %v1474 = vld [vmem:[%s5 + $0x20] sm:$0xff]
      %v1475 = vld [vmem:[%s5 + $0x28] sm:$0xff]
      %v1476 = vld [vmem:[%s5 + $0x30] sm:$0xff]
      %v1477 = vld [vmem:[%s5 + $0x38] sm:$0xff]
      %v1478 = vld [vmem:[%s5 + $0x40] sm:$0xff]
      %v1479 = vld [vmem:[%s5 + $0x48] sm:$0xff]
      %v1480 = vld [vmem:[%s5 + $0x50] sm:$0xff]
      %v1481 = vld [vmem:[%s5 + $0x58] sm:$0xff]
      %v1482 = vld [vmem:[%s5 + $0x60] sm:$0xff]
      %v1483 = vld [vmem:[%s5 + $0x68] sm:$0xff]
      %v1484 = vld [vmem:[%s5 + $0x70] sm:$0xff]
      %v1485 = vld [vmem:[%s5 + $0x78] sm:$0xff]
      %v1486 = vld [vmem:[%s5 + $0x80] sm:$0xff]
      %v1487 = vld [vmem:[%s5 + $0x88] sm:$0xff]
      %v1488 = vld [vmem:[%s5 + $0x90] sm:$0xff]
      %v1489 = vld [vmem:[%s5 + $0x98] sm:$0xff]
      %v1490 = vld [vmem:[%s5 + $0xa0] sm:$0xff]
      %v1491 = vld [vmem:[%s5 + $0xa8] sm:$0xff]
      %v1492 = vld [vmem:[%s5 + $0xb0] sm:$0xff]
      %v1493 = vld [vmem:[%s5 + $0xb8] sm:$0xff]
      %v1494 = vld [vmem:[%s5 + $0xc0] sm:$0xff]
      %v1495 = vld [vmem:[%s5 + $0xc8] sm:$0xff]
      %v1496 = vld [vmem:[%s5 + $0xd0] sm:$0xff]
      %v1497 = vld [vmem:[%s5 + $0xd8] sm:$0xff]
      %v1498 = vld [vmem:[%s5 + $0xe0] sm:$0xff]
      %v1499 = vld [vmem:[%s5 + $0xe8] sm:$0xff]
      %v1530 = vunpack.c.l.b16 %v1470
      %v1531 = vunpack.c.h.b16 %v1470
      %v1532 = vunpack.c.l.b16 %v1471
      %v1533 = vunpack.c.h.b16 %v1471
      %v1534 = vunpack.c.l.b16 %v1472
      %v1535 = vunpack.c.h.b16 %v1472
      %v1536 = vunpack.c.l.b16 %v1473
      %v1537 = vunpack.c.h.b16 %v1473
      %v1538 = vunpack.c.l.b16 %v1474
      %v1539 = vunpack.c.h.b16 %v1474
      %v1540 = vunpack.c.l.b16 %v1475
      %v1541 = vunpack.c.h.b16 %v1475
      %v1542 = vunpack.c.l.b16 %v1476
      %v1543 = vunpack.c.h.b16 %v1476
      %v1544 = vunpack.c.l.b16 %v1477
      %v1545 = vunpack.c.h.b16 %v1477
      %v1546 = vunpack.c.l.b16 %v1478
      %v1547 = vunpack.c.h.b16 %v1478
      %v1548 = vunpack.c.l.b16 %v1479
      %v1549 = vunpack.c.h.b16 %v1479
      %v1550 = vunpack.c.l.b16 %v1480
      %v1551 = vunpack.c.h.b16 %v1480
      %v1552 = vunpack.c.l.b16 %v1481
      %v1553 = vunpack.c.h.b16 %v1481
      %v1554 = vunpack.c.l.b16 %v1482
      %v1555 = vunpack.c.h.b16 %v1482
      %v1556 = vunpack.c.l.b16 %v1483
      %v1557 = vunpack.c.h.b16 %v1483
      %v1558 = vunpack.c.l.b16 %v1484
      %v1559 = vunpack.c.h.b16 %v1484
      %v1560 = vunpack.c.l.b16 %v1485
      %v1561 = vunpack.c.h.b16 %v1485
      %v1562 = vunpack.c.l.b16 %v1486
      %v1563 = vunpack.c.h.b16 %v1486
      %v1564 = vunpack.c.l.b16 %v1487
      %v1565 = vunpack.c.h.b16 %v1487
      %v1566 = vunpack.c.l.b16 %v1488
      %v1567 = vunpack.c.h.b16 %v1488
      %v1568 = vunpack.c.l.b16 %v1489
      %v1569 = vunpack.c.h.b16 %v1489
      %v1570 = vunpack.c.l.b16 %v1490
      %v1571 = vunpack.c.h.b16 %v1490
      %v1572 = vunpack.c.l.b16 %v1491
      %v1573 = vunpack.c.h.b16 %v1491
      %v1574 = vunpack.c.l.b16 %v1492
      %v1575 = vunpack.c.h.b16 %v1492
      %v1576 = vunpack.c.l.b16 %v1493
      %v1577 = vunpack.c.h.b16 %v1493
      %v1578 = vunpack.c.l.b16 %v1494
      %v1579 = vunpack.c.h.b16 %v1494
      %v1580 = vunpack.c.l.b16 %v1495
      %v1581 = vunpack.c.h.b16 %v1495
      %v1582 = vunpack.c.l.b16 %v1496
      %v1583 = vunpack.c.h.b16 %v1496
      %v1584 = vunpack.c.l.b16 %v1497
      %v1585 = vunpack.c.h.b16 %v1497
      %v1586 = vunpack.c.l.b16 %v1498
      %v1587 = vunpack.c.h.b16 %v1498
      %v1588 = vunpack.c.l.b16 %v1499
      %v1589 = vunpack.c.h.b16 %v1499
      %v1590 = vpack.c.b16 %v1532, %v1530
      %v1591 = vpack.c.b16 %v1533, %v1531
      %v1592 = vpack.c.b16 %v1536, %v1534
      %v1593 = vpack.c.b16 %v1537, %v1535
      %v1594 = vpack.c.b16 %v1540, %v1538
      %v1595 = vpack.c.b16 %v1541, %v1539
      %v1596 = vpack.c.b16 %v1544, %v1542
      %v1597 = vpack.c.b16 %v1545, %v1543
      %v1598 = vpack.c.b16 %v1548, %v1546
      %v1599 = vpack.c.b16 %v1549, %v1547
      %v1600 = vpack.c.b16 %v1552, %v1550
      %v1601 = vpack.c.b16 %v1553, %v1551
      %v1602 = vpack.c.b16 %v1556, %v1554
      %v1603 = vpack.c.b16 %v1557, %v1555
      %v1604 = vpack.c.b16 %v1560, %v1558
      %v1605 = vpack.c.b16 %v1561, %v1559
      %v1606 = vpack.c.b16 %v1564, %v1562
      %v1607 = vpack.c.b16 %v1565, %v1563
      %v1608 = vpack.c.b16 %v1568, %v1566
      %v1609 = vpack.c.b16 %v1569, %v1567
      %v1610 = vpack.c.b16 %v1572, %v1570
      %v1611 = vpack.c.b16 %v1573, %v1571
      %v1612 = vpack.c.b16 %v1576, %v1574
      %v1613 = vpack.c.b16 %v1577, %v1575
      %v1614 = vpack.c.b16 %v1580, %v1578
      %v1615 = vpack.c.b16 %v1581, %v1579
      %v1616 = vpack.c.b16 %v1584, %v1582
      %v1617 = vpack.c.b16 %v1585, %v1583
      %v1618 = vpack.c.b16 %v1588, %v1586
      %v1619 = vpack.c.b16 %v1589, %v1587
      %1650 = vmatprep.subr.bf16.mxu0 %v1591
      %1651 = vmatpush1.bf16.msra.mxu0 %v1590
      %1652 = vmatprep.subr.bf16.mxu0 %v1593
      %1653 = vmatpush1.bf16.msra.mxu0 %v1592
      %1654 = vmatprep.subr.bf16.mxu0 %v1595
      %1655 = vmatpush1.bf16.msra.mxu0 %v1594
      %1656 = vmatprep.subr.bf16.mxu0 %v1597
      %1657 = vmatpush1.bf16.msra.mxu0 %v1596
      %1658 = vmatprep.subr.bf16.mxu0 %v1599
      %1659 = vmatpush1.bf16.msra.mxu0 %v1598
      %1660 = vmatprep.subr.bf16.mxu0 %v1601
      %1661 = vmatpush1.bf16.msra.mxu0 %v1600
      %1662 = vmatprep.subr.bf16.mxu0 %v1603
      %1663 = vmatpush1.bf16.msra.mxu0 %v1602
      %1664 = vmatprep.subr.bf16.mxu0 %v1605
      %1665 = vmatpush1.bf16.msra.mxu0 %v1604
      %1666 = vmatprep.subr.bf16.mxu0 %v1607
      %1667 = vmatpush1.bf16.msra.mxu0 %v1606
      %1668 = vmatprep.subr.bf16.mxu0 %v1609
      %1669 = vmatpush1.bf16.msra.mxu0 %v1608
      %1670 = vmatprep.subr.bf16.mxu0 %v1611
      %1671 = vmatpush1.bf16.msra.mxu0 %v1610
      %1672 = vmatprep.subr.bf16.mxu0 %v1613
      %1673 = vmatpush1.bf16.msra.mxu0 %v1612
      %1674 = vmatprep.subr.bf16.mxu0 %v1615
      %1675 = vmatpush1.bf16.msra.mxu0 %v1614
      %1676 = vmatprep.subr.bf16.mxu0 %v1617
      %1677 = vmatpush1.bf16.msra.mxu0 %v1616
      %1678 = vmatprep.subr.bf16.mxu0 %v1619
      %1679 = vmatpush1.bf16.msra.mxu0 %v1618
      %1680 = vmatprep.subr.bf16.mxu0 0
      %1681 = vmatpush1.bf16.msra.mxu0 0
      %1682 = vmatprep.mubr.bf16.mxu0 %v1363
      %1683 = vmatmul.mubr.bf16.gmra.mrb[0].mxu0 %v1159
      %v1684 = vpop.f32.mrb[0].mxu0
      %v1685 = vadd.f32 %v1206, %v1684
      %v1686 = vpop.f32.mrb[0].mxu0
      %v1687 = vadd.f32 %v1210, %v1686
      %v1688 = vpop.f32.mrb[0].mxu0
      %v1689 = vpop.f32.mrb[0].mxu0
      %1690 = vdwg.mxu0
      %vm1691 = vcmp.gt.f32.partialorder %v1685, 0.0
      %vm1692 = vcmp.gt.f32.partialorder %v1687, 0.0
      %v1693 = vmul.f32 %v1421, %v1685
      %v1694 = vmul.f32 %v1425, %v1687
      %v1695 = vsel %vm1691, %v1685, %v1693
      %v1696 = vsel %vm1692, %v1687, %v1694
      %v1697 = vmul.f32 %v1695, %v1443
      %v1698 = vmul.f32 %v1696, %v1447
      %v1699 = vadd.f32 %v1697, %v1463
      %v1700 = vadd.f32 %v1698, %v1467
      %v1701 = vmax.f32 %v1468, %v1699
      %v1702 = vmax.f32 %v1469, %v1700
      %v1703 = vpack.c.bf16 %v1701, %v1701
      %v1704 = vpack.c.bf16 %v1702, %v1702
      %v1705 = vld [vmem:[%s7] sm:$0xf]
      %v1706 = vld [vmem:[%s7 + $0x4] sm:$0xf]
      %v1707 = vld [vmem:[%s7 + $0x8] sm:$0xf]
      %v1708 = vld [vmem:[%s7 + $0xc] sm:$0xf]
      %v1709 = vld [vmem:[%s7 + $0x10] sm:$0xf]
      %v1710 = vld [vmem:[%s7 + $0x14] sm:$0xf]
      %v1711 = vld [vmem:[%s7 + $0x18] sm:$0xf]
      %v1712 = vld [vmem:[%s7 + $0x1c] sm:$0xf]
      %v1713 = vld [vmem:[%s7 + $0x20] sm:$0xf]
      %v1714 = vld [vmem:[%s7 + $0x24] sm:$0xf]
      %v1715 = vld [vmem:[%s7 + $0x28] sm:$0xf]
      %v1716 = vld [vmem:[%s7 + $0x2c] sm:$0xf]
      %v1717 = vld [vmem:[%s7 + $0x30] sm:$0xf]
      %v1718 = vld [vmem:[%s7 + $0x34] sm:$0xf]
      %v1719 = vld [vmem:[%s7 + $0x38] sm:$0xf]
      %v1720 = vld [vmem:[%s7 + $0x3c] sm:$0xf]
      %v1721 = vld [vmem:[%s7 + $0x40] sm:$0xf]
      %v1722 = vld [vmem:[%s7 + $0x44] sm:$0xf]
      %v1723 = vld [vmem:[%s7 + $0x48] sm:$0xf]
      %v1724 = vld [vmem:[%s7 + $0x4c] sm:$0xf]
      %v1725 = vld [vmem:[%s7 + $0x50] sm:$0xf]
      %v1726 = vld [vmem:[%s7 + $0x54] sm:$0xf]
      %v1727 = vld [vmem:[%s7 + $0x58] sm:$0x3]
      %v1728 = vld [vmem:[%s9] sm:$0xf]
      %v1729 = vlaneseq
      %v1730 = vshrl.u32 %v1729, 7
      %v1731 = vsub.s32 0, %v1730
      %v1732 = vrot.slane %v1728, %v1731
      %v1756 = vunpack.c.l.b16 %v1705
      %v1757 = vunpack.c.l.b16 %v1706
      %v1758 = vunpack.c.l.b16 %v1707
      %v1759 = vunpack.c.l.b16 %v1708
      %v1760 = vunpack.c.l.b16 %v1709
      %v1761 = vunpack.c.l.b16 %v1710
      %v1762 = vunpack.c.l.b16 %v1711
      %v1763 = vunpack.c.l.b16 %v1712
      %v1764 = vunpack.c.l.b16 %v1713
      %v1765 = vunpack.c.l.b16 %v1714
      %v1766 = vunpack.c.l.b16 %v1715
      %v1767 = vunpack.c.l.b16 %v1716
      %v1768 = vunpack.c.l.b16 %v1717
      %v1769 = vunpack.c.l.b16 %v1718
      %v1770 = vunpack.c.l.b16 %v1719
      %v1771 = vunpack.c.l.b16 %v1720
      %v1772 = vunpack.c.l.b16 %v1721
      %v1773 = vunpack.c.l.b16 %v1722
      %v1774 = vunpack.c.l.b16 %v1723
      %v1775 = vunpack.c.l.b16 %v1724
      %v1776 = vunpack.c.l.b16 %v1725
      %v1777 = vunpack.c.l.b16 %v1726
      %v1778 = vunpack.c.l.b16 %v1727
      %v1779 = vpack.c.b16 %v1757, %v1756
      %v1780 = vpack.c.b16 %v1759, %v1758
      %v1781 = vpack.c.b16 %v1761, %v1760
      %v1782 = vpack.c.b16 %v1763, %v1762
      %v1783 = vpack.c.b16 %v1765, %v1764
      %v1784 = vpack.c.b16 %v1767, %v1766
      %v1785 = vpack.c.b16 %v1769, %v1768
      %v1786 = vpack.c.b16 %v1771, %v1770
      %v1787 = vpack.c.b16 %v1773, %v1772
      %v1788 = vpack.c.b16 %v1775, %v1774
      %v1789 = vpack.c.b16 %v1777, %v1776
      %v1790 = vpack.c.b16 %v1778, %v1778
      %vm1802 = vcmask 424960
      %v1804 = vsel %vm1802, %v1704, 0
      %vm1806 = vcmask 1041408
      %v1808 = vsel %vm1806, %v1790, 0
      %1810 = vmatprep.subr.bf16.mxu0 0
      %1811 = vmatpush1.bf16.msra.mxu0 %v1779
      %1812 = vmatprep.subr.bf16.mxu0 0
      %1813 = vmatpush1.bf16.msra.mxu0 %v1780
      %1814 = vmatprep.subr.bf16.mxu0 0
      %1815 = vmatpush1.bf16.msra.mxu0 %v1781
      %1816 = vmatprep.subr.bf16.mxu0 0
      %1817 = vmatpush1.bf16.msra.mxu0 %v1782
      %1818 = vmatprep.subr.bf16.mxu0 0
      %1819 = vmatpush1.bf16.msra.mxu0 %v1783
      %1820 = vmatprep.subr.bf16.mxu0 0
      %1821 = vmatpush1.bf16.msra.mxu0 %v1784
      %1822 = vmatprep.subr.bf16.mxu0 0
      %1823 = vmatpush1.bf16.msra.mxu0 %v1785
      %1824 = vmatprep.subr.bf16.mxu0 0
      %1825 = vmatpush1.bf16.msra.mxu0 %v1786
      %1826 = vmatprep.subr.bf16.mxu0 0
      %1827 = vmatpush1.bf16.msra.mxu0 %v1787
      %1828 = vmatprep.subr.bf16.mxu0 0
      %1829 = vmatpush1.bf16.msra.mxu0 %v1788
      %1830 = vmatprep.subr.bf16.mxu0 0
      %1831 = vmatpush1.bf16.msra.mxu0 %v1789
      %1832 = vmatprep.subr.bf16.mxu0 0
      %1833 = vmatpush1.bf16.msra.mxu0 %v1808
      %1834 = vmatprep.subr.bf16.mxu0 0
      %1835 = vmatpush1.bf16.msra.mxu0 0
      %1836 = vmatprep.subr.bf16.mxu0 0
      %1837 = vmatpush1.bf16.msra.mxu0 0
      %1838 = vmatprep.subr.bf16.mxu0 0
      %1839 = vmatpush1.bf16.msra.mxu0 0
      %1840 = vmatprep.subr.bf16.mxu0 0
      %1841 = vmatpush1.bf16.msra.mxu0 0
      %1842 = vmatprep.mubr.bf16.mxu0 %v1804
      %1843 = vmatmul.mubr.bf16.gmra.mrb[0].mxu0 %v1703
      %v1844 = vpop.f32.mrb[0].mxu0
      %v1845 = vadd.f32 %v1732, %v1844
      %v1846 = vpop.f32.mrb[0].mxu0
      %v1847 = vpop.f32.mrb[0].mxu0
      %v1848 = vpop.f32.mrb[0].mxu0
      %1849 = vdwg.mxu0
      %vm1850 = vcmp.gt.f32.partialorder %v1845, 0.0
      %v1851 = vlaneseq
      %v1852 = vshrl.u32 %v1851, 7
      %v1853 = vsub.s32 3, %v1852
      %v1854 = vrot.slane %v1728, %v1853
      %v1855 = vmul.f32 %v1854, %v1845
      %v1856 = vsel %vm1850, %v1845, %v1855
      %v1857 = vlaneseq
      %v1858 = vshrl.u32 %v1857, 7
      %v1859 = vsub.s32 1, %v1858
      %v1860 = vrot.slane %v1728, %v1859
      %v1861 = vmul.f32 %v1856, %v1860
      %v1862 = vlaneseq
      %v1863 = vshrl.u32 %v1862, 7
      %v1864 = vsub.s32 2, %v1863
      %v1865 = vrot.slane %v1728, %v1864
      %v1866 = vadd.f32 %v1861, %v1865
      %v1867 = vld [vmem:[%s8] sm:$0xf]
      %v1868 = vld [vmem:[%s8 + $0x4] sm:$0xf]
      %v1869 = vld [vmem:[%s8 + $0x8] sm:$0xf]
      %v1870 = vld [vmem:[%s8 + $0xc] sm:$0xf]
      %v1871 = vld [vmem:[%s8 + $0x10] sm:$0xf]
      %v1872 = vld [vmem:[%s8 + $0x14] sm:$0xf]
      %v1873 = vld [vmem:[%s8 + $0x18] sm:$0xf]
      %v1874 = vld [vmem:[%s8 + $0x1c] sm:$0xf]
      %v1875 = vld [vmem:[%s8 + $0x20] sm:$0xf]
      %v1876 = vld [vmem:[%s8 + $0x24] sm:$0xf]
      %v1877 = vld [vmem:[%s8 + $0x28] sm:$0xf]
      %v1878 = vld [vmem:[%s8 + $0x2c] sm:$0xf]
      %v1879 = vld [vmem:[%s8 + $0x30] sm:$0xf]
      %v1880 = vld [vmem:[%s8 + $0x34] sm:$0xf]
      %v1881 = vld [vmem:[%s8 + $0x38] sm:$0xf]
      %v1882 = vld [vmem:[%s8 + $0x3c] sm:$0xf]
      %v1883 = vld [vmem:[%s8 + $0x40] sm:$0xf]
      %v1884 = vld [vmem:[%s8 + $0x44] sm:$0xf]
      %v1885 = vld [vmem:[%s8 + $0x48] sm:$0xf]
      %v1886 = vld [vmem:[%s8 + $0x4c] sm:$0xf]
      %v1887 = vld [vmem:[%s8 + $0x50] sm:$0xf]
      %v1888 = vld [vmem:[%s8 + $0x54] sm:$0xf]
      %v1889 = vld [vmem:[%s8 + $0x58] sm:$0x3]
      %v1913 = vunpack.c.l.b16 %v1867
      %v1914 = vunpack.c.l.b16 %v1868
      %v1915 = vunpack.c.l.b16 %v1869
      %v1916 = vunpack.c.l.b16 %v1870
      %v1917 = vunpack.c.l.b16 %v1871
      %v1918 = vunpack.c.l.b16 %v1872
      %v1919 = vunpack.c.l.b16 %v1873
      %v1920 = vunpack.c.l.b16 %v1874
      %v1921 = vunpack.c.l.b16 %v1875
      %v1922 = vunpack.c.l.b16 %v1876
      %v1923 = vunpack.c.l.b16 %v1877
      %v1924 = vunpack.c.l.b16 %v1878
      %v1925 = vunpack.c.l.b16 %v1879
      %v1926 = vunpack.c.l.b16 %v1880
      %v1927 = vunpack.c.l.b16 %v1881
      %v1928 = vunpack.c.l.b16 %v1882
      %v1929 = vunpack.c.l.b16 %v1883
      %v1930 = vunpack.c.l.b16 %v1884
      %v1931 = vunpack.c.l.b16 %v1885
      %v1932 = vunpack.c.l.b16 %v1886
      %v1933 = vunpack.c.l.b16 %v1887
      %v1934 = vunpack.c.l.b16 %v1888
      %v1935 = vunpack.c.l.b16 %v1889
      %v1936 = vpack.c.b16 %v1914, %v1913
      %v1937 = vpack.c.b16 %v1916, %v1915
      %v1938 = vpack.c.b16 %v1918, %v1917
      %v1939 = vpack.c.b16 %v1920, %v1919
      %v1940 = vpack.c.b16 %v1922, %v1921
      %v1941 = vpack.c.b16 %v1924, %v1923
      %v1942 = vpack.c.b16 %v1926, %v1925
      %v1943 = vpack.c.b16 %v1928, %v1927
      %v1944 = vpack.c.b16 %v1930, %v1929
      %v1945 = vpack.c.b16 %v1932, %v1931
      %v1946 = vpack.c.b16 %v1934, %v1933
      %v1947 = vpack.c.b16 %v1935, %v1935
      %v1960 = vsel %vm1806, %v1947, 0
      %1962 = vmatprep.subr.bf16.mxu0 0
      %1963 = vmatpush1.bf16.msra.mxu0 %v1936
      %1964 = vmatprep.subr.bf16.mxu0 0
      %1965 = vmatpush1.bf16.msra.mxu0 %v1937
      %1966 = vmatprep.subr.bf16.mxu0 0
      %1967 = vmatpush1.bf16.msra.mxu0 %v1938
      %1968 = vmatprep.subr.bf16.mxu0 0
      %1969 = vmatpush1.bf16.msra.mxu0 %v1939
      %1970 = vmatprep.subr.bf16.mxu0 0
      %1971 = vmatpush1.bf16.msra.mxu0 %v1940
      %1972 = vmatprep.subr.bf16.mxu0 0
      %1973 = vmatpush1.bf16.msra.mxu0 %v1941
      %1974 = vmatprep.subr.bf16.mxu0 0
      %1975 = vmatpush1.bf16.msra.mxu0 %v1942
      %1976 = vmatprep.subr.bf16.mxu0 0
      %1977 = vmatpush1.bf16.msra.mxu0 %v1943
      %1978 = vmatprep.subr.bf16.mxu0 0
      %1979 = vmatpush1.bf16.msra.mxu0 %v1944
      %1980 = vmatprep.subr.bf16.mxu0 0
      %1981 = vmatpush1.bf16.msra.mxu0 %v1945
      %1982 = vmatprep.subr.bf16.mxu0 0
      %1983 = vmatpush1.bf16.msra.mxu0 %v1946
      %1984 = vmatprep.subr.bf16.mxu0 0
      %1985 = vmatpush1.bf16.msra.mxu0 %v1960
      %1986 = vmatprep.subr.bf16.mxu0 0
      %1987 = vmatpush1.bf16.msra.mxu0 0
      %1988 = vmatprep.subr.bf16.mxu0 0
      %1989 = vmatpush1.bf16.msra.mxu0 0
      %1990 = vmatprep.subr.bf16.mxu0 0
      %1991 = vmatpush1.bf16.msra.mxu0 0
      %1992 = vmatprep.subr.bf16.mxu0 0
      %1993 = vmatpush1.bf16.msra.mxu0 0
      %1994 = vmatprep.mubr.bf16.mxu0 %v1804
      %1995 = vmatmul.mubr.bf16.gmra.mrb[0].mxu0 %v1703
      %v1996 = vpop.f32.mrb[0].mxu0
      %v1997 = vadd.f32 %v1732, %v1996
      %v1998 = vpop.f32.mrb[0].mxu0
      %v1999 = vpop.f32.mrb[0].mxu0
      %v2000 = vpop.f32.mrb[0].mxu0
      %2001 = vdwg.mxu0
      %vm2002 = vcmp.gt.f32.partialorder %v1997, 0.0
      %v2003 = vmul.f32 %v1854, %v1997
      %v2004 = vsel %vm2002, %v1997, %v2003
      %v2005 = vmul.f32 %v2004, %v1860
      %v2006 = vadd.f32 %v2005, %v1865
      %v2007 = vmax.f32 %v1866, %v2006
      %v2008 = vpack.c.bf16 %v2007, %v2007
      %v2009 = vld [vmem:[%s10] sm:$0xf]
      %v2010 = vld [vmem:[%s10 + $0x4] sm:$0xf]
      %v2011 = vld [vmem:[%s10 + $0x8] sm:$0xf]
      %v2012 = vld [vmem:[%s10 + $0xc] sm:$0xf]
      %v2013 = vld [vmem:[%s10 + $0x10] sm:$0xf]
      %v2014 = vld [vmem:[%s10 + $0x14] sm:$0xf]
      %v2015 = vld [vmem:[%s10 + $0x18] sm:$0xf]
      %v2016 = vld [vmem:[%s10 + $0x1c] sm:$0xf]
      %v2017 = vld [vmem:[%s10 + $0x20] sm:$0xf]
      %v2018 = vld [vmem:[%s10 + $0x24] sm:$0xf]
      %v2019 = vld [vmem:[%s10 + $0x28] sm:$0xf]
      %v2020 = vld [vmem:[%s10 + $0x2c] sm:$0x1]
      %v2021 = vld [vmem:[%s11] sm:$0x1]
      %v2023 = vlaneseq
      %v2024 = vshrl.u32 %v2023, 7
      %v2025 = vsub.s32 0, %v2024
      %v2026 = vrot.slane %v2021, %v2025
      %v2040 = vunpack.c.l.b16 %v2009
      %v2041 = vunpack.c.l.b16 %v2010
      %v2042 = vunpack.c.l.b16 %v2011
      %v2043 = vunpack.c.l.b16 %v2012
      %v2044 = vunpack.c.l.b16 %v2013
      %v2045 = vunpack.c.l.b16 %v2014
      %v2046 = vunpack.c.l.b16 %v2015
      %v2047 = vunpack.c.l.b16 %v2016
      %v2048 = vunpack.c.l.b16 %v2017
      %v2049 = vunpack.c.l.b16 %v2018
      %v2050 = vunpack.c.l.b16 %v2019
      %v2051 = vunpack.c.l.b16 %v2020
      %v2052 = vpack.c.b16 %v2041, %v2040
      %v2053 = vpack.c.b16 %v2043, %v2042
      %v2054 = vpack.c.b16 %v2045, %v2044
      %v2055 = vpack.c.b16 %v2047, %v2046
      %v2056 = vpack.c.b16 %v2049, %v2048
      %v2057 = vpack.c.b16 %v2051, %v2050
      %vm2063 = vcmask 736256
      %v2065 = vsel %vm2063, %v2008, 0
      %vm2067 = vcmask 1044480
      %v2069 = vsel %vm2067, %v2057, 0
      %2071 = vmatprep.subr.bf16.mxu0 0
      %2072 = vmatpush1.bf16.msra.mxu0 %v2052
      %2073 = vmatprep.subr.bf16.mxu0 0
      %2074 = vmatpush1.bf16.msra.mxu0 %v2053
      %2075 = vmatprep.subr.bf16.mxu0 0
      %2076 = vmatpush1.bf16.msra.mxu0 %v2054
      %2077 = vmatprep.subr.bf16.mxu0 0
      %2078 = vmatpush1.bf16.msra.mxu0 %v2055
      %2079 = vmatprep.subr.bf16.mxu0 0
      %2080 = vmatpush1.bf16.msra.mxu0 %v2056
      %2081 = vmatprep.subr.bf16.mxu0 0
      %2082 = vmatpush1.bf16.msra.mxu0 %v2069
      %2083 = vmatprep.subr.bf16.mxu0 0
      %2084 = vmatpush1.bf16.msra.mxu0 0
      %2085 = vmatprep.subr.bf16.mxu0 0
      %2086 = vmatpush1.bf16.msra.mxu0 0
      %2087 = vmatprep.subr.bf16.mxu0 0
      %2088 = vmatpush1.bf16.msra.mxu0 0
      %2089 = vmatprep.subr.bf16.mxu0 0
      %2090 = vmatpush1.bf16.msra.mxu0 0
      %2091 = vmatprep.subr.bf16.mxu0 0
      %2092 = vmatpush1.bf16.msra.mxu0 0
      %2093 = vmatprep.subr.bf16.mxu0 0
      %2094 = vmatpush1.bf16.msra.mxu0 0
      %2095 = vmatprep.subr.bf16.mxu0 0
      %2096 = vmatpush1.bf16.msra.mxu0 0
      %2097 = vmatprep.subr.bf16.mxu0 0
      %2098 = vmatpush1.bf16.msra.mxu0 0
      %2099 = vmatprep.subr.bf16.mxu0 0
      %2100 = vmatpush1.bf16.msra.mxu0 0
      %2101 = vmatprep.subr.bf16.mxu0 0
      %2102 = vmatpush1.bf16.msra.mxu0 0
      %2103 = vmatprep.mubr.bf16.mxu0 0
      %2104 = vmatmul.mubr.bf16.gmra.mrb[0].mxu0 %v2065
      %v2105 = vpop.f32.mrb[0].mxu0
      %v2106 = vadd.f32 %v2026, %v2105
      %v2107 = vpop.f32.mrb[0].mxu0
      %v2108 = vpop.f32.mrb[0].mxu0
      %v2109 = vpop.f32.mrb[0].mxu0
      %2110 = vdwg.mxu0
      %v2111 = vpack.c.bf16 %v2106, %v2106
      %v2112 = vld [vmem:[%s12] sm:$0xf]
      %v2113 = vld [vmem:[%s12 + $0x4] sm:$0xf]
      %v2114 = vld [vmem:[%s12 + $0x8] sm:$0xf]
      %v2115 = vld [vmem:[%s12 + $0xc] sm:$0xf]
      %v2116 = vld [vmem:[%s13] sm:$0xf]
      %v2117 = vlaneseq
      %v2118 = vshrl.u32 %v2117, 7
      %v2119 = vsub.s32 0, %v2118
      %v2120 = vrot.slane %v2116, %v2119
      %v2125 = vunpack.c.l.b16 %v2112
      %v2126 = vunpack.c.l.b16 %v2113
      %v2127 = vunpack.c.l.b16 %v2114
      %v2128 = vunpack.c.l.b16 %v2115
      %v2129 = vpack.c.b16 %v2126, %v2125
      %v2130 = vpack.c.b16 %v2128, %v2127
      %vm2133 = vcmask 261120
      %v2135 = vsel %vm2133, %v2111, 0
      %2137 = vmatprep.subr.bf16.mxu0 0
      %2138 = vmatpush1.bf16.msra.mxu0 %v2129
      %2139 = vmatprep.subr.bf16.mxu0 0
      %2140 = vmatpush1.bf16.msra.mxu0 %v2130
      %2141 = vmatprep.subr.bf16.mxu0 0
      %2142 = vmatpush1.bf16.msra.mxu0 0
      %2143 = vmatprep.subr.bf16.mxu0 0
      %2144 = vmatpush1.bf16.msra.mxu0 0
      %2145 = vmatprep.subr.bf16.mxu0 0
      %2146 = vmatpush1.bf16.msra.mxu0 0
      %2147 = vmatprep.subr.bf16.mxu0 0
      %2148 = vmatpush1.bf16.msra.mxu0 0
      %2149 = vmatprep.subr.bf16.mxu0 0
      %2150 = vmatpush1.bf16.msra.mxu0 0
      %2151 = vmatprep.subr.bf16.mxu0 0
      %2152 = vmatpush1.bf16.msra.mxu0 0
      %2153 = vmatprep.subr.bf16.mxu0 0
      %2154 = vmatpush1.bf16.msra.mxu0 0
      %2155 = vmatprep.subr.bf16.mxu0 0
      %2156 = vmatpush1.bf16.msra.mxu0 0
      %2157 = vmatprep.subr.bf16.mxu0 0
      %2158 = vmatpush1.bf16.msra.mxu0 0
      %2159 = vmatprep.subr.bf16.mxu0 0
      %2160 = vmatpush1.bf16.msra.mxu0 0
      %2161 = vmatprep.subr.bf16.mxu0 0
      %2162 = vmatpush1.bf16.msra.mxu0 0
      %2163 = vmatprep.subr.bf16.mxu0 0
      %2164 = vmatpush1.bf16.msra.mxu0 0
      %2165 = vmatprep.subr.bf16.mxu0 0
      %2166 = vmatpush1.bf16.msra.mxu0 0
      %2167 = vmatprep.subr.bf16.mxu0 0
      %2168 = vmatpush1.bf16.msra.mxu0 0
      %2169 = vmatprep.mubr.bf16.mxu0 0
      %2170 = vmatmul.mubr.bf16.gmra.mrb[0].mxu0 %v2135
      %v2171 = vpop.f32.mrb[0].mxu0
      %v2172 = vadd.f32 %v2120, %v2171
      %v2173 = vpop.f32.mrb[0].mxu0
      %v2174 = vpop.f32.mrb[0].mxu0
      %v2175 = vpop.f32.mrb[0].mxu0
      %2176 = vdwg.mxu0
      %vm2177 = vcmp.gt.f32.partialorder %v2172, 0.0
      %v2178 = vlaneseq
      %v2179 = vshrl.u32 %v2178, 7
      %v2180 = vsub.s32 3, %v2179
      %v2181 = vrot.slane %v2116, %v2180
      %v2182 = vmul.f32 %v2181, %v2172
      %v2183 = vsel %vm2177, %v2172, %v2182
      %v2184 = vlaneseq
      %v2185 = vshrl.u32 %v2184, 7
      %v2186 = vsub.s32 1, %v2185
      %v2187 = vrot.slane %v2116, %v2186
      %v2188 = vmul.f32 %v2183, %v2187
      %v2189 = vlaneseq
      %v2190 = vshrl.u32 %v2189, 7
      %v2191 = vsub.s32 2, %v2190
      %v2192 = vrot.slane %v2116, %v2191
      %v2193 = vadd.f32 %v2188, %v2192
      %v2194 = vpack.c.bf16 %v2193, %v2193
      %v2195 = vld [vmem:[%s14] sm:$0xff]
      %v2196 = vld [vmem:[%s14 + $0x8] sm:$0xf]
      %v2197 = vld [vmem:[%s14 + $0xc] sm:$0xff]
      %v2198 = vld [vmem:[%s14 + $0x14] sm:$0xf]
      %v2199 = vld [vmem:[%s14 + $0x18] sm:$0xff]
      %v2200 = vld [vmem:[%s14 + $0x20] sm:$0xf]
      %v2201 = vld [vmem:[%s14 + $0x24] sm:$0xff]
      %v2202 = vld [vmem:[%s14 + $0x2c] sm:$0xf]
      %v2203 = vld [vmem:[%s14 + $0x30] sm:$0xff]
      %v2204 = vld [vmem:[%s14 + $0x38] sm:$0xf]
      %v2205 = vld [vmem:[%s14 + $0x3c] sm:$0xff]
      %v2206 = vld [vmem:[%s14 + $0x44] sm:$0xf]
      %v2207 = vld [vmem:[%s14 + $0x48] sm:$0xff]
      %v2208 = vld [vmem:[%s14 + $0x50] sm:$0xf]
      %v2209 = vld [vmem:[%s14 + $0x54] sm:$0xff]
      %v2210 = vld [vmem:[%s14 + $0x5c] sm:$0xf]
      %v2211 = vld [vmem:[%s14 + $0x60] sm:$0xff]
      %v2212 = vld [vmem:[%s14 + $0x68] sm:$0xf]
      %v2213 = vld [vmem:[%s14 + $0x6c] sm:$0xff]
      %v2214 = vld [vmem:[%s14 + $0x74] sm:$0xf]
      %v2215 = vld [vmem:[%s14 + $0x78] sm:$0xff]
      %v2216 = vld [vmem:[%s14 + $0x80] sm:$0xf]
      %v2217 = vld [vmem:[%s14 + $0x84] sm:$0x11]
      %v2218 = vld [vmem:[%s14 + $0x8c] sm:$0x1]
      %v2219 = vld [vmem:[%s15] sm:$0xff]
      %v2220 = vld [vmem:[%s15 + $0x8] sm:$0xf]
      %v2223 = vlaneseq
      %v2224 = vshrl.u32 %v2223, 7
      %v2225 = vsub.s32 0, %v2224
      %v2226 = vrot.slane %v2219, %v2225
      %v2227 = vlaneseq
      %v2228 = vshrl.u32 %v2227, 7
      %v2229 = vsub.s32 4, %v2228
      %v2230 = vrot.slane %v2219, %v2229
      %v2231 = vlaneseq
      %v2232 = vshrl.u32 %v2231, 7
      %v2233 = vsub.s32 0, %v2232
      %v2234 = vrot.slane %v2220, %v2233
      %v2238 = vlaneseq
      %v2239 = vshrl.u32 %v2238, 7
      %v2240 = vsub.s32 0, %v2239
      %v2241 = vrot.slane %v2226, %v2240
      %v2242 = vlaneseq
      %v2243 = vshrl.u32 %v2242, 7
      %v2244 = vsub.s32 0, %v2243
      %v2245 = vrot.slane %v2230, %v2244
      %v2246 = vlaneseq
      %v2247 = vshrl.u32 %v2246, 7
      %v2248 = vsub.s32 0, %v2247
      %v2249 = vrot.slane %v2234, %v2248
      %v2274 = vunpack.c.l.b16 %v2195
      %v2275 = vunpack.c.h.b16 %v2195
      %v2276 = vunpack.c.l.b16 %v2196
      %v2277 = vunpack.c.l.b16 %v2197
      %v2278 = vunpack.c.h.b16 %v2197
      %v2279 = vunpack.c.l.b16 %v2198
      %v2280 = vunpack.c.l.b16 %v2199
      %v2281 = vunpack.c.h.b16 %v2199
      %v2282 = vunpack.c.l.b16 %v2200
      %v2283 = vunpack.c.l.b16 %v2201
      %v2284 = vunpack.c.h.b16 %v2201
      %v2285 = vunpack.c.l.b16 %v2202
      %v2286 = vunpack.c.l.b16 %v2203
      %v2287 = vunpack.c.h.b16 %v2203
      %v2288 = vunpack.c.l.b16 %v2204
      %v2289 = vunpack.c.l.b16 %v2205
      %v2290 = vunpack.c.h.b16 %v2205
      %v2291 = vunpack.c.l.b16 %v2206
      %v2292 = vunpack.c.l.b16 %v2207
      %v2293 = vunpack.c.h.b16 %v2207
      %v2294 = vunpack.c.l.b16 %v2208
      %v2295 = vunpack.c.l.b16 %v2209
      %v2296 = vunpack.c.h.b16 %v2209
      %v2297 = vunpack.c.l.b16 %v2210
      %v2298 = vunpack.c.l.b16 %v2211
      %v2299 = vunpack.c.h.b16 %v2211
      %v2300 = vunpack.c.l.b16 %v2212
      %v2301 = vunpack.c.l.b16 %v2213
      %v2302 = vunpack.c.h.b16 %v2213
      %v2303 = vunpack.c.l.b16 %v2214
      %v2304 = vunpack.c.l.b16 %v2215
      %v2305 = vunpack.c.h.b16 %v2215
      %v2306 = vunpack.c.l.b16 %v2216
      %v2307 = vunpack.c.l.b16 %v2217
      %v2308 = vunpack.c.h.b16 %v2217
      %v2309 = vunpack.c.l.b16 %v2218
      %v2310 = vpack.c.b16 %v2277, %v2274
      %v2311 = vpack.c.b16 %v2278, %v2275
      %v2312 = vpack.c.b16 %v2279, %v2276
      %v2313 = vpack.c.b16 %v2283, %v2280
      %v2314 = vpack.c.b16 %v2284, %v2281
      %v2315 = vpack.c.b16 %v2285, %v2282
      %v2316 = vpack.c.b16 %v2289, %v2286
      %v2317 = vpack.c.b16 %v2290, %v2287
      %v2318 = vpack.c.b16 %v2291, %v2288
      %v2319 = vpack.c.b16 %v2295, %v2292
      %v2320 = vpack.c.b16 %v2296, %v2293
      %v2321 = vpack.c.b16 %v2297, %v2294
      %v2322 = vpack.c.b16 %v2301, %v2298
      %v2323 = vpack.c.b16 %v2302, %v2299
      %v2324 = vpack.c.b16 %v2303, %v2300
      %v2325 = vpack.c.b16 %v2307, %v2304
      %v2326 = vpack.c.b16 %v2308, %v2305
      %v2327 = vpack.c.b16 %v2309, %v2306
      %v2344 = vsel %vm2063, %v2194, 0
      %v2347 = vsel %vm2067, %v2325, 0
      %v2350 = vsel %vm2067, %v2326, 0
      %v2353 = vsel %vm2067, %v2327, 0
      %2355 = vmatprep.subr.bf16.mxu0 %v2311
      %2356 = vmatpush1.bf16.msra.mxu0 %v2310
      %2357 = vmatprep.subr.bf16.mxu0 %v2314
      %2358 = vmatpush1.bf16.msra.mxu0 %v2313
      %2359 = vmatprep.subr.bf16.mxu0 %v2317
      %2360 = vmatpush1.bf16.msra.mxu0 %v2316
      %2361 = vmatprep.subr.bf16.mxu0 %v2320
      %2362 = vmatpush1.bf16.msra.mxu0 %v2319
      %2363 = vmatprep.subr.bf16.mxu0 %v2323
      %2364 = vmatpush1.bf16.msra.mxu0 %v2322
      %2365 = vmatprep.subr.bf16.mxu0 %v2350
      %2366 = vmatpush1.bf16.msra.mxu0 %v2347
      %2367 = vmatprep.subr.bf16.mxu0 0
      %2368 = vmatpush1.bf16.msra.mxu0 0
      %2369 = vmatprep.subr.bf16.mxu0 0
      %2370 = vmatpush1.bf16.msra.mxu0 0
      %2371 = vmatprep.subr.bf16.mxu0 0
      %2372 = vmatpush1.bf16.msra.mxu0 0
      %2373 = vmatprep.subr.bf16.mxu0 0
      %2374 = vmatpush1.bf16.msra.mxu0 0
      %2375 = vmatprep.subr.bf16.mxu0 0
      %2376 = vmatpush1.bf16.msra.mxu0 0
      %2377 = vmatprep.subr.bf16.mxu0 0
      %2378 = vmatpush1.bf16.msra.mxu0 0
      %2379 = vmatprep.subr.bf16.mxu0 0
      %2380 = vmatpush1.bf16.msra.mxu0 0
      %2381 = vmatprep.subr.bf16.mxu0 0
      %2382 = vmatpush1.bf16.msra.mxu0 0
      %2383 = vmatprep.subr.bf16.mxu0 0
      %2384 = vmatpush1.bf16.msra.mxu0 0
      %2385 = vmatprep.subr.bf16.mxu0 0
      %2386 = vmatpush1.bf16.msra.mxu0 0
      %2387 = vmatprep.mubr.bf16.mxu0 0
      %2388 = vmatmul.mubr.bf16.gmra.mrb[0].mxu0 %v2344
      %v2389 = vpop.f32.mrb[0].mxu0
      %v2390 = vadd.f32 %v2241, %v2389
      %v2391 = vpop.f32.mrb[0].mxu0
      %v2392 = vadd.f32 %v2245, %v2391
      %v2393 = vpop.f32.mrb[0].mxu0
      %v2394 = vpop.f32.mrb[0].mxu0
      %2395 = vdwg.mxu0
      %2396 = vmatprep.subr.bf16.mxu0 0
      %2397 = vmatpush1.bf16.msra.mxu0 %v2312
      %2398 = vmatprep.subr.bf16.mxu0 0
      %2399 = vmatpush1.bf16.msra.mxu0 %v2315
      %2400 = vmatprep.subr.bf16.mxu0 0
      %2401 = vmatpush1.bf16.msra.mxu0 %v2318
      %2402 = vmatprep.subr.bf16.mxu0 0
      %2403 = vmatpush1.bf16.msra.mxu0 %v2321
      %2404 = vmatprep.subr.bf16.mxu0 0
      %2405 = vmatpush1.bf16.msra.mxu0 %v2324
      %2406 = vmatprep.subr.bf16.mxu0 0
      %2407 = vmatpush1.bf16.msra.mxu0 %v2353
      %2408 = vmatprep.subr.bf16.mxu0 0
      %2409 = vmatpush1.bf16.msra.mxu0 0
      %2410 = vmatprep.subr.bf16.mxu0 0
      %2411 = vmatpush1.bf16.msra.mxu0 0
      %2412 = vmatprep.subr.bf16.mxu0 0
      %2413 = vmatpush1.bf16.msra.mxu0 0
      %2414 = vmatprep.subr.bf16.mxu0 0
      %2415 = vmatpush1.bf16.msra.mxu0 0
      %2416 = vmatprep.subr.bf16.mxu0 0
      %2417 = vmatpush1.bf16.msra.mxu0 0
      %2418 = vmatprep.subr.bf16.mxu0 0
      %2419 = vmatpush1.bf16.msra.mxu0 0
      %2420 = vmatprep.subr.bf16.mxu0 0
      %2421 = vmatpush1.bf16.msra.mxu0 0
      %2422 = vmatprep.subr.bf16.mxu0 0
      %2423 = vmatpush1.bf16.msra.mxu0 0
      %2424 = vmatprep.subr.bf16.mxu0 0
      %2425 = vmatpush1.bf16.msra.mxu0 0
      %2426 = vmatprep.subr.bf16.mxu0 0
      %2427 = vmatpush1.bf16.msra.mxu0 0
      %2428 = vmatprep.mubr.bf16.mxu0 0
      %2429 = vmatmul.mubr.bf16.gmra.mrb[0].mxu0 %v2344
      %v2430 = vpop.f32.mrb[0].mxu0
      %v2431 = vadd.f32 %v2249, %v2430
      %v2432 = vpop.f32.mrb[0].mxu0
      %v2433 = vpop.f32.mrb[0].mxu0
      %v2434 = vpop.f32.mrb[0].mxu0
      %2435 = vdwg.mxu0
      %vm2436 = vcmp.gt.f32.partialorder %v2390, 0.0
      %vm2437 = vcmp.gt.f32.partialorder %v2392, 0.0
      %vm2438 = vcmp.gt.f32.partialorder %v2431, 0.0
      %v2439 = vlaneseq
      %v2440 = vshrl.u32 %v2439, 7
      %v2441 = vsub.s32 3, %v2440
      %v2442 = vrot.slane %v2219, %v2441
      %v2443 = vlaneseq
      %v2444 = vshrl.u32 %v2443, 7
      %v2445 = vsub.s32 7, %v2444
      %v2446 = vrot.slane %v2219, %v2445
      %v2447 = vlaneseq
      %v2448 = vshrl.u32 %v2447, 7
      %v2449 = vsub.s32 3, %v2448
      %v2450 = vrot.slane %v2220, %v2449
      %v2454 = vlaneseq
      %v2455 = vshrl.u32 %v2454, 7
      %v2456 = vsub.s32 3, %v2455
      %v2457 = vrot.slane %v2442, %v2456
      %v2458 = vlaneseq
      %v2459 = vshrl.u32 %v2458, 7
      %v2460 = vsub.s32 3, %v2459
      %v2461 = vrot.slane %v2446, %v2460
      %v2462 = vlaneseq
      %v2463 = vshrl.u32 %v2462, 7
      %v2464 = vsub.s32 3, %v2463
      %v2465 = vrot.slane %v2450, %v2464
      %v2466 = vmul.f32 %v2457, %v2390
      %v2467 = vmul.f32 %v2461, %v2392
      %v2468 = vmul.f32 %v2465, %v2431
      %v2469 = vsel %vm2436, %v2390, %v2466
      %v2470 = vsel %vm2437, %v2392, %v2467
      %v2471 = vsel %vm2438, %v2431, %v2468
      %v2472 = vlaneseq
      %v2473 = vshrl.u32 %v2472, 7
      %v2474 = vsub.s32 1, %v2473
      %v2475 = vrot.slane %v2219, %v2474
      %v2476 = vlaneseq
      %v2477 = vshrl.u32 %v2476, 7
      %v2478 = vsub.s32 5, %v2477
      %v2479 = vrot.slane %v2219, %v2478
      %v2480 = vlaneseq
      %v2481 = vshrl.u32 %v2480, 7
      %v2482 = vsub.s32 1, %v2481
      %v2483 = vrot.slane %v2220, %v2482
      %v2487 = vlaneseq
      %v2488 = vshrl.u32 %v2487, 7
      %v2489 = vsub.s32 1, %v2488
      %v2490 = vrot.slane %v2475, %v2489
      %v2491 = vlaneseq
      %v2492 = vshrl.u32 %v2491, 7
      %v2493 = vsub.s32 1, %v2492
      %v2494 = vrot.slane %v2479, %v2493
      %v2495 = vlaneseq
      %v2496 = vshrl.u32 %v2495, 7
      %v2497 = vsub.s32 1, %v2496
      %v2498 = vrot.slane %v2483, %v2497
      %v2499 = vmul.f32 %v2469, %v2490
      %v2500 = vmul.f32 %v2470, %v2494
      %v2501 = vmul.f32 %v2471, %v2498
      %v2502 = vlaneseq
      %v2503 = vshrl.u32 %v2502, 7
      %v2504 = vsub.s32 2, %v2503
      %v2505 = vrot.slane %v2219, %v2504
      %v2506 = vlaneseq
      %v2507 = vshrl.u32 %v2506, 7
      %v2508 = vsub.s32 6, %v2507
      %v2509 = vrot.slane %v2219, %v2508
      %v2510 = vlaneseq
      %v2511 = vshrl.u32 %v2510, 7
      %v2512 = vsub.s32 2, %v2511
      %v2513 = vrot.slane %v2220, %v2512
      %v2517 = vlaneseq
      %v2518 = vshrl.u32 %v2517, 7
      %v2519 = vsub.s32 2, %v2518
      %v2520 = vrot.slane %v2505, %v2519
      %v2521 = vlaneseq
      %v2522 = vshrl.u32 %v2521, 7
      %v2523 = vsub.s32 2, %v2522
      %v2524 = vrot.slane %v2509, %v2523
      %v2525 = vlaneseq
      %v2526 = vshrl.u32 %v2525, 7
      %v2527 = vsub.s32 2, %v2526
      %v2528 = vrot.slane %v2513, %v2527
      %v2529 = vadd.f32 %v2499, %v2520
      %v2530 = vadd.f32 %v2500, %v2524
      %v2531 = vadd.f32 %v2501, %v2528
      %v2532 = vpack.c.bf16 %v2529, %v2529
      %v2533 = vpack.c.bf16 %v2530, %v2530
      %v2534 = vpack.c.bf16 %v2531, %v2531
      %v2535 = vld [vmem:[%s16] sm:$0xff]
      %v2536 = vld [vmem:[%s16 + $0x8] sm:$0xff]
      %v2537 = vld [vmem:[%s16 + $0x10] sm:$0xff]
      %v2538 = vld [vmem:[%s16 + $0x18] sm:$0xff]
      %v2539 = vld [vmem:[%s16 + $0x20] sm:$0xff]
      %v2540 = vld [vmem:[%s16 + $0x28] sm:$0xff]
      %v2541 = vld [vmem:[%s16 + $0x30] sm:$0xff]
      %v2542 = vld [vmem:[%s16 + $0x38] sm:$0xff]
      %v2543 = vld [vmem:[%s16 + $0x40] sm:$0xff]
      %v2544 = vld [vmem:[%s16 + $0x48] sm:$0xff]
      %v2545 = vld [vmem:[%s16 + $0x50] sm:$0xff]
      %v2546 = vld [vmem:[%s16 + $0x58] sm:$0xff]
      %v2547 = vld [vmem:[%s16 + $0x60] sm:$0xff]
      %v2548 = vld [vmem:[%s16 + $0x68] sm:$0xff]
      %v2549 = vld [vmem:[%s16 + $0x70] sm:$0xff]
      %v2550 = vld [vmem:[%s16 + $0x78] sm:$0xff]
      %v2551 = vld [vmem:[%s16 + $0x80] sm:$0xff]
      %v2552 = vld [vmem:[%s16 + $0x88] sm:$0xff]
      %v2553 = vld [vmem:[%s16 + $0x90] sm:$0xff]
      %v2554 = vld [vmem:[%s16 + $0x98] sm:$0xff]
      %v2555 = vld [vmem:[%s16 + $0xa0] sm:$0xff]
      %v2556 = vld [vmem:[%s16 + $0xa8] sm:$0xff]
      %v2557 = vld [vmem:[%s16 + $0xb0] sm:$0xff]
      %v2558 = vld [vmem:[%s16 + $0xb8] sm:$0xff]
      %v2559 = vld [vmem:[%s16 + $0xc0] sm:$0xff]
      %v2560 = vld [vmem:[%s16 + $0xc8] sm:$0xff]
      %v2561 = vld [vmem:[%s16 + $0xd0] sm:$0xff]
      %v2562 = vld [vmem:[%s16 + $0xd8] sm:$0xff]
      %v2563 = vld [vmem:[%s16 + $0xe0] sm:$0xff]
      %v2564 = vld [vmem:[%s16 + $0xe8] sm:$0xff]
      %v2565 = vld [vmem:[%s16 + $0xf0] sm:$0xff]
      %v2566 = vld [vmem:[%s16 + $0xf8] sm:$0xff]
      %v2567 = vld [vmem:[%s16 + $0x100] sm:$0xff]
      %v2568 = vld [vmem:[%s16 + $0x108] sm:$0xff]
      %v2569 = vld [vmem:[%s16 + $0x110] sm:$0xff]
      %v2570 = vld [vmem:[%s16 + $0x118] sm:$0xff]
      %v2571 = vld [vmem:[%s16 + $0x120] sm:$0xff]
      %v2572 = vld [vmem:[%s16 + $0x128] sm:$0xff]
      %v2573 = vld [vmem:[%s16 + $0x130] sm:$0xff]
      %v2574 = vld [vmem:[%s16 + $0x138] sm:$0xff]
      %v2575 = vld [vmem:[%s16 + $0x140] sm:$0xff]
      %v2576 = vld [vmem:[%s16 + $0x148] sm:$0xff]
      %v2577 = vld [vmem:[%s16 + $0x150] sm:$0xff]
      %v2578 = vld [vmem:[%s16 + $0x158] sm:$0xff]
      %v2579 = vld [vmem:[%s16 + $0x160] sm:$0xff]
      %v2580 = vld [vmem:[%s16 + $0x168] sm:$0xff]
      %v2581 = vld [vmem:[%s16 + $0x170] sm:$0xff]
      %v2582 = vld [vmem:[%s16 + $0x178] sm:$0xff]
      %v2583 = vld [vmem:[%s16 + $0x180] sm:$0xff]
      %v2584 = vld [vmem:[%s16 + $0x188] sm:$0xff]
      %v2585 = vld [vmem:[%s16 + $0x190] sm:$0xff]
      %v2586 = vld [vmem:[%s16 + $0x198] sm:$0xff]
      %v2587 = vld [vmem:[%s16 + $0x1a0] sm:$0xff]
      %v2588 = vld [vmem:[%s16 + $0x1a8] sm:$0xff]
      %v2589 = vld [vmem:[%s16 + $0x1b0] sm:$0xff]
      %v2590 = vld [vmem:[%s16 + $0x1b8] sm:$0xff]
      %v2591 = vld [vmem:[%s16 + $0x1c0] sm:$0xff]
      %v2592 = vld [vmem:[%s16 + $0x1c8] sm:$0xff]
      %v2593 = vld [vmem:[%s16 + $0x1d0] sm:$0xff]
      %v2594 = vld [vmem:[%s16 + $0x1d8] sm:$0xff]
      %v2595 = vld [vmem:[%s16 + $0x1e0] sm:$0xff]
      %v2596 = vld [vmem:[%s16 + $0x1e8] sm:$0xff]
      %v2597 = vld [vmem:[%s16 + $0x1f0] sm:$0xff]
      %v2598 = vld [vmem:[%s16 + $0x1f8] sm:$0xff]
      %v2599 = vld [vmem:[%s16 + $0x200] sm:$0xff]
      %v2600 = vld [vmem:[%s16 + $0x208] sm:$0xff]
      %v2601 = vld [vmem:[%s16 + $0x210] sm:$0xff]
      %v2602 = vld [vmem:[%s16 + $0x218] sm:$0xff]
      %v2603 = vld [vmem:[%s16 + $0x220] sm:$0xff]
      %v2604 = vld [vmem:[%s16 + $0x228] sm:$0xff]
      %v2605 = vld [vmem:[%s16 + $0x230] sm:$0xff]
      %v2606 = vld [vmem:[%s16 + $0x238] sm:$0xff]
      %v2607 = vld [vmem:[%s16 + $0x240] sm:$0xff]
      %v2608 = vld [vmem:[%s16 + $0x248] sm:$0xff]
      %v2609 = vld [vmem:[%s16 + $0x250] sm:$0xff]
      %v2610 = vld [vmem:[%s16 + $0x258] sm:$0xff]
      %v2611 = vld [vmem:[%s16 + $0x260] sm:$0xff]
      %v2612 = vld [vmem:[%s16 + $0x268] sm:$0xff]
      %v2613 = vld [vmem:[%s16 + $0x270] sm:$0xff]
      %v2614 = vld [vmem:[%s16 + $0x278] sm:$0xff]
      %v2615 = vld [vmem:[%s16 + $0x280] sm:$0xff]
      %v2616 = vld [vmem:[%s16 + $0x288] sm:$0xff]
      %v2617 = vld [vmem:[%s16 + $0x290] sm:$0xff]
      %v2618 = vld [vmem:[%s16 + $0x298] sm:$0xff]
      %v2619 = vld [vmem:[%s16 + $0x2a0] sm:$0xff]
      %v2620 = vld [vmem:[%s16 + $0x2a8] sm:$0xff]
      %v2621 = vld [vmem:[%s16 + $0x2b0] sm:$0xff]
      %v2622 = vld [vmem:[%s16 + $0x2b8] sm:$0xff]
      %v2623 = vld [vmem:[%s16 + $0x2c0] sm:$0xff]
      %v2624 = vld [vmem:[%s16 + $0x2c8] sm:$0xff]
      %v2625 = vld [vmem:[%s16 + $0x2d0] sm:$0xff]
      %v2626 = vld [vmem:[%s16 + $0x2d8] sm:$0xff]
      %v2627 = vld [vmem:[%s16 + $0x2e0] sm:$0xff]
      %v2628 = vld [vmem:[%s16 + $0x2e8] sm:$0xff]
      %v2629 = vld [vmem:[%s16 + $0x2f0] sm:$0xff]
      %v2630 = vld [vmem:[%s16 + $0x2f8] sm:$0xff]
      %v2631 = vld [vmem:[%s16 + $0x300] sm:$0xff]
      %v2632 = vld [vmem:[%s16 + $0x308] sm:$0xff]
      %v2633 = vld [vmem:[%s16 + $0x310] sm:$0xff]
      %v2634 = vld [vmem:[%s16 + $0x318] sm:$0xff]
      %v2635 = vld [vmem:[%s16 + $0x320] sm:$0xff]
      %v2636 = vld [vmem:[%s16 + $0x328] sm:$0xff]
      %v2637 = vld [vmem:[%s16 + $0x330] sm:$0xff]
      %v2638 = vld [vmem:[%s16 + $0x338] sm:$0xff]
      %v2639 = vld [vmem:[%s16 + $0x340] sm:$0xff]
      %v2640 = vld [vmem:[%s16 + $0x348] sm:$0xff]
      %v2641 = vld [vmem:[%s16 + $0x350] sm:$0xff]
      %v2642 = vld [vmem:[%s16 + $0x358] sm:$0xff]
      %v2643 = vld [vmem:[%s16 + $0x360] sm:$0xff]
      %v2644 = vld [vmem:[%s16 + $0x368] sm:$0xff]
      %v2645 = vld [vmem:[%s16 + $0x370] sm:$0xff]
      %v2646 = vld [vmem:[%s16 + $0x378] sm:$0xff]
      %v2647 = vld [vmem:[%s16 + $0x380] sm:$0xff]
      %v2648 = vld [vmem:[%s16 + $0x388] sm:$0xff]
      %v2649 = vld [vmem:[%s16 + $0x390] sm:$0xff]
      %v2650 = vld [vmem:[%s16 + $0x398] sm:$0xff]
      %v2651 = vld [vmem:[%s16 + $0x3a0] sm:$0xff]
      %v2652 = vld [vmem:[%s16 + $0x3a8] sm:$0xff]
      %v2653 = vld [vmem:[%s16 + $0x3b0] sm:$0xff]
      %v2654 = vld [vmem:[%s16 + $0x3b8] sm:$0xff]
      %v2655 = vld [vmem:[%s16 + $0x3c0] sm:$0xff]
      %v2656 = vld [vmem:[%s16 + $0x3c8] sm:$0xff]
      %v2657 = vld [vmem:[%s16 + $0x3d0] sm:$0xff]
      %v2658 = vld [vmem:[%s16 + $0x3d8] sm:$0xff]
      %v2659 = vld [vmem:[%s16 + $0x3e0] sm:$0xff]
      %v2660 = vld [vmem:[%s16 + $0x3e8] sm:$0xff]
      %v2661 = vld [vmem:[%s16 + $0x3f0] sm:$0xff]
      %v2662 = vld [vmem:[%s16 + $0x3f8] sm:$0xff]
      %v2663 = vld [vmem:[%s16 + $0x400] sm:$0xff]
      %v2664 = vld [vmem:[%s16 + $0x408] sm:$0xff]
      %v2665 = vld [vmem:[%s16 + $0x410] sm:$0xff]
      %v2666 = vld [vmem:[%s16 + $0x418] sm:$0xff]
      %v2667 = vld [vmem:[%s16 + $0x420] sm:$0xff]
      %v2668 = vld [vmem:[%s16 + $0x428] sm:$0xff]
      %v2669 = vld [vmem:[%s16 + $0x430] sm:$0xff]
      %v2670 = vld [vmem:[%s17] sm:$0xff]
      %v2671 = vld [vmem:[%s17 + $0x8] sm:$0xff]
      %v2672 = vld [vmem:[%s17 + $0x10] sm:$0xff]
      %v2676 = vlaneseq
      %v2677 = vshrl.u32 %v2676, 7
      %v2678 = vsub.s32 0, %v2677
      %v2679 = vrot.slane %v2670, %v2678
      %v2680 = vlaneseq
      %v2681 = vshrl.u32 %v2680, 7
      %v2682 = vsub.s32 4, %v2681
      %v2683 = vrot.slane %v2670, %v2682
      %v2684 = vlaneseq
      %v2685 = vshrl.u32 %v2684, 7
      %v2686 = vsub.s32 0, %v2685
      %v2687 = vrot.slane %v2671, %v2686
      %v2688 = vlaneseq
      %v2689 = vshrl.u32 %v2688, 7
      %v2690 = vsub.s32 4, %v2689
      %v2691 = vrot.slane %v2671, %v2690
      %v2692 = vlaneseq
      %v2693 = vshrl.u32 %v2692, 7
      %v2694 = vsub.s32 0, %v2693
      %v2695 = vrot.slane %v2672, %v2694
      %v2696 = vlaneseq
      %v2697 = vshrl.u32 %v2696, 7
      %v2698 = vsub.s32 4, %v2697
      %v2699 = vrot.slane %v2672, %v2698
      %v2706 = vlaneseq
      %v2707 = vshrl.u32 %v2706, 7
      %v2708 = vsub.s32 0, %v2707
      %v2709 = vrot.slane %v2679, %v2708
      %v2710 = vlaneseq
      %v2711 = vshrl.u32 %v2710, 7
      %v2712 = vsub.s32 0, %v2711
      %v2713 = vrot.slane %v2683, %v2712
      %v2714 = vlaneseq
      %v2715 = vshrl.u32 %v2714, 7
      %v2716 = vsub.s32 0, %v2715
      %v2717 = vrot.slane %v2687, %v2716
      %v2718 = vlaneseq
      %v2719 = vshrl.u32 %v2718, 7
      %v2720 = vsub.s32 0, %v2719
      %v2721 = vrot.slane %v2691, %v2720
      %v2722 = vlaneseq
      %v2723 = vshrl.u32 %v2722, 7
      %v2724 = vsub.s32 0, %v2723
      %v2725 = vrot.slane %v2695, %v2724
      %v2726 = vlaneseq
      %v2727 = vshrl.u32 %v2726, 7
      %v2728 = vsub.s32 0, %v2727
      %v2729 = vrot.slane %v2699, %v2728
      %v2865 = vunpack.c.l.b16 %v2535
      %v2866 = vunpack.c.h.b16 %v2535
      %v2867 = vunpack.c.l.b16 %v2536
      %v2868 = vunpack.c.h.b16 %v2536
      %v2869 = vunpack.c.l.b16 %v2537
      %v2870 = vunpack.c.h.b16 %v2537
      %v2871 = vunpack.c.l.b16 %v2538
      %v2872 = vunpack.c.h.b16 %v2538
      %v2873 = vunpack.c.l.b16 %v2539
      %v2874 = vunpack.c.h.b16 %v2539
      %v2875 = vunpack.c.l.b16 %v2540
      %v2876 = vunpack.c.h.b16 %v2540
      %v2877 = vunpack.c.l.b16 %v2541
      %v2878 = vunpack.c.h.b16 %v2541
      %v2879 = vunpack.c.l.b16 %v2542
      %v2880 = vunpack.c.h.b16 %v2542
      %v2881 = vunpack.c.l.b16 %v2543
      %v2882 = vunpack.c.h.b16 %v2543
      %v2883 = vunpack.c.l.b16 %v2544
      %v2884 = vunpack.c.h.b16 %v2544
      %v2885 = vunpack.c.l.b16 %v2545
      %v2886 = vunpack.c.h.b16 %v2545
      %v2887 = vunpack.c.l.b16 %v2546
      %v2888 = vunpack.c.h.b16 %v2546
      %v2889 = vunpack.c.l.b16 %v2547
      %v2890 = vunpack.c.h.b16 %v2547
      %v2891 = vunpack.c.l.b16 %v2548
      %v2892 = vunpack.c.h.b16 %v2548
      %v2893 = vunpack.c.l.b16 %v2549
      %v2894 = vunpack.c.h.b16 %v2549
      %v2895 = vunpack.c.l.b16 %v2550
      %v2896 = vunpack.c.h.b16 %v2550
      %v2897 = vunpack.c.l.b16 %v2551
      %v2898 = vunpack.c.h.b16 %v2551
      %v2899 = vunpack.c.l.b16 %v2552
      %v2900 = vunpack.c.h.b16 %v2552
      %v2901 = vunpack.c.l.b16 %v2553
      %v2902 = vunpack.c.h.b16 %v2553
      %v2903 = vunpack.c.l.b16 %v2554
      %v2904 = vunpack.c.h.b16 %v2554
      %v2905 = vunpack.c.l.b16 %v2555
      %v2906 = vunpack.c.h.b16 %v2555
      %v2907 = vunpack.c.l.b16 %v2556
      %v2908 = vunpack.c.h.b16 %v2556
      %v2909 = vunpack.c.l.b16 %v2557
      %v2910 = vunpack.c.h.b16 %v2557
      %v2911 = vunpack.c.l.b16 %v2558
      %v2912 = vunpack.c.h.b16 %v2558
      %v2913 = vunpack.c.l.b16 %v2559
      %v2914 = vunpack.c.h.b16 %v2559
      %v2915 = vunpack.c.l.b16 %v2560
      %v2916 = vunpack.c.h.b16 %v2560
      %v2917 = vunpack.c.l.b16 %v2561
      %v2918 = vunpack.c.h.b16 %v2561
      %v2919 = vunpack.c.l.b16 %v2562
      %v2920 = vunpack.c.h.b16 %v2562
      %v2921 = vunpack.c.l.b16 %v2563
      %v2922 = vunpack.c.h.b16 %v2563
      %v2923 = vunpack.c.l.b16 %v2564
      %v2924 = vunpack.c.h.b16 %v2564
      %v2925 = vunpack.c.l.b16 %v2565
      %v2926 = vunpack.c.h.b16 %v2565
      %v2927 = vunpack.c.l.b16 %v2566
      %v2928 = vunpack.c.h.b16 %v2566
      %v2929 = vunpack.c.l.b16 %v2567
      %v2930 = vunpack.c.h.b16 %v2567
      %v2931 = vunpack.c.l.b16 %v2568
      %v2932 = vunpack.c.h.b16 %v2568
      %v2933 = vunpack.c.l.b16 %v2569
      %v2934 = vunpack.c.h.b16 %v2569
      %v2935 = vunpack.c.l.b16 %v2570
      %v2936 = vunpack.c.h.b16 %v2570
      %v2937 = vunpack.c.l.b16 %v2571
      %v2938 = vunpack.c.h.b16 %v2571
      %v2939 = vunpack.c.l.b16 %v2572
      %v2940 = vunpack.c.h.b16 %v2572
      %v2941 = vunpack.c.l.b16 %v2573
      %v2942 = vunpack.c.h.b16 %v2573
      %v2943 = vunpack.c.l.b16 %v2574
      %v2944 = vunpack.c.h.b16 %v2574
      %v2945 = vunpack.c.l.b16 %v2575
      %v2946 = vunpack.c.h.b16 %v2575
      %v2947 = vunpack.c.l.b16 %v2576
      %v2948 = vunpack.c.h.b16 %v2576
      %v2949 = vunpack.c.l.b16 %v2577
      %v2950 = vunpack.c.h.b16 %v2577
      %v2951 = vunpack.c.l.b16 %v2578
      %v2952 = vunpack.c.h.b16 %v2578
      %v2953 = vunpack.c.l.b16 %v2579
      %v2954 = vunpack.c.h.b16 %v2579
      %v2955 = vunpack.c.l.b16 %v2580
      %v2956 = vunpack.c.h.b16 %v2580
      %v2957 = vunpack.c.l.b16 %v2581
      %v2958 = vunpack.c.h.b16 %v2581
      %v2959 = vunpack.c.l.b16 %v2582
      %v2960 = vunpack.c.h.b16 %v2582
      %v2961 = vunpack.c.l.b16 %v2583
      %v2962 = vunpack.c.h.b16 %v2583
      %v2963 = vunpack.c.l.b16 %v2584
      %v2964 = vunpack.c.h.b16 %v2584
      %v2965 = vunpack.c.l.b16 %v2585
      %v2966 = vunpack.c.h.b16 %v2585
      %v2967 = vunpack.c.l.b16 %v2586
      %v2968 = vunpack.c.h.b16 %v2586
      %v2969 = vunpack.c.l.b16 %v2587
      %v2970 = vunpack.c.h.b16 %v2587
      %v2971 = vunpack.c.l.b16 %v2588
      %v2972 = vunpack.c.h.b16 %v2588
      %v2973 = vunpack.c.l.b16 %v2589
      %v2974 = vunpack.c.h.b16 %v2589
      %v2975 = vunpack.c.l.b16 %v2590
      %v2976 = vunpack.c.h.b16 %v2590
      %v2977 = vunpack.c.l.b16 %v2591
      %v2978 = vunpack.c.h.b16 %v2591
      %v2979 = vunpack.c.l.b16 %v2592
      %v2980 = vunpack.c.h.b16 %v2592
      %v2981 = vunpack.c.l.b16 %v2593
      %v2982 = vunpack.c.h.b16 %v2593
      %v2983 = vunpack.c.l.b16 %v2594
      %v2984 = vunpack.c.h.b16 %v2594
      %v2985 = vunpack.c.l.b16 %v2595
      %v2986 = vunpack.c.h.b16 %v2595
      %v2987 = vunpack.c.l.b16 %v2596
      %v2988 = vunpack.c.h.b16 %v2596
      %v2989 = vunpack.c.l.b16 %v2597
      %v2990 = vunpack.c.h.b16 %v2597
      %v2991 = vunpack.c.l.b16 %v2598
      %v2992 = vunpack.c.h.b16 %v2598
      %v2993 = vunpack.c.l.b16 %v2599
      %v2994 = vunpack.c.h.b16 %v2599
      %v2995 = vunpack.c.l.b16 %v2600
      %v2996 = vunpack.c.h.b16 %v2600
      %v2997 = vunpack.c.l.b16 %v2601
      %v2998 = vunpack.c.h.b16 %v2601
      %v2999 = vunpack.c.l.b16 %v2602
      %v3000 = vunpack.c.h.b16 %v2602
      %v3001 = vunpack.c.l.b16 %v2603
      %v3002 = vunpack.c.h.b16 %v2603
      %v3003 = vunpack.c.l.b16 %v2604
      %v3004 = vunpack.c.h.b16 %v2604
      %v3005 = vunpack.c.l.b16 %v2605
      %v3006 = vunpack.c.h.b16 %v2605
      %v3007 = vunpack.c.l.b16 %v2606
      %v3008 = vunpack.c.h.b16 %v2606
      %v3009 = vunpack.c.l.b16 %v2607
      %v3010 = vunpack.c.h.b16 %v2607
      %v3011 = vunpack.c.l.b16 %v2608
      %v3012 = vunpack.c.h.b16 %v2608
      %v3013 = vunpack.c.l.b16 %v2609
      %v3014 = vunpack.c.h.b16 %v2609
      %v3015 = vunpack.c.l.b16 %v2610
      %v3016 = vunpack.c.h.b16 %v2610
      %v3017 = vunpack.c.l.b16 %v2611
      %v3018 = vunpack.c.h.b16 %v2611
      %v3019 = vunpack.c.l.b16 %v2612
      %v3020 = vunpack.c.h.b16 %v2612
      %v3021 = vunpack.c.l.b16 %v2613
      %v3022 = vunpack.c.h.b16 %v2613
      %v3023 = vunpack.c.l.b16 %v2614
      %v3024 = vunpack.c.h.b16 %v2614
      %v3025 = vunpack.c.l.b16 %v2615
      %v3026 = vunpack.c.h.b16 %v2615
      %v3027 = vunpack.c.l.b16 %v2616
      %v3028 = vunpack.c.h.b16 %v2616
      %v3029 = vunpack.c.l.b16 %v2617
      %v3030 = vunpack.c.h.b16 %v2617
      %v3031 = vunpack.c.l.b16 %v2618
      %v3032 = vunpack.c.h.b16 %v2618
      %v3033 = vunpack.c.l.b16 %v2619
      %v3034 = vunpack.c.h.b16 %v2619
      %v3035 = vunpack.c.l.b16 %v2620
      %v3036 = vunpack.c.h.b16 %v2620
      %v3037 = vunpack.c.l.b16 %v2621
      %v3038 = vunpack.c.h.b16 %v2621
      %v3039 = vunpack.c.l.b16 %v2622
      %v3040 = vunpack.c.h.b16 %v2622
      %v3041 = vunpack.c.l.b16 %v2623
      %v3042 = vunpack.c.h.b16 %v2623
      %v3043 = vunpack.c.l.b16 %v2624
      %v3044 = vunpack.c.h.b16 %v2624
      %v3045 = vunpack.c.l.b16 %v2625
      %v3046 = vunpack.c.h.b16 %v2625
      %v3047 = vunpack.c.l.b16 %v2626
      %v3048 = vunpack.c.h.b16 %v2626
      %v3049 = vunpack.c.l.b16 %v2627
      %v3050 = vunpack.c.h.b16 %v2627
      %v3051 = vunpack.c.l.b16 %v2628
      %v3052 = vunpack.c.h.b16 %v2628
      %v3053 = vunpack.c.l.b16 %v2629
      %v3054 = vunpack.c.h.b16 %v2629
      %v3055 = vunpack.c.l.b16 %v2630
      %v3056 = vunpack.c.h.b16 %v2630
      %v3057 = vunpack.c.l.b16 %v2631
      %v3058 = vunpack.c.h.b16 %v2631
      %v3059 = vunpack.c.l.b16 %v2632
      %v3060 = vunpack.c.h.b16 %v2632
      %v3061 = vunpack.c.l.b16 %v2633
      %v3062 = vunpack.c.h.b16 %v2633
      %v3063 = vunpack.c.l.b16 %v2634
      %v3064 = vunpack.c.h.b16 %v2634
      %v3065 = vunpack.c.l.b16 %v2635
      %v3066 = vunpack.c.h.b16 %v2635
      %v3067 = vunpack.c.l.b16 %v2636
      %v3068 = vunpack.c.h.b16 %v2636
      %v3069 = vunpack.c.l.b16 %v2637
      %v3070 = vunpack.c.h.b16 %v2637
      %v3071 = vunpack.c.l.b16 %v2638
      %v3072 = vunpack.c.h.b16 %v2638
      %v3073 = vunpack.c.l.b16 %v2639
      %v3074 = vunpack.c.h.b16 %v2639
      %v3075 = vunpack.c.l.b16 %v2640
      %v3076 = vunpack.c.h.b16 %v2640
      %v3077 = vunpack.c.l.b16 %v2641
      %v3078 = vunpack.c.h.b16 %v2641
      %v3079 = vunpack.c.l.b16 %v2642
      %v3080 = vunpack.c.h.b16 %v2642
      %v3081 = vunpack.c.l.b16 %v2643
      %v3082 = vunpack.c.h.b16 %v2643
      %v3083 = vunpack.c.l.b16 %v2644
      %v3084 = vunpack.c.h.b16 %v2644
      %v3085 = vunpack.c.l.b16 %v2645
      %v3086 = vunpack.c.h.b16 %v2645
      %v3087 = vunpack.c.l.b16 %v2646
      %v3088 = vunpack.c.h.b16 %v2646
      %v3089 = vunpack.c.l.b16 %v2647
      %v3090 = vunpack.c.h.b16 %v2647
      %v3091 = vunpack.c.l.b16 %v2648
      %v3092 = vunpack.c.h.b16 %v2648
      %v3093 = vunpack.c.l.b16 %v2649
      %v3094 = vunpack.c.h.b16 %v2649
      %v3095 = vunpack.c.l.b16 %v2650
      %v3096 = vunpack.c.h.b16 %v2650
      %v3097 = vunpack.c.l.b16 %v2651
      %v3098 = vunpack.c.h.b16 %v2651
      %v3099 = vunpack.c.l.b16 %v2652
      %v3100 = vunpack.c.h.b16 %v2652
      %v3101 = vunpack.c.l.b16 %v2653
      %v3102 = vunpack.c.h.b16 %v2653
      %v3103 = vunpack.c.l.b16 %v2654
      %v3104 = vunpack.c.h.b16 %v2654
      %v3105 = vunpack.c.l.b16 %v2655
      %v3106 = vunpack.c.h.b16 %v2655
      %v3107 = vunpack.c.l.b16 %v2656
      %v3108 = vunpack.c.h.b16 %v2656
      %v3109 = vunpack.c.l.b16 %v2657
      %v3110 = vunpack.c.h.b16 %v2657
      %v3111 = vunpack.c.l.b16 %v2658
      %v3112 = vunpack.c.h.b16 %v2658
      %v3113 = vunpack.c.l.b16 %v2659
      %v3114 = vunpack.c.h.b16 %v2659
      %v3115 = vunpack.c.l.b16 %v2660
      %v3116 = vunpack.c.h.b16 %v2660
      %v3117 = vunpack.c.l.b16 %v2661
      %v3118 = vunpack.c.h.b16 %v2661
      %v3119 = vunpack.c.l.b16 %v2662
      %v3120 = vunpack.c.h.b16 %v2662
      %v3121 = vunpack.c.l.b16 %v2663
      %v3122 = vunpack.c.h.b16 %v2663
      %v3123 = vunpack.c.l.b16 %v2664
      %v3124 = vunpack.c.h.b16 %v2664
      %v3125 = vunpack.c.l.b16 %v2665
      %v3126 = vunpack.c.h.b16 %v2665
      %v3127 = vunpack.c.l.b16 %v2666
      %v3128 = vunpack.c.h.b16 %v2666
      %v3129 = vunpack.c.l.b16 %v2667
      %v3130 = vunpack.c.h.b16 %v2667
      %v3131 = vunpack.c.l.b16 %v2668
      %v3132 = vunpack.c.h.b16 %v2668
      %v3133 = vunpack.c.l.b16 %v2669
      %v3134 = vunpack.c.h.b16 %v2669
      %v3135 = vpack.c.b16 %v2871, %v2865
      %v3136 = vpack.c.b16 %v2872, %v2866
      %v3137 = vpack.c.b16 %v2873, %v2867
      %v3138 = vpack.c.b16 %v2874, %v2868
      %v3139 = vpack.c.b16 %v2875, %v2869
      %v3140 = vpack.c.b16 %v2876, %v2870
      %v3141 = vpack.c.b16 %v2883, %v2877
      %v3142 = vpack.c.b16 %v2884, %v2878
      %v3143 = vpack.c.b16 %v2885, %v2879
      %v3144 = vpack.c.b16 %v2886, %v2880
      %v3145 = vpack.c.b16 %v2887, %v2881
      %v3146 = vpack.c.b16 %v2888, %v2882
      %v3147 = vpack.c.b16 %v2895, %v2889
      %v3148 = vpack.c.b16 %v2896, %v2890
      %v3149 = vpack.c.b16 %v2897, %v2891
      %v3150 = vpack.c.b16 %v2898, %v2892
      %v3151 = vpack.c.b16 %v2899, %v2893
      %v3152 = vpack.c.b16 %v2900, %v2894
      %v3153 = vpack.c.b16 %v2907, %v2901
      %v3154 = vpack.c.b16 %v2908, %v2902
      %v3155 = vpack.c.b16 %v2909, %v2903
      %v3156 = vpack.c.b16 %v2910, %v2904
      %v3157 = vpack.c.b16 %v2911, %v2905
      %v3158 = vpack.c.b16 %v2912, %v2906
      %v3159 = vpack.c.b16 %v2919, %v2913
      %v3160 = vpack.c.b16 %v2920, %v2914
      %v3161 = vpack.c.b16 %v2921, %v2915
      %v3162 = vpack.c.b16 %v2922, %v2916
      %v3163 = vpack.c.b16 %v2923, %v2917
      %v3164 = vpack.c.b16 %v2924, %v2918
      %v3165 = vpack.c.b16 %v2931, %v2925
      %v3166 = vpack.c.b16 %v2932, %v2926
      %v3167 = vpack.c.b16 %v2933, %v2927
      %v3168 = vpack.c.b16 %v2934, %v2928
      %v3169 = vpack.c.b16 %v2935, %v2929
      %v3170 = vpack.c.b16 %v2936, %v2930
      %v3171 = vpack.c.b16 %v2943, %v2937
      %v3172 = vpack.c.b16 %v2944, %v2938
      %v3173 = vpack.c.b16 %v2945, %v2939
      %v3174 = vpack.c.b16 %v2946, %v2940
      %v3175 = vpack.c.b16 %v2947, %v2941
      %v3176 = vpack.c.b16 %v2948, %v2942
      %v3177 = vpack.c.b16 %v2955, %v2949
      %v3178 = vpack.c.b16 %v2956, %v2950
      %v3179 = vpack.c.b16 %v2957, %v2951
      %v3180 = vpack.c.b16 %v2958, %v2952
      %v3181 = vpack.c.b16 %v2959, %v2953
      %v3182 = vpack.c.b16 %v2960, %v2954
      %v3183 = vpack.c.b16 %v2967, %v2961
      %v3184 = vpack.c.b16 %v2968, %v2962
      %v3185 = vpack.c.b16 %v2969, %v2963
      %v3186 = vpack.c.b16 %v2970, %v2964
      %v3187 = vpack.c.b16 %v2971, %v2965
      %v3188 = vpack.c.b16 %v2972, %v2966
      %v3189 = vpack.c.b16 %v2979, %v2973
      %v3190 = vpack.c.b16 %v2980, %v2974
      %v3191 = vpack.c.b16 %v2981, %v2975
      %v3192 = vpack.c.b16 %v2982, %v2976
      %v3193 = vpack.c.b16 %v2983, %v2977
      %v3194 = vpack.c.b16 %v2984, %v2978
      %v3195 = vpack.c.b16 %v2991, %v2985
      %v3196 = vpack.c.b16 %v2992, %v2986
      %v3197 = vpack.c.b16 %v2993, %v2987
      %v3198 = vpack.c.b16 %v2994, %v2988
      %v3199 = vpack.c.b16 %v2995, %v2989
      %v3200 = vpack.c.b16 %v2996, %v2990
      %v3201 = vpack.c.b16 %v3003, %v2997
      %v3202 = vpack.c.b16 %v3004, %v2998
      %v3203 = vpack.c.b16 %v3005, %v2999
      %v3204 = vpack.c.b16 %v3006, %v3000
      %v3205 = vpack.c.b16 %v3007, %v3001
      %v3206 = vpack.c.b16 %v3008, %v3002
      %v3207 = vpack.c.b16 %v3015, %v3009
      %v3208 = vpack.c.b16 %v3016, %v3010
      %v3209 = vpack.c.b16 %v3017, %v3011
      %v3210 = vpack.c.b16 %v3018, %v3012
      %v3211 = vpack.c.b16 %v3019, %v3013
      %v3212 = vpack.c.b16 %v3020, %v3014
      %v3213 = vpack.c.b16 %v3027, %v3021
      %v3214 = vpack.c.b16 %v3028, %v3022
      %v3215 = vpack.c.b16 %v3029, %v3023
      %v3216 = vpack.c.b16 %v3030, %v3024
      %v3217 = vpack.c.b16 %v3031, %v3025
      %v3218 = vpack.c.b16 %v3032, %v3026
      %v3219 = vpack.c.b16 %v3039, %v3033
      %v3220 = vpack.c.b16 %v3040, %v3034
      %v3221 = vpack.c.b16 %v3041, %v3035
      %v3222 = vpack.c.b16 %v3042, %v3036
      %v3223 = vpack.c.b16 %v3043, %v3037
      %v3224 = vpack.c.b16 %v3044, %v3038
      %v3225 = vpack.c.b16 %v3051, %v3045
      %v3226 = vpack.c.b16 %v3052, %v3046
      %v3227 = vpack.c.b16 %v3053, %v3047
      %v3228 = vpack.c.b16 %v3054, %v3048
      %v3229 = vpack.c.b16 %v3055, %v3049
      %v3230 = vpack.c.b16 %v3056, %v3050
      %v3231 = vpack.c.b16 %v3063, %v3057
      %v3232 = vpack.c.b16 %v3064, %v3058
      %v3233 = vpack.c.b16 %v3065, %v3059
      %v3234 = vpack.c.b16 %v3066, %v3060
      %v3235 = vpack.c.b16 %v3067, %v3061
      %v3236 = vpack.c.b16 %v3068, %v3062
      %v3237 = vpack.c.b16 %v3075, %v3069
      %v3238 = vpack.c.b16 %v3076, %v3070
      %v3239 = vpack.c.b16 %v3077, %v3071
      %v3240 = vpack.c.b16 %v3078, %v3072
      %v3241 = vpack.c.b16 %v3079, %v3073
      %v3242 = vpack.c.b16 %v3080, %v3074
      %v3243 = vpack.c.b16 %v3087, %v3081
      %v3244 = vpack.c.b16 %v3088, %v3082
      %v3245 = vpack.c.b16 %v3089, %v3083
      %v3246 = vpack.c.b16 %v3090, %v3084
      %v3247 = vpack.c.b16 %v3091, %v3085
      %v3248 = vpack.c.b16 %v3092, %v3086
      %v3249 = vpack.c.b16 %v3099, %v3093
      %v3250 = vpack.c.b16 %v3100, %v3094
      %v3251 = vpack.c.b16 %v3101, %v3095
      %v3252 = vpack.c.b16 %v3102, %v3096
      %v3253 = vpack.c.b16 %v3103, %v3097
      %v3254 = vpack.c.b16 %v3104, %v3098
      %v3255 = vpack.c.b16 %v3111, %v3105
      %v3256 = vpack.c.b16 %v3112, %v3106
      %v3257 = vpack.c.b16 %v3113, %v3107
      %v3258 = vpack.c.b16 %v3114, %v3108
      %v3259 = vpack.c.b16 %v3115, %v3109
      %v3260 = vpack.c.b16 %v3116, %v3110
      %v3261 = vpack.c.b16 %v3123, %v3117
      %v3262 = vpack.c.b16 %v3124, %v3118
      %v3263 = vpack.c.b16 %v3125, %v3119
      %v3264 = vpack.c.b16 %v3126, %v3120
      %v3265 = vpack.c.b16 %v3127, %v3121
      %v3266 = vpack.c.b16 %v3128, %v3122
      %v3267 = vpack.c.b16 %v3129, %v3129
      %v3268 = vpack.c.b16 %v3130, %v3130
      %v3269 = vpack.c.b16 %v3131, %v3131
      %v3270 = vpack.c.b16 %v3132, %v3132
      %v3271 = vpack.c.b16 %v3133, %v3133
      %v3272 = vpack.c.b16 %v3134, %v3134
      %vm3405 = vcmask 850944
      %v3407 = vsel %vm3405, %v2534, 0
      %vm3409 = vcmask 1043456
      %v3411 = vsel %vm3409, %v3267, 0
      %v3414 = vsel %vm3409, %v3268, 0
      %v3417 = vsel %vm3409, %v3269, 0
      %v3420 = vsel %vm3409, %v3270, 0
      %v3423 = vsel %vm3409, %v3271, 0
      %v3426 = vsel %vm3409, %v3272, 0
      %3428 = vmatprep.subr.bf16.mxu0 %v3136
      %3429 = vmatpush1.bf16.msra.mxu0 %v3135
      %3430 = vmatprep.subr.bf16.mxu0 %v3142
      %3431 = vmatpush1.bf16.msra.mxu0 %v3141
      %3432 = vmatprep.subr.bf16.mxu0 %v3148
      %3433 = vmatpush1.bf16.msra.mxu0 %v3147
      %3434 = vmatprep.subr.bf16.mxu0 %v3154
      %3435 = vmatpush1.bf16.msra.mxu0 %v3153
      %3436 = vmatprep.subr.bf16.mxu0 %v3160
      %3437 = vmatpush1.bf16.msra.mxu0 %v3159
      %3438 = vmatprep.subr.bf16.mxu0 %v3166
      %3439 = vmatpush1.bf16.msra.mxu0 %v3165
      %3440 = vmatprep.subr.bf16.mxu0 %v3172
      %3441 = vmatpush1.bf16.msra.mxu0 %v3171
      %3442 = vmatprep.subr.bf16.mxu0 %v3178
      %3443 = vmatpush1.bf16.msra.mxu0 %v3177
      %3444 = vmatprep.subr.bf16.mxu0 %v3184
      %3445 = vmatpush1.bf16.msra.mxu0 %v3183
      %3446 = vmatprep.subr.bf16.mxu0 %v3190
      %3447 = vmatpush1.bf16.msra.mxu0 %v3189
      %3448 = vmatprep.subr.bf16.mxu0 %v3196
      %3449 = vmatpush1.bf16.msra.mxu0 %v3195
      %3450 = vmatprep.subr.bf16.mxu0 %v3202
      %3451 = vmatpush1.bf16.msra.mxu0 %v3201
      %3452 = vmatprep.subr.bf16.mxu0 %v3208
      %3453 = vmatpush1.bf16.msra.mxu0 %v3207
      %3454 = vmatprep.subr.bf16.mxu0 %v3214
      %3455 = vmatpush1.bf16.msra.mxu0 %v3213
      %3456 = vmatprep.subr.bf16.mxu0 %v3220
      %3457 = vmatpush1.bf16.msra.mxu0 %v3219
      %3458 = vmatprep.subr.bf16.mxu0 %v3226
      %3459 = vmatpush1.bf16.msra.mxu0 %v3225
      %3460 = vmatprep.mubr.bf16.mxu0 %v2533
      %3461 = vmatmul.mubr.bf16.gmra.mrb[0].mxu0 %v2532
      %v3462 = vpop.f32.mrb[0].mxu0
      %v3463 = vadd.f32 %v2709, %v3462
      %v3464 = vpop.f32.mrb[0].mxu0
      %v3465 = vadd.f32 %v2713, %v3464
      %v3466 = vpop.f32.mrb[0].mxu0
      %v3467 = vpop.f32.mrb[0].mxu0
      %3468 = vdwg.mxu0
      %3469 = vmatprep.subr.bf16.mxu0 %v3232
      %3470 = vmatpush1.bf16.msra.mxu0 %v3231
      %3471 = vmatprep.subr.bf16.mxu0 %v3238
      %3472 = vmatpush1.bf16.msra.mxu0 %v3237
      %3473 = vmatprep.subr.bf16.mxu0 %v3244
      %3474 = vmatpush1.bf16.msra.mxu0 %v3243
      %3475 = vmatprep.subr.bf16.mxu0 %v3250
      %3476 = vmatpush1.bf16.msra.mxu0 %v3249
      %3477 = vmatprep.subr.bf16.mxu0 %v3256
      %3478 = vmatpush1.bf16.msra.mxu0 %v3255
      %3479 = vmatprep.subr.bf16.mxu0 %v3262
      %3480 = vmatpush1.bf16.msra.mxu0 %v3261
      %3481 = vmatprep.subr.bf16.mxu0 %v3414
      %3482 = vmatpush1.bf16.msra.mxu0 %v3411
      %3483 = vmatprep.subr.bf16.mxu0 0
      %3484 = vmatpush1.bf16.msra.mxu0 0
      %3485 = vmatprep.subr.bf16.mxu0 0
      %3486 = vmatpush1.bf16.msra.mxu0 0
      %3487 = vmatprep.subr.bf16.mxu0 0
      %3488 = vmatpush1.bf16.msra.mxu0 0
      %3489 = vmatprep.subr.bf16.mxu0 0
      %3490 = vmatpush1.bf16.msra.mxu0 0
      %3491 = vmatprep.subr.bf16.mxu0 0
      %3492 = vmatpush1.bf16.msra.mxu0 0
      %3493 = vmatprep.subr.bf16.mxu0 0
      %3494 = vmatpush1.bf16.msra.mxu0 0
      %3495 = vmatprep.subr.bf16.mxu0 0
      %3496 = vmatpush1.bf16.msra.mxu0 0
      %3497 = vmatprep.subr.bf16.mxu0 0
      %3498 = vmatpush1.bf16.msra.mxu0 0
      %3499 = vmatprep.subr.bf16.mxu0 0
      %3500 = vmatpush1.bf16.msra.mxu0 0
      %3501 = vmatprep.mubr.bf16.mxu0 0
      %3502 = vmatmul.mubr.bf16.gmra.mrb[0].mxu0 %v3407
      %v3503 = vpop.f32.mrb[0].mxu0
      %v3504 = vadd.f32 %v3463, %v3503
      %v3505 = vpop.f32.mrb[0].mxu0
      %v3506 = vadd.f32 %v3465, %v3505
      %v3507 = vpop.f32.mrb[0].mxu0
      %v3508 = vpop.f32.mrb[0].mxu0
      %3509 = vdwg.mxu0
      %3510 = vmatprep.subr.bf16.mxu0 %v3138
      %3511 = vmatpush1.bf16.msra.mxu0 %v3137
      %3512 = vmatprep.subr.bf16.mxu0 %v3144
      %3513 = vmatpush1.bf16.msra.mxu0 %v3143
      %3514 = vmatprep.subr.bf16.mxu0 %v3150
      %3515 = vmatpush1.bf16.msra.mxu0 %v3149
      %3516 = vmatprep.subr.bf16.mxu0 %v3156
      %3517 = vmatpush1.bf16.msra.mxu0 %v3155
      %3518 = vmatprep.subr.bf16.mxu0 %v3162
      %3519 = vmatpush1.bf16.msra.mxu0 %v3161
      %3520 = vmatprep.subr.bf16.mxu0 %v3168
      %3521 = vmatpush1.bf16.msra.mxu0 %v3167
      %3522 = vmatprep.subr.bf16.mxu0 %v3174
      %3523 = vmatpush1.bf16.msra.mxu0 %v3173
      %3524 = vmatprep.subr.bf16.mxu0 %v3180
      %3525 = vmatpush1.bf16.msra.mxu0 %v3179
      %3526 = vmatprep.subr.bf16.mxu0 %v3186
      %3527 = vmatpush1.bf16.msra.mxu0 %v3185
      %3528 = vmatprep.subr.bf16.mxu0 %v3192
      %3529 = vmatpush1.bf16.msra.mxu0 %v3191
      %3530 = vmatprep.subr.bf16.mxu0 %v3198
      %3531 = vmatpush1.bf16.msra.mxu0 %v3197
      %3532 = vmatprep.subr.bf16.mxu0 %v3204
      %3533 = vmatpush1.bf16.msra.mxu0 %v3203
      %3534 = vmatprep.subr.bf16.mxu0 %v3210
      %3535 = vmatpush1.bf16.msra.mxu0 %v3209
      %3536 = vmatprep.subr.bf16.mxu0 %v3216
      %3537 = vmatpush1.bf16.msra.mxu0 %v3215
      %3538 = vmatprep.subr.bf16.mxu0 %v3222
      %3539 = vmatpush1.bf16.msra.mxu0 %v3221
      %3540 = vmatprep.subr.bf16.mxu0 %v3228
      %3541 = vmatpush1.bf16.msra.mxu0 %v3227
      %3542 = vmatprep.mubr.bf16.mxu0 %v2533
      %3543 = vmatmul.mubr.bf16.gmra.mrb[0].mxu0 %v2532
      %v3544 = vpop.f32.mrb[0].mxu0
      %v3545 = vadd.f32 %v2717, %v3544
      %v3546 = vpop.f32.mrb[0].mxu0
      %v3547 = vadd.f32 %v2721, %v3546
      %v3548 = vpop.f32.mrb[0].mxu0
      %v3549 = vpop.f32.mrb[0].mxu0
      %3550 = vdwg.mxu0
      %3551 = vmatprep.subr.bf16.mxu0 %v3234
      %3552 = vmatpush1.bf16.msra.mxu0 %v3233
      %3553 = vmatprep.subr.bf16.mxu0 %v3240
      %3554 = vmatpush1.bf16.msra.mxu0 %v3239
      %3555 = vmatprep.subr.bf16.mxu0 %v3246
      %3556 = vmatpush1.bf16.msra.mxu0 %v3245
      %3557 = vmatprep.subr.bf16.mxu0 %v3252
      %3558 = vmatpush1.bf16.msra.mxu0 %v3251
      %3559 = vmatprep.subr.bf16.mxu0 %v3258
      %3560 = vmatpush1.bf16.msra.mxu0 %v3257
      %3561 = vmatprep.subr.bf16.mxu0 %v3264
      %3562 = vmatpush1.bf16.msra.mxu0 %v3263
      %3563 = vmatprep.subr.bf16.mxu0 %v3420
      %3564 = vmatpush1.bf16.msra.mxu0 %v3417
      %3565 = vmatprep.subr.bf16.mxu0 0
      %3566 = vmatpush1.bf16.msra.mxu0 0
      %3567 = vmatprep.subr.bf16.mxu0 0
      %3568 = vmatpush1.bf16.msra.mxu0 0
      %3569 = vmatprep.subr.bf16.mxu0 0
      %3570 = vmatpush1.bf16.msra.mxu0 0
      %3571 = vmatprep.subr.bf16.mxu0 0
      %3572 = vmatpush1.bf16.msra.mxu0 0
      %3573 = vmatprep.subr.bf16.mxu0 0
      %3574 = vmatpush1.bf16.msra.mxu0 0
      %3575 = vmatprep.subr.bf16.mxu0 0
      %3576 = vmatpush1.bf16.msra.mxu0 0
      %3577 = vmatprep.subr.bf16.mxu0 0
      %3578 = vmatpush1.bf16.msra.mxu0 0
      %3579 = vmatprep.subr.bf16.mxu0 0
      %3580 = vmatpush1.bf16.msra.mxu0 0
      %3581 = vmatprep.subr.bf16.mxu0 0
      %3582 = vmatpush1.bf16.msra.mxu0 0
      %3583 = vmatprep.mubr.bf16.mxu0 0
      %3584 = vmatmul.mubr.bf16.gmra.mrb[0].mxu0 %v3407
      %v3585 = vpop.f32.mrb[0].mxu0
      %v3586 = vadd.f32 %v3545, %v3585
      %v3587 = vpop.f32.mrb[0].mxu0
      %v3588 = vadd.f32 %v3547, %v3587
      %v3589 = vpop.f32.mrb[0].mxu0
      %v3590 = vpop.f32.mrb[0].mxu0
      %3591 = vdwg.mxu0
      %3592 = vmatprep.subr.bf16.mxu0 %v3140
      %3593 = vmatpush1.bf16.msra.mxu0 %v3139
      %3594 = vmatprep.subr.bf16.mxu0 %v3146
      %3595 = vmatpush1.bf16.msra.mxu0 %v3145
      %3596 = vmatprep.subr.bf16.mxu0 %v3152
      %3597 = vmatpush1.bf16.msra.mxu0 %v3151
      %3598 = vmatprep.subr.bf16.mxu0 %v3158
      %3599 = vmatpush1.bf16.msra.mxu0 %v3157
      %3600 = vmatprep.subr.bf16.mxu0 %v3164
      %3601 = vmatpush1.bf16.msra.mxu0 %v3163
      %3602 = vmatprep.subr.bf16.mxu0 %v3170
      %3603 = vmatpush1.bf16.msra.mxu0 %v3169
      %3604 = vmatprep.subr.bf16.mxu0 %v3176
      %3605 = vmatpush1.bf16.msra.mxu0 %v3175
      %3606 = vmatprep.subr.bf16.mxu0 %v3182
      %3607 = vmatpush1.bf16.msra.mxu0 %v3181
      %3608 = vmatprep.subr.bf16.mxu0 %v3188
      %3609 = vmatpush1.bf16.msra.mxu0 %v3187
      %3610 = vmatprep.subr.bf16.mxu0 %v3194
      %3611 = vmatpush1.bf16.msra.mxu0 %v3193
      %3612 = vmatprep.subr.bf16.mxu0 %v3200
      %3613 = vmatpush1.bf16.msra.mxu0 %v3199
      %3614 = vmatprep.subr.bf16.mxu0 %v3206
      %3615 = vmatpush1.bf16.msra.mxu0 %v3205
      %3616 = vmatprep.subr.bf16.mxu0 %v3212
      %3617 = vmatpush1.bf16.msra.mxu0 %v3211
      %3618 = vmatprep.subr.bf16.mxu0 %v3218
      %3619 = vmatpush1.bf16.msra.mxu0 %v3217
      %3620 = vmatprep.subr.bf16.mxu0 %v3224
      %3621 = vmatpush1.bf16.msra.mxu0 %v3223
      %3622 = vmatprep.subr.bf16.mxu0 %v3230
      %3623 = vmatpush1.bf16.msra.mxu0 %v3229
      %3624 = vmatprep.mubr.bf16.mxu0 %v2533
      %3625 = vmatmul.mubr.bf16.gmra.mrb[0].mxu0 %v2532
      %v3626 = vpop.f32.mrb[0].mxu0
      %v3627 = vadd.f32 %v2725, %v3626
      %v3628 = vpop.f32.mrb[0].mxu0
      %v3629 = vadd.f32 %v2729, %v3628
      %v3630 = vpop.f32.mrb[0].mxu0
      %v3631 = vpop.f32.mrb[0].mxu0
      %3632 = vdwg.mxu0
      %3633 = vmatprep.subr.bf16.mxu0 %v3236
      %3634 = vmatpush1.bf16.msra.mxu0 %v3235
      %3635 = vmatprep.subr.bf16.mxu0 %v3242
      %3636 = vmatpush1.bf16.msra.mxu0 %v3241
      %3637 = vmatprep.subr.bf16.mxu0 %v3248
      %3638 = vmatpush1.bf16.msra.mxu0 %v3247
      %3639 = vmatprep.subr.bf16.mxu0 %v3254
      %3640 = vmatpush1.bf16.msra.mxu0 %v3253
      %3641 = vmatprep.subr.bf16.mxu0 %v3260
      %3642 = vmatpush1.bf16.msra.mxu0 %v3259
      %3643 = vmatprep.subr.bf16.mxu0 %v3266
      %3644 = vmatpush1.bf16.msra.mxu0 %v3265
      %3645 = vmatprep.subr.bf16.mxu0 %v3426
      %3646 = vmatpush1.bf16.msra.mxu0 %v3423
      %3647 = vmatprep.subr.bf16.mxu0 0
      %3648 = vmatpush1.bf16.msra.mxu0 0
      %3649 = vmatprep.subr.bf16.mxu0 0
      %3650 = vmatpush1.bf16.msra.mxu0 0
      %3651 = vmatprep.subr.bf16.mxu0 0
      %3652 = vmatpush1.bf16.msra.mxu0 0
      %3653 = vmatprep.subr.bf16.mxu0 0
      %3654 = vmatpush1.bf16.msra.mxu0 0
      %3655 = vmatprep.subr.bf16.mxu0 0
      %3656 = vmatpush1.bf16.msra.mxu0 0
      %3657 = vmatprep.subr.bf16.mxu0 0
      %3658 = vmatpush1.bf16.msra.mxu0 0
      %3659 = vmatprep.subr.bf16.mxu0 0
      %3660 = vmatpush1.bf16.msra.mxu0 0
      %3661 = vmatprep.subr.bf16.mxu0 0
      %3662 = vmatpush1.bf16.msra.mxu0 0
      %3663 = vmatprep.subr.bf16.mxu0 0
      %3664 = vmatpush1.bf16.msra.mxu0 0
      %3665 = vmatprep.mubr.bf16.mxu0 0
      %3666 = vmatmul.mubr.bf16.gmra.mrb[0].mxu0 %v3407
      %v3667 = vpop.f32.mrb[0].mxu0
      %v3668 = vadd.f32 %v3627, %v3667
      %v3669 = vpop.f32.mrb[0].mxu0
      %v3670 = vadd.f32 %v3629, %v3669
      %v3671 = vpop.f32.mrb[0].mxu0
      %v3672 = vpop.f32.mrb[0].mxu0
      %3673 = vdwg.mxu0
      %vm3674 = vcmp.gt.f32.partialorder %v3504, 0.0
      %vm3675 = vcmp.gt.f32.partialorder %v3506, 0.0
      %vm3676 = vcmp.gt.f32.partialorder %v3586, 0.0
      %vm3677 = vcmp.gt.f32.partialorder %v3588, 0.0
      %vm3678 = vcmp.gt.f32.partialorder %v3668, 0.0
      %vm3679 = vcmp.gt.f32.partialorder %v3670, 0.0
      %v3680 = vlaneseq
      %v3681 = vshrl.u32 %v3680, 7
      %v3682 = vsub.s32 3, %v3681
      %v3683 = vrot.slane %v2670, %v3682
      %v3684 = vlaneseq
      %v3685 = vshrl.u32 %v3684, 7
      %v3686 = vsub.s32 7, %v3685
      %v3687 = vrot.slane %v2670, %v3686
      %v3688 = vlaneseq
      %v3689 = vshrl.u32 %v3688, 7
      %v3690 = vsub.s32 3, %v3689
      %v3691 = vrot.slane %v2671, %v3690
      %v3692 = vlaneseq
      %v3693 = vshrl.u32 %v3692, 7
      %v3694 = vsub.s32 7, %v3693
      %v3695 = vrot.slane %v2671, %v3694
      %v3696 = vlaneseq
      %v3697 = vshrl.u32 %v3696, 7
      %v3698 = vsub.s32 3, %v3697
      %v3699 = vrot.slane %v2672, %v3698
      %v3700 = vlaneseq
      %v3701 = vshrl.u32 %v3700, 7
      %v3702 = vsub.s32 7, %v3701
      %v3703 = vrot.slane %v2672, %v3702
      %v3710 = vlaneseq
      %v3711 = vshrl.u32 %v3710, 7
      %v3712 = vsub.s32 3, %v3711
      %v3713 = vrot.slane %v3683, %v3712
      %v3714 = vlaneseq
      %v3715 = vshrl.u32 %v3714, 7
      %v3716 = vsub.s32 3, %v3715
      %v3717 = vrot.slane %v3687, %v3716
      %v3718 = vlaneseq
      %v3719 = vshrl.u32 %v3718, 7
      %v3720 = vsub.s32 3, %v3719
      %v3721 = vrot.slane %v3691, %v3720
      %v3722 = vlaneseq
      %v3723 = vshrl.u32 %v3722, 7
      %v3724 = vsub.s32 3, %v3723
      %v3725 = vrot.slane %v3695, %v3724
      %v3726 = vlaneseq
      %v3727 = vshrl.u32 %v3726, 7
      %v3728 = vsub.s32 3, %v3727
      %v3729 = vrot.slane %v3699, %v3728
      %v3730 = vlaneseq
      %v3731 = vshrl.u32 %v3730, 7
      %v3732 = vsub.s32 3, %v3731
      %v3733 = vrot.slane %v3703, %v3732
      %v3734 = vmul.f32 %v3713, %v3504
      %v3735 = vmul.f32 %v3717, %v3506
      %v3736 = vmul.f32 %v3721, %v3586
      %v3737 = vmul.f32 %v3725, %v3588
      %v3738 = vmul.f32 %v3729, %v3668
      %v3739 = vmul.f32 %v3733, %v3670
      %v3740 = vsel %vm3674, %v3504, %v3734
      %v3741 = vsel %vm3675, %v3506, %v3735
      %v3742 = vsel %vm3676, %v3586, %v3736
      %v3743 = vsel %vm3677, %v3588, %v3737
      %v3744 = vsel %vm3678, %v3668, %v3738
      %v3745 = vsel %vm3679, %v3670, %v3739
      %v3746 = vlaneseq
      %v3747 = vshrl.u32 %v3746, 7
      %v3748 = vsub.s32 1, %v3747
      %v3749 = vrot.slane %v2670, %v3748
      %v3750 = vlaneseq
      %v3751 = vshrl.u32 %v3750, 7
      %v3752 = vsub.s32 5, %v3751
      %v3753 = vrot.slane %v2670, %v3752
      %v3754 = vlaneseq
      %v3755 = vshrl.u32 %v3754, 7
      %v3756 = vsub.s32 1, %v3755
      %v3757 = vrot.slane %v2671, %v3756
      %v3758 = vlaneseq
      %v3759 = vshrl.u32 %v3758, 7
      %v3760 = vsub.s32 5, %v3759
      %v3761 = vrot.slane %v2671, %v3760
      %v3762 = vlaneseq
      %v3763 = vshrl.u32 %v3762, 7
      %v3764 = vsub.s32 1, %v3763
      %v3765 = vrot.slane %v2672, %v3764
      %v3766 = vlaneseq
      %v3767 = vshrl.u32 %v3766, 7
      %v3768 = vsub.s32 5, %v3767
      %v3769 = vrot.slane %v2672, %v3768
      %v3776 = vlaneseq
      %v3777 = vshrl.u32 %v3776, 7
      %v3778 = vsub.s32 1, %v3777
      %v3779 = vrot.slane %v3749, %v3778
      %v3780 = vlaneseq
      %v3781 = vshrl.u32 %v3780, 7
      %v3782 = vsub.s32 1, %v3781
      %v3783 = vrot.slane %v3753, %v3782
      %v3784 = vlaneseq
      %v3785 = vshrl.u32 %v3784, 7
      %v3786 = vsub.s32 1, %v3785
      %v3787 = vrot.slane %v3757, %v3786
      %v3788 = vlaneseq
      %v3789 = vshrl.u32 %v3788, 7
      %v3790 = vsub.s32 1, %v3789
      %v3791 = vrot.slane %v3761, %v3790
      %v3792 = vlaneseq
      %v3793 = vshrl.u32 %v3792, 7
      %v3794 = vsub.s32 1, %v3793
      %v3795 = vrot.slane %v3765, %v3794
      %v3796 = vlaneseq
      %v3797 = vshrl.u32 %v3796, 7
      %v3798 = vsub.s32 1, %v3797
      %v3799 = vrot.slane %v3769, %v3798
      %v3800 = vmul.f32 %v3740, %v3779
      %v3801 = vmul.f32 %v3741, %v3783
      %v3802 = vmul.f32 %v3742, %v3787
      %v3803 = vmul.f32 %v3743, %v3791
      %v3804 = vmul.f32 %v3744, %v3795
      %v3805 = vmul.f32 %v3745, %v3799
      %v3806 = vlaneseq
      %v3807 = vshrl.u32 %v3806, 7
      %v3808 = vsub.s32 2, %v3807
      %v3809 = vrot.slane %v2670, %v3808
      %v3810 = vlaneseq
      %v3811 = vshrl.u32 %v3810, 7
      %v3812 = vsub.s32 6, %v3811
      %v3813 = vrot.slane %v2670, %v3812
      %v3814 = vlaneseq
      %v3815 = vshrl.u32 %v3814, 7
      %v3816 = vsub.s32 2, %v3815
      %v3817 = vrot.slane %v2671, %v3816
      %v3818 = vlaneseq
      %v3819 = vshrl.u32 %v3818, 7
      %v3820 = vsub.s32 6, %v3819
      %v3821 = vrot.slane %v2671, %v3820
      %v3822 = vlaneseq
      %v3823 = vshrl.u32 %v3822, 7
      %v3824 = vsub.s32 2, %v3823
      %v3825 = vrot.slane %v2672, %v3824
      %v3826 = vlaneseq
      %v3827 = vshrl.u32 %v3826, 7
      %v3828 = vsub.s32 6, %v3827
      %v3829 = vrot.slane %v2672, %v3828
      %v3836 = vlaneseq
      %v3837 = vshrl.u32 %v3836, 7
      %v3838 = vsub.s32 2, %v3837
      %v3839 = vrot.slane %v3809, %v3838
      %v3840 = vlaneseq
      %v3841 = vshrl.u32 %v3840, 7
      %v3842 = vsub.s32 2, %v3841
      %v3843 = vrot.slane %v3813, %v3842
      %v3844 = vlaneseq
      %v3845 = vshrl.u32 %v3844, 7
      %v3846 = vsub.s32 2, %v3845
      %v3847 = vrot.slane %v3817, %v3846
      %v3848 = vlaneseq
      %v3849 = vshrl.u32 %v3848, 7
      %v3850 = vsub.s32 2, %v3849
      %v3851 = vrot.slane %v3821, %v3850
      %v3852 = vlaneseq
      %v3853 = vshrl.u32 %v3852, 7
      %v3854 = vsub.s32 2, %v3853
      %v3855 = vrot.slane %v3825, %v3854
      %v3856 = vlaneseq
      %v3857 = vshrl.u32 %v3856, 7
      %v3858 = vsub.s32 2, %v3857
      %v3859 = vrot.slane %v3829, %v3858
      %v3860 = vadd.f32 %v3800, %v3839
      %v3861 = vadd.f32 %v3801, %v3843
      %v3862 = vadd.f32 %v3802, %v3847
      %v3863 = vadd.f32 %v3803, %v3851
      %v3864 = vadd.f32 %v3804, %v3855
      %v3865 = vadd.f32 %v3805, %v3859
      %v3866 = vpack.c.bf16 %v3860, %v3860
      %v3867 = vpack.c.bf16 %v3861, %v3861
      %v3868 = vpack.c.bf16 %v3862, %v3862
      %v3869 = vpack.c.bf16 %v3863, %v3863
      %v3870 = vpack.c.bf16 %v3864, %v3864
      %v3871 = vpack.c.bf16 %v3865, %v3865
      %v3872 = vld [vmem:[%s18] sm:$0xff]
      %v3873 = vld [vmem:[%s18 + $0x8] sm:$0xff]
      %v3874 = vld [vmem:[%s18 + $0x10] sm:$0xff]
      %v3875 = vld [vmem:[%s18 + $0x18] sm:$0xff]
      %v3876 = vld [vmem:[%s18 + $0x20] sm:$0xff]
      %v3877 = vld [vmem:[%s18 + $0x28] sm:$0xff]
      %v3878 = vld [vmem:[%s18 + $0x30] sm:$0xff]
      %v3879 = vld [vmem:[%s18 + $0x38] sm:$0xff]
      %v3880 = vld [vmem:[%s18 + $0x40] sm:$0xff]
      %v3881 = vld [vmem:[%s18 + $0x48] sm:$0xff]
      %v3882 = vld [vmem:[%s18 + $0x50] sm:$0xff]
      %v3883 = vld [vmem:[%s18 + $0x58] sm:$0xff]
      %v3884 = vld [vmem:[%s18 + $0x60] sm:$0xff]
      %v3885 = vld [vmem:[%s18 + $0x68] sm:$0xff]
      %v3886 = vld [vmem:[%s18 + $0x70] sm:$0xff]
      %v3887 = vld [vmem:[%s18 + $0x78] sm:$0xff]
      %v3888 = vld [vmem:[%s18 + $0x80] sm:$0xff]
      %v3889 = vld [vmem:[%s18 + $0x88] sm:$0xff]
      %v3890 = vld [vmem:[%s18 + $0x90] sm:$0xff]
      %v3891 = vld [vmem:[%s18 + $0x98] sm:$0xff]
      %v3892 = vld [vmem:[%s18 + $0xa0] sm:$0xff]
      %v3893 = vld [vmem:[%s18 + $0xa8] sm:$0xff]
      %v3894 = vld [vmem:[%s18 + $0xb0] sm:$0xff]
      %v3895 = vld [vmem:[%s18 + $0xb8] sm:$0xff]
      %v3896 = vld [vmem:[%s18 + $0xc0] sm:$0xff]
      %v3897 = vld [vmem:[%s18 + $0xc8] sm:$0xff]
      %v3898 = vld [vmem:[%s18 + $0xd0] sm:$0xff]
      %v3899 = vld [vmem:[%s18 + $0xd8] sm:$0xff]
      %v3900 = vld [vmem:[%s18 + $0xe0] sm:$0xff]
      %v3901 = vld [vmem:[%s18 + $0xe8] sm:$0xff]
      %v3902 = vld [vmem:[%s18 + $0xf0] sm:$0xff]
      %v3903 = vld [vmem:[%s18 + $0xf8] sm:$0xff]
      %v3904 = vld [vmem:[%s18 + $0x100] sm:$0xff]
      %v3905 = vld [vmem:[%s18 + $0x108] sm:$0xff]
      %v3906 = vld [vmem:[%s18 + $0x110] sm:$0xff]
      %v3907 = vld [vmem:[%s18 + $0x118] sm:$0xff]
      %v3908 = vld [vmem:[%s18 + $0x120] sm:$0xff]
      %v3909 = vld [vmem:[%s18 + $0x128] sm:$0xff]
      %v3910 = vld [vmem:[%s18 + $0x130] sm:$0xff]
      %v3911 = vld [vmem:[%s18 + $0x138] sm:$0xff]
      %v3912 = vld [vmem:[%s18 + $0x140] sm:$0xff]
      %v3913 = vld [vmem:[%s18 + $0x148] sm:$0xff]
      %v3914 = vld [vmem:[%s18 + $0x150] sm:$0xff]
      %v3915 = vld [vmem:[%s18 + $0x158] sm:$0xff]
      %v3916 = vld [vmem:[%s18 + $0x160] sm:$0xff]
      %v3917 = vld [vmem:[%s18 + $0x168] sm:$0xff]
      %v3918 = vld [vmem:[%s18 + $0x170] sm:$0xff]
      %v3919 = vld [vmem:[%s18 + $0x178] sm:$0xff]
      %v3920 = vld [vmem:[%s18 + $0x180] sm:$0xff]
      %v3921 = vld [vmem:[%s18 + $0x188] sm:$0xff]
      %v3922 = vld [vmem:[%s18 + $0x190] sm:$0xff]
      %v3923 = vld [vmem:[%s18 + $0x198] sm:$0xff]
      %v3924 = vld [vmem:[%s18 + $0x1a0] sm:$0xff]
      %v3925 = vld [vmem:[%s18 + $0x1a8] sm:$0xff]
      %v3926 = vld [vmem:[%s18 + $0x1b0] sm:$0xff]
      %v3927 = vld [vmem:[%s18 + $0x1b8] sm:$0xff]
      %v3928 = vld [vmem:[%s18 + $0x1c0] sm:$0xff]
      %v3929 = vld [vmem:[%s18 + $0x1c8] sm:$0xff]
      %v3930 = vld [vmem:[%s18 + $0x1d0] sm:$0xff]
      %v3931 = vld [vmem:[%s18 + $0x1d8] sm:$0xff]
      %v3932 = vld [vmem:[%s18 + $0x1e0] sm:$0xff]
      %v3933 = vld [vmem:[%s18 + $0x1e8] sm:$0xff]
      %v3934 = vld [vmem:[%s18 + $0x1f0] sm:$0xff]
      %v3935 = vld [vmem:[%s18 + $0x1f8] sm:$0xff]
      %v3936 = vld [vmem:[%s18 + $0x200] sm:$0xff]
      %v3937 = vld [vmem:[%s18 + $0x208] sm:$0xff]
      %v3938 = vld [vmem:[%s18 + $0x210] sm:$0xff]
      %v3939 = vld [vmem:[%s18 + $0x218] sm:$0xff]
      %v3940 = vld [vmem:[%s18 + $0x220] sm:$0xff]
      %v3941 = vld [vmem:[%s18 + $0x228] sm:$0xff]
      %v3942 = vld [vmem:[%s18 + $0x230] sm:$0xff]
      %v3943 = vld [vmem:[%s18 + $0x238] sm:$0xff]
      %v3944 = vld [vmem:[%s18 + $0x240] sm:$0xff]
      %v3945 = vld [vmem:[%s18 + $0x248] sm:$0xff]
      %v3946 = vld [vmem:[%s18 + $0x250] sm:$0xff]
      %v3947 = vld [vmem:[%s18 + $0x258] sm:$0xff]
      %v3948 = vld [vmem:[%s18 + $0x260] sm:$0xff]
      %v3949 = vld [vmem:[%s18 + $0x268] sm:$0xff]
      %v3950 = vld [vmem:[%s18 + $0x270] sm:$0xff]
      %v3951 = vld [vmem:[%s18 + $0x278] sm:$0xff]
      %v3952 = vld [vmem:[%s18 + $0x280] sm:$0xff]
      %v3953 = vld [vmem:[%s18 + $0x288] sm:$0xff]
      %v3954 = vld [vmem:[%s18 + $0x290] sm:$0xff]
      %v3955 = vld [vmem:[%s18 + $0x298] sm:$0xff]
      %v3956 = vld [vmem:[%s18 + $0x2a0] sm:$0xff]
      %v3957 = vld [vmem:[%s18 + $0x2a8] sm:$0xff]
      %v3958 = vld [vmem:[%s18 + $0x2b0] sm:$0xff]
      %v3959 = vld [vmem:[%s18 + $0x2b8] sm:$0xff]
      %v3960 = vld [vmem:[%s18 + $0x2c0] sm:$0xff]
      %v3961 = vld [vmem:[%s18 + $0x2c8] sm:$0xff]
      %v3962 = vld [vmem:[%s18 + $0x2d0] sm:$0xff]
      %v3963 = vld [vmem:[%s18 + $0x2d8] sm:$0xff]
      %v3964 = vld [vmem:[%s18 + $0x2e0] sm:$0xff]
      %v3965 = vld [vmem:[%s18 + $0x2e8] sm:$0xff]
      %v3966 = vld [vmem:[%s18 + $0x2f0] sm:$0xff]
      %v3967 = vld [vmem:[%s18 + $0x2f8] sm:$0xff]
      %v3968 = vld [vmem:[%s18 + $0x300] sm:$0xff]
      %v3969 = vld [vmem:[%s18 + $0x308] sm:$0xff]
      %v3970 = vld [vmem:[%s18 + $0x310] sm:$0xff]
      %v3971 = vld [vmem:[%s18 + $0x318] sm:$0xff]
      %v3972 = vld [vmem:[%s18 + $0x320] sm:$0xff]
      %v3973 = vld [vmem:[%s18 + $0x328] sm:$0xff]
      %v3974 = vld [vmem:[%s18 + $0x330] sm:$0xff]
      %v3975 = vld [vmem:[%s18 + $0x338] sm:$0xff]
      %v3976 = vld [vmem:[%s18 + $0x340] sm:$0xff]
      %v3977 = vld [vmem:[%s18 + $0x348] sm:$0xff]
      %v3978 = vld [vmem:[%s18 + $0x350] sm:$0xff]
      %v3979 = vld [vmem:[%s18 + $0x358] sm:$0xff]
      %v3980 = vld [vmem:[%s18 + $0x360] sm:$0xff]
      %v3981 = vld [vmem:[%s18 + $0x368] sm:$0xff]
      %v3982 = vld [vmem:[%s18 + $0x370] sm:$0xff]
      %v3983 = vld [vmem:[%s18 + $0x378] sm:$0xff]
      %v3984 = vld [vmem:[%s18 + $0x380] sm:$0xff]
      %v3985 = vld [vmem:[%s18 + $0x388] sm:$0xff]
      %v3986 = vld [vmem:[%s18 + $0x390] sm:$0xff]
      %v3987 = vld [vmem:[%s18 + $0x398] sm:$0xff]
      %v3988 = vld [vmem:[%s18 + $0x3a0] sm:$0xff]
      %v3989 = vld [vmem:[%s18 + $0x3a8] sm:$0xff]
      %v3990 = vld [vmem:[%s18 + $0x3b0] sm:$0xff]
      %v3991 = vld [vmem:[%s18 + $0x3b8] sm:$0xff]
      %v3992 = vld [vmem:[%s18 + $0x3c0] sm:$0xff]
      %v3993 = vld [vmem:[%s18 + $0x3c8] sm:$0xff]
      %v3994 = vld [vmem:[%s18 + $0x3d0] sm:$0xff]
      %v3995 = vld [vmem:[%s18 + $0x3d8] sm:$0xff]
      %v3996 = vld [vmem:[%s18 + $0x3e0] sm:$0xff]
      %v3997 = vld [vmem:[%s18 + $0x3e8] sm:$0xff]
      %v3998 = vld [vmem:[%s18 + $0x3f0] sm:$0xff]
      %v3999 = vld [vmem:[%s18 + $0x3f8] sm:$0xff]
      %v4000 = vld [vmem:[%s18 + $0x400] sm:$0xff]
      %v4001 = vld [vmem:[%s18 + $0x408] sm:$0xff]
      %v4002 = vld [vmem:[%s18 + $0x410] sm:$0xff]
      %v4003 = vld [vmem:[%s18 + $0x418] sm:$0xff]
      %v4004 = vld [vmem:[%s18 + $0x420] sm:$0xff]
      %v4005 = vld [vmem:[%s18 + $0x428] sm:$0xff]
      %v4006 = vld [vmem:[%s18 + $0x430] sm:$0xff]
      %v4007 = vld [vmem:[%s18 + $0x438] sm:$0xff]
      %v4008 = vld [vmem:[%s18 + $0x440] sm:$0xff]
      %v4009 = vld [vmem:[%s18 + $0x448] sm:$0xff]
      %v4010 = vld [vmem:[%s18 + $0x450] sm:$0xff]
      %v4011 = vld [vmem:[%s18 + $0x458] sm:$0xff]
      %v4012 = vld [vmem:[%s18 + $0x460] sm:$0xff]
      %v4013 = vld [vmem:[%s18 + $0x468] sm:$0xff]
      %v4014 = vld [vmem:[%s18 + $0x470] sm:$0xff]
      %v4015 = vld [vmem:[%s18 + $0x478] sm:$0xff]
      %v4016 = vld [vmem:[%s18 + $0x480] sm:$0xff]
      %v4017 = vld [vmem:[%s18 + $0x488] sm:$0xff]
      %v4018 = vld [vmem:[%s18 + $0x490] sm:$0xff]
      %v4019 = vld [vmem:[%s18 + $0x498] sm:$0xff]
      %v4020 = vld [vmem:[%s18 + $0x4a0] sm:$0xff]
      %v4021 = vld [vmem:[%s18 + $0x4a8] sm:$0xff]
      %v4022 = vld [vmem:[%s18 + $0x4b0] sm:$0xff]
      %v4023 = vld [vmem:[%s18 + $0x4b8] sm:$0xff]
      %v4024 = vld [vmem:[%s18 + $0x4c0] sm:$0xff]
      %v4025 = vld [vmem:[%s18 + $0x4c8] sm:$0xff]
      %v4026 = vld [vmem:[%s18 + $0x4d0] sm:$0xff]
      %v4027 = vld [vmem:[%s18 + $0x4d8] sm:$0xff]
      %v4028 = vld [vmem:[%s18 + $0x4e0] sm:$0xff]
      %v4029 = vld [vmem:[%s18 + $0x4e8] sm:$0xff]
      %v4030 = vld [vmem:[%s18 + $0x4f0] sm:$0xff]
      %v4031 = vld [vmem:[%s18 + $0x4f8] sm:$0xff]
      %v4032 = vld [vmem:[%s18 + $0x500] sm:$0xff]
      %v4033 = vld [vmem:[%s18 + $0x508] sm:$0xff]
      %v4034 = vld [vmem:[%s18 + $0x510] sm:$0xff]
      %v4035 = vld [vmem:[%s18 + $0x518] sm:$0xff]
      %v4036 = vld [vmem:[%s18 + $0x520] sm:$0xff]
      %v4037 = vld [vmem:[%s18 + $0x528] sm:$0xff]
      %v4038 = vld [vmem:[%s18 + $0x530] sm:$0xff]
      %v4039 = vld [vmem:[%s18 + $0x538] sm:$0xff]
      %v4040 = vld [vmem:[%s18 + $0x540] sm:$0xff]
      %v4041 = vld [vmem:[%s18 + $0x548] sm:$0xff]
      %v4042 = vld [vmem:[%s18 + $0x550] sm:$0xff]
      %v4043 = vld [vmem:[%s18 + $0x558] sm:$0xff]
      %v4044 = vld [vmem:[%s18 + $0x560] sm:$0xff]
      %v4045 = vld [vmem:[%s18 + $0x568] sm:$0xff]
      %v4046 = vld [vmem:[%s18 + $0x570] sm:$0xff]
      %v4047 = vld [vmem:[%s18 + $0x578] sm:$0xff]
      %v4048 = vld [vmem:[%s18 + $0x580] sm:$0xff]
      %v4049 = vld [vmem:[%s18 + $0x588] sm:$0xff]
      %v4050 = vld [vmem:[%s18 + $0x590] sm:$0xff]
      %v4051 = vld [vmem:[%s18 + $0x598] sm:$0xff]
      %v4052 = vld [vmem:[%s18 + $0x5a0] sm:$0xff]
      %v4053 = vld [vmem:[%s18 + $0x5a8] sm:$0xff]
      %v4054 = vld [vmem:[%s18 + $0x5b0] sm:$0xff]
      %v4055 = vld [vmem:[%s18 + $0x5b8] sm:$0xff]
      %v4056 = vld [vmem:[%s18 + $0x5c0] sm:$0xff]
      %v4057 = vld [vmem:[%s18 + $0x5c8] sm:$0xff]
      %v4058 = vld [vmem:[%s18 + $0x5d0] sm:$0xff]
      %v4059 = vld [vmem:[%s18 + $0x5d8] sm:$0xff]
      %v4060 = vld [vmem:[%s18 + $0x5e0] sm:$0xff]
      %v4061 = vld [vmem:[%s18 + $0x5e8] sm:$0xff]
      %v4062 = vld [vmem:[%s18 + $0x5f0] sm:$0xff]
      %v4063 = vld [vmem:[%s18 + $0x5f8] sm:$0xff]
      %v4064 = vld [vmem:[%s18 + $0x600] sm:$0xff]
      %v4065 = vld [vmem:[%s18 + $0x608] sm:$0xff]
      %v4066 = vld [vmem:[%s18 + $0x610] sm:$0xff]
      %v4067 = vld [vmem:[%s18 + $0x618] sm:$0xff]
      %v4068 = vld [vmem:[%s18 + $0x620] sm:$0xff]
      %v4069 = vld [vmem:[%s18 + $0x628] sm:$0xff]
      %v4070 = vld [vmem:[%s18 + $0x630] sm:$0xff]
      %v4071 = vld [vmem:[%s18 + $0x638] sm:$0xff]
      %v4072 = vld [vmem:[%s18 + $0x640] sm:$0xff]
      %v4073 = vld [vmem:[%s18 + $0x648] sm:$0xff]
      %v4074 = vld [vmem:[%s18 + $0x650] sm:$0xff]
      %v4075 = vld [vmem:[%s18 + $0x658] sm:$0xff]
      %v4076 = vld [vmem:[%s18 + $0x660] sm:$0xff]
      %v4077 = vld [vmem:[%s18 + $0x668] sm:$0xff]
      %v4078 = vld [vmem:[%s18 + $0x670] sm:$0xff]
      %v4079 = vld [vmem:[%s18 + $0x678] sm:$0xff]
      %v4080 = vld [vmem:[%s18 + $0x680] sm:$0xff]
      %v4081 = vld [vmem:[%s18 + $0x688] sm:$0xff]
      %v4082 = vld [vmem:[%s18 + $0x690] sm:$0xff]
      %v4083 = vld [vmem:[%s18 + $0x698] sm:$0xff]
      %v4084 = vld [vmem:[%s18 + $0x6a0] sm:$0xff]
      %v4085 = vld [vmem:[%s18 + $0x6a8] sm:$0xff]
      %v4086 = vld [vmem:[%s18 + $0x6b0] sm:$0xff]
      %v4087 = vld [vmem:[%s18 + $0x6b8] sm:$0xff]
      %v4088 = vld [vmem:[%s18 + $0x6c0] sm:$0xff]
      %v4089 = vld [vmem:[%s18 + $0x6c8] sm:$0xff]
      %v4090 = vld [vmem:[%s18 + $0x6d0] sm:$0xff]
      %v4091 = vld [vmem:[%s18 + $0x6d8] sm:$0xff]
      %v4092 = vld [vmem:[%s18 + $0x6e0] sm:$0xff]
      %v4093 = vld [vmem:[%s18 + $0x6e8] sm:$0xff]
      %v4094 = vld [vmem:[%s18 + $0x6f0] sm:$0xff]
      %v4095 = vld [vmem:[%s18 + $0x6f8] sm:$0xff]
      %v4096 = vld [vmem:[%s18 + $0x700] sm:$0xff]
      %v4097 = vld [vmem:[%s18 + $0x708] sm:$0xff]
      %v4098 = vld [vmem:[%s18 + $0x710] sm:$0xff]
      %v4099 = vld [vmem:[%s18 + $0x718] sm:$0xff]
      %v4100 = vld [vmem:[%s18 + $0x720] sm:$0xff]
      %v4101 = vld [vmem:[%s18 + $0x728] sm:$0xff]
      %v4102 = vld [vmem:[%s18 + $0x730] sm:$0xff]
      %v4103 = vld [vmem:[%s18 + $0x738] sm:$0xff]
      %v4104 = vld [vmem:[%s18 + $0x740] sm:$0xff]
      %v4105 = vld [vmem:[%s18 + $0x748] sm:$0xff]
      %v4106 = vld [vmem:[%s18 + $0x750] sm:$0xff]
      %v4107 = vld [vmem:[%s18 + $0x758] sm:$0xff]
      %v4108 = vld [vmem:[%s18 + $0x760] sm:$0xff]
      %v4109 = vld [vmem:[%s18 + $0x768] sm:$0xff]
      %v4110 = vld [vmem:[%s18 + $0x770] sm:$0xff]
      %v4111 = vld [vmem:[%s18 + $0x778] sm:$0xff]
      %v4112 = vld [vmem:[%s18 + $0x780] sm:$0xff]
      %v4113 = vld [vmem:[%s18 + $0x788] sm:$0xff]
      %v4114 = vld [vmem:[%s18 + $0x790] sm:$0xff]
      %v4115 = vld [vmem:[%s18 + $0x798] sm:$0xff]
      %v4116 = vld [vmem:[%s18 + $0x7a0] sm:$0xff]
      %v4117 = vld [vmem:[%s18 + $0x7a8] sm:$0xff]
      %v4118 = vld [vmem:[%s18 + $0x7b0] sm:$0xff]
      %v4119 = vld [vmem:[%s18 + $0x7b8] sm:$0xff]
      %v4120 = vld [vmem:[%s18 + $0x7c0] sm:$0xff]
      %v4121 = vld [vmem:[%s18 + $0x7c8] sm:$0xff]
      %v4122 = vld [vmem:[%s18 + $0x7d0] sm:$0xff]
      %v4123 = vld [vmem:[%s18 + $0x7d8] sm:$0xff]
      %v4124 = vld [vmem:[%s18 + $0x7e0] sm:$0xff]
      %v4125 = vld [vmem:[%s18 + $0x7e8] sm:$0xff]
      %v4126 = vld [vmem:[%s18 + $0x7f0] sm:$0xff]
      %v4127 = vld [vmem:[%s18 + $0x7f8] sm:$0xff]
      %v4128 = vld [vmem:[%s18 + $0x800] sm:$0xff]
      %v4129 = vld [vmem:[%s18 + $0x808] sm:$0xff]
      %v4130 = vld [vmem:[%s18 + $0x810] sm:$0xff]
      %v4131 = vld [vmem:[%s18 + $0x818] sm:$0xff]
      %v4132 = vld [vmem:[%s18 + $0x820] sm:$0xff]
      %v4133 = vld [vmem:[%s18 + $0x828] sm:$0xff]
      %v4134 = vld [vmem:[%s18 + $0x830] sm:$0xff]
      %v4135 = vld [vmem:[%s18 + $0x838] sm:$0xff]
      %v4136 = vld [vmem:[%s18 + $0x840] sm:$0xff]
      %v4137 = vld [vmem:[%s18 + $0x848] sm:$0xff]
      %v4138 = vld [vmem:[%s18 + $0x850] sm:$0xff]
      %v4139 = vld [vmem:[%s18 + $0x858] sm:$0xff]
      %v4140 = vld [vmem:[%s18 + $0x860] sm:$0xff]
      %v4141 = vld [vmem:[%s18 + $0x868] sm:$0xff]
      %v4142 = vld [vmem:[%s18 + $0x870] sm:$0xff]
      %v4143 = vld [vmem:[%s18 + $0x878] sm:$0xff]
      %v4144 = vld [vmem:[%s18 + $0x880] sm:$0xff]
      %v4145 = vld [vmem:[%s18 + $0x888] sm:$0xff]
      %v4146 = vld [vmem:[%s18 + $0x890] sm:$0xff]
      %v4147 = vld [vmem:[%s18 + $0x898] sm:$0xff]
      %v4148 = vld [vmem:[%s18 + $0x8a0] sm:$0xff]
      %v4149 = vld [vmem:[%s18 + $0x8a8] sm:$0xff]
      %v4150 = vld [vmem:[%s18 + $0x8b0] sm:$0xff]
      %v4151 = vld [vmem:[%s18 + $0x8b8] sm:$0xff]
      %v4152 = vld [vmem:[%s18 + $0x8c0] sm:$0xff]
      %v4153 = vld [vmem:[%s18 + $0x8c8] sm:$0xff]
      %v4154 = vld [vmem:[%s18 + $0x8d0] sm:$0xff]
      %v4155 = vld [vmem:[%s18 + $0x8d8] sm:$0xff]
      %v4156 = vld [vmem:[%s18 + $0x8e0] sm:$0xff]
      %v4157 = vld [vmem:[%s18 + $0x8e8] sm:$0xff]
      %v4158 = vld [vmem:[%s18 + $0x8f0] sm:$0xff]
      %v4159 = vld [vmem:[%s18 + $0x8f8] sm:$0xff]
      %v4160 = vld [vmem:[%s18 + $0x900] sm:$0xff]
      %v4161 = vld [vmem:[%s18 + $0x908] sm:$0xff]
      %v4162 = vld [vmem:[%s18 + $0x910] sm:$0xff]
      %v4163 = vld [vmem:[%s18 + $0x918] sm:$0xff]
      %v4164 = vld [vmem:[%s18 + $0x920] sm:$0xff]
      %v4165 = vld [vmem:[%s18 + $0x928] sm:$0xff]
      %v4166 = vld [vmem:[%s18 + $0x930] sm:$0xff]
      %v4167 = vld [vmem:[%s18 + $0x938] sm:$0xff]
      %v4168 = vld [vmem:[%s18 + $0x940] sm:$0xff]
      %v4169 = vld [vmem:[%s18 + $0x948] sm:$0xff]
      %v4170 = vld [vmem:[%s18 + $0x950] sm:$0xff]
      %v4171 = vld [vmem:[%s18 + $0x958] sm:$0xff]
      %v4172 = vld [vmem:[%s18 + $0x960] sm:$0xff]
      %v4173 = vld [vmem:[%s18 + $0x968] sm:$0xff]
      %v4174 = vld [vmem:[%s18 + $0x970] sm:$0xff]
      %v4175 = vld [vmem:[%s18 + $0x978] sm:$0xff]
      %v4176 = vld [vmem:[%s18 + $0x980] sm:$0xff]
      %v4177 = vld [vmem:[%s18 + $0x988] sm:$0xff]
      %v4178 = vld [vmem:[%s18 + $0x990] sm:$0xff]
      %v4179 = vld [vmem:[%s18 + $0x998] sm:$0xff]
      %v4180 = vld [vmem:[%s18 + $0x9a0] sm:$0xff]
      %v4181 = vld [vmem:[%s18 + $0x9a8] sm:$0xff]
      %v4182 = vld [vmem:[%s18 + $0x9b0] sm:$0xff]
      %v4183 = vld [vmem:[%s18 + $0x9b8] sm:$0xff]
      %v4184 = vld [vmem:[%s18 + $0x9c0] sm:$0xff]
      %v4185 = vld [vmem:[%s18 + $0x9c8] sm:$0xff]
      %v4186 = vld [vmem:[%s18 + $0x9d0] sm:$0xff]
      %v4187 = vld [vmem:[%s18 + $0x9d8] sm:$0xff]
      %v4188 = vld [vmem:[%s18 + $0x9e0] sm:$0xff]
      %v4189 = vld [vmem:[%s18 + $0x9e8] sm:$0xff]
      %v4190 = vld [vmem:[%s18 + $0x9f0] sm:$0xff]
      %v4191 = vld [vmem:[%s18 + $0x9f8] sm:$0xff]
      %v4192 = vld [vmem:[%s18 + $0xa00] sm:$0xff]
      %v4193 = vld [vmem:[%s18 + $0xa08] sm:$0xff]
      %v4194 = vld [vmem:[%s18 + $0xa10] sm:$0xff]
      %v4195 = vld [vmem:[%s18 + $0xa18] sm:$0xff]
      %v4196 = vld [vmem:[%s18 + $0xa20] sm:$0xff]
      %v4197 = vld [vmem:[%s18 + $0xa28] sm:$0xff]
      %v4198 = vld [vmem:[%s18 + $0xa30] sm:$0xff]
      %v4199 = vld [vmem:[%s18 + $0xa38] sm:$0xff]
      %v4200 = vld [vmem:[%s18 + $0xa40] sm:$0xff]
      %v4201 = vld [vmem:[%s18 + $0xa48] sm:$0xff]
      %v4202 = vld [vmem:[%s18 + $0xa50] sm:$0xff]
      %v4203 = vld [vmem:[%s18 + $0xa58] sm:$0xff]
      %v4204 = vld [vmem:[%s18 + $0xa60] sm:$0xff]
      %v4205 = vld [vmem:[%s18 + $0xa68] sm:$0xff]
      %v4206 = vld [vmem:[%s18 + $0xa70] sm:$0xff]
      %v4207 = vld [vmem:[%s18 + $0xa78] sm:$0xff]
      %v4208 = vld [vmem:[%s18 + $0xa80] sm:$0xff]
      %v4209 = vld [vmem:[%s18 + $0xa88] sm:$0xff]
      %v4210 = vld [vmem:[%s18 + $0xa90] sm:$0xff]
      %v4211 = vld [vmem:[%s18 + $0xa98] sm:$0xff]
      %v4212 = vld [vmem:[%s18 + $0xaa0] sm:$0xff]
      %v4213 = vld [vmem:[%s18 + $0xaa8] sm:$0xff]
      %v4214 = vld [vmem:[%s18 + $0xab0] sm:$0xff]
      %v4215 = vld [vmem:[%s18 + $0xab8] sm:$0xff]
      %v4216 = vld [vmem:[%s18 + $0xac0] sm:$0xff]
      %v4217 = vld [vmem:[%s18 + $0xac8] sm:$0xff]
      %v4218 = vld [vmem:[%s18 + $0xad0] sm:$0xff]
      %v4219 = vld [vmem:[%s18 + $0xad8] sm:$0xff]
      %v4220 = vld [vmem:[%s18 + $0xae0] sm:$0xff]
      %v4221 = vld [vmem:[%s18 + $0xae8] sm:$0xff]
      %v4222 = vld [vmem:[%s18 + $0xaf0] sm:$0xff]
      %v4223 = vld [vmem:[%s18 + $0xaf8] sm:$0xff]
      %v4224 = vld [vmem:[%s18 + $0xb00] sm:$0xff]
      %v4225 = vld [vmem:[%s18 + $0xb08] sm:$0xff]
      %v4226 = vld [vmem:[%s18 + $0xb10] sm:$0xff]
      %v4227 = vld [vmem:[%s18 + $0xb18] sm:$0xff]
      %v4228 = vld [vmem:[%s18 + $0xb20] sm:$0xff]
      %v4229 = vld [vmem:[%s18 + $0xb28] sm:$0xff]
      %v4230 = vld [vmem:[%s18 + $0xb30] sm:$0xff]
      %v4231 = vld [vmem:[%s18 + $0xb38] sm:$0xff]
      %v4232 = vld [vmem:[%s19] sm:$0xff]
      %v4233 = vld [vmem:[%s19 + $0x8] sm:$0xff]
      %v4234 = vld [vmem:[%s19 + $0x10] sm:$0xff]
      %v4235 = vld [vmem:[%s19 + $0x18] sm:$0xff]
      %v4240 = vlaneseq
      %v4241 = vshrl.u32 %v4240, 7
      %v4242 = vsub.s32 0, %v4241
      %v4243 = vrot.slane %v4232, %v4242
      %v4244 = vlaneseq
      %v4245 = vshrl.u32 %v4244, 7
      %v4246 = vsub.s32 4, %v4245
      %v4247 = vrot.slane %v4232, %v4246
      %v4248 = vlaneseq
      %v4249 = vshrl.u32 %v4248, 7
      %v4250 = vsub.s32 0, %v4249
      %v4251 = vrot.slane %v4233, %v4250
      %v4252 = vlaneseq
      %v4253 = vshrl.u32 %v4252, 7
      %v4254 = vsub.s32 4, %v4253
      %v4255 = vrot.slane %v4233, %v4254
      %v4256 = vlaneseq
      %v4257 = vshrl.u32 %v4256, 7
      %v4258 = vsub.s32 0, %v4257
      %v4259 = vrot.slane %v4234, %v4258
      %v4260 = vlaneseq
      %v4261 = vshrl.u32 %v4260, 7
      %v4262 = vsub.s32 4, %v4261
      %v4263 = vrot.slane %v4234, %v4262
      %v4264 = vlaneseq
      %v4265 = vshrl.u32 %v4264, 7
      %v4266 = vsub.s32 0, %v4265
      %v4267 = vrot.slane %v4235, %v4266
      %v4268 = vlaneseq
      %v4269 = vshrl.u32 %v4268, 7
      %v4270 = vsub.s32 4, %v4269
      %v4271 = vrot.slane %v4235, %v4270
      %v4280 = vlaneseq
      %v4281 = vshrl.u32 %v4280, 7
      %v4282 = vsub.s32 0, %v4281
      %v4283 = vrot.slane %v4243, %v4282
      %v4284 = vlaneseq
      %v4285 = vshrl.u32 %v4284, 7
      %v4286 = vsub.s32 0, %v4285
      %v4287 = vrot.slane %v4247, %v4286
      %v4288 = vlaneseq
      %v4289 = vshrl.u32 %v4288, 7
      %v4290 = vsub.s32 0, %v4289
      %v4291 = vrot.slane %v4251, %v4290
      %v4292 = vlaneseq
      %v4293 = vshrl.u32 %v4292, 7
      %v4294 = vsub.s32 0, %v4293
      %v4295 = vrot.slane %v4255, %v4294
      %v4296 = vlaneseq
      %v4297 = vshrl.u32 %v4296, 7
      %v4298 = vsub.s32 0, %v4297
      %v4299 = vrot.slane %v4259, %v4298
      %v4300 = vlaneseq
      %v4301 = vshrl.u32 %v4300, 7
      %v4302 = vsub.s32 0, %v4301
      %v4303 = vrot.slane %v4263, %v4302
      %v4304 = vlaneseq
      %v4305 = vshrl.u32 %v4304, 7
      %v4306 = vsub.s32 0, %v4305
      %v4307 = vrot.slane %v4267, %v4306
      %v4308 = vlaneseq
      %v4309 = vshrl.u32 %v4308, 7
      %v4310 = vsub.s32 0, %v4309
      %v4311 = vrot.slane %v4271, %v4310
      %v4672 = vunpack.c.l.b16 %v3872
      %v4673 = vunpack.c.h.b16 %v3872
      %v4674 = vunpack.c.l.b16 %v3873
      %v4675 = vunpack.c.h.b16 %v3873
      %v4676 = vunpack.c.l.b16 %v3874
      %v4677 = vunpack.c.h.b16 %v3874
      %v4678 = vunpack.c.l.b16 %v3875
      %v4679 = vunpack.c.h.b16 %v3875
      %v4680 = vunpack.c.l.b16 %v3876
      %v4681 = vunpack.c.h.b16 %v3876
      %v4682 = vunpack.c.l.b16 %v3877
      %v4683 = vunpack.c.h.b16 %v3877
      %v4684 = vunpack.c.l.b16 %v3878
      %v4685 = vunpack.c.h.b16 %v3878
      %v4686 = vunpack.c.l.b16 %v3879
      %v4687 = vunpack.c.h.b16 %v3879
      %v4688 = vunpack.c.l.b16 %v3880
      %v4689 = vunpack.c.h.b16 %v3880
      %v4690 = vunpack.c.l.b16 %v3881
      %v4691 = vunpack.c.h.b16 %v3881
      %v4692 = vunpack.c.l.b16 %v3882
      %v4693 = vunpack.c.h.b16 %v3882
      %v4694 = vunpack.c.l.b16 %v3883
      %v4695 = vunpack.c.h.b16 %v3883
      %v4696 = vunpack.c.l.b16 %v3884
      %v4697 = vunpack.c.h.b16 %v3884
      %v4698 = vunpack.c.l.b16 %v3885
      %v4699 = vunpack.c.h.b16 %v3885
      %v4700 = vunpack.c.l.b16 %v3886
      %v4701 = vunpack.c.h.b16 %v3886
      %v4702 = vunpack.c.l.b16 %v3887
      %v4703 = vunpack.c.h.b16 %v3887
      %v4704 = vunpack.c.l.b16 %v3888
      %v4705 = vunpack.c.h.b16 %v3888
      %v4706 = vunpack.c.l.b16 %v3889
      %v4707 = vunpack.c.h.b16 %v3889
      %v4708 = vunpack.c.l.b16 %v3890
      %v4709 = vunpack.c.h.b16 %v3890
      %v4710 = vunpack.c.l.b16 %v3891
      %v4711 = vunpack.c.h.b16 %v3891
      %v4712 = vunpack.c.l.b16 %v3892
      %v4713 = vunpack.c.h.b16 %v3892
      %v4714 = vunpack.c.l.b16 %v3893
      %v4715 = vunpack.c.h.b16 %v3893
      %v4716 = vunpack.c.l.b16 %v3894
      %v4717 = vunpack.c.h.b16 %v3894
      %v4718 = vunpack.c.l.b16 %v3895
      %v4719 = vunpack.c.h.b16 %v3895
      %v4720 = vunpack.c.l.b16 %v3896
      %v4721 = vunpack.c.h.b16 %v3896
      %v4722 = vunpack.c.l.b16 %v3897
      %v4723 = vunpack.c.h.b16 %v3897
      %v4724 = vunpack.c.l.b16 %v3898
      %v4725 = vunpack.c.h.b16 %v3898
      %v4726 = vunpack.c.l.b16 %v3899
      %v4727 = vunpack.c.h.b16 %v3899
      %v4728 = vunpack.c.l.b16 %v3900
      %v4729 = vunpack.c.h.b16 %v3900
      %v4730 = vunpack.c.l.b16 %v3901
      %v4731 = vunpack.c.h.b16 %v3901
      %v4732 = vunpack.c.l.b16 %v3902
      %v4733 = vunpack.c.h.b16 %v3902
      %v4734 = vunpack.c.l.b16 %v3903
      %v4735 = vunpack.c.h.b16 %v3903
      %v4736 = vunpack.c.l.b16 %v3904
      %v4737 = vunpack.c.h.b16 %v3904
      %v4738 = vunpack.c.l.b16 %v3905
      %v4739 = vunpack.c.h.b16 %v3905
      %v4740 = vunpack.c.l.b16 %v3906
      %v4741 = vunpack.c.h.b16 %v3906
      %v4742 = vunpack.c.l.b16 %v3907
      %v4743 = vunpack.c.h.b16 %v3907
      %v4744 = vunpack.c.l.b16 %v3908
      %v4745 = vunpack.c.h.b16 %v3908
      %v4746 = vunpack.c.l.b16 %v3909
      %v4747 = vunpack.c.h.b16 %v3909
      %v4748 = vunpack.c.l.b16 %v3910
      %v4749 = vunpack.c.h.b16 %v3910
      %v4750 = vunpack.c.l.b16 %v3911
      %v4751 = vunpack.c.h.b16 %v3911
      %v4752 = vunpack.c.l.b16 %v3912
      %v4753 = vunpack.c.h.b16 %v3912
      %v4754 = vunpack.c.l.b16 %v3913
      %v4755 = vunpack.c.h.b16 %v3913
      %v4756 = vunpack.c.l.b16 %v3914
      %v4757 = vunpack.c.h.b16 %v3914
      %v4758 = vunpack.c.l.b16 %v3915
      %v4759 = vunpack.c.h.b16 %v3915
      %v4760 = vunpack.c.l.b16 %v3916
      %v4761 = vunpack.c.h.b16 %v3916
      %v4762 = vunpack.c.l.b16 %v3917
      %v4763 = vunpack.c.h.b16 %v3917
      %v4764 = vunpack.c.l.b16 %v3918
      %v4765 = vunpack.c.h.b16 %v3918
      %v4766 = vunpack.c.l.b16 %v3919
      %v4767 = vunpack.c.h.b16 %v3919
      %v4768 = vunpack.c.l.b16 %v3920
      %v4769 = vunpack.c.h.b16 %v3920
      %v4770 = vunpack.c.l.b16 %v3921
      %v4771 = vunpack.c.h.b16 %v3921
      %v4772 = vunpack.c.l.b16 %v3922
      %v4773 = vunpack.c.h.b16 %v3922
      %v4774 = vunpack.c.l.b16 %v3923
      %v4775 = vunpack.c.h.b16 %v3923
      %v4776 = vunpack.c.l.b16 %v3924
      %v4777 = vunpack.c.h.b16 %v3924
      %v4778 = vunpack.c.l.b16 %v3925
      %v4779 = vunpack.c.h.b16 %v3925
      %v4780 = vunpack.c.l.b16 %v3926
      %v4781 = vunpack.c.h.b16 %v3926
      %v4782 = vunpack.c.l.b16 %v3927
      %v4783 = vunpack.c.h.b16 %v3927
      %v4784 = vunpack.c.l.b16 %v3928
      %v4785 = vunpack.c.h.b16 %v3928
      %v4786 = vunpack.c.l.b16 %v3929
      %v4787 = vunpack.c.h.b16 %v3929
      %v4788 = vunpack.c.l.b16 %v3930
      %v4789 = vunpack.c.h.b16 %v3930
      %v4790 = vunpack.c.l.b16 %v3931
      %v4791 = vunpack.c.h.b16 %v3931
      %v4792 = vunpack.c.l.b16 %v3932
      %v4793 = vunpack.c.h.b16 %v3932
      %v4794 = vunpack.c.l.b16 %v3933
      %v4795 = vunpack.c.h.b16 %v3933
      %v4796 = vunpack.c.l.b16 %v3934
      %v4797 = vunpack.c.h.b16 %v3934
      %v4798 = vunpack.c.l.b16 %v3935
      %v4799 = vunpack.c.h.b16 %v3935
      %v4800 = vunpack.c.l.b16 %v3936
      %v4801 = vunpack.c.h.b16 %v3936
      %v4802 = vunpack.c.l.b16 %v3937
      %v4803 = vunpack.c.h.b16 %v3937
      %v4804 = vunpack.c.l.b16 %v3938
      %v4805 = vunpack.c.h.b16 %v3938
      %v4806 = vunpack.c.l.b16 %v3939
      %v4807 = vunpack.c.h.b16 %v3939
      %v4808 = vunpack.c.l.b16 %v3940
      %v4809 = vunpack.c.h.b16 %v3940
      %v4810 = vunpack.c.l.b16 %v3941
      %v4811 = vunpack.c.h.b16 %v3941
      %v4812 = vunpack.c.l.b16 %v3942
      %v4813 = vunpack.c.h.b16 %v3942
      %v4814 = vunpack.c.l.b16 %v3943
      %v4815 = vunpack.c.h.b16 %v3943
      %v4816 = vunpack.c.l.b16 %v3944
      %v4817 = vunpack.c.h.b16 %v3944
      %v4818 = vunpack.c.l.b16 %v3945
      %v4819 = vunpack.c.h.b16 %v3945
      %v4820 = vunpack.c.l.b16 %v3946
      %v4821 = vunpack.c.h.b16 %v3946
      %v4822 = vunpack.c.l.b16 %v3947
      %v4823 = vunpack.c.h.b16 %v3947
      %v4824 = vunpack.c.l.b16 %v3948
      %v4825 = vunpack.c.h.b16 %v3948
      %v4826 = vunpack.c.l.b16 %v3949
      %v4827 = vunpack.c.h.b16 %v3949
      %v4828 = vunpack.c.l.b16 %v3950
      %v4829 = vunpack.c.h.b16 %v3950
      %v4830 = vunpack.c.l.b16 %v3951
      %v4831 = vunpack.c.h.b16 %v3951
      %v4832 = vunpack.c.l.b16 %v3952
      %v4833 = vunpack.c.h.b16 %v3952
      %v4834 = vunpack.c.l.b16 %v3953
      %v4835 = vunpack.c.h.b16 %v3953
      %v4836 = vunpack.c.l.b16 %v3954
      %v4837 = vunpack.c.h.b16 %v3954
      %v4838 = vunpack.c.l.b16 %v3955
      %v4839 = vunpack.c.h.b16 %v3955
      %v4840 = vunpack.c.l.b16 %v3956
      %v4841 = vunpack.c.h.b16 %v3956
      %v4842 = vunpack.c.l.b16 %v3957
      %v4843 = vunpack.c.h.b16 %v3957
      %v4844 = vunpack.c.l.b16 %v3958
      %v4845 = vunpack.c.h.b16 %v3958
      %v4846 = vunpack.c.l.b16 %v3959
      %v4847 = vunpack.c.h.b16 %v3959
      %v4848 = vunpack.c.l.b16 %v3960
      %v4849 = vunpack.c.h.b16 %v3960
      %v4850 = vunpack.c.l.b16 %v3961
      %v4851 = vunpack.c.h.b16 %v3961
      %v4852 = vunpack.c.l.b16 %v3962
      %v4853 = vunpack.c.h.b16 %v3962
      %v4854 = vunpack.c.l.b16 %v3963
      %v4855 = vunpack.c.h.b16 %v3963
      %v4856 = vunpack.c.l.b16 %v3964
      %v4857 = vunpack.c.h.b16 %v3964
      %v4858 = vunpack.c.l.b16 %v3965
      %v4859 = vunpack.c.h.b16 %v3965
      %v4860 = vunpack.c.l.b16 %v3966
      %v4861 = vunpack.c.h.b16 %v3966
      %v4862 = vunpack.c.l.b16 %v3967
      %v4863 = vunpack.c.h.b16 %v3967
      %v4864 = vunpack.c.l.b16 %v3968
      %v4865 = vunpack.c.h.b16 %v3968
      %v4866 = vunpack.c.l.b16 %v3969
      %v4867 = vunpack.c.h.b16 %v3969
      %v4868 = vunpack.c.l.b16 %v3970
      %v4869 = vunpack.c.h.b16 %v3970
      %v4870 = vunpack.c.l.b16 %v3971
      %v4871 = vunpack.c.h.b16 %v3971
      %v4872 = vunpack.c.l.b16 %v3972
      %v4873 = vunpack.c.h.b16 %v3972
      %v4874 = vunpack.c.l.b16 %v3973
      %v4875 = vunpack.c.h.b16 %v3973
      %v4876 = vunpack.c.l.b16 %v3974
      %v4877 = vunpack.c.h.b16 %v3974
      %v4878 = vunpack.c.l.b16 %v3975
      %v4879 = vunpack.c.h.b16 %v3975
      %v4880 = vunpack.c.l.b16 %v3976
      %v4881 = vunpack.c.h.b16 %v3976
      %v4882 = vunpack.c.l.b16 %v3977
      %v4883 = vunpack.c.h.b16 %v3977
      %v4884 = vunpack.c.l.b16 %v3978
      %v4885 = vunpack.c.h.b16 %v3978
      %v4886 = vunpack.c.l.b16 %v3979
      %v4887 = vunpack.c.h.b16 %v3979
      %v4888 = vunpack.c.l.b16 %v3980
      %v4889 = vunpack.c.h.b16 %v3980
      %v4890 = vunpack.c.l.b16 %v3981
      %v4891 = vunpack.c.h.b16 %v3981
      %v4892 = vunpack.c.l.b16 %v3982
      %v4893 = vunpack.c.h.b16 %v3982
      %v4894 = vunpack.c.l.b16 %v3983
      %v4895 = vunpack.c.h.b16 %v3983
      %v4896 = vunpack.c.l.b16 %v3984
      %v4897 = vunpack.c.h.b16 %v3984
      %v4898 = vunpack.c.l.b16 %v3985
      %v4899 = vunpack.c.h.b16 %v3985
      %v4900 = vunpack.c.l.b16 %v3986
      %v4901 = vunpack.c.h.b16 %v3986
      %v4902 = vunpack.c.l.b16 %v3987
      %v4903 = vunpack.c.h.b16 %v3987
      %v4904 = vunpack.c.l.b16 %v3988
      %v4905 = vunpack.c.h.b16 %v3988
      %v4906 = vunpack.c.l.b16 %v3989
      %v4907 = vunpack.c.h.b16 %v3989
      %v4908 = vunpack.c.l.b16 %v3990
      %v4909 = vunpack.c.h.b16 %v3990
      %v4910 = vunpack.c.l.b16 %v3991
      %v4911 = vunpack.c.h.b16 %v3991
      %v4912 = vunpack.c.l.b16 %v3992
      %v4913 = vunpack.c.h.b16 %v3992
      %v4914 = vunpack.c.l.b16 %v3993
      %v4915 = vunpack.c.h.b16 %v3993
      %v4916 = vunpack.c.l.b16 %v3994
      %v4917 = vunpack.c.h.b16 %v3994
      %v4918 = vunpack.c.l.b16 %v3995
      %v4919 = vunpack.c.h.b16 %v3995
      %v4920 = vunpack.c.l.b16 %v3996
      %v4921 = vunpack.c.h.b16 %v3996
      %v4922 = vunpack.c.l.b16 %v3997
      %v4923 = vunpack.c.h.b16 %v3997
      %v4924 = vunpack.c.l.b16 %v3998
      %v4925 = vunpack.c.h.b16 %v3998
      %v4926 = vunpack.c.l.b16 %v3999
      %v4927 = vunpack.c.h.b16 %v3999
      %v4928 = vunpack.c.l.b16 %v4000
      %v4929 = vunpack.c.h.b16 %v4000
      %v4930 = vunpack.c.l.b16 %v4001
      %v4931 = vunpack.c.h.b16 %v4001
      %v4932 = vunpack.c.l.b16 %v4002
      %v4933 = vunpack.c.h.b16 %v4002
      %v4934 = vunpack.c.l.b16 %v4003
      %v4935 = vunpack.c.h.b16 %v4003
      %v4936 = vunpack.c.l.b16 %v4004
      %v4937 = vunpack.c.h.b16 %v4004
      %v4938 = vunpack.c.l.b16 %v4005
      %v4939 = vunpack.c.h.b16 %v4005
      %v4940 = vunpack.c.l.b16 %v4006
      %v4941 = vunpack.c.h.b16 %v4006
      %v4942 = vunpack.c.l.b16 %v4007
      %v4943 = vunpack.c.h.b16 %v4007
      %v4944 = vunpack.c.l.b16 %v4008
      %v4945 = vunpack.c.h.b16 %v4008
      %v4946 = vunpack.c.l.b16 %v4009
      %v4947 = vunpack.c.h.b16 %v4009
      %v4948 = vunpack.c.l.b16 %v4010
      %v4949 = vunpack.c.h.b16 %v4010
      %v4950 = vunpack.c.l.b16 %v4011
      %v4951 = vunpack.c.h.b16 %v4011
      %v4952 = vunpack.c.l.b16 %v4012
      %v4953 = vunpack.c.h.b16 %v4012
      %v4954 = vunpack.c.l.b16 %v4013
      %v4955 = vunpack.c.h.b16 %v4013
      %v4956 = vunpack.c.l.b16 %v4014
      %v4957 = vunpack.c.h.b16 %v4014
      %v4958 = vunpack.c.l.b16 %v4015
      %v4959 = vunpack.c.h.b16 %v4015
      %v4960 = vunpack.c.l.b16 %v4016
      %v4961 = vunpack.c.h.b16 %v4016
      %v4962 = vunpack.c.l.b16 %v4017
      %v4963 = vunpack.c.h.b16 %v4017
      %v4964 = vunpack.c.l.b16 %v4018
      %v4965 = vunpack.c.h.b16 %v4018
      %v4966 = vunpack.c.l.b16 %v4019
      %v4967 = vunpack.c.h.b16 %v4019
      %v4968 = vunpack.c.l.b16 %v4020
      %v4969 = vunpack.c.h.b16 %v4020
      %v4970 = vunpack.c.l.b16 %v4021
      %v4971 = vunpack.c.h.b16 %v4021
      %v4972 = vunpack.c.l.b16 %v4022
      %v4973 = vunpack.c.h.b16 %v4022
      %v4974 = vunpack.c.l.b16 %v4023
      %v4975 = vunpack.c.h.b16 %v4023
      %v4976 = vunpack.c.l.b16 %v4024
      %v4977 = vunpack.c.h.b16 %v4024
      %v4978 = vunpack.c.l.b16 %v4025
      %v4979 = vunpack.c.h.b16 %v4025
      %v4980 = vunpack.c.l.b16 %v4026
      %v4981 = vunpack.c.h.b16 %v4026
      %v4982 = vunpack.c.l.b16 %v4027
      %v4983 = vunpack.c.h.b16 %v4027
      %v4984 = vunpack.c.l.b16 %v4028
      %v4985 = vunpack.c.h.b16 %v4028
      %v4986 = vunpack.c.l.b16 %v4029
      %v4987 = vunpack.c.h.b16 %v4029
      %v4988 = vunpack.c.l.b16 %v4030
      %v4989 = vunpack.c.h.b16 %v4030
      %v4990 = vunpack.c.l.b16 %v4031
      %v4991 = vunpack.c.h.b16 %v4031
      %v4992 = vunpack.c.l.b16 %v4032
      %v4993 = vunpack.c.h.b16 %v4032
      %v4994 = vunpack.c.l.b16 %v4033
      %v4995 = vunpack.c.h.b16 %v4033
      %v4996 = vunpack.c.l.b16 %v4034
      %v4997 = vunpack.c.h.b16 %v4034
      %v4998 = vunpack.c.l.b16 %v4035
      %v4999 = vunpack.c.h.b16 %v4035
      %v5000 = vunpack.c.l.b16 %v4036
      %v5001 = vunpack.c.h.b16 %v4036
      %v5002 = vunpack.c.l.b16 %v4037
      %v5003 = vunpack.c.h.b16 %v4037
      %v5004 = vunpack.c.l.b16 %v4038
      %v5005 = vunpack.c.h.b16 %v4038
      %v5006 = vunpack.c.l.b16 %v4039
      %v5007 = vunpack.c.h.b16 %v4039
      %v5008 = vunpack.c.l.b16 %v4040
      %v5009 = vunpack.c.h.b16 %v4040
      %v5010 = vunpack.c.l.b16 %v4041
      %v5011 = vunpack.c.h.b16 %v4041
      %v5012 = vunpack.c.l.b16 %v4042
      %v5013 = vunpack.c.h.b16 %v4042
      %v5014 = vunpack.c.l.b16 %v4043
      %v5015 = vunpack.c.h.b16 %v4043
      %v5016 = vunpack.c.l.b16 %v4044
      %v5017 = vunpack.c.h.b16 %v4044
      %v5018 = vunpack.c.l.b16 %v4045
      %v5019 = vunpack.c.h.b16 %v4045
      %v5020 = vunpack.c.l.b16 %v4046
      %v5021 = vunpack.c.h.b16 %v4046
      %v5022 = vunpack.c.l.b16 %v4047
      %v5023 = vunpack.c.h.b16 %v4047
      %v5024 = vunpack.c.l.b16 %v4048
      %v5025 = vunpack.c.h.b16 %v4048
      %v5026 = vunpack.c.l.b16 %v4049
      %v5027 = vunpack.c.h.b16 %v4049
      %v5028 = vunpack.c.l.b16 %v4050
      %v5029 = vunpack.c.h.b16 %v4050
      %v5030 = vunpack.c.l.b16 %v4051
      %v5031 = vunpack.c.h.b16 %v4051
      %v5032 = vunpack.c.l.b16 %v4052
      %v5033 = vunpack.c.h.b16 %v4052
      %v5034 = vunpack.c.l.b16 %v4053
      %v5035 = vunpack.c.h.b16 %v4053
      %v5036 = vunpack.c.l.b16 %v4054
      %v5037 = vunpack.c.h.b16 %v4054
      %v5038 = vunpack.c.l.b16 %v4055
      %v5039 = vunpack.c.h.b16 %v4055
      %v5040 = vunpack.c.l.b16 %v4056
      %v5041 = vunpack.c.h.b16 %v4056
      %v5042 = vunpack.c.l.b16 %v4057
      %v5043 = vunpack.c.h.b16 %v4057
      %v5044 = vunpack.c.l.b16 %v4058
      %v5045 = vunpack.c.h.b16 %v4058
      %v5046 = vunpack.c.l.b16 %v4059
      %v5047 = vunpack.c.h.b16 %v4059
      %v5048 = vunpack.c.l.b16 %v4060
      %v5049 = vunpack.c.h.b16 %v4060
      %v5050 = vunpack.c.l.b16 %v4061
      %v5051 = vunpack.c.h.b16 %v4061
      %v5052 = vunpack.c.l.b16 %v4062
      %v5053 = vunpack.c.h.b16 %v4062
      %v5054 = vunpack.c.l.b16 %v4063
      %v5055 = vunpack.c.h.b16 %v4063
      %v5056 = vunpack.c.l.b16 %v4064
      %v5057 = vunpack.c.h.b16 %v4064
      %v5058 = vunpack.c.l.b16 %v4065
      %v5059 = vunpack.c.h.b16 %v4065
      %v5060 = vunpack.c.l.b16 %v4066
      %v5061 = vunpack.c.h.b16 %v4066
      %v5062 = vunpack.c.l.b16 %v4067
      %v5063 = vunpack.c.h.b16 %v4067
      %v5064 = vunpack.c.l.b16 %v4068
      %v5065 = vunpack.c.h.b16 %v4068
      %v5066 = vunpack.c.l.b16 %v4069
      %v5067 = vunpack.c.h.b16 %v4069
      %v5068 = vunpack.c.l.b16 %v4070
      %v5069 = vunpack.c.h.b16 %v4070
      %v5070 = vunpack.c.l.b16 %v4071
      %v5071 = vunpack.c.h.b16 %v4071
      %v5072 = vunpack.c.l.b16 %v4072
      %v5073 = vunpack.c.h.b16 %v4072
      %v5074 = vunpack.c.l.b16 %v4073
      %v5075 = vunpack.c.h.b16 %v4073
      %v5076 = vunpack.c.l.b16 %v4074
      %v5077 = vunpack.c.h.b16 %v4074
      %v5078 = vunpack.c.l.b16 %v4075
      %v5079 = vunpack.c.h.b16 %v4075
      %v5080 = vunpack.c.l.b16 %v4076
      %v5081 = vunpack.c.h.b16 %v4076
      %v5082 = vunpack.c.l.b16 %v4077
      %v5083 = vunpack.c.h.b16 %v4077
      %v5084 = vunpack.c.l.b16 %v4078
      %v5085 = vunpack.c.h.b16 %v4078
      %v5086 = vunpack.c.l.b16 %v4079
      %v5087 = vunpack.c.h.b16 %v4079
      %v5088 = vunpack.c.l.b16 %v4080
      %v5089 = vunpack.c.h.b16 %v4080
      %v5090 = vunpack.c.l.b16 %v4081
      %v5091 = vunpack.c.h.b16 %v4081
      %v5092 = vunpack.c.l.b16 %v4082
      %v5093 = vunpack.c.h.b16 %v4082
      %v5094 = vunpack.c.l.b16 %v4083
      %v5095 = vunpack.c.h.b16 %v4083
      %v5096 = vunpack.c.l.b16 %v4084
      %v5097 = vunpack.c.h.b16 %v4084
      %v5098 = vunpack.c.l.b16 %v4085
      %v5099 = vunpack.c.h.b16 %v4085
      %v5100 = vunpack.c.l.b16 %v4086
      %v5101 = vunpack.c.h.b16 %v4086
      %v5102 = vunpack.c.l.b16 %v4087
      %v5103 = vunpack.c.h.b16 %v4087
      %v5104 = vunpack.c.l.b16 %v4088
      %v5105 = vunpack.c.h.b16 %v4088
      %v5106 = vunpack.c.l.b16 %v4089
      %v5107 = vunpack.c.h.b16 %v4089
      %v5108 = vunpack.c.l.b16 %v4090
      %v5109 = vunpack.c.h.b16 %v4090
      %v5110 = vunpack.c.l.b16 %v4091
      %v5111 = vunpack.c.h.b16 %v4091
      %v5112 = vunpack.c.l.b16 %v4092
      %v5113 = vunpack.c.h.b16 %v4092
      %v5114 = vunpack.c.l.b16 %v4093
      %v5115 = vunpack.c.h.b16 %v4093
      %v5116 = vunpack.c.l.b16 %v4094
      %v5117 = vunpack.c.h.b16 %v4094
      %v5118 = vunpack.c.l.b16 %v4095
      %v5119 = vunpack.c.h.b16 %v4095
      %v5120 = vunpack.c.l.b16 %v4096
      %v5121 = vunpack.c.h.b16 %v4096
      %v5122 = vunpack.c.l.b16 %v4097
      %v5123 = vunpack.c.h.b16 %v4097
      %v5124 = vunpack.c.l.b16 %v4098
      %v5125 = vunpack.c.h.b16 %v4098
      %v5126 = vunpack.c.l.b16 %v4099
      %v5127 = vunpack.c.h.b16 %v4099
      %v5128 = vunpack.c.l.b16 %v4100
      %v5129 = vunpack.c.h.b16 %v4100
      %v5130 = vunpack.c.l.b16 %v4101
      %v5131 = vunpack.c.h.b16 %v4101
      %v5132 = vunpack.c.l.b16 %v4102
      %v5133 = vunpack.c.h.b16 %v4102
      %v5134 = vunpack.c.l.b16 %v4103
      %v5135 = vunpack.c.h.b16 %v4103
      %v5136 = vunpack.c.l.b16 %v4104
      %v5137 = vunpack.c.h.b16 %v4104
      %v5138 = vunpack.c.l.b16 %v4105
      %v5139 = vunpack.c.h.b16 %v4105
      %v5140 = vunpack.c.l.b16 %v4106
      %v5141 = vunpack.c.h.b16 %v4106
      %v5142 = vunpack.c.l.b16 %v4107
      %v5143 = vunpack.c.h.b16 %v4107
      %v5144 = vunpack.c.l.b16 %v4108
      %v5145 = vunpack.c.h.b16 %v4108
      %v5146 = vunpack.c.l.b16 %v4109
      %v5147 = vunpack.c.h.b16 %v4109
      %v5148 = vunpack.c.l.b16 %v4110
      %v5149 = vunpack.c.h.b16 %v4110
      %v5150 = vunpack.c.l.b16 %v4111
      %v5151 = vunpack.c.h.b16 %v4111
      %v5152 = vunpack.c.l.b16 %v4112
      %v5153 = vunpack.c.h.b16 %v4112
      %v5154 = vunpack.c.l.b16 %v4113
      %v5155 = vunpack.c.h.b16 %v4113
      %v5156 = vunpack.c.l.b16 %v4114
      %v5157 = vunpack.c.h.b16 %v4114
      %v5158 = vunpack.c.l.b16 %v4115
      %v5159 = vunpack.c.h.b16 %v4115
      %v5160 = vunpack.c.l.b16 %v4116
      %v5161 = vunpack.c.h.b16 %v4116
      %v5162 = vunpack.c.l.b16 %v4117
      %v5163 = vunpack.c.h.b16 %v4117
      %v5164 = vunpack.c.l.b16 %v4118
      %v5165 = vunpack.c.h.b16 %v4118
      %v5166 = vunpack.c.l.b16 %v4119
      %v5167 = vunpack.c.h.b16 %v4119
      %v5168 = vunpack.c.l.b16 %v4120
      %v5169 = vunpack.c.h.b16 %v4120
      %v5170 = vunpack.c.l.b16 %v4121
      %v5171 = vunpack.c.h.b16 %v4121
      %v5172 = vunpack.c.l.b16 %v4122
      %v5173 = vunpack.c.h.b16 %v4122
      %v5174 = vunpack.c.l.b16 %v4123
      %v5175 = vunpack.c.h.b16 %v4123
      %v5176 = vunpack.c.l.b16 %v4124
      %v5177 = vunpack.c.h.b16 %v4124
      %v5178 = vunpack.c.l.b16 %v4125
      %v5179 = vunpack.c.h.b16 %v4125
      %v5180 = vunpack.c.l.b16 %v4126
      %v5181 = vunpack.c.h.b16 %v4126
      %v5182 = vunpack.c.l.b16 %v4127
      %v5183 = vunpack.c.h.b16 %v4127
      %v5184 = vunpack.c.l.b16 %v4128
      %v5185 = vunpack.c.h.b16 %v4128
      %v5186 = vunpack.c.l.b16 %v4129
      %v5187 = vunpack.c.h.b16 %v4129
      %v5188 = vunpack.c.l.b16 %v4130
      %v5189 = vunpack.c.h.b16 %v4130
      %v5190 = vunpack.c.l.b16 %v4131
      %v5191 = vunpack.c.h.b16 %v4131
      %v5192 = vunpack.c.l.b16 %v4132
      %v5193 = vunpack.c.h.b16 %v4132
      %v5194 = vunpack.c.l.b16 %v4133
      %v5195 = vunpack.c.h.b16 %v4133
      %v5196 = vunpack.c.l.b16 %v4134
      %v5197 = vunpack.c.h.b16 %v4134
      %v5198 = vunpack.c.l.b16 %v4135
      %v5199 = vunpack.c.h.b16 %v4135
      %v5200 = vunpack.c.l.b16 %v4136
      %v5201 = vunpack.c.h.b16 %v4136
      %v5202 = vunpack.c.l.b16 %v4137
      %v5203 = vunpack.c.h.b16 %v4137
      %v5204 = vunpack.c.l.b16 %v4138
      %v5205 = vunpack.c.h.b16 %v4138
      %v5206 = vunpack.c.l.b16 %v4139
      %v5207 = vunpack.c.h.b16 %v4139
      %v5208 = vunpack.c.l.b16 %v4140
      %v5209 = vunpack.c.h.b16 %v4140
      %v5210 = vunpack.c.l.b16 %v4141
      %v5211 = vunpack.c.h.b16 %v4141
      %v5212 = vunpack.c.l.b16 %v4142
      %v5213 = vunpack.c.h.b16 %v4142
      %v5214 = vunpack.c.l.b16 %v4143
      %v5215 = vunpack.c.h.b16 %v4143
      %v5216 = vunpack.c.l.b16 %v4144
      %v5217 = vunpack.c.h.b16 %v4144
      %v5218 = vunpack.c.l.b16 %v4145
      %v5219 = vunpack.c.h.b16 %v4145
      %v5220 = vunpack.c.l.b16 %v4146
      %v5221 = vunpack.c.h.b16 %v4146
      %v5222 = vunpack.c.l.b16 %v4147
      %v5223 = vunpack.c.h.b16 %v4147
      %v5224 = vunpack.c.l.b16 %v4148
      %v5225 = vunpack.c.h.b16 %v4148
      %v5226 = vunpack.c.l.b16 %v4149
      %v5227 = vunpack.c.h.b16 %v4149
      %v5228 = vunpack.c.l.b16 %v4150
      %v5229 = vunpack.c.h.b16 %v4150
      %v5230 = vunpack.c.l.b16 %v4151
      %v5231 = vunpack.c.h.b16 %v4151
      %v5232 = vunpack.c.l.b16 %v4152
      %v5233 = vunpack.c.h.b16 %v4152
      %v5234 = vunpack.c.l.b16 %v4153
      %v5235 = vunpack.c.h.b16 %v4153
      %v5236 = vunpack.c.l.b16 %v4154
      %v5237 = vunpack.c.h.b16 %v4154
      %v5238 = vunpack.c.l.b16 %v4155
      %v5239 = vunpack.c.h.b16 %v4155
      %v5240 = vunpack.c.l.b16 %v4156
      %v5241 = vunpack.c.h.b16 %v4156
      %v5242 = vunpack.c.l.b16 %v4157
      %v5243 = vunpack.c.h.b16 %v4157
      %v5244 = vunpack.c.l.b16 %v4158
      %v5245 = vunpack.c.h.b16 %v4158
      %v5246 = vunpack.c.l.b16 %v4159
      %v5247 = vunpack.c.h.b16 %v4159
      %v5248 = vunpack.c.l.b16 %v4160
      %v5249 = vunpack.c.h.b16 %v4160
      %v5250 = vunpack.c.l.b16 %v4161
      %v5251 = vunpack.c.h.b16 %v4161
      %v5252 = vunpack.c.l.b16 %v4162
      %v5253 = vunpack.c.h.b16 %v4162
      %v5254 = vunpack.c.l.b16 %v4163
      %v5255 = vunpack.c.h.b16 %v4163
      %v5256 = vunpack.c.l.b16 %v4164
      %v5257 = vunpack.c.h.b16 %v4164
      %v5258 = vunpack.c.l.b16 %v4165
      %v5259 = vunpack.c.h.b16 %v4165
      %v5260 = vunpack.c.l.b16 %v4166
      %v5261 = vunpack.c.h.b16 %v4166
      %v5262 = vunpack.c.l.b16 %v4167
      %v5263 = vunpack.c.h.b16 %v4167
      %v5264 = vunpack.c.l.b16 %v4168
      %v5265 = vunpack.c.h.b16 %v4168
      %v5266 = vunpack.c.l.b16 %v4169
      %v5267 = vunpack.c.h.b16 %v4169
      %v5268 = vunpack.c.l.b16 %v4170
      %v5269 = vunpack.c.h.b16 %v4170
      %v5270 = vunpack.c.l.b16 %v4171
      %v5271 = vunpack.c.h.b16 %v4171
      %v5272 = vunpack.c.l.b16 %v4172
      %v5273 = vunpack.c.h.b16 %v4172
      %v5274 = vunpack.c.l.b16 %v4173
      %v5275 = vunpack.c.h.b16 %v4173
      %v5276 = vunpack.c.l.b16 %v4174
      %v5277 = vunpack.c.h.b16 %v4174
      %v5278 = vunpack.c.l.b16 %v4175
      %v5279 = vunpack.c.h.b16 %v4175
      %v5280 = vunpack.c.l.b16 %v4176
      %v5281 = vunpack.c.h.b16 %v4176
      %v5282 = vunpack.c.l.b16 %v4177
      %v5283 = vunpack.c.h.b16 %v4177
      %v5284 = vunpack.c.l.b16 %v4178
      %v5285 = vunpack.c.h.b16 %v4178
      %v5286 = vunpack.c.l.b16 %v4179
      %v5287 = vunpack.c.h.b16 %v4179
      %v5288 = vunpack.c.l.b16 %v4180
      %v5289 = vunpack.c.h.b16 %v4180
      %v5290 = vunpack.c.l.b16 %v4181
      %v5291 = vunpack.c.h.b16 %v4181
      %v5292 = vunpack.c.l.b16 %v4182
      %v5293 = vunpack.c.h.b16 %v4182
      %v5294 = vunpack.c.l.b16 %v4183
      %v5295 = vunpack.c.h.b16 %v4183
      %v5296 = vunpack.c.l.b16 %v4184
      %v5297 = vunpack.c.h.b16 %v4184
      %v5298 = vunpack.c.l.b16 %v4185
      %v5299 = vunpack.c.h.b16 %v4185
      %v5300 = vunpack.c.l.b16 %v4186
      %v5301 = vunpack.c.h.b16 %v4186
      %v5302 = vunpack.c.l.b16 %v4187
      %v5303 = vunpack.c.h.b16 %v4187
      %v5304 = vunpack.c.l.b16 %v4188
      %v5305 = vunpack.c.h.b16 %v4188
      %v5306 = vunpack.c.l.b16 %v4189
      %v5307 = vunpack.c.h.b16 %v4189
      %v5308 = vunpack.c.l.b16 %v4190
      %v5309 = vunpack.c.h.b16 %v4190
      %v5310 = vunpack.c.l.b16 %v4191
      %v5311 = vunpack.c.h.b16 %v4191
      %v5312 = vunpack.c.l.b16 %v4192
      %v5313 = vunpack.c.h.b16 %v4192
      %v5314 = vunpack.c.l.b16 %v4193
      %v5315 = vunpack.c.h.b16 %v4193
      %v5316 = vunpack.c.l.b16 %v4194
      %v5317 = vunpack.c.h.b16 %v4194
      %v5318 = vunpack.c.l.b16 %v4195
      %v5319 = vunpack.c.h.b16 %v4195
      %v5320 = vunpack.c.l.b16 %v4196
      %v5321 = vunpack.c.h.b16 %v4196
      %v5322 = vunpack.c.l.b16 %v4197
      %v5323 = vunpack.c.h.b16 %v4197
      %v5324 = vunpack.c.l.b16 %v4198
      %v5325 = vunpack.c.h.b16 %v4198
      %v5326 = vunpack.c.l.b16 %v4199
      %v5327 = vunpack.c.h.b16 %v4199
      %v5328 = vunpack.c.l.b16 %v4200
      %v5329 = vunpack.c.h.b16 %v4200
      %v5330 = vunpack.c.l.b16 %v4201
      %v5331 = vunpack.c.h.b16 %v4201
      %v5332 = vunpack.c.l.b16 %v4202
      %v5333 = vunpack.c.h.b16 %v4202
      %v5334 = vunpack.c.l.b16 %v4203
      %v5335 = vunpack.c.h.b16 %v4203
      %v5336 = vunpack.c.l.b16 %v4204
      %v5337 = vunpack.c.h.b16 %v4204
      %v5338 = vunpack.c.l.b16 %v4205
      %v5339 = vunpack.c.h.b16 %v4205
      %v5340 = vunpack.c.l.b16 %v4206
      %v5341 = vunpack.c.h.b16 %v4206
      %v5342 = vunpack.c.l.b16 %v4207
      %v5343 = vunpack.c.h.b16 %v4207
      %v5344 = vunpack.c.l.b16 %v4208
      %v5345 = vunpack.c.h.b16 %v4208
      %v5346 = vunpack.c.l.b16 %v4209
      %v5347 = vunpack.c.h.b16 %v4209
      %v5348 = vunpack.c.l.b16 %v4210
      %v5349 = vunpack.c.h.b16 %v4210
      %v5350 = vunpack.c.l.b16 %v4211
      %v5351 = vunpack.c.h.b16 %v4211
      %v5352 = vunpack.c.l.b16 %v4212
      %v5353 = vunpack.c.h.b16 %v4212
      %v5354 = vunpack.c.l.b16 %v4213
      %v5355 = vunpack.c.h.b16 %v4213
      %v5356 = vunpack.c.l.b16 %v4214
      %v5357 = vunpack.c.h.b16 %v4214
      %v5358 = vunpack.c.l.b16 %v4215
      %v5359 = vunpack.c.h.b16 %v4215
      %v5360 = vunpack.c.l.b16 %v4216
      %v5361 = vunpack.c.h.b16 %v4216
      %v5362 = vunpack.c.l.b16 %v4217
      %v5363 = vunpack.c.h.b16 %v4217
      %v5364 = vunpack.c.l.b16 %v4218
      %v5365 = vunpack.c.h.b16 %v4218
      %v5366 = vunpack.c.l.b16 %v4219
      %v5367 = vunpack.c.h.b16 %v4219
      %v5368 = vunpack.c.l.b16 %v4220
      %v5369 = vunpack.c.h.b16 %v4220
      %v5370 = vunpack.c.l.b16 %v4221
      %v5371 = vunpack.c.h.b16 %v4221
      %v5372 = vunpack.c.l.b16 %v4222
      %v5373 = vunpack.c.h.b16 %v4222
      %v5374 = vunpack.c.l.b16 %v4223
      %v5375 = vunpack.c.h.b16 %v4223
      %v5376 = vunpack.c.l.b16 %v4224
      %v5377 = vunpack.c.h.b16 %v4224
      %v5378 = vunpack.c.l.b16 %v4225
      %v5379 = vunpack.c.h.b16 %v4225
      %v5380 = vunpack.c.l.b16 %v4226
      %v5381 = vunpack.c.h.b16 %v4226
      %v5382 = vunpack.c.l.b16 %v4227
      %v5383 = vunpack.c.h.b16 %v4227
      %v5384 = vunpack.c.l.b16 %v4228
      %v5385 = vunpack.c.h.b16 %v4228
      %v5386 = vunpack.c.l.b16 %v4229
      %v5387 = vunpack.c.h.b16 %v4229
      %v5388 = vunpack.c.l.b16 %v4230
      %v5389 = vunpack.c.h.b16 %v4230
      %v5390 = vunpack.c.l.b16 %v4231
      %v5391 = vunpack.c.h.b16 %v4231
      %v5392 = vpack.c.b16 %v4680, %v4672
      %v5393 = vpack.c.b16 %v4681, %v4673
      %v5394 = vpack.c.b16 %v4682, %v4674
      %v5395 = vpack.c.b16 %v4683, %v4675
      %v5396 = vpack.c.b16 %v4684, %v4676
      %v5397 = vpack.c.b16 %v4685, %v4677
      %v5398 = vpack.c.b16 %v4686, %v4678
      %v5399 = vpack.c.b16 %v4687, %v4679
      %v5400 = vpack.c.b16 %v4696, %v4688
      %v5401 = vpack.c.b16 %v4697, %v4689
      %v5402 = vpack.c.b16 %v4698, %v4690
      %v5403 = vpack.c.b16 %v4699, %v4691
      %v5404 = vpack.c.b16 %v4700, %v4692
      %v5405 = vpack.c.b16 %v4701, %v4693
      %v5406 = vpack.c.b16 %v4702, %v4694
      %v5407 = vpack.c.b16 %v4703, %v4695
      %v5408 = vpack.c.b16 %v4712, %v4704
      %v5409 = vpack.c.b16 %v4713, %v4705
      %v5410 = vpack.c.b16 %v4714, %v4706
      %v5411 = vpack.c.b16 %v4715, %v4707
      %v5412 = vpack.c.b16 %v4716, %v4708
      %v5413 = vpack.c.b16 %v4717, %v4709
      %v5414 = vpack.c.b16 %v4718, %v4710
      %v5415 = vpack.c.b16 %v4719, %v4711
      %v5416 = vpack.c.b16 %v4728, %v4720
      %v5417 = vpack.c.b16 %v4729, %v4721
      %v5418 = vpack.c.b16 %v4730, %v4722
      %v5419 = vpack.c.b16 %v4731, %v4723
      %v5420 = vpack.c.b16 %v4732, %v4724
      %v5421 = vpack.c.b16 %v4733, %v4725
      %v5422 = vpack.c.b16 %v4734, %v4726
      %v5423 = vpack.c.b16 %v4735, %v4727
      %v5424 = vpack.c.b16 %v4744, %v4736
      %v5425 = vpack.c.b16 %v4745, %v4737
      %v5426 = vpack.c.b16 %v4746, %v4738
      %v5427 = vpack.c.b16 %v4747, %v4739
      %v5428 = vpack.c.b16 %v4748, %v4740
      %v5429 = vpack.c.b16 %v4749, %v4741
      %v5430 = vpack.c.b16 %v4750, %v4742
      %v5431 = vpack.c.b16 %v4751, %v4743
      %v5432 = vpack.c.b16 %v4760, %v4752
      %v5433 = vpack.c.b16 %v4761, %v4753
      %v5434 = vpack.c.b16 %v4762, %v4754
      %v5435 = vpack.c.b16 %v4763, %v4755
      %v5436 = vpack.c.b16 %v4764, %v4756
      %v5437 = vpack.c.b16 %v4765, %v4757
      %v5438 = vpack.c.b16 %v4766, %v4758
      %v5439 = vpack.c.b16 %v4767, %v4759
      %v5440 = vpack.c.b16 %v4776, %v4768
      %v5441 = vpack.c.b16 %v4777, %v4769
      %v5442 = vpack.c.b16 %v4778, %v4770
      %v5443 = vpack.c.b16 %v4779, %v4771
      %v5444 = vpack.c.b16 %v4780, %v4772
      %v5445 = vpack.c.b16 %v4781, %v4773
      %v5446 = vpack.c.b16 %v4782, %v4774
      %v5447 = vpack.c.b16 %v4783, %v4775
      %v5448 = vpack.c.b16 %v4792, %v4784
      %v5449 = vpack.c.b16 %v4793, %v4785
      %v5450 = vpack.c.b16 %v4794, %v4786
      %v5451 = vpack.c.b16 %v4795, %v4787
      %v5452 = vpack.c.b16 %v4796, %v4788
      %v5453 = vpack.c.b16 %v4797, %v4789
      %v5454 = vpack.c.b16 %v4798, %v4790
      %v5455 = vpack.c.b16 %v4799, %v4791
      %v5456 = vpack.c.b16 %v4808, %v4800
      %v5457 = vpack.c.b16 %v4809, %v4801
      %v5458 = vpack.c.b16 %v4810, %v4802
      %v5459 = vpack.c.b16 %v4811, %v4803
      %v5460 = vpack.c.b16 %v4812, %v4804
      %v5461 = vpack.c.b16 %v4813, %v4805
      %v5462 = vpack.c.b16 %v4814, %v4806
      %v5463 = vpack.c.b16 %v4815, %v4807
      %v5464 = vpack.c.b16 %v4824, %v4816
      %v5465 = vpack.c.b16 %v4825, %v4817
      %v5466 = vpack.c.b16 %v4826, %v4818
      %v5467 = vpack.c.b16 %v4827, %v4819
      %v5468 = vpack.c.b16 %v4828, %v4820
      %v5469 = vpack.c.b16 %v4829, %v4821
      %v5470 = vpack.c.b16 %v4830, %v4822
      %v5471 = vpack.c.b16 %v4831, %v4823
      %v5472 = vpack.c.b16 %v4840, %v4832
      %v5473 = vpack.c.b16 %v4841, %v4833
      %v5474 = vpack.c.b16 %v4842, %v4834
      %v5475 = vpack.c.b16 %v4843, %v4835
      %v5476 = vpack.c.b16 %v4844, %v4836
      %v5477 = vpack.c.b16 %v4845, %v4837
      %v5478 = vpack.c.b16 %v4846, %v4838
      %v5479 = vpack.c.b16 %v4847, %v4839
      %v5480 = vpack.c.b16 %v4856, %v4848
      %v5481 = vpack.c.b16 %v4857, %v4849
      %v5482 = vpack.c.b16 %v4858, %v4850
      %v5483 = vpack.c.b16 %v4859, %v4851
      %v5484 = vpack.c.b16 %v4860, %v4852
      %v5485 = vpack.c.b16 %v4861, %v4853
      %v5486 = vpack.c.b16 %v4862, %v4854
      %v5487 = vpack.c.b16 %v4863, %v4855
      %v5488 = vpack.c.b16 %v4872, %v4864
      %v5489 = vpack.c.b16 %v4873, %v4865
      %v5490 = vpack.c.b16 %v4874, %v4866
      %v5491 = vpack.c.b16 %v4875, %v4867
      %v5492 = vpack.c.b16 %v4876, %v4868
      %v5493 = vpack.c.b16 %v4877, %v4869
      %v5494 = vpack.c.b16 %v4878, %v4870
      %v5495 = vpack.c.b16 %v4879, %v4871
      %v5496 = vpack.c.b16 %v4888, %v4880
      %v5497 = vpack.c.b16 %v4889, %v4881
      %v5498 = vpack.c.b16 %v4890, %v4882
      %v5499 = vpack.c.b16 %v4891, %v4883
      %v5500 = vpack.c.b16 %v4892, %v4884
      %v5501 = vpack.c.b16 %v4893, %v4885
      %v5502 = vpack.c.b16 %v4894, %v4886
      %v5503 = vpack.c.b16 %v4895, %v4887
      %v5504 = vpack.c.b16 %v4904, %v4896
      %v5505 = vpack.c.b16 %v4905, %v4897
      %v5506 = vpack.c.b16 %v4906, %v4898
      %v5507 = vpack.c.b16 %v4907, %v4899
      %v5508 = vpack.c.b16 %v4908, %v4900
      %v5509 = vpack.c.b16 %v4909, %v4901
      %v5510 = vpack.c.b16 %v4910, %v4902
      %v5511 = vpack.c.b16 %v4911, %v4903
      %v5512 = vpack.c.b16 %v4920, %v4912
      %v5513 = vpack.c.b16 %v4921, %v4913
      %v5514 = vpack.c.b16 %v4922, %v4914
      %v5515 = vpack.c.b16 %v4923, %v4915
      %v5516 = vpack.c.b16 %v4924, %v4916
      %v5517 = vpack.c.b16 %v4925, %v4917
      %v5518 = vpack.c.b16 %v4926, %v4918
      %v5519 = vpack.c.b16 %v4927, %v4919
      %v5520 = vpack.c.b16 %v4936, %v4928
      %v5521 = vpack.c.b16 %v4937, %v4929
      %v5522 = vpack.c.b16 %v4938, %v4930
      %v5523 = vpack.c.b16 %v4939, %v4931
      %v5524 = vpack.c.b16 %v4940, %v4932
      %v5525 = vpack.c.b16 %v4941, %v4933
      %v5526 = vpack.c.b16 %v4942, %v4934
      %v5527 = vpack.c.b16 %v4943, %v4935
      %v5528 = vpack.c.b16 %v4952, %v4944
      %v5529 = vpack.c.b16 %v4953, %v4945
      %v5530 = vpack.c.b16 %v4954, %v4946
      %v5531 = vpack.c.b16 %v4955, %v4947
      %v5532 = vpack.c.b16 %v4956, %v4948
      %v5533 = vpack.c.b16 %v4957, %v4949
      %v5534 = vpack.c.b16 %v4958, %v4950
      %v5535 = vpack.c.b16 %v4959, %v4951
      %v5536 = vpack.c.b16 %v4968, %v4960
      %v5537 = vpack.c.b16 %v4969, %v4961
      %v5538 = vpack.c.b16 %v4970, %v4962
      %v5539 = vpack.c.b16 %v4971, %v4963
      %v5540 = vpack.c.b16 %v4972, %v4964
      %v5541 = vpack.c.b16 %v4973, %v4965
      %v5542 = vpack.c.b16 %v4974, %v4966
      %v5543 = vpack.c.b16 %v4975, %v4967
      %v5544 = vpack.c.b16 %v4984, %v4976
      %v5545 = vpack.c.b16 %v4985, %v4977
      %v5546 = vpack.c.b16 %v4986, %v4978
      %v5547 = vpack.c.b16 %v4987, %v4979
      %v5548 = vpack.c.b16 %v4988, %v4980
      %v5549 = vpack.c.b16 %v4989, %v4981
      %v5550 = vpack.c.b16 %v4990, %v4982
      %v5551 = vpack.c.b16 %v4991, %v4983
      %v5552 = vpack.c.b16 %v5000, %v4992
      %v5553 = vpack.c.b16 %v5001, %v4993
      %v5554 = vpack.c.b16 %v5002, %v4994
      %v5555 = vpack.c.b16 %v5003, %v4995
      %v5556 = vpack.c.b16 %v5004, %v4996
      %v5557 = vpack.c.b16 %v5005, %v4997
      %v5558 = vpack.c.b16 %v5006, %v4998
      %v5559 = vpack.c.b16 %v5007, %v4999
      %v5560 = vpack.c.b16 %v5016, %v5008
      %v5561 = vpack.c.b16 %v5017, %v5009
      %v5562 = vpack.c.b16 %v5018, %v5010
      %v5563 = vpack.c.b16 %v5019, %v5011
      %v5564 = vpack.c.b16 %v5020, %v5012
      %v5565 = vpack.c.b16 %v5021, %v5013
      %v5566 = vpack.c.b16 %v5022, %v5014
      %v5567 = vpack.c.b16 %v5023, %v5015
      %v5568 = vpack.c.b16 %v5032, %v5024
      %v5569 = vpack.c.b16 %v5033, %v5025
      %v5570 = vpack.c.b16 %v5034, %v5026
      %v5571 = vpack.c.b16 %v5035, %v5027
      %v5572 = vpack.c.b16 %v5036, %v5028
      %v5573 = vpack.c.b16 %v5037, %v5029
      %v5574 = vpack.c.b16 %v5038, %v5030
      %v5575 = vpack.c.b16 %v5039, %v5031
      %v5576 = vpack.c.b16 %v5048, %v5040
      %v5577 = vpack.c.b16 %v5049, %v5041
      %v5578 = vpack.c.b16 %v5050, %v5042
      %v5579 = vpack.c.b16 %v5051, %v5043
      %v5580 = vpack.c.b16 %v5052, %v5044
      %v5581 = vpack.c.b16 %v5053, %v5045
      %v5582 = vpack.c.b16 %v5054, %v5046
      %v5583 = vpack.c.b16 %v5055, %v5047
      %v5584 = vpack.c.b16 %v5064, %v5056
      %v5585 = vpack.c.b16 %v5065, %v5057
      %v5586 = vpack.c.b16 %v5066, %v5058
      %v5587 = vpack.c.b16 %v5067, %v5059
      %v5588 = vpack.c.b16 %v5068, %v5060
      %v5589 = vpack.c.b16 %v5069, %v5061
      %v5590 = vpack.c.b16 %v5070, %v5062
      %v5591 = vpack.c.b16 %v5071, %v5063
      %v5592 = vpack.c.b16 %v5080, %v5072
      %v5593 = vpack.c.b16 %v5081, %v5073
      %v5594 = vpack.c.b16 %v5082, %v5074
      %v5595 = vpack.c.b16 %v5083, %v5075
      %v5596 = vpack.c.b16 %v5084, %v5076
      %v5597 = vpack.c.b16 %v5085, %v5077
      %v5598 = vpack.c.b16 %v5086, %v5078
      %v5599 = vpack.c.b16 %v5087, %v5079
      %v5600 = vpack.c.b16 %v5096, %v5088
      %v5601 = vpack.c.b16 %v5097, %v5089
      %v5602 = vpack.c.b16 %v5098, %v5090
      %v5603 = vpack.c.b16 %v5099, %v5091
      %v5604 = vpack.c.b16 %v5100, %v5092
      %v5605 = vpack.c.b16 %v5101, %v5093
      %v5606 = vpack.c.b16 %v5102, %v5094
      %v5607 = vpack.c.b16 %v5103, %v5095
      %v5608 = vpack.c.b16 %v5112, %v5104
      %v5609 = vpack.c.b16 %v5113, %v5105
      %v5610 = vpack.c.b16 %v5114, %v5106
      %v5611 = vpack.c.b16 %v5115, %v5107
      %v5612 = vpack.c.b16 %v5116, %v5108
      %v5613 = vpack.c.b16 %v5117, %v5109
      %v5614 = vpack.c.b16 %v5118, %v5110
      %v5615 = vpack.c.b16 %v5119, %v5111
      %v5616 = vpack.c.b16 %v5128, %v5120
      %v5617 = vpack.c.b16 %v5129, %v5121
      %v5618 = vpack.c.b16 %v5130, %v5122
      %v5619 = vpack.c.b16 %v5131, %v5123
      %v5620 = vpack.c.b16 %v5132, %v5124
      %v5621 = vpack.c.b16 %v5133, %v5125
      %v5622 = vpack.c.b16 %v5134, %v5126
      %v5623 = vpack.c.b16 %v5135, %v5127
      %v5624 = vpack.c.b16 %v5144, %v5136
      %v5625 = vpack.c.b16 %v5145, %v5137
      %v5626 = vpack.c.b16 %v5146, %v5138
      %v5627 = vpack.c.b16 %v5147, %v5139
      %v5628 = vpack.c.b16 %v5148, %v5140
      %v5629 = vpack.c.b16 %v5149, %v5141
      %v5630 = vpack.c.b16 %v5150, %v5142
      %v5631 = vpack.c.b16 %v5151, %v5143
      %v5632 = vpack.c.b16 %v5160, %v5152
      %v5633 = vpack.c.b16 %v5161, %v5153
      %v5634 = vpack.c.b16 %v5162, %v5154
      %v5635 = vpack.c.b16 %v5163, %v5155
      %v5636 = vpack.c.b16 %v5164, %v5156
      %v5637 = vpack.c.b16 %v5165, %v5157
      %v5638 = vpack.c.b16 %v5166, %v5158
      %v5639 = vpack.c.b16 %v5167, %v5159
      %v5640 = vpack.c.b16 %v5176, %v5168
      %v5641 = vpack.c.b16 %v5177, %v5169
      %v5642 = vpack.c.b16 %v5178, %v5170
      %v5643 = vpack.c.b16 %v5179, %v5171
      %v5644 = vpack.c.b16 %v5180, %v5172
      %v5645 = vpack.c.b16 %v5181, %v5173
      %v5646 = vpack.c.b16 %v5182, %v5174
      %v5647 = vpack.c.b16 %v5183, %v5175
      %v5648 = vpack.c.b16 %v5192, %v5184
      %v5649 = vpack.c.b16 %v5193, %v5185
      %v5650 = vpack.c.b16 %v5194, %v5186
      %v5651 = vpack.c.b16 %v5195, %v5187
      %v5652 = vpack.c.b16 %v5196, %v5188
      %v5653 = vpack.c.b16 %v5197, %v5189
      %v5654 = vpack.c.b16 %v5198, %v5190
      %v5655 = vpack.c.b16 %v5199, %v5191
      %v5656 = vpack.c.b16 %v5208, %v5200
      %v5657 = vpack.c.b16 %v5209, %v5201
      %v5658 = vpack.c.b16 %v5210, %v5202
      %v5659 = vpack.c.b16 %v5211, %v5203
      %v5660 = vpack.c.b16 %v5212, %v5204
      %v5661 = vpack.c.b16 %v5213, %v5205
      %v5662 = vpack.c.b16 %v5214, %v5206
      %v5663 = vpack.c.b16 %v5215, %v5207
      %v5664 = vpack.c.b16 %v5224, %v5216
      %v5665 = vpack.c.b16 %v5225, %v5217
      %v5666 = vpack.c.b16 %v5226, %v5218
      %v5667 = vpack.c.b16 %v5227, %v5219
      %v5668 = vpack.c.b16 %v5228, %v5220
      %v5669 = vpack.c.b16 %v5229, %v5221
      %v5670 = vpack.c.b16 %v5230, %v5222
      %v5671 = vpack.c.b16 %v5231, %v5223
      %v5672 = vpack.c.b16 %v5240, %v5232
      %v5673 = vpack.c.b16 %v5241, %v5233
      %v5674 = vpack.c.b16 %v5242, %v5234
      %v5675 = vpack.c.b16 %v5243, %v5235
      %v5676 = vpack.c.b16 %v5244, %v5236
      %v5677 = vpack.c.b16 %v5245, %v5237
      %v5678 = vpack.c.b16 %v5246, %v5238
      %v5679 = vpack.c.b16 %v5247, %v5239
      %v5680 = vpack.c.b16 %v5256, %v5248
      %v5681 = vpack.c.b16 %v5257, %v5249
      %v5682 = vpack.c.b16 %v5258, %v5250
      %v5683 = vpack.c.b16 %v5259, %v5251
      %v5684 = vpack.c.b16 %v5260, %v5252
      %v5685 = vpack.c.b16 %v5261, %v5253
      %v5686 = vpack.c.b16 %v5262, %v5254
      %v5687 = vpack.c.b16 %v5263, %v5255
      %v5688 = vpack.c.b16 %v5272, %v5264
      %v5689 = vpack.c.b16 %v5273, %v5265
      %v5690 = vpack.c.b16 %v5274, %v5266
      %v5691 = vpack.c.b16 %v5275, %v5267
      %v5692 = vpack.c.b16 %v5276, %v5268
      %v5693 = vpack.c.b16 %v5277, %v5269
      %v5694 = vpack.c.b16 %v5278, %v5270
      %v5695 = vpack.c.b16 %v5279, %v5271
      %v5696 = vpack.c.b16 %v5288, %v5280
      %v5697 = vpack.c.b16 %v5289, %v5281
      %v5698 = vpack.c.b16 %v5290, %v5282
      %v5699 = vpack.c.b16 %v5291, %v5283
      %v5700 = vpack.c.b16 %v5292, %v5284
      %v5701 = vpack.c.b16 %v5293, %v5285
      %v5702 = vpack.c.b16 %v5294, %v5286
      %v5703 = vpack.c.b16 %v5295, %v5287
      %v5704 = vpack.c.b16 %v5304, %v5296
      %v5705 = vpack.c.b16 %v5305, %v5297
      %v5706 = vpack.c.b16 %v5306, %v5298
      %v5707 = vpack.c.b16 %v5307, %v5299
      %v5708 = vpack.c.b16 %v5308, %v5300
      %v5709 = vpack.c.b16 %v5309, %v5301
      %v5710 = vpack.c.b16 %v5310, %v5302
      %v5711 = vpack.c.b16 %v5311, %v5303
      %v5712 = vpack.c.b16 %v5320, %v5312
      %v5713 = vpack.c.b16 %v5321, %v5313
      %v5714 = vpack.c.b16 %v5322, %v5314
      %v5715 = vpack.c.b16 %v5323, %v5315
      %v5716 = vpack.c.b16 %v5324, %v5316
      %v5717 = vpack.c.b16 %v5325, %v5317
      %v5718 = vpack.c.b16 %v5326, %v5318
      %v5719 = vpack.c.b16 %v5327, %v5319
      %v5720 = vpack.c.b16 %v5336, %v5328
      %v5721 = vpack.c.b16 %v5337, %v5329
      %v5722 = vpack.c.b16 %v5338, %v5330
      %v5723 = vpack.c.b16 %v5339, %v5331
      %v5724 = vpack.c.b16 %v5340, %v5332
      %v5725 = vpack.c.b16 %v5341, %v5333
      %v5726 = vpack.c.b16 %v5342, %v5334
      %v5727 = vpack.c.b16 %v5343, %v5335
      %v5728 = vpack.c.b16 %v5352, %v5344
      %v5729 = vpack.c.b16 %v5353, %v5345
      %v5730 = vpack.c.b16 %v5354, %v5346
      %v5731 = vpack.c.b16 %v5355, %v5347
      %v5732 = vpack.c.b16 %v5356, %v5348
      %v5733 = vpack.c.b16 %v5357, %v5349
      %v5734 = vpack.c.b16 %v5358, %v5350
      %v5735 = vpack.c.b16 %v5359, %v5351
      %v5736 = vpack.c.b16 %v5368, %v5360
      %v5737 = vpack.c.b16 %v5369, %v5361
      %v5738 = vpack.c.b16 %v5370, %v5362
      %v5739 = vpack.c.b16 %v5371, %v5363
      %v5740 = vpack.c.b16 %v5372, %v5364
      %v5741 = vpack.c.b16 %v5373, %v5365
      %v5742 = vpack.c.b16 %v5374, %v5366
      %v5743 = vpack.c.b16 %v5375, %v5367
      %v5744 = vpack.c.b16 %v5384, %v5376
      %v5745 = vpack.c.b16 %v5385, %v5377
      %v5746 = vpack.c.b16 %v5386, %v5378
      %v5747 = vpack.c.b16 %v5387, %v5379
      %v5748 = vpack.c.b16 %v5388, %v5380
      %v5749 = vpack.c.b16 %v5389, %v5381
      %v5750 = vpack.c.b16 %v5390, %v5382
      %v5751 = vpack.c.b16 %v5391, %v5383
      %vm6112 = vcmask 654336
      %v6114 = vsel %vm6112, %v3871, 0
      %6116 = vmatprep.subr.bf16.mxu0 %v5393
      %6117 = vmatpush1.bf16.msra.mxu0 %v5392
      %6118 = vmatprep.subr.bf16.mxu0 %v5401
      %6119 = vmatpush1.bf16.msra.mxu0 %v5400
      %6120 = vmatprep.subr.bf16.mxu0 %v5409
      %6121 = vmatpush1.bf16.msra.mxu0 %v5408
      %6122 = vmatprep.subr.bf16.mxu0 %v5417
      %6123 = vmatpush1.bf16.msra.mxu0 %v5416
      %6124 = vmatprep.subr.bf16.mxu0 %v5425
      %6125 = vmatpush1.bf16.msra.mxu0 %v5424
      %6126 = vmatprep.subr.bf16.mxu0 %v5433
      %6127 = vmatpush1.bf16.msra.mxu0 %v5432
      %6128 = vmatprep.subr.bf16.mxu0 %v5441
      %6129 = vmatpush1.bf16.msra.mxu0 %v5440
      %6130 = vmatprep.subr.bf16.mxu0 %v5449
      %6131 = vmatpush1.bf16.msra.mxu0 %v5448
      %6132 = vmatprep.subr.bf16.mxu0 %v5457
      %6133 = vmatpush1.bf16.msra.mxu0 %v5456
      %6134 = vmatprep.subr.bf16.mxu0 %v5465
      %6135 = vmatpush1.bf16.msra.mxu0 %v5464
      %6136 = vmatprep.subr.bf16.mxu0 %v5473
      %6137 = vmatpush1.bf16.msra.mxu0 %v5472
      %6138 = vmatprep.subr.bf16.mxu0 %v5481
      %6139 = vmatpush1.bf16.msra.mxu0 %v5480
      %6140 = vmatprep.subr.bf16.mxu0 %v5489
      %6141 = vmatpush1.bf16.msra.mxu0 %v5488
      %6142 = vmatprep.subr.bf16.mxu0 %v5497
      %6143 = vmatpush1.bf16.msra.mxu0 %v5496
      %6144 = vmatprep.subr.bf16.mxu0 %v5505
      %6145 = vmatpush1.bf16.msra.mxu0 %v5504
      %6146 = vmatprep.subr.bf16.mxu0 %v5513
      %6147 = vmatpush1.bf16.msra.mxu0 %v5512
      %6148 = vmatprep.mubr.bf16.mxu0 %v3867
      %6149 = vmatmul.mubr.bf16.gmra.mrb[0].mxu0 %v3866
      %v6150 = vpop.f32.mrb[0].mxu0
      %v6151 = vadd.f32 %v4283, %v6150
      %v6152 = vpop.f32.mrb[0].mxu0
      %v6153 = vadd.f32 %v4287, %v6152
      %v6154 = vpop.f32.mrb[0].mxu0
      %v6155 = vpop.f32.mrb[0].mxu0
      %6156 = vdwg.mxu0
      %6157 = vmatprep.subr.bf16.mxu0 %v5521
      %6158 = vmatpush1.bf16.msra.mxu0 %v5520
      %6159 = vmatprep.subr.bf16.mxu0 %v5529
      %6160 = vmatpush1.bf16.msra.mxu0 %v5528
      %6161 = vmatprep.subr.bf16.mxu0 %v5537
      %6162 = vmatpush1.bf16.msra.mxu0 %v5536
      %6163 = vmatprep.subr.bf16.mxu0 %v5545
      %6164 = vmatpush1.bf16.msra.mxu0 %v5544
      %6165 = vmatprep.subr.bf16.mxu0 %v5553
      %6166 = vmatpush1.bf16.msra.mxu0 %v5552
      %6167 = vmatprep.subr.bf16.mxu0 %v5561
      %6168 = vmatpush1.bf16.msra.mxu0 %v5560
      %6169 = vmatprep.subr.bf16.mxu0 %v5569
      %6170 = vmatpush1.bf16.msra.mxu0 %v5568
      %6171 = vmatprep.subr.bf16.mxu0 %v5577
      %6172 = vmatpush1.bf16.msra.mxu0 %v5576
      %6173 = vmatprep.subr.bf16.mxu0 %v5585
      %6174 = vmatpush1.bf16.msra.mxu0 %v5584
      %6175 = vmatprep.subr.bf16.mxu0 %v5593
      %6176 = vmatpush1.bf16.msra.mxu0 %v5592
      %6177 = vmatprep.subr.bf16.mxu0 %v5601
      %6178 = vmatpush1.bf16.msra.mxu0 %v5600
      %6179 = vmatprep.subr.bf16.mxu0 %v5609
      %6180 = vmatpush1.bf16.msra.mxu0 %v5608
      %6181 = vmatprep.subr.bf16.mxu0 %v5617
      %6182 = vmatpush1.bf16.msra.mxu0 %v5616
      %6183 = vmatprep.subr.bf16.mxu0 %v5625
      %6184 = vmatpush1.bf16.msra.mxu0 %v5624
      %6185 = vmatprep.subr.bf16.mxu0 %v5633
      %6186 = vmatpush1.bf16.msra.mxu0 %v5632
      %6187 = vmatprep.subr.bf16.mxu0 %v5641
      %6188 = vmatpush1.bf16.msra.mxu0 %v5640
      %6189 = vmatprep.mubr.bf16.mxu0 %v3869
      %6190 = vmatmul.mubr.bf16.gmra.mrb[0].mxu0 %v3868
      %v6191 = vpop.f32.mrb[0].mxu0
      %v6192 = vadd.f32 %v6151, %v6191
      %v6193 = vpop.f32.mrb[0].mxu0
      %v6194 = vadd.f32 %v6153, %v6193
      %v6195 = vpop.f32.mrb[0].mxu0
      %v6196 = vpop.f32.mrb[0].mxu0
      %6197 = vdwg.mxu0
      %6198 = vmatprep.subr.bf16.mxu0 %v5649
      %6199 = vmatpush1.bf16.msra.mxu0 %v5648
      %6200 = vmatprep.subr.bf16.mxu0 %v5657
      %6201 = vmatpush1.bf16.msra.mxu0 %v5656
      %6202 = vmatprep.subr.bf16.mxu0 %v5665
      %6203 = vmatpush1.bf16.msra.mxu0 %v5664
      %6204 = vmatprep.subr.bf16.mxu0 %v5673
      %6205 = vmatpush1.bf16.msra.mxu0 %v5672
      %6206 = vmatprep.subr.bf16.mxu0 %v5681
      %6207 = vmatpush1.bf16.msra.mxu0 %v5680
      %6208 = vmatprep.subr.bf16.mxu0 %v5689
      %6209 = vmatpush1.bf16.msra.mxu0 %v5688
      %6210 = vmatprep.subr.bf16.mxu0 %v5697
      %6211 = vmatpush1.bf16.msra.mxu0 %v5696
      %6212 = vmatprep.subr.bf16.mxu0 %v5705
      %6213 = vmatpush1.bf16.msra.mxu0 %v5704
      %6214 = vmatprep.subr.bf16.mxu0 %v5713
      %6215 = vmatpush1.bf16.msra.mxu0 %v5712
      %6216 = vmatprep.subr.bf16.mxu0 %v5721
      %6217 = vmatpush1.bf16.msra.mxu0 %v5720
      %6218 = vmatprep.subr.bf16.mxu0 %v5729
      %6219 = vmatpush1.bf16.msra.mxu0 %v5728
      %6220 = vmatprep.subr.bf16.mxu0 %v5737
      %6221 = vmatpush1.bf16.msra.mxu0 %v5736
      %6222 = vmatprep.subr.bf16.mxu0 %v5745
      %6223 = vmatpush1.bf16.msra.mxu0 %v5744
      %6224 = vmatprep.subr.bf16.mxu0 0
      %6225 = vmatpush1.bf16.msra.mxu0 0
      %6226 = vmatprep.subr.bf16.mxu0 0
      %6227 = vmatpush1.bf16.msra.mxu0 0
      %6228 = vmatprep.subr.bf16.mxu0 0
      %6229 = vmatpush1.bf16.msra.mxu0 0
      %6230 = vmatprep.mubr.bf16.mxu0 %v6114
      %6231 = vmatmul.mubr.bf16.gmra.mrb[0].mxu0 %v3870
      %v6232 = vpop.f32.mrb[0].mxu0
      %v6233 = vadd.f32 %v6192, %v6232
      %v6234 = vpop.f32.mrb[0].mxu0
      %v6235 = vadd.f32 %v6194, %v6234
      %v6236 = vpop.f32.mrb[0].mxu0
      %v6237 = vpop.f32.mrb[0].mxu0
      %6238 = vdwg.mxu0
      %6239 = vmatprep.subr.bf16.mxu0 %v5395
      %6240 = vmatpush1.bf16.msra.mxu0 %v5394
      %6241 = vmatprep.subr.bf16.mxu0 %v5403
      %6242 = vmatpush1.bf16.msra.mxu0 %v5402
      %6243 = vmatprep.subr.bf16.mxu0 %v5411
      %6244 = vmatpush1.bf16.msra.mxu0 %v5410
      %6245 = vmatprep.subr.bf16.mxu0 %v5419
      %6246 = vmatpush1.bf16.msra.mxu0 %v5418
      %6247 = vmatprep.subr.bf16.mxu0 %v5427
      %6248 = vmatpush1.bf16.msra.mxu0 %v5426
      %6249 = vmatprep.subr.bf16.mxu0 %v5435
      %6250 = vmatpush1.bf16.msra.mxu0 %v5434
      %6251 = vmatprep.subr.bf16.mxu0 %v5443
      %6252 = vmatpush1.bf16.msra.mxu0 %v5442
      %6253 = vmatprep.subr.bf16.mxu0 %v5451
      %6254 = vmatpush1.bf16.msra.mxu0 %v5450
      %6255 = vmatprep.subr.bf16.mxu0 %v5459
      %6256 = vmatpush1.bf16.msra.mxu0 %v5458
      %6257 = vmatprep.subr.bf16.mxu0 %v5467
      %6258 = vmatpush1.bf16.msra.mxu0 %v5466
      %6259 = vmatprep.subr.bf16.mxu0 %v5475
      %6260 = vmatpush1.bf16.msra.mxu0 %v5474
      %6261 = vmatprep.subr.bf16.mxu0 %v5483
      %6262 = vmatpush1.bf16.msra.mxu0 %v5482
      %6263 = vmatprep.subr.bf16.mxu0 %v5491
      %6264 = vmatpush1.bf16.msra.mxu0 %v5490
      %6265 = vmatprep.subr.bf16.mxu0 %v5499
      %6266 = vmatpush1.bf16.msra.mxu0 %v5498
      %6267 = vmatprep.subr.bf16.mxu0 %v5507
      %6268 = vmatpush1.bf16.msra.mxu0 %v5506
      %6269 = vmatprep.subr.bf16.mxu0 %v5515
      %6270 = vmatpush1.bf16.msra.mxu0 %v5514
      %6271 = vmatprep.mubr.bf16.mxu0 %v3867
      %6272 = vmatmul.mubr.bf16.gmra.mrb[0].mxu0 %v3866
      %v6273 = vpop.f32.mrb[0].mxu0
      %v6274 = vadd.f32 %v4291, %v6273
      %v6275 = vpop.f32.mrb[0].mxu0
      %v6276 = vadd.f32 %v4295, %v6275
      %v6277 = vpop.f32.mrb[0].mxu0
      %v6278 = vpop.f32.mrb[0].mxu0
      %6279 = vdwg.mxu0
      %6280 = vmatprep.subr.bf16.mxu0 %v5523
      %6281 = vmatpush1.bf16.msra.mxu0 %v5522
      %6282 = vmatprep.subr.bf16.mxu0 %v5531
      %6283 = vmatpush1.bf16.msra.mxu0 %v5530
      %6284 = vmatprep.subr.bf16.mxu0 %v5539
      %6285 = vmatpush1.bf16.msra.mxu0 %v5538
      %6286 = vmatprep.subr.bf16.mxu0 %v5547
      %6287 = vmatpush1.bf16.msra.mxu0 %v5546
      %6288 = vmatprep.subr.bf16.mxu0 %v5555
      %6289 = vmatpush1.bf16.msra.mxu0 %v5554
      %6290 = vmatprep.subr.bf16.mxu0 %v5563
      %6291 = vmatpush1.bf16.msra.mxu0 %v5562
      %6292 = vmatprep.subr.bf16.mxu0 %v5571
      %6293 = vmatpush1.bf16.msra.mxu0 %v5570
      %6294 = vmatprep.subr.bf16.mxu0 %v5579
      %6295 = vmatpush1.bf16.msra.mxu0 %v5578
      %6296 = vmatprep.subr.bf16.mxu0 %v5587
      %6297 = vmatpush1.bf16.msra.mxu0 %v5586
      %6298 = vmatprep.subr.bf16.mxu0 %v5595
      %6299 = vmatpush1.bf16.msra.mxu0 %v5594
      %6300 = vmatprep.subr.bf16.mxu0 %v5603
      %6301 = vmatpush1.bf16.msra.mxu0 %v5602
      %6302 = vmatprep.subr.bf16.mxu0 %v5611
      %6303 = vmatpush1.bf16.msra.mxu0 %v5610
      %6304 = vmatprep.subr.bf16.mxu0 %v5619
      %6305 = vmatpush1.bf16.msra.mxu0 %v5618
      %6306 = vmatprep.subr.bf16.mxu0 %v5627
      %6307 = vmatpush1.bf16.msra.mxu0 %v5626
      %6308 = vmatprep.subr.bf16.mxu0 %v5635
      %6309 = vmatpush1.bf16.msra.mxu0 %v5634
      %6310 = vmatprep.subr.bf16.mxu0 %v5643
      %6311 = vmatpush1.bf16.msra.mxu0 %v5642
      %6312 = vmatprep.mubr.bf16.mxu0 %v3869
      %6313 = vmatmul.mubr.bf16.gmra.mrb[0].mxu0 %v3868
      %v6314 = vpop.f32.mrb[0].mxu0
      %v6315 = vadd.f32 %v6274, %v6314
      %v6316 = vpop.f32.mrb[0].mxu0
      %v6317 = vadd.f32 %v6276, %v6316
      %v6318 = vpop.f32.mrb[0].mxu0
      %v6319 = vpop.f32.mrb[0].mxu0
      %6320 = vdwg.mxu0
      %6321 = vmatprep.subr.bf16.mxu0 %v5651
      %6322 = vmatpush1.bf16.msra.mxu0 %v5650
      %6323 = vmatprep.subr.bf16.mxu0 %v5659
      %6324 = vmatpush1.bf16.msra.mxu0 %v5658
      %6325 = vmatprep.subr.bf16.mxu0 %v5667
      %6326 = vmatpush1.bf16.msra.mxu0 %v5666
      %6327 = vmatprep.subr.bf16.mxu0 %v5675
      %6328 = vmatpush1.bf16.msra.mxu0 %v5674
      %6329 = vmatprep.subr.bf16.mxu0 %v5683
      %6330 = vmatpush1.bf16.msra.mxu0 %v5682
      %6331 = vmatprep.subr.bf16.mxu0 %v5691
      %6332 = vmatpush1.bf16.msra.mxu0 %v5690
      %6333 = vmatprep.subr.bf16.mxu0 %v5699
      %6334 = vmatpush1.bf16.msra.mxu0 %v5698
      %6335 = vmatprep.subr.bf16.mxu0 %v5707
      %6336 = vmatpush1.bf16.msra.mxu0 %v5706
      %6337 = vmatprep.subr.bf16.mxu0 %v5715
      %6338 = vmatpush1.bf16.msra.mxu0 %v5714
      %6339 = vmatprep.subr.bf16.mxu0 %v5723
      %6340 = vmatpush1.bf16.msra.mxu0 %v5722
      %6341 = vmatprep.subr.bf16.mxu0 %v5731
      %6342 = vmatpush1.bf16.msra.mxu0 %v5730
      %6343 = vmatprep.subr.bf16.mxu0 %v5739
      %6344 = vmatpush1.bf16.msra.mxu0 %v5738
      %6345 = vmatprep.subr.bf16.mxu0 %v5747
      %6346 = vmatpush1.bf16.msra.mxu0 %v5746
      %6347 = vmatprep.subr.bf16.mxu0 0
      %6348 = vmatpush1.bf16.msra.mxu0 0
      %6349 = vmatprep.subr.bf16.mxu0 0
      %6350 = vmatpush1.bf16.msra.mxu0 0
      %6351 = vmatprep.subr.bf16.mxu0 0
      %6352 = vmatpush1.bf16.msra.mxu0 0
      %6353 = vmatprep.mubr.bf16.mxu0 %v6114
      %6354 = vmatmul.mubr.bf16.gmra.mrb[0].mxu0 %v3870
      %v6355 = vpop.f32.mrb[0].mxu0
      %v6356 = vadd.f32 %v6315, %v6355
      %v6357 = vpop.f32.mrb[0].mxu0
      %v6358 = vadd.f32 %v6317, %v6357
      %v6359 = vpop.f32.mrb[0].mxu0
      %v6360 = vpop.f32.mrb[0].mxu0
      %6361 = vdwg.mxu0
      %6362 = vmatprep.subr.bf16.mxu0 %v5397
      %6363 = vmatpush1.bf16.msra.mxu0 %v5396
      %6364 = vmatprep.subr.bf16.mxu0 %v5405
      %6365 = vmatpush1.bf16.msra.mxu0 %v5404
      %6366 = vmatprep.subr.bf16.mxu0 %v5413
      %6367 = vmatpush1.bf16.msra.mxu0 %v5412
      %6368 = vmatprep.subr.bf16.mxu0 %v5421
      %6369 = vmatpush1.bf16.msra.mxu0 %v5420
      %6370 = vmatprep.subr.bf16.mxu0 %v5429
      %6371 = vmatpush1.bf16.msra.mxu0 %v5428
      %6372 = vmatprep.subr.bf16.mxu0 %v5437
      %6373 = vmatpush1.bf16.msra.mxu0 %v5436
      %6374 = vmatprep.subr.bf16.mxu0 %v5445
      %6375 = vmatpush1.bf16.msra.mxu0 %v5444
      %6376 = vmatprep.subr.bf16.mxu0 %v5453
      %6377 = vmatpush1.bf16.msra.mxu0 %v5452
      %6378 = vmatprep.subr.bf16.mxu0 %v5461
      %6379 = vmatpush1.bf16.msra.mxu0 %v5460
      %6380 = vmatprep.subr.bf16.mxu0 %v5469
      %6381 = vmatpush1.bf16.msra.mxu0 %v5468
      %6382 = vmatprep.subr.bf16.mxu0 %v5477
      %6383 = vmatpush1.bf16.msra.mxu0 %v5476
      %6384 = vmatprep.subr.bf16.mxu0 %v5485
      %6385 = vmatpush1.bf16.msra.mxu0 %v5484
      %6386 = vmatprep.subr.bf16.mxu0 %v5493
      %6387 = vmatpush1.bf16.msra.mxu0 %v5492
      %6388 = vmatprep.subr.bf16.mxu0 %v5501
      %6389 = vmatpush1.bf16.msra.mxu0 %v5500
      %6390 = vmatprep.subr.bf16.mxu0 %v5509
      %6391 = vmatpush1.bf16.msra.mxu0 %v5508
      %6392 = vmatprep.subr.bf16.mxu0 %v5517
      %6393 = vmatpush1.bf16.msra.mxu0 %v5516
      %6394 = vmatprep.mubr.bf16.mxu0 %v3867
      %6395 = vmatmul.mubr.bf16.gmra.mrb[0].mxu0 %v3866
      %v6396 = vpop.f32.mrb[0].mxu0
      %v6397 = vadd.f32 %v4299, %v6396
      %v6398 = vpop.f32.mrb[0].mxu0
      %v6399 = vadd.f32 %v4303, %v6398
      %v6400 = vpop.f32.mrb[0].mxu0
      %v6401 = vpop.f32.mrb[0].mxu0
      %6402 = vdwg.mxu0
      %6403 = vmatprep.subr.bf16.mxu0 %v5525
      %6404 = vmatpush1.bf16.msra.mxu0 %v5524
      %6405 = vmatprep.subr.bf16.mxu0 %v5533
      %6406 = vmatpush1.bf16.msra.mxu0 %v5532
      %6407 = vmatprep.subr.bf16.mxu0 %v5541
      %6408 = vmatpush1.bf16.msra.mxu0 %v5540
      %6409 = vmatprep.subr.bf16.mxu0 %v5549
      %6410 = vmatpush1.bf16.msra.mxu0 %v5548
      %6411 = vmatprep.subr.bf16.mxu0 %v5557
      %6412 = vmatpush1.bf16.msra.mxu0 %v5556
      %6413 = vmatprep.subr.bf16.mxu0 %v5565
      %6414 = vmatpush1.bf16.msra.mxu0 %v5564
      %6415 = vmatprep.subr.bf16.mxu0 %v5573
      %6416 = vmatpush1.bf16.msra.mxu0 %v5572
      %6417 = vmatprep.subr.bf16.mxu0 %v5581
      %6418 = vmatpush1.bf16.msra.mxu0 %v5580
      %6419 = vmatprep.subr.bf16.mxu0 %v5589
      %6420 = vmatpush1.bf16.msra.mxu0 %v5588
      %6421 = vmatprep.subr.bf16.mxu0 %v5597
      %6422 = vmatpush1.bf16.msra.mxu0 %v5596
      %6423 = vmatprep.subr.bf16.mxu0 %v5605
      %6424 = vmatpush1.bf16.msra.mxu0 %v5604
      %6425 = vmatprep.subr.bf16.mxu0 %v5613
      %6426 = vmatpush1.bf16.msra.mxu0 %v5612
      %6427 = vmatprep.subr.bf16.mxu0 %v5621
      %6428 = vmatpush1.bf16.msra.mxu0 %v5620
      %6429 = vmatprep.subr.bf16.mxu0 %v5629
      %6430 = vmatpush1.bf16.msra.mxu0 %v5628
      %6431 = vmatprep.subr.bf16.mxu0 %v5637
      %6432 = vmatpush1.bf16.msra.mxu0 %v5636
      %6433 = vmatprep.subr.bf16.mxu0 %v5645
      %6434 = vmatpush1.bf16.msra.mxu0 %v5644
      %6435 = vmatprep.mubr.bf16.mxu0 %v3869
      %6436 = vmatmul.mubr.bf16.gmra.mrb[0].mxu0 %v3868
      %v6437 = vpop.f32.mrb[0].mxu0
      %v6438 = vadd.f32 %v6397, %v6437
      %v6439 = vpop.f32.mrb[0].mxu0
      %v6440 = vadd.f32 %v6399, %v6439
      %v6441 = vpop.f32.mrb[0].mxu0
      %v6442 = vpop.f32.mrb[0].mxu0
      %6443 = vdwg.mxu0
      %6444 = vmatprep.subr.bf16.mxu0 %v5653
      %6445 = vmatpush1.bf16.msra.mxu0 %v5652
      %6446 = vmatprep.subr.bf16.mxu0 %v5661
      %6447 = vmatpush1.bf16.msra.mxu0 %v5660
      %6448 = vmatprep.subr.bf16.mxu0 %v5669
      %6449 = vmatpush1.bf16.msra.mxu0 %v5668
      %6450 = vmatprep.subr.bf16.mxu0 %v5677
      %6451 = vmatpush1.bf16.msra.mxu0 %v5676
      %6452 = vmatprep.subr.bf16.mxu0 %v5685
      %6453 = vmatpush1.bf16.msra.mxu0 %v5684
      %6454 = vmatprep.subr.bf16.mxu0 %v5693
      %6455 = vmatpush1.bf16.msra.mxu0 %v5692
      %6456 = vmatprep.subr.bf16.mxu0 %v5701
      %6457 = vmatpush1.bf16.msra.mxu0 %v5700
      %6458 = vmatprep.subr.bf16.mxu0 %v5709
      %6459 = vmatpush1.bf16.msra.mxu0 %v5708
      %6460 = vmatprep.subr.bf16.mxu0 %v5717
      %6461 = vmatpush1.bf16.msra.mxu0 %v5716
      %6462 = vmatprep.subr.bf16.mxu0 %v5725
      %6463 = vmatpush1.bf16.msra.mxu0 %v5724
      %6464 = vmatprep.subr.bf16.mxu0 %v5733
      %6465 = vmatpush1.bf16.msra.mxu0 %v5732
      %6466 = vmatprep.subr.bf16.mxu0 %v5741
      %6467 = vmatpush1.bf16.msra.mxu0 %v5740
      %6468 = vmatprep.subr.bf16.mxu0 %v5749
      %6469 = vmatpush1.bf16.msra.mxu0 %v5748
      %6470 = vmatprep.subr.bf16.mxu0 0
      %6471 = vmatpush1.bf16.msra.mxu0 0
      %6472 = vmatprep.subr.bf16.mxu0 0
      %6473 = vmatpush1.bf16.msra.mxu0 0
      %6474 = vmatprep.subr.bf16.mxu0 0
      %6475 = vmatpush1.bf16.msra.mxu0 0
      %6476 = vmatprep.mubr.bf16.mxu0 %v6114
      %6477 = vmatmul.mubr.bf16.gmra.mrb[0].mxu0 %v3870
      %v6478 = vpop.f32.mrb[0].mxu0
      %v6479 = vadd.f32 %v6438, %v6478
      %v6480 = vpop.f32.mrb[0].mxu0
      %v6481 = vadd.f32 %v6440, %v6480
      %v6482 = vpop.f32.mrb[0].mxu0
      %v6483 = vpop.f32.mrb[0].mxu0
      %6484 = vdwg.mxu0
      %6485 = vmatprep.subr.bf16.mxu0 %v5399
      %6486 = vmatpush1.bf16.msra.mxu0 %v5398
      %6487 = vmatprep.subr.bf16.mxu0 %v5407
      %6488 = vmatpush1.bf16.msra.mxu0 %v5406
      %6489 = vmatprep.subr.bf16.mxu0 %v5415
      %6490 = vmatpush1.bf16.msra.mxu0 %v5414
      %6491 = vmatprep.subr.bf16.mxu0 %v5423
      %6492 = vmatpush1.bf16.msra.mxu0 %v5422
      %6493 = vmatprep.subr.bf16.mxu0 %v5431
      %6494 = vmatpush1.bf16.msra.mxu0 %v5430
      %6495 = vmatprep.subr.bf16.mxu0 %v5439
      %6496 = vmatpush1.bf16.msra.mxu0 %v5438
      %6497 = vmatprep.subr.bf16.mxu0 %v5447
      %6498 = vmatpush1.bf16.msra.mxu0 %v5446
      %6499 = vmatprep.subr.bf16.mxu0 %v5455
      %6500 = vmatpush1.bf16.msra.mxu0 %v5454
      %6501 = vmatprep.subr.bf16.mxu0 %v5463
      %6502 = vmatpush1.bf16.msra.mxu0 %v5462
      %6503 = vmatprep.subr.bf16.mxu0 %v5471
      %6504 = vmatpush1.bf16.msra.mxu0 %v5470
      %6505 = vmatprep.subr.bf16.mxu0 %v5479
      %6506 = vmatpush1.bf16.msra.mxu0 %v5478
      %6507 = vmatprep.subr.bf16.mxu0 %v5487
      %6508 = vmatpush1.bf16.msra.mxu0 %v5486
      %6509 = vmatprep.subr.bf16.mxu0 %v5495
      %6510 = vmatpush1.bf16.msra.mxu0 %v5494
      %6511 = vmatprep.subr.bf16.mxu0 %v5503
      %6512 = vmatpush1.bf16.msra.mxu0 %v5502
      %6513 = vmatprep.subr.bf16.mxu0 %v5511
      %6514 = vmatpush1.bf16.msra.mxu0 %v5510
      %6515 = vmatprep.subr.bf16.mxu0 %v5519
      %6516 = vmatpush1.bf16.msra.mxu0 %v5518
      %6517 = vmatprep.mubr.bf16.mxu0 %v3867
      %6518 = vmatmul.mubr.bf16.gmra.mrb[0].mxu0 %v3866
      %v6519 = vpop.f32.mrb[0].mxu0
      %v6520 = vadd.f32 %v4307, %v6519
      %v6521 = vpop.f32.mrb[0].mxu0
      %v6522 = vadd.f32 %v4311, %v6521
      %v6523 = vpop.f32.mrb[0].mxu0
      %v6524 = vpop.f32.mrb[0].mxu0
      %6525 = vdwg.mxu0
      %6526 = vmatprep.subr.bf16.mxu0 %v5527
      %6527 = vmatpush1.bf16.msra.mxu0 %v5526
      %6528 = vmatprep.subr.bf16.mxu0 %v5535
      %6529 = vmatpush1.bf16.msra.mxu0 %v5534
      %6530 = vmatprep.subr.bf16.mxu0 %v5543
      %6531 = vmatpush1.bf16.msra.mxu0 %v5542
      %6532 = vmatprep.subr.bf16.mxu0 %v5551
      %6533 = vmatpush1.bf16.msra.mxu0 %v5550
      %6534 = vmatprep.subr.bf16.mxu0 %v5559
      %6535 = vmatpush1.bf16.msra.mxu0 %v5558
      %6536 = vmatprep.subr.bf16.mxu0 %v5567
      %6537 = vmatpush1.bf16.msra.mxu0 %v5566
      %6538 = vmatprep.subr.bf16.mxu0 %v5575
      %6539 = vmatpush1.bf16.msra.mxu0 %v5574
      %6540 = vmatprep.subr.bf16.mxu0 %v5583
      %6541 = vmatpush1.bf16.msra.mxu0 %v5582
      %6542 = vmatprep.subr.bf16.mxu0 %v5591
      %6543 = vmatpush1.bf16.msra.mxu0 %v5590
      %6544 = vmatprep.subr.bf16.mxu0 %v5599
      %6545 = vmatpush1.bf16.msra.mxu0 %v5598
      %6546 = vmatprep.subr.bf16.mxu0 %v5607
      %6547 = vmatpush1.bf16.msra.mxu0 %v5606
      %6548 = vmatprep.subr.bf16.mxu0 %v5615
      %6549 = vmatpush1.bf16.msra.mxu0 %v5614
      %6550 = vmatprep.subr.bf16.mxu0 %v5623
      %6551 = vmatpush1.bf16.msra.mxu0 %v5622
      %6552 = vmatprep.subr.bf16.mxu0 %v5631
      %6553 = vmatpush1.bf16.msra.mxu0 %v5630
      %6554 = vmatprep.subr.bf16.mxu0 %v5639
      %6555 = vmatpush1.bf16.msra.mxu0 %v5638
      %6556 = vmatprep.subr.bf16.mxu0 %v5647
      %6557 = vmatpush1.bf16.msra.mxu0 %v5646
      %6558 = vmatprep.mubr.bf16.mxu0 %v3869
      %6559 = vmatmul.mubr.bf16.gmra.mrb[0].mxu0 %v3868
      %v6560 = vpop.f32.mrb[0].mxu0
      %v6561 = vadd.f32 %v6520, %v6560
      %v6562 = vpop.f32.mrb[0].mxu0
      %v6563 = vadd.f32 %v6522, %v6562
      %v6564 = vpop.f32.mrb[0].mxu0
      %v6565 = vpop.f32.mrb[0].mxu0
      %6566 = vdwg.mxu0
      %6567 = vmatprep.subr.bf16.mxu0 %v5655
      %6568 = vmatpush1.bf16.msra.mxu0 %v5654
      %6569 = vmatprep.subr.bf16.mxu0 %v5663
      %6570 = vmatpush1.bf16.msra.mxu0 %v5662
      %6571 = vmatprep.subr.bf16.mxu0 %v5671
      %6572 = vmatpush1.bf16.msra.mxu0 %v5670
      %6573 = vmatprep.subr.bf16.mxu0 %v5679
      %6574 = vmatpush1.bf16.msra.mxu0 %v5678
      %6575 = vmatprep.subr.bf16.mxu0 %v5687
      %6576 = vmatpush1.bf16.msra.mxu0 %v5686
      %6577 = vmatprep.subr.bf16.mxu0 %v5695
      %6578 = vmatpush1.bf16.msra.mxu0 %v5694
      %6579 = vmatprep.subr.bf16.mxu0 %v5703
      %6580 = vmatpush1.bf16.msra.mxu0 %v5702
      %6581 = vmatprep.subr.bf16.mxu0 %v5711
      %6582 = vmatpush1.bf16.msra.mxu0 %v5710
      %6583 = vmatprep.subr.bf16.mxu0 %v5719
      %6584 = vmatpush1.bf16.msra.mxu0 %v5718
      %6585 = vmatprep.subr.bf16.mxu0 %v5727
      %6586 = vmatpush1.bf16.msra.mxu0 %v5726
      %6587 = vmatprep.subr.bf16.mxu0 %v5735
      %6588 = vmatpush1.bf16.msra.mxu0 %v5734
      %6589 = vmatprep.subr.bf16.mxu0 %v5743
      %6590 = vmatpush1.bf16.msra.mxu0 %v5742
      %6591 = vmatprep.subr.bf16.mxu0 %v5751
      %6592 = vmatpush1.bf16.msra.mxu0 %v5750
      %6593 = vmatprep.subr.bf16.mxu0 0
      %6594 = vmatpush1.bf16.msra.mxu0 0
      %6595 = vmatprep.subr.bf16.mxu0 0
      %6596 = vmatpush1.bf16.msra.mxu0 0
      %6597 = vmatprep.subr.bf16.mxu0 0
      %6598 = vmatpush1.bf16.msra.mxu0 0
      %6599 = vmatprep.mubr.bf16.mxu0 %v6114
      %6600 = vmatmul.mubr.bf16.gmra.mrb[0].mxu0 %v3870
      %v6601 = vpop.f32.mrb[0].mxu0
      %v6602 = vadd.f32 %v6561, %v6601
      %v6603 = vpop.f32.mrb[0].mxu0
      %v6604 = vadd.f32 %v6563, %v6603
      %v6605 = vpop.f32.mrb[0].mxu0
      %v6606 = vpop.f32.mrb[0].mxu0
      %6607 = vdwg.mxu0
      %vm6608 = vcmp.gt.f32.partialorder %v6233, 0.0
      %vm6609 = vcmp.gt.f32.partialorder %v6235, 0.0
      %vm6610 = vcmp.gt.f32.partialorder %v6356, 0.0
      %vm6611 = vcmp.gt.f32.partialorder %v6358, 0.0
      %vm6612 = vcmp.gt.f32.partialorder %v6479, 0.0
      %vm6613 = vcmp.gt.f32.partialorder %v6481, 0.0
      %vm6614 = vcmp.gt.f32.partialorder %v6602, 0.0
      %vm6615 = vcmp.gt.f32.partialorder %v6604, 0.0
      %v6616 = vlaneseq
      %v6617 = vshrl.u32 %v6616, 7
      %v6618 = vsub.s32 3, %v6617
      %v6619 = vrot.slane %v4232, %v6618
      %v6620 = vlaneseq
      %v6621 = vshrl.u32 %v6620, 7
      %v6622 = vsub.s32 7, %v6621
      %v6623 = vrot.slane %v4232, %v6622
      %v6624 = vlaneseq
      %v6625 = vshrl.u32 %v6624, 7
      %v6626 = vsub.s32 3, %v6625
      %v6627 = vrot.slane %v4233, %v6626
      %v6628 = vlaneseq
      %v6629 = vshrl.u32 %v6628, 7
      %v6630 = vsub.s32 7, %v6629
      %v6631 = vrot.slane %v4233, %v6630
      %v6632 = vlaneseq
      %v6633 = vshrl.u32 %v6632, 7
      %v6634 = vsub.s32 3, %v6633
      %v6635 = vrot.slane %v4234, %v6634
      %v6636 = vlaneseq
      %v6637 = vshrl.u32 %v6636, 7
      %v6638 = vsub.s32 7, %v6637
      %v6639 = vrot.slane %v4234, %v6638
      %v6640 = vlaneseq
      %v6641 = vshrl.u32 %v6640, 7
      %v6642 = vsub.s32 3, %v6641
      %v6643 = vrot.slane %v4235, %v6642
      %v6644 = vlaneseq
      %v6645 = vshrl.u32 %v6644, 7
      %v6646 = vsub.s32 7, %v6645
      %v6647 = vrot.slane %v4235, %v6646
      %v6656 = vlaneseq
      %v6657 = vshrl.u32 %v6656, 7
      %v6658 = vsub.s32 3, %v6657
      %v6659 = vrot.slane %v6619, %v6658
      %v6660 = vlaneseq
      %v6661 = vshrl.u32 %v6660, 7
      %v6662 = vsub.s32 3, %v6661
      %v6663 = vrot.slane %v6623, %v6662
      %v6664 = vlaneseq
      %v6665 = vshrl.u32 %v6664, 7
      %v6666 = vsub.s32 3, %v6665
      %v6667 = vrot.slane %v6627, %v6666
      %v6668 = vlaneseq
      %v6669 = vshrl.u32 %v6668, 7
      %v6670 = vsub.s32 3, %v6669
      %v6671 = vrot.slane %v6631, %v6670
      %v6672 = vlaneseq
      %v6673 = vshrl.u32 %v6672, 7
      %v6674 = vsub.s32 3, %v6673
      %v6675 = vrot.slane %v6635, %v6674
      %v6676 = vlaneseq
      %v6677 = vshrl.u32 %v6676, 7
      %v6678 = vsub.s32 3, %v6677
      %v6679 = vrot.slane %v6639, %v6678
      %v6680 = vlaneseq
      %v6681 = vshrl.u32 %v6680, 7
      %v6682 = vsub.s32 3, %v6681
      %v6683 = vrot.slane %v6643, %v6682
      %v6684 = vlaneseq
      %v6685 = vshrl.u32 %v6684, 7
      %v6686 = vsub.s32 3, %v6685
      %v6687 = vrot.slane %v6647, %v6686
      %v6688 = vmul.f32 %v6659, %v6233
      %v6689 = vmul.f32 %v6663, %v6235
      %v6690 = vmul.f32 %v6667, %v6356
      %v6691 = vmul.f32 %v6671, %v6358
      %v6692 = vmul.f32 %v6675, %v6479
      %v6693 = vmul.f32 %v6679, %v6481
      %v6694 = vmul.f32 %v6683, %v6602
      %v6695 = vmul.f32 %v6687, %v6604
      %v6696 = vsel %vm6608, %v6233, %v6688
      %v6697 = vsel %vm6609, %v6235, %v6689
      %v6698 = vsel %vm6610, %v6356, %v6690
      %v6699 = vsel %vm6611, %v6358, %v6691
      %v6700 = vsel %vm6612, %v6479, %v6692
      %v6701 = vsel %vm6613, %v6481, %v6693
      %v6702 = vsel %vm6614, %v6602, %v6694
      %v6703 = vsel %vm6615, %v6604, %v6695
      %v6704 = vlaneseq
      %v6705 = vshrl.u32 %v6704, 7
      %v6706 = vsub.s32 1, %v6705
      %v6707 = vrot.slane %v4232, %v6706
      %v6708 = vlaneseq
      %v6709 = vshrl.u32 %v6708, 7
      %v6710 = vsub.s32 5, %v6709
      %v6711 = vrot.slane %v4232, %v6710
      %v6712 = vlaneseq
      %v6713 = vshrl.u32 %v6712, 7
      %v6714 = vsub.s32 1, %v6713
      %v6715 = vrot.slane %v4233, %v6714
      %v6716 = vlaneseq
      %v6717 = vshrl.u32 %v6716, 7
      %v6718 = vsub.s32 5, %v6717
      %v6719 = vrot.slane %v4233, %v6718
      %v6720 = vlaneseq
      %v6721 = vshrl.u32 %v6720, 7
      %v6722 = vsub.s32 1, %v6721
      %v6723 = vrot.slane %v4234, %v6722
      %v6724 = vlaneseq
      %v6725 = vshrl.u32 %v6724, 7
      %v6726 = vsub.s32 5, %v6725
      %v6727 = vrot.slane %v4234, %v6726
      %v6728 = vlaneseq
      %v6729 = vshrl.u32 %v6728, 7
      %v6730 = vsub.s32 1, %v6729
      %v6731 = vrot.slane %v4235, %v6730
      %v6732 = vlaneseq
      %v6733 = vshrl.u32 %v6732, 7
      %v6734 = vsub.s32 5, %v6733
      %v6735 = vrot.slane %v4235, %v6734
      %v6744 = vlaneseq
      %v6745 = vshrl.u32 %v6744, 7
      %v6746 = vsub.s32 1, %v6745
      %v6747 = vrot.slane %v6707, %v6746
      %v6748 = vlaneseq
      %v6749 = vshrl.u32 %v6748, 7
      %v6750 = vsub.s32 1, %v6749
      %v6751 = vrot.slane %v6711, %v6750
      %v6752 = vlaneseq
      %v6753 = vshrl.u32 %v6752, 7
      %v6754 = vsub.s32 1, %v6753
      %v6755 = vrot.slane %v6715, %v6754
      %v6756 = vlaneseq
      %v6757 = vshrl.u32 %v6756, 7
      %v6758 = vsub.s32 1, %v6757
      %v6759 = vrot.slane %v6719, %v6758
      %v6760 = vlaneseq
      %v6761 = vshrl.u32 %v6760, 7
      %v6762 = vsub.s32 1, %v6761
      %v6763 = vrot.slane %v6723, %v6762
      %v6764 = vlaneseq
      %v6765 = vshrl.u32 %v6764, 7
      %v6766 = vsub.s32 1, %v6765
      %v6767 = vrot.slane %v6727, %v6766
      %v6768 = vlaneseq
      %v6769 = vshrl.u32 %v6768, 7
      %v6770 = vsub.s32 1, %v6769
      %v6771 = vrot.slane %v6731, %v6770
      %v6772 = vlaneseq
      %v6773 = vshrl.u32 %v6772, 7
      %v6774 = vsub.s32 1, %v6773
      %v6775 = vrot.slane %v6735, %v6774
      %v6776 = vmul.f32 %v6696, %v6747
      %v6777 = vmul.f32 %v6697, %v6751
      %v6778 = vmul.f32 %v6698, %v6755
      %v6779 = vmul.f32 %v6699, %v6759
      %v6780 = vmul.f32 %v6700, %v6763
      %v6781 = vmul.f32 %v6701, %v6767
      %v6782 = vmul.f32 %v6702, %v6771
      %v6783 = vmul.f32 %v6703, %v6775
      %v6784 = vlaneseq
      %v6785 = vshrl.u32 %v6784, 7
      %v6786 = vsub.s32 2, %v6785
      %v6787 = vrot.slane %v4232, %v6786
      %v6788 = vlaneseq
      %v6789 = vshrl.u32 %v6788, 7
      %v6790 = vsub.s32 6, %v6789
      %v6791 = vrot.slane %v4232, %v6790
      %v6792 = vlaneseq
      %v6793 = vshrl.u32 %v6792, 7
      %v6794 = vsub.s32 2, %v6793
      %v6795 = vrot.slane %v4233, %v6794
      %v6796 = vlaneseq
      %v6797 = vshrl.u32 %v6796, 7
      %v6798 = vsub.s32 6, %v6797
      %v6799 = vrot.slane %v4233, %v6798
      %v6800 = vlaneseq
      %v6801 = vshrl.u32 %v6800, 7
      %v6802 = vsub.s32 2, %v6801
      %v6803 = vrot.slane %v4234, %v6802
      %v6804 = vlaneseq
      %v6805 = vshrl.u32 %v6804, 7
      %v6806 = vsub.s32 6, %v6805
      %v6807 = vrot.slane %v4234, %v6806
      %v6808 = vlaneseq
      %v6809 = vshrl.u32 %v6808, 7
      %v6810 = vsub.s32 2, %v6809
      %v6811 = vrot.slane %v4235, %v6810
      %v6812 = vlaneseq
      %v6813 = vshrl.u32 %v6812, 7
      %v6814 = vsub.s32 6, %v6813
      %v6815 = vrot.slane %v4235, %v6814
      %v6824 = vlaneseq
      %v6825 = vshrl.u32 %v6824, 7
      %v6826 = vsub.s32 2, %v6825
      %v6827 = vrot.slane %v6787, %v6826
      %v6828 = vlaneseq
      %v6829 = vshrl.u32 %v6828, 7
      %v6830 = vsub.s32 2, %v6829
      %v6831 = vrot.slane %v6791, %v6830
      %v6832 = vlaneseq
      %v6833 = vshrl.u32 %v6832, 7
      %v6834 = vsub.s32 2, %v6833
      %v6835 = vrot.slane %v6795, %v6834
      %v6836 = vlaneseq
      %v6837 = vshrl.u32 %v6836, 7
      %v6838 = vsub.s32 2, %v6837
      %v6839 = vrot.slane %v6799, %v6838
      %v6840 = vlaneseq
      %v6841 = vshrl.u32 %v6840, 7
      %v6842 = vsub.s32 2, %v6841
      %v6843 = vrot.slane %v6803, %v6842
      %v6844 = vlaneseq
      %v6845 = vshrl.u32 %v6844, 7
      %v6846 = vsub.s32 2, %v6845
      %v6847 = vrot.slane %v6807, %v6846
      %v6848 = vlaneseq
      %v6849 = vshrl.u32 %v6848, 7
      %v6850 = vsub.s32 2, %v6849
      %v6851 = vrot.slane %v6811, %v6850
      %v6852 = vlaneseq
      %v6853 = vshrl.u32 %v6852, 7
      %v6854 = vsub.s32 2, %v6853
      %v6855 = vrot.slane %v6815, %v6854
      %v6856 = vadd.f32 %v6776, %v6827
      %v6857 = vadd.f32 %v6777, %v6831
      %v6858 = vadd.f32 %v6778, %v6835
      %v6859 = vadd.f32 %v6779, %v6839
      %v6860 = vadd.f32 %v6780, %v6843
      %v6861 = vadd.f32 %v6781, %v6847
      %v6862 = vadd.f32 %v6782, %v6851
      %v6863 = vadd.f32 %v6783, %v6855
      %v6864 = vpack.c.bf16 %v6856, %v6856
      %v6865 = vpack.c.bf16 %v6857, %v6857
      %v6866 = vpack.c.bf16 %v6858, %v6858
      %v6867 = vpack.c.bf16 %v6859, %v6859
      %v6868 = vpack.c.bf16 %v6860, %v6860
      %v6869 = vpack.c.bf16 %v6861, %v6861
      %v6870 = vpack.c.bf16 %v6862, %v6862
      %v6871 = vpack.c.bf16 %v6863, %v6863
      %v6872 = vld [vmem:[%s20] sm:$0xff]
      %v6873 = vld [vmem:[%s20 + $0x8] sm:$0xff]
      %v6874 = vld [vmem:[%s20 + $0x10] sm:$0xff]
      %v6875 = vld [vmem:[%s20 + $0x18] sm:$0xff]
      %v6876 = vld [vmem:[%s20 + $0x20] sm:$0xff]
      %v6877 = vld [vmem:[%s20 + $0x28] sm:$0xff]
      %v6878 = vld [vmem:[%s20 + $0x30] sm:$0xff]
      %v6879 = vld [vmem:[%s20 + $0x38] sm:$0xff]
      %v6880 = vld [vmem:[%s20 + $0x40] sm:$0xff]
      %v6881 = vld [vmem:[%s20 + $0x48] sm:$0xff]
      %v6882 = vld [vmem:[%s20 + $0x50] sm:$0xff]
      %v6883 = vld [vmem:[%s20 + $0x58] sm:$0xff]
      %v6884 = vld [vmem:[%s20 + $0x60] sm:$0xff]
      %v6885 = vld [vmem:[%s20 + $0x68] sm:$0xff]
      %v6886 = vld [vmem:[%s20 + $0x70] sm:$0xff]
      %v6887 = vld [vmem:[%s20 + $0x78] sm:$0xff]
      %v6888 = vld [vmem:[%s20 + $0x80] sm:$0xff]
      %v6889 = vld [vmem:[%s20 + $0x88] sm:$0xff]
      %v6890 = vld [vmem:[%s20 + $0x90] sm:$0xff]
      %v6891 = vld [vmem:[%s20 + $0x98] sm:$0xff]
      %v6892 = vld [vmem:[%s20 + $0xa0] sm:$0xff]
      %v6893 = vld [vmem:[%s20 + $0xa8] sm:$0xff]
      %v6894 = vld [vmem:[%s20 + $0xb0] sm:$0xff]
      %v6895 = vld [vmem:[%s20 + $0xb8] sm:$0xff]
      %v6896 = vld [vmem:[%s20 + $0xc0] sm:$0xff]
      %v6897 = vld [vmem:[%s20 + $0xc8] sm:$0xff]
      %v6898 = vld [vmem:[%s20 + $0xd0] sm:$0xff]
      %v6899 = vld [vmem:[%s20 + $0xd8] sm:$0xff]
      %v6900 = vld [vmem:[%s20 + $0xe0] sm:$0xff]
      %v6901 = vld [vmem:[%s20 + $0xe8] sm:$0xff]
      %v6902 = vld [vmem:[%s20 + $0xf0] sm:$0xff]
      %v6903 = vld [vmem:[%s20 + $0xf8] sm:$0xff]
      %v6904 = vld [vmem:[%s20 + $0x100] sm:$0xff]
      %v6905 = vld [vmem:[%s20 + $0x108] sm:$0xff]
      %v6906 = vld [vmem:[%s20 + $0x110] sm:$0xff]
      %v6907 = vld [vmem:[%s20 + $0x118] sm:$0xff]
      %v6908 = vld [vmem:[%s20 + $0x120] sm:$0xff]
      %v6909 = vld [vmem:[%s20 + $0x128] sm:$0xff]
      %v6910 = vld [vmem:[%s20 + $0x130] sm:$0xff]
      %v6911 = vld [vmem:[%s20 + $0x138] sm:$0xff]
      %v6912 = vld [vmem:[%s20 + $0x140] sm:$0xff]
      %v6913 = vld [vmem:[%s20 + $0x148] sm:$0xff]
      %v6914 = vld [vmem:[%s20 + $0x150] sm:$0xff]
      %v6915 = vld [vmem:[%s20 + $0x158] sm:$0xff]
      %v6916 = vld [vmem:[%s20 + $0x160] sm:$0xff]
      %v6917 = vld [vmem:[%s20 + $0x168] sm:$0xff]
      %v6918 = vld [vmem:[%s20 + $0x170] sm:$0xff]
      %v6919 = vld [vmem:[%s20 + $0x178] sm:$0xff]
      %v6920 = vld [vmem:[%s20 + $0x180] sm:$0xff]
      %v6921 = vld [vmem:[%s20 + $0x188] sm:$0xff]
      %v6922 = vld [vmem:[%s20 + $0x190] sm:$0xff]
      %v6923 = vld [vmem:[%s20 + $0x198] sm:$0xff]
      %v6924 = vld [vmem:[%s20 + $0x1a0] sm:$0xff]
      %v6925 = vld [vmem:[%s20 + $0x1a8] sm:$0xff]
      %v6926 = vld [vmem:[%s20 + $0x1b0] sm:$0xff]
      %v6927 = vld [vmem:[%s20 + $0x1b8] sm:$0xff]
      %v6928 = vld [vmem:[%s20 + $0x1c0] sm:$0xff]
      %v6929 = vld [vmem:[%s20 + $0x1c8] sm:$0xff]
      %v6930 = vld [vmem:[%s20 + $0x1d0] sm:$0xff]
      %v6931 = vld [vmem:[%s20 + $0x1d8] sm:$0xff]
      %v6932 = vld [vmem:[%s20 + $0x1e0] sm:$0xff]
      %v6933 = vld [vmem:[%s20 + $0x1e8] sm:$0xff]
      %v6934 = vld [vmem:[%s20 + $0x1f0] sm:$0xff]
      %v6935 = vld [vmem:[%s20 + $0x1f8] sm:$0xff]
      %v6936 = vld [vmem:[%s20 + $0x200] sm:$0xff]
      %v6937 = vld [vmem:[%s20 + $0x208] sm:$0xff]
      %v6938 = vld [vmem:[%s20 + $0x210] sm:$0xff]
      %v6939 = vld [vmem:[%s20 + $0x218] sm:$0xff]
      %v6940 = vld [vmem:[%s20 + $0x220] sm:$0xff]
      %v6941 = vld [vmem:[%s20 + $0x228] sm:$0xff]
      %v6942 = vld [vmem:[%s20 + $0x230] sm:$0xff]
      %v6943 = vld [vmem:[%s20 + $0x238] sm:$0xff]
      %v6944 = vld [vmem:[%s20 + $0x240] sm:$0xff]
      %v6945 = vld [vmem:[%s20 + $0x248] sm:$0xff]
      %v6946 = vld [vmem:[%s20 + $0x250] sm:$0xff]
      %v6947 = vld [vmem:[%s20 + $0x258] sm:$0xff]
      %v6948 = vld [vmem:[%s20 + $0x260] sm:$0xff]
      %v6949 = vld [vmem:[%s20 + $0x268] sm:$0xff]
      %v6950 = vld [vmem:[%s20 + $0x270] sm:$0xff]
      %v6951 = vld [vmem:[%s20 + $0x278] sm:$0xff]
      %v6952 = vld [vmem:[%s20 + $0x280] sm:$0xff]
      %v6953 = vld [vmem:[%s20 + $0x288] sm:$0xff]
      %v6954 = vld [vmem:[%s20 + $0x290] sm:$0xff]
      %v6955 = vld [vmem:[%s20 + $0x298] sm:$0xff]
      %v6956 = vld [vmem:[%s20 + $0x2a0] sm:$0xff]
      %v6957 = vld [vmem:[%s20 + $0x2a8] sm:$0xff]
      %v6958 = vld [vmem:[%s20 + $0x2b0] sm:$0xff]
      %v6959 = vld [vmem:[%s20 + $0x2b8] sm:$0xff]
      %v6960 = vld [vmem:[%s20 + $0x2c0] sm:$0xff]
      %v6961 = vld [vmem:[%s20 + $0x2c8] sm:$0xff]
      %v6962 = vld [vmem:[%s20 + $0x2d0] sm:$0xff]
      %v6963 = vld [vmem:[%s20 + $0x2d8] sm:$0xff]
      %v6964 = vld [vmem:[%s20 + $0x2e0] sm:$0xff]
      %v6965 = vld [vmem:[%s20 + $0x2e8] sm:$0xff]
      %v6966 = vld [vmem:[%s20 + $0x2f0] sm:$0xff]
      %v6967 = vld [vmem:[%s20 + $0x2f8] sm:$0xff]
      %v6968 = vld [vmem:[%s20 + $0x300] sm:$0xff]
      %v6969 = vld [vmem:[%s20 + $0x308] sm:$0xff]
      %v6970 = vld [vmem:[%s20 + $0x310] sm:$0xff]
      %v6971 = vld [vmem:[%s20 + $0x318] sm:$0xff]
      %v6972 = vld [vmem:[%s20 + $0x320] sm:$0xff]
      %v6973 = vld [vmem:[%s20 + $0x328] sm:$0xff]
      %v6974 = vld [vmem:[%s20 + $0x330] sm:$0xff]
      %v6975 = vld [vmem:[%s20 + $0x338] sm:$0xff]
      %v6976 = vld [vmem:[%s20 + $0x340] sm:$0xff]
      %v6977 = vld [vmem:[%s20 + $0x348] sm:$0xff]
      %v6978 = vld [vmem:[%s20 + $0x350] sm:$0xff]
      %v6979 = vld [vmem:[%s20 + $0x358] sm:$0xff]
      %v6980 = vld [vmem:[%s20 + $0x360] sm:$0xff]
      %v6981 = vld [vmem:[%s20 + $0x368] sm:$0xff]
      %v6982 = vld [vmem:[%s20 + $0x370] sm:$0xff]
      %v6983 = vld [vmem:[%s20 + $0x378] sm:$0xff]
      %v6984 = vld [vmem:[%s20 + $0x380] sm:$0xff]
      %v6985 = vld [vmem:[%s20 + $0x388] sm:$0xff]
      %v6986 = vld [vmem:[%s20 + $0x390] sm:$0xff]
      %v6987 = vld [vmem:[%s20 + $0x398] sm:$0xff]
      %v6988 = vld [vmem:[%s20 + $0x3a0] sm:$0xff]
      %v6989 = vld [vmem:[%s20 + $0x3a8] sm:$0xff]
      %v6990 = vld [vmem:[%s20 + $0x3b0] sm:$0xff]
      %v6991 = vld [vmem:[%s20 + $0x3b8] sm:$0xff]
      %v6992 = vld [vmem:[%s21] sm:$0x3]
      %v6994 = vlaneseq
      %v6995 = vshrl.u32 %v6994, 7
      %v6996 = vsub.s32 0, %v6995
      %v6997 = vrot.slane %v6992, %v6996
      %v6998 = vlaneseq
      %v6999 = vshrl.u32 %v6998, 7
      %v7000 = vsub.s32 1, %v6999
      %v7001 = vrot.slane %v6992, %v7000
      %v7124 = vunpack.c.l.b16 %v6872
      %v7125 = vunpack.c.h.b16 %v6872
      %v7126 = vunpack.c.l.b16 %v6873
      %v7127 = vunpack.c.h.b16 %v6873
      %v7128 = vunpack.c.l.b16 %v6874
      %v7129 = vunpack.c.h.b16 %v6874
      %v7130 = vunpack.c.l.b16 %v6875
      %v7131 = vunpack.c.h.b16 %v6875
      %v7132 = vunpack.c.l.b16 %v6876
      %v7133 = vunpack.c.h.b16 %v6876
      %v7134 = vunpack.c.l.b16 %v6877
      %v7135 = vunpack.c.h.b16 %v6877
      %v7136 = vunpack.c.l.b16 %v6878
      %v7137 = vunpack.c.h.b16 %v6878
      %v7138 = vunpack.c.l.b16 %v6879
      %v7139 = vunpack.c.h.b16 %v6879
      %v7140 = vunpack.c.l.b16 %v6880
      %v7141 = vunpack.c.h.b16 %v6880
      %v7142 = vunpack.c.l.b16 %v6881
      %v7143 = vunpack.c.h.b16 %v6881
      %v7144 = vunpack.c.l.b16 %v6882
      %v7145 = vunpack.c.h.b16 %v6882
      %v7146 = vunpack.c.l.b16 %v6883
      %v7147 = vunpack.c.h.b16 %v6883
      %v7148 = vunpack.c.l.b16 %v6884
      %v7149 = vunpack.c.h.b16 %v6884
      %v7150 = vunpack.c.l.b16 %v6885
      %v7151 = vunpack.c.h.b16 %v6885
      %v7152 = vunpack.c.l.b16 %v6886
      %v7153 = vunpack.c.h.b16 %v6886
      %v7154 = vunpack.c.l.b16 %v6887
      %v7155 = vunpack.c.h.b16 %v6887
      %v7156 = vunpack.c.l.b16 %v6888
      %v7157 = vunpack.c.h.b16 %v6888
      %v7158 = vunpack.c.l.b16 %v6889
      %v7159 = vunpack.c.h.b16 %v6889
      %v7160 = vunpack.c.l.b16 %v6890
      %v7161 = vunpack.c.h.b16 %v6890
      %v7162 = vunpack.c.l.b16 %v6891
      %v7163 = vunpack.c.h.b16 %v6891
      %v7164 = vunpack.c.l.b16 %v6892
      %v7165 = vunpack.c.h.b16 %v6892
      %v7166 = vunpack.c.l.b16 %v6893
      %v7167 = vunpack.c.h.b16 %v6893
      %v7168 = vunpack.c.l.b16 %v6894
      %v7169 = vunpack.c.h.b16 %v6894
      %v7170 = vunpack.c.l.b16 %v6895
      %v7171 = vunpack.c.h.b16 %v6895
      %v7172 = vunpack.c.l.b16 %v6896
      %v7173 = vunpack.c.h.b16 %v6896
      %v7174 = vunpack.c.l.b16 %v6897
      %v7175 = vunpack.c.h.b16 %v6897
      %v7176 = vunpack.c.l.b16 %v6898
      %v7177 = vunpack.c.h.b16 %v6898
      %v7178 = vunpack.c.l.b16 %v6899
      %v7179 = vunpack.c.h.b16 %v6899
      %v7180 = vunpack.c.l.b16 %v6900
      %v7181 = vunpack.c.h.b16 %v6900
      %v7182 = vunpack.c.l.b16 %v6901
      %v7183 = vunpack.c.h.b16 %v6901
      %v7184 = vunpack.c.l.b16 %v6902
      %v7185 = vunpack.c.h.b16 %v6902
      %v7186 = vunpack.c.l.b16 %v6903
      %v7187 = vunpack.c.h.b16 %v6903
      %v7188 = vunpack.c.l.b16 %v6904
      %v7189 = vunpack.c.h.b16 %v6904
      %v7190 = vunpack.c.l.b16 %v6905
      %v7191 = vunpack.c.h.b16 %v6905
      %v7192 = vunpack.c.l.b16 %v6906
      %v7193 = vunpack.c.h.b16 %v6906
      %v7194 = vunpack.c.l.b16 %v6907
      %v7195 = vunpack.c.h.b16 %v6907
      %v7196 = vunpack.c.l.b16 %v6908
      %v7197 = vunpack.c.h.b16 %v6908
      %v7198 = vunpack.c.l.b16 %v6909
      %v7199 = vunpack.c.h.b16 %v6909
      %v7200 = vunpack.c.l.b16 %v6910
      %v7201 = vunpack.c.h.b16 %v6910
      %v7202 = vunpack.c.l.b16 %v6911
      %v7203 = vunpack.c.h.b16 %v6911
      %v7204 = vunpack.c.l.b16 %v6912
      %v7205 = vunpack.c.h.b16 %v6912
      %v7206 = vunpack.c.l.b16 %v6913
      %v7207 = vunpack.c.h.b16 %v6913
      %v7208 = vunpack.c.l.b16 %v6914
      %v7209 = vunpack.c.h.b16 %v6914
      %v7210 = vunpack.c.l.b16 %v6915
      %v7211 = vunpack.c.h.b16 %v6915
      %v7212 = vunpack.c.l.b16 %v6916
      %v7213 = vunpack.c.h.b16 %v6916
      %v7214 = vunpack.c.l.b16 %v6917
      %v7215 = vunpack.c.h.b16 %v6917
      %v7216 = vunpack.c.l.b16 %v6918
      %v7217 = vunpack.c.h.b16 %v6918
      %v7218 = vunpack.c.l.b16 %v6919
      %v7219 = vunpack.c.h.b16 %v6919
      %v7220 = vunpack.c.l.b16 %v6920
      %v7221 = vunpack.c.h.b16 %v6920
      %v7222 = vunpack.c.l.b16 %v6921
      %v7223 = vunpack.c.h.b16 %v6921
      %v7224 = vunpack.c.l.b16 %v6922
      %v7225 = vunpack.c.h.b16 %v6922
      %v7226 = vunpack.c.l.b16 %v6923
      %v7227 = vunpack.c.h.b16 %v6923
      %v7228 = vunpack.c.l.b16 %v6924
      %v7229 = vunpack.c.h.b16 %v6924
      %v7230 = vunpack.c.l.b16 %v6925
      %v7231 = vunpack.c.h.b16 %v6925
      %v7232 = vunpack.c.l.b16 %v6926
      %v7233 = vunpack.c.h.b16 %v6926
      %v7234 = vunpack.c.l.b16 %v6927
      %v7235 = vunpack.c.h.b16 %v6927
      %v7236 = vunpack.c.l.b16 %v6928
      %v7237 = vunpack.c.h.b16 %v6928
      %v7238 = vunpack.c.l.b16 %v6929
      %v7239 = vunpack.c.h.b16 %v6929
      %v7240 = vunpack.c.l.b16 %v6930
      %v7241 = vunpack.c.h.b16 %v6930
      %v7242 = vunpack.c.l.b16 %v6931
      %v7243 = vunpack.c.h.b16 %v6931
      %v7244 = vunpack.c.l.b16 %v6932
      %v7245 = vunpack.c.h.b16 %v6932
      %v7246 = vunpack.c.l.b16 %v6933
      %v7247 = vunpack.c.h.b16 %v6933
      %v7248 = vunpack.c.l.b16 %v6934
      %v7249 = vunpack.c.h.b16 %v6934
      %v7250 = vunpack.c.l.b16 %v6935
      %v7251 = vunpack.c.h.b16 %v6935
      %v7252 = vunpack.c.l.b16 %v6936
      %v7253 = vunpack.c.h.b16 %v6936
      %v7254 = vunpack.c.l.b16 %v6937
      %v7255 = vunpack.c.h.b16 %v6937
      %v7256 = vunpack.c.l.b16 %v6938
      %v7257 = vunpack.c.h.b16 %v6938
      %v7258 = vunpack.c.l.b16 %v6939
      %v7259 = vunpack.c.h.b16 %v6939
      %v7260 = vunpack.c.l.b16 %v6940
      %v7261 = vunpack.c.h.b16 %v6940
      %v7262 = vunpack.c.l.b16 %v6941
      %v7263 = vunpack.c.h.b16 %v6941
      %v7264 = vunpack.c.l.b16 %v6942
      %v7265 = vunpack.c.h.b16 %v6942
      %v7266 = vunpack.c.l.b16 %v6943
      %v7267 = vunpack.c.h.b16 %v6943
      %v7268 = vunpack.c.l.b16 %v6944
      %v7269 = vunpack.c.h.b16 %v6944
      %v7270 = vunpack.c.l.b16 %v6945
      %v7271 = vunpack.c.h.b16 %v6945
      %v7272 = vunpack.c.l.b16 %v6946
      %v7273 = vunpack.c.h.b16 %v6946
      %v7274 = vunpack.c.l.b16 %v6947
      %v7275 = vunpack.c.h.b16 %v6947
      %v7276 = vunpack.c.l.b16 %v6948
      %v7277 = vunpack.c.h.b16 %v6948
      %v7278 = vunpack.c.l.b16 %v6949
      %v7279 = vunpack.c.h.b16 %v6949
      %v7280 = vunpack.c.l.b16 %v6950
      %v7281 = vunpack.c.h.b16 %v6950
      %v7282 = vunpack.c.l.b16 %v6951
      %v7283 = vunpack.c.h.b16 %v6951
      %v7284 = vunpack.c.l.b16 %v6952
      %v7285 = vunpack.c.h.b16 %v6952
      %v7286 = vunpack.c.l.b16 %v6953
      %v7287 = vunpack.c.h.b16 %v6953
      %v7288 = vunpack.c.l.b16 %v6954
      %v7289 = vunpack.c.h.b16 %v6954
      %v7290 = vunpack.c.l.b16 %v6955
      %v7291 = vunpack.c.h.b16 %v6955
      %v7292 = vunpack.c.l.b16 %v6956
      %v7293 = vunpack.c.h.b16 %v6956
      %v7294 = vunpack.c.l.b16 %v6957
      %v7295 = vunpack.c.h.b16 %v6957
      %v7296 = vunpack.c.l.b16 %v6958
      %v7297 = vunpack.c.h.b16 %v6958
      %v7298 = vunpack.c.l.b16 %v6959
      %v7299 = vunpack.c.h.b16 %v6959
      %v7300 = vunpack.c.l.b16 %v6960
      %v7301 = vunpack.c.h.b16 %v6960
      %v7302 = vunpack.c.l.b16 %v6961
      %v7303 = vunpack.c.h.b16 %v6961
      %v7304 = vunpack.c.l.b16 %v6962
      %v7305 = vunpack.c.h.b16 %v6962
      %v7306 = vunpack.c.l.b16 %v6963
      %v7307 = vunpack.c.h.b16 %v6963
      %v7308 = vunpack.c.l.b16 %v6964
      %v7309 = vunpack.c.h.b16 %v6964
      %v7310 = vunpack.c.l.b16 %v6965
      %v7311 = vunpack.c.h.b16 %v6965
      %v7312 = vunpack.c.l.b16 %v6966
      %v7313 = vunpack.c.h.b16 %v6966
      %v7314 = vunpack.c.l.b16 %v6967
      %v7315 = vunpack.c.h.b16 %v6967
      %v7316 = vunpack.c.l.b16 %v6968
      %v7317 = vunpack.c.h.b16 %v6968
      %v7318 = vunpack.c.l.b16 %v6969
      %v7319 = vunpack.c.h.b16 %v6969
      %v7320 = vunpack.c.l.b16 %v6970
      %v7321 = vunpack.c.h.b16 %v6970
      %v7322 = vunpack.c.l.b16 %v6971
      %v7323 = vunpack.c.h.b16 %v6971
      %v7324 = vunpack.c.l.b16 %v6972
      %v7325 = vunpack.c.h.b16 %v6972
      %v7326 = vunpack.c.l.b16 %v6973
      %v7327 = vunpack.c.h.b16 %v6973
      %v7328 = vunpack.c.l.b16 %v6974
      %v7329 = vunpack.c.h.b16 %v6974
      %v7330 = vunpack.c.l.b16 %v6975
      %v7331 = vunpack.c.h.b16 %v6975
      %v7332 = vunpack.c.l.b16 %v6976
      %v7333 = vunpack.c.h.b16 %v6976
      %v7334 = vunpack.c.l.b16 %v6977
      %v7335 = vunpack.c.h.b16 %v6977
      %v7336 = vunpack.c.l.b16 %v6978
      %v7337 = vunpack.c.h.b16 %v6978
      %v7338 = vunpack.c.l.b16 %v6979
      %v7339 = vunpack.c.h.b16 %v6979
      %v7340 = vunpack.c.l.b16 %v6980
      %v7341 = vunpack.c.h.b16 %v6980
      %v7342 = vunpack.c.l.b16 %v6981
      %v7343 = vunpack.c.h.b16 %v6981
      %v7344 = vunpack.c.l.b16 %v6982
      %v7345 = vunpack.c.h.b16 %v6982
      %v7346 = vunpack.c.l.b16 %v6983
      %v7347 = vunpack.c.h.b16 %v6983
      %v7348 = vunpack.c.l.b16 %v6984
      %v7349 = vunpack.c.h.b16 %v6984
      %v7350 = vunpack.c.l.b16 %v6985
      %v7351 = vunpack.c.h.b16 %v6985
      %v7352 = vunpack.c.l.b16 %v6986
      %v7353 = vunpack.c.h.b16 %v6986
      %v7354 = vunpack.c.l.b16 %v6987
      %v7355 = vunpack.c.h.b16 %v6987
      %v7356 = vunpack.c.l.b16 %v6988
      %v7357 = vunpack.c.h.b16 %v6988
      %v7358 = vunpack.c.l.b16 %v6989
      %v7359 = vunpack.c.h.b16 %v6989
      %v7360 = vunpack.c.l.b16 %v6990
      %v7361 = vunpack.c.h.b16 %v6990
      %v7362 = vunpack.c.l.b16 %v6991
      %v7363 = vunpack.c.h.b16 %v6991
      %v7364 = vpack.c.b16 %v7126, %v7124
      %v7365 = vpack.c.b16 %v7127, %v7125
      %v7366 = vpack.c.b16 %v7130, %v7128
      %v7367 = vpack.c.b16 %v7131, %v7129
      %v7368 = vpack.c.b16 %v7134, %v7132
      %v7369 = vpack.c.b16 %v7135, %v7133
      %v7370 = vpack.c.b16 %v7138, %v7136
      %v7371 = vpack.c.b16 %v7139, %v7137
      %v7372 = vpack.c.b16 %v7142, %v7140
      %v7373 = vpack.c.b16 %v7143, %v7141
      %v7374 = vpack.c.b16 %v7146, %v7144
      %v7375 = vpack.c.b16 %v7147, %v7145
      %v7376 = vpack.c.b16 %v7150, %v7148
      %v7377 = vpack.c.b16 %v7151, %v7149
      %v7378 = vpack.c.b16 %v7154, %v7152
      %v7379 = vpack.c.b16 %v7155, %v7153
      %v7380 = vpack.c.b16 %v7158, %v7156
      %v7381 = vpack.c.b16 %v7159, %v7157
      %v7382 = vpack.c.b16 %v7162, %v7160
      %v7383 = vpack.c.b16 %v7163, %v7161
      %v7384 = vpack.c.b16 %v7166, %v7164
      %v7385 = vpack.c.b16 %v7167, %v7165
      %v7386 = vpack.c.b16 %v7170, %v7168
      %v7387 = vpack.c.b16 %v7171, %v7169
      %v7388 = vpack.c.b16 %v7174, %v7172
      %v7389 = vpack.c.b16 %v7175, %v7173
      %v7390 = vpack.c.b16 %v7178, %v7176
      %v7391 = vpack.c.b16 %v7179, %v7177
      %v7392 = vpack.c.b16 %v7182, %v7180
      %v7393 = vpack.c.b16 %v7183, %v7181
      %v7394 = vpack.c.b16 %v7186, %v7184
      %v7395 = vpack.c.b16 %v7187, %v7185
      %v7396 = vpack.c.b16 %v7190, %v7188
      %v7397 = vpack.c.b16 %v7191, %v7189
      %v7398 = vpack.c.b16 %v7194, %v7192
      %v7399 = vpack.c.b16 %v7195, %v7193
      %v7400 = vpack.c.b16 %v7198, %v7196
      %v7401 = vpack.c.b16 %v7199, %v7197
      %v7402 = vpack.c.b16 %v7202, %v7200
      %v7403 = vpack.c.b16 %v7203, %v7201
      %v7404 = vpack.c.b16 %v7206, %v7204
      %v7405 = vpack.c.b16 %v7207, %v7205
      %v7406 = vpack.c.b16 %v7210, %v7208
      %v7407 = vpack.c.b16 %v7211, %v7209
      %v7408 = vpack.c.b16 %v7214, %v7212
      %v7409 = vpack.c.b16 %v7215, %v7213
      %v7410 = vpack.c.b16 %v7218, %v7216
      %v7411 = vpack.c.b16 %v7219, %v7217
      %v7412 = vpack.c.b16 %v7222, %v7220
      %v7413 = vpack.c.b16 %v7223, %v7221
      %v7414 = vpack.c.b16 %v7226, %v7224
      %v7415 = vpack.c.b16 %v7227, %v7225
      %v7416 = vpack.c.b16 %v7230, %v7228
      %v7417 = vpack.c.b16 %v7231, %v7229
      %v7418 = vpack.c.b16 %v7234, %v7232
      %v7419 = vpack.c.b16 %v7235, %v7233
      %v7420 = vpack.c.b16 %v7238, %v7236
      %v7421 = vpack.c.b16 %v7239, %v7237
      %v7422 = vpack.c.b16 %v7242, %v7240
      %v7423 = vpack.c.b16 %v7243, %v7241
      %v7424 = vpack.c.b16 %v7246, %v7244
      %v7425 = vpack.c.b16 %v7247, %v7245
      %v7426 = vpack.c.b16 %v7250, %v7248
      %v7427 = vpack.c.b16 %v7251, %v7249
      %v7428 = vpack.c.b16 %v7254, %v7252
      %v7429 = vpack.c.b16 %v7255, %v7253
      %v7430 = vpack.c.b16 %v7258, %v7256
      %v7431 = vpack.c.b16 %v7259, %v7257
      %v7432 = vpack.c.b16 %v7262, %v7260
      %v7433 = vpack.c.b16 %v7263, %v7261
      %v7434 = vpack.c.b16 %v7266, %v7264
      %v7435 = vpack.c.b16 %v7267, %v7265
      %v7436 = vpack.c.b16 %v7270, %v7268
      %v7437 = vpack.c.b16 %v7271, %v7269
      %v7438 = vpack.c.b16 %v7274, %v7272
      %v7439 = vpack.c.b16 %v7275, %v7273
      %v7440 = vpack.c.b16 %v7278, %v7276
      %v7441 = vpack.c.b16 %v7279, %v7277
      %v7442 = vpack.c.b16 %v7282, %v7280
      %v7443 = vpack.c.b16 %v7283, %v7281
      %v7444 = vpack.c.b16 %v7286, %v7284
      %v7445 = vpack.c.b16 %v7287, %v7285
      %v7446 = vpack.c.b16 %v7290, %v7288
      %v7447 = vpack.c.b16 %v7291, %v7289
      %v7448 = vpack.c.b16 %v7294, %v7292
      %v7449 = vpack.c.b16 %v7295, %v7293
      %v7450 = vpack.c.b16 %v7298, %v7296
      %v7451 = vpack.c.b16 %v7299, %v7297
      %v7452 = vpack.c.b16 %v7302, %v7300
      %v7453 = vpack.c.b16 %v7303, %v7301
      %v7454 = vpack.c.b16 %v7306, %v7304
      %v7455 = vpack.c.b16 %v7307, %v7305
      %v7456 = vpack.c.b16 %v7310, %v7308
      %v7457 = vpack.c.b16 %v7311, %v7309
      %v7458 = vpack.c.b16 %v7314, %v7312
      %v7459 = vpack.c.b16 %v7315, %v7313
      %v7460 = vpack.c.b16 %v7318, %v7316
      %v7461 = vpack.c.b16 %v7319, %v7317
      %v7462 = vpack.c.b16 %v7322, %v7320
      %v7463 = vpack.c.b16 %v7323, %v7321
      %v7464 = vpack.c.b16 %v7326, %v7324
      %v7465 = vpack.c.b16 %v7327, %v7325
      %v7466 = vpack.c.b16 %v7330, %v7328
      %v7467 = vpack.c.b16 %v7331, %v7329
      %v7468 = vpack.c.b16 %v7334, %v7332
      %v7469 = vpack.c.b16 %v7335, %v7333
      %v7470 = vpack.c.b16 %v7338, %v7336
      %v7471 = vpack.c.b16 %v7339, %v7337
      %v7472 = vpack.c.b16 %v7342, %v7340
      %v7473 = vpack.c.b16 %v7343, %v7341
      %v7474 = vpack.c.b16 %v7346, %v7344
      %v7475 = vpack.c.b16 %v7347, %v7345
      %v7476 = vpack.c.b16 %v7350, %v7348
      %v7477 = vpack.c.b16 %v7351, %v7349
      %v7478 = vpack.c.b16 %v7354, %v7352
      %v7479 = vpack.c.b16 %v7355, %v7353
      %v7480 = vpack.c.b16 %v7358, %v7356
      %v7481 = vpack.c.b16 %v7359, %v7357
      %v7482 = vpack.c.b16 %v7362, %v7360
      %v7483 = vpack.c.b16 %v7363, %v7361
      %v7605 = vsel %vm853, %v6871, 0
      %7607 = vmatprep.subr.bf16.mxu0 %v7365
      %7608 = vmatpush1.bf16.msra.mxu0 %v7364
      %7609 = vmatprep.subr.bf16.mxu0 %v7367
      %7610 = vmatpush1.bf16.msra.mxu0 %v7366
      %7611 = vmatprep.subr.bf16.mxu0 %v7369
      %7612 = vmatpush1.bf16.msra.mxu0 %v7368
      %7613 = vmatprep.subr.bf16.mxu0 %v7371
      %7614 = vmatpush1.bf16.msra.mxu0 %v7370
      %7615 = vmatprep.subr.bf16.mxu0 %v7373
      %7616 = vmatpush1.bf16.msra.mxu0 %v7372
      %7617 = vmatprep.subr.bf16.mxu0 %v7375
      %7618 = vmatpush1.bf16.msra.mxu0 %v7374
      %7619 = vmatprep.subr.bf16.mxu0 %v7377
      %7620 = vmatpush1.bf16.msra.mxu0 %v7376
      %7621 = vmatprep.subr.bf16.mxu0 %v7379
      %7622 = vmatpush1.bf16.msra.mxu0 %v7378
      %7623 = vmatprep.subr.bf16.mxu0 %v7381
      %7624 = vmatpush1.bf16.msra.mxu0 %v7380
      %7625 = vmatprep.subr.bf16.mxu0 %v7383
      %7626 = vmatpush1.bf16.msra.mxu0 %v7382
      %7627 = vmatprep.subr.bf16.mxu0 %v7385
      %7628 = vmatpush1.bf16.msra.mxu0 %v7384
      %7629 = vmatprep.subr.bf16.mxu0 %v7387
      %7630 = vmatpush1.bf16.msra.mxu0 %v7386
      %7631 = vmatprep.subr.bf16.mxu0 %v7389
      %7632 = vmatpush1.bf16.msra.mxu0 %v7388
      %7633 = vmatprep.subr.bf16.mxu0 %v7391
      %7634 = vmatpush1.bf16.msra.mxu0 %v7390
      %7635 = vmatprep.subr.bf16.mxu0 %v7393
      %7636 = vmatpush1.bf16.msra.mxu0 %v7392
      %7637 = vmatprep.subr.bf16.mxu0 %v7395
      %7638 = vmatpush1.bf16.msra.mxu0 %v7394
      %7639 = vmatprep.mubr.bf16.mxu0 %v6865
      %7640 = vmatmul.mubr.bf16.gmra.mrb[0].mxu0 %v6864
      %v7641 = vpop.f32.mrb[0].mxu0
      %v7642 = vadd.f32 %v6997, %v7641
      %v7643 = vpop.f32.mrb[0].mxu0
      %v7644 = vadd.f32 %v7001, %v7643
      %v7645 = vpop.f32.mrb[0].mxu0
      %v7646 = vpop.f32.mrb[0].mxu0
      %7647 = vdwg.mxu0
      %7648 = vmatprep.subr.bf16.mxu0 %v7397
      %7649 = vmatpush1.bf16.msra.mxu0 %v7396
      %7650 = vmatprep.subr.bf16.mxu0 %v7399
      %7651 = vmatpush1.bf16.msra.mxu0 %v7398
      %7652 = vmatprep.subr.bf16.mxu0 %v7401
      %7653 = vmatpush1.bf16.msra.mxu0 %v7400
      %7654 = vmatprep.subr.bf16.mxu0 %v7403
      %7655 = vmatpush1.bf16.msra.mxu0 %v7402
      %7656 = vmatprep.subr.bf16.mxu0 %v7405
      %7657 = vmatpush1.bf16.msra.mxu0 %v7404
      %7658 = vmatprep.subr.bf16.mxu0 %v7407
      %7659 = vmatpush1.bf16.msra.mxu0 %v7406
      %7660 = vmatprep.subr.bf16.mxu0 %v7409
      %7661 = vmatpush1.bf16.msra.mxu0 %v7408
      %7662 = vmatprep.subr.bf16.mxu0 %v7411
      %7663 = vmatpush1.bf16.msra.mxu0 %v7410
      %7664 = vmatprep.subr.bf16.mxu0 %v7413
      %7665 = vmatpush1.bf16.msra.mxu0 %v7412
      %7666 = vmatprep.subr.bf16.mxu0 %v7415
      %7667 = vmatpush1.bf16.msra.mxu0 %v7414
      %7668 = vmatprep.subr.bf16.mxu0 %v7417
      %7669 = vmatpush1.bf16.msra.mxu0 %v7416
      %7670 = vmatprep.subr.bf16.mxu0 %v7419
      %7671 = vmatpush1.bf16.msra.mxu0 %v7418
      %7672 = vmatprep.subr.bf16.mxu0 %v7421
      %7673 = vmatpush1.bf16.msra.mxu0 %v7420
      %7674 = vmatprep.subr.bf16.mxu0 %v7423
      %7675 = vmatpush1.bf16.msra.mxu0 %v7422
      %7676 = vmatprep.subr.bf16.mxu0 %v7425
      %7677 = vmatpush1.bf16.msra.mxu0 %v7424
      %7678 = vmatprep.subr.bf16.mxu0 %v7427
      %7679 = vmatpush1.bf16.msra.mxu0 %v7426
      %7680 = vmatprep.mubr.bf16.mxu0 %v6867
      %7681 = vmatmul.mubr.bf16.gmra.mrb[0].mxu0 %v6866
      %v7682 = vpop.f32.mrb[0].mxu0
      %v7683 = vadd.f32 %v7642, %v7682
      %v7684 = vpop.f32.mrb[0].mxu0
      %v7685 = vadd.f32 %v7644, %v7684
      %v7686 = vpop.f32.mrb[0].mxu0
      %v7687 = vpop.f32.mrb[0].mxu0
      %7688 = vdwg.mxu0
      %7689 = vmatprep.subr.bf16.mxu0 %v7429
      %7690 = vmatpush1.bf16.msra.mxu0 %v7428
      %7691 = vmatprep.subr.bf16.mxu0 %v7431
      %7692 = vmatpush1.bf16.msra.mxu0 %v7430
      %7693 = vmatprep.subr.bf16.mxu0 %v7433
      %7694 = vmatpush1.bf16.msra.mxu0 %v7432
      %7695 = vmatprep.subr.bf16.mxu0 %v7435
      %7696 = vmatpush1.bf16.msra.mxu0 %v7434
      %7697 = vmatprep.subr.bf16.mxu0 %v7437
      %7698 = vmatpush1.bf16.msra.mxu0 %v7436
      %7699 = vmatprep.subr.bf16.mxu0 %v7439
      %7700 = vmatpush1.bf16.msra.mxu0 %v7438
      %7701 = vmatprep.subr.bf16.mxu0 %v7441
      %7702 = vmatpush1.bf16.msra.mxu0 %v7440
      %7703 = vmatprep.subr.bf16.mxu0 %v7443
      %7704 = vmatpush1.bf16.msra.mxu0 %v7442
      %7705 = vmatprep.subr.bf16.mxu0 %v7445
      %7706 = vmatpush1.bf16.msra.mxu0 %v7444
      %7707 = vmatprep.subr.bf16.mxu0 %v7447
      %7708 = vmatpush1.bf16.msra.mxu0 %v7446
      %7709 = vmatprep.subr.bf16.mxu0 %v7449
      %7710 = vmatpush1.bf16.msra.mxu0 %v7448
      %7711 = vmatprep.subr.bf16.mxu0 %v7451
      %7712 = vmatpush1.bf16.msra.mxu0 %v7450
      %7713 = vmatprep.subr.bf16.mxu0 %v7453
      %7714 = vmatpush1.bf16.msra.mxu0 %v7452
      %7715 = vmatprep.subr.bf16.mxu0 %v7455
      %7716 = vmatpush1.bf16.msra.mxu0 %v7454
      %7717 = vmatprep.subr.bf16.mxu0 %v7457
      %7718 = vmatpush1.bf16.msra.mxu0 %v7456
      %7719 = vmatprep.subr.bf16.mxu0 %v7459
      %7720 = vmatpush1.bf16.msra.mxu0 %v7458
      %7721 = vmatprep.mubr.bf16.mxu0 %v6869
      %7722 = vmatmul.mubr.bf16.gmra.mrb[0].mxu0 %v6868
      %v7723 = vpop.f32.mrb[0].mxu0
      %v7724 = vadd.f32 %v7683, %v7723
      %v7725 = vpop.f32.mrb[0].mxu0
      %v7726 = vadd.f32 %v7685, %v7725
      %v7727 = vpop.f32.mrb[0].mxu0
      %v7728 = vpop.f32.mrb[0].mxu0
      %7729 = vdwg.mxu0
      %7730 = vmatprep.subr.bf16.mxu0 %v7461
      %7731 = vmatpush1.bf16.msra.mxu0 %v7460
      %7732 = vmatprep.subr.bf16.mxu0 %v7463
      %7733 = vmatpush1.bf16.msra.mxu0 %v7462
      %7734 = vmatprep.subr.bf16.mxu0 %v7465
      %7735 = vmatpush1.bf16.msra.mxu0 %v7464
      %7736 = vmatprep.subr.bf16.mxu0 %v7467
      %7737 = vmatpush1.bf16.msra.mxu0 %v7466
      %7738 = vmatprep.subr.bf16.mxu0 %v7469
      %7739 = vmatpush1.bf16.msra.mxu0 %v7468
      %7740 = vmatprep.subr.bf16.mxu0 %v7471
      %7741 = vmatpush1.bf16.msra.mxu0 %v7470
      %7742 = vmatprep.subr.bf16.mxu0 %v7473
      %7743 = vmatpush1.bf16.msra.mxu0 %v7472
      %7744 = vmatprep.subr.bf16.mxu0 %v7475
      %7745 = vmatpush1.bf16.msra.mxu0 %v7474
      %7746 = vmatprep.subr.bf16.mxu0 %v7477
      %7747 = vmatpush1.bf16.msra.mxu0 %v7476
      %7748 = vmatprep.subr.bf16.mxu0 %v7479
      %7749 = vmatpush1.bf16.msra.mxu0 %v7478
      %7750 = vmatprep.subr.bf16.mxu0 %v7481
      %7751 = vmatpush1.bf16.msra.mxu0 %v7480
      %7752 = vmatprep.subr.bf16.mxu0 %v7483
      %7753 = vmatpush1.bf16.msra.mxu0 %v7482
      %7754 = vmatprep.subr.bf16.mxu0 0
      %7755 = vmatpush1.bf16.msra.mxu0 0
      %7756 = vmatprep.subr.bf16.mxu0 0
      %7757 = vmatpush1.bf16.msra.mxu0 0
      %7758 = vmatprep.subr.bf16.mxu0 0
      %7759 = vmatpush1.bf16.msra.mxu0 0
      %7760 = vmatprep.subr.bf16.mxu0 0
      %7761 = vmatpush1.bf16.msra.mxu0 0
      %7762 = vmatprep.mubr.bf16.mxu0 %v7605
      %7763 = vmatmul.mubr.bf16.gmra.mrb[0].mxu0 %v6870
      %v7764 = vpop.f32.mrb[0].mxu0
      %v7765 = vadd.f32 %v7724, %v7764
      %v7766 = vpop.f32.mrb[0].mxu0
      %v7767 = vadd.f32 %v7726, %v7766
      %v7768 = vpop.f32.mrb[0].mxu0
      %v7769 = vpop.f32.mrb[0].mxu0
      %7770 = vdwg.mxu0
      %7771 = vst [vmem:[%s683] sm:$0xff] %v7765
      %7772 = vst.msk [vmem:[%s683 + $0x8] sm:$0xff] %vm853, %v7767
      %p7773 = scmp.lt.s32.totalorder %s33, 1
      %s7774 = scalar_select %p7773, %s33, 1
      %s7775 = smul.addr %s7774, 2
      %s7776 = smul.addr %s7775, 8
      %s7777 = scalar_lea.vmem %s22, %s7776
      // Predicated region
      $region109: #{autoencoder_forward.1} parent=107 // pred_check
        %p7778 = pneg %p518
      $region110: #{autoencoder_forward.1} parent=107 // pred_check_branch
        %7780 = sbr.rel (%p7778) target = $region112
      $region111: #{autoencoder_forward.1} parent=107 // pred_region
        _
      $region112: #{autoencoder_forward.1} parent=107 // pred_fallthru
        _
    $region108: #{autoencoder_forward.1} parent=5 // pred_fallthru
      _
    %p7781 = scmp.le.s32.totalorder 2, %s28
    // Predicated region
    $region113: #{autoencoder_forward.1} parent=5 // pred_check
      %p7782 = pneg %p7781
    $region114: #{autoencoder_forward.1} parent=5 // pred_check_branch
      %7784 = sbr.rel (%p7782) target = $region116
    $region115: #{autoencoder_forward.1} parent=5 // pred_region
      %s7785 = ssub.s32 %s28, 2
      // Predicated region
      $region117: #{autoencoder_forward.1} parent=115 // pred_check
        %p7786 = pneg %p524
      $region118: #{autoencoder_forward.1} parent=115 // pred_check_branch
        %7788 = sbr.rel (%p7786) target = $region120
      $region119: #{autoencoder_forward.1} parent=115 // pred_region
        %p7789 = scmp.lt.s32.totalorder %s34, 1
        %s7790 = scalar_select %p7789, %s34, 1
        %s7791 = smul.addr %s7790, 2
        %s7792 = smul.addr %s7791, 8
        %s7793 = scalar_lea.vmem %s22, %s7792
      $region120: #{autoencoder_forward.1} parent=115 // pred_fallthru
        _
    $region116: #{autoencoder_forward.1} parent=5 // pred_fallthru
      _
  $region6: #{autoencoder_forward.1} parent=0 // loop_footer
    %s32 = sadd.s32 1, %s28
  $region7: #{autoencoder_forward.1} parent=0 // loop_footer_branch
    %27 = sbr.rel target = $region3
  $region8: #{autoencoder_forward.1} parent=0 // loop_exit
    _

</llo_original>
